<compile_context>
chip_gen: v7x
topology: tpu7x:2x2x1
jax: 0.10.0
libtpu: 0.0.40
codegen_flags: <defaults>
</compile_context>

<pallas_src>
import functools

import numpy as np
import jax
import jax.numpy as jnp
from jax import lax
from jax.experimental import pallas as pl
from jax.experimental.pallas import tpu as pltpu

NEG_SLOPE = 0.01   # nn.LeakyReLU default
BN_EPS = 1e-5      # nn.BatchNorm2d default


def _leaky(x):
    return jnp.where(x > 0, x, NEG_SLOPE * x)


def _round_up(x, k):
    return -(-x // k) * k


def _pick_images_per_step(n):
    # Prefer folding several images per grid step (amortizes MXU fill/drain and
    # the ~0.35us per-step overhead); at large batches this still leaves >=2
    # grid steps so the xd DMA double-buffers.
    for b in (8, 4, 2):
        if n % b == 0 and (n // b >= 2 or b >= n):
            return b
    return 1


# ----------------------------- fused Pallas kernel -----------------------------

def _cross_stage_kernel(xd_ref, mask_ref, wd_ref, bd_ref,
                        wes_ref, bes_ref, web_ref, beb_ref,
                        w1_ref, b1_ref, w2_ref, b2_ref,
                        wtb_ref, btb_ref, wtrs_ref, wtrb_ref, btr_ref,
                        o_ref, frame_ref, *, wp, off, depth, ngrp, exp_act):
    """One grid step == B images of the batch; whole CrossStage stays in VMEM.

    Activation row space: each image occupies F_IMG rows; real pixels are the
    first m = H*(W+2) rows (2 pad columns per spatial row carry finite garbage),
    the trailing gap rows carry garbage.  Before each 3x3 conv the activation is
    masked (pad columns + gap rows -> 0) and stored into the frame scratch at
    sublane-aligned offset `off`; the 9 taps are then static slices of the frame
    (shift = dy*wp + dx - (wp+1)) consumed by 9 accumulating matmuls.
    """
    m_tot = xd_ref.shape[0]                 # B * F_IMG
    c_mid = w1_ref.shape[2]
    prows = frame_ref.shape[0]

    # Frame borders zeroed ONCE per grid step (interior is fully overwritten by
    # every block; gap rows inside the interior are zeroed by the mask).
    frame_ref[0:off, :] = jnp.zeros((off, c_mid), frame_ref.dtype)
    frame_ref[off + m_tot:prows, :] = jnp.zeros((prows - off - m_tot, c_mid),
                                                frame_ref.dtype)

    # Hoisted mask broadcast (JAX does not CSE broadcast_in_dim per block).
    maskb = jnp.broadcast_to(mask_ref[...], (m_tot, c_mid))

    def cna(x, w, b, act=True):
        # conv-as-matmul + folded-BN bias + LeakyReLU; operand dtype follows the
        # weight (bf16 MXU except the final f32 layer), f32 accumulate/epilogue.
        y = jnp.dot(x.astype(w.dtype), w, preferred_element_type=jnp.float32) + b
        return _leaky(y) if act else y

    # conv_down: 3x3 stride-2 (im2col precomputed by the wrapper, K = 9*Cin).
    hd = cna(xd_ref[...], wd_ref[...], bd_ref[...]).astype(jnp.bfloat16)
    # conv_exp as two split matmuls -> xs / xb directly (no lane-offset split).
    xs = cna(hd, wes_ref[...], bes_ref[...], act=exp_act)        # (m_tot, half)
    xb = cna(hd, web_ref[...], beb_ref[...], act=exp_act)        # (m_tot, half)

    # DarkBlocks: 1x1 CNA -> 3x3 CNA (frame-shift im2col) -> + shortcut.
    shifts = [off - (wp + 1) + dy * wp + dx for dy in range(3) for dx in range(3)]
    for i in range(depth):
        shortcut = xb
        z = cna(xb, w1_ref[i], b1_ref[i])                        # (m_tot, c_mid)
        # Aligned full-interior store of the masked activation.
        frame_ref[off:off + m_tot, :] = (z * maskb).astype(frame_ref.dtype)
        acc = b2_ref[i]                                          # (1, c_blk) broadcasts
        for t, s in enumerate(shifts):                           # 9 accumulating matmuls
            tap = frame_ref[s:s + m_tot, :].astype(jnp.bfloat16)
            acc = acc + jnp.dot(tap, w2_ref[i * 9 + t],
                                preferred_element_type=jnp.float32)
        xb = _leaky(acc) + shortcut                              # residual add (f32)

    xb = cna(xb, wtb_ref[...], btb_ref[...])                     # conv_transition_b
    # conv_transition on concat([xs, xb]) as two accumulating f32 matmuls
    # (no lane concat; f32 on the last layer claws back bf16 accumulation error).
    out = _leaky(jnp.dot(xs, wtrs_ref[...], preferred_element_type=jnp.float32)
                 + jnp.dot(xb, wtrb_ref[...], preferred_element_type=jnp.float32)
                 + btr_ref[...])                                 # (m_tot, c_out)

    # Lane-dense writeback: pack ngrp aligned row blocks side by side so the
    # store is ngrp*c_out (=128) unmasked lanes wide.  Wrapper undoes this.
    if ngrp > 1:
        qr = m_tot // ngrp
        out = jnp.concatenate([out[q * qr:(q + 1) * qr, :] for q in range(ngrp)],
                              axis=1)
    o_ref[...] = out.astype(o_ref.dtype)


# ----------------------------- CrossStage forward -----------------------------

def cross_stage_forward(x_nchw, params, *, stride, expand_channels, cross_linear):
    # TODO(synk): groups > 1, SqueezeExcitation and the stride==1 (Identity
    # conv_down) path are not implemented; this config uses groups=1, SE=False,
    # stride=2.
    x = jnp.transpose(x_nchw, (0, 2, 3, 1))                 # NCHW -> NHWC
    n, h, w, cin = x.shape

    wd, bd = params["conv_down"]                            # (3,3,cin,c_down)
    we, be = params["conv_exp"]
    wtb, btb = params["conv_transition_b"]
    wtr, btr = params["conv_transition"]
    blocks = params["blocks"]
    depth = len(blocks)
    c_down = wd.shape[-1]
    c_exp = we.shape[-1]
    half = c_exp // 2
    c_mid = blocks[0]["c1"][0].shape[-1]
    c_blk = blocks[0]["c2"][0].shape[-1]
    c_out = wtr.shape[-1]

    ho = (h + 2 - 3) // stride + 1
    wo = (w + 2 - 3) // stride + 1
    wp = wo + 2                                             # width-padded row
    m = ho * wp                                             # real rows per image

    # ---- batch folding: B images per grid step, fixed per-image row stride ----
    bsz = _pick_images_per_step(n)
    n_steps = n // bsz
    f_img = _round_up(m + wp + 1, 16)                       # per-image frame stride
    m_tot = bsz * f_img                                     # rows per grid step
    off = _round_up(wp + 1, 16)                             # aligned frame interior offset
    prows = _round_up(off + m_tot + wp + 1, 8)              # frame scratch rows

    # lane-dense output packing factor (4 when c_out == 32)
    ngrp = 128 // c_out if (128 % c_out == 0 and m_tot % (128 // c_out) == 0) else 1
    qr = m_tot // ngrp

    # Wrapper glue: im2col for the stride-2 conv_down, laid out directly in the
    # per-image frame-row space (pad columns and gap rows are zero).
    # TODO(synk): at production H,W this im2col should move into the kernel
    # (DMA raw padded frames) to avoid the 9x HBM amplification of the input.
    xp = jnp.pad(x, ((0, 0), (1, 1), (1, 1), (0, 0)))
    taps = [xp[:, dy:dy + (ho - 1) * stride + 1:stride,
               dx:dx + (wo - 1) * stride + 1:stride, :]
            for dy in range(3) for dx in range(3)]
    xd = jnp.concatenate(taps, axis=-1)                     # (n, ho, wo, 9*cin)
    xd = jnp.pad(xd, ((0, 0), (0, 0), (0, wp - wo), (0, 0)))
    xd = xd.reshape(n, m, 9 * cin)
    xd = jnp.pad(xd, ((0, 0), (0, f_img - m), (0, 0)))      # gap rows
    xd = xd.reshape(n_steps, m_tot, 9 * cin).astype(jnp.bfloat16)

    # mask: 1 on real pixels, 0 on pad columns / per-image gap rows
    k = np.arange(f_img)
    mrow = ((k < m) & ((k % wp) < wo)).astype(np.float32)
    mask = jnp.asarray(np.tile(mrow, bsz).reshape(m_tot, 1))

    bf = jnp.bfloat16
    wd2 = wd.reshape(9 * cin, c_down).astype(bf)
    wes, web = we[:, :half].astype(bf), we[:, half:].astype(bf)      # pre-split
    bes, beb = be[:, :half], be[:, half:]
    w1 = jnp.stack([b["c1"][0] for b in blocks]).astype(bf)          # (d, half, c_mid)
    b1 = jnp.stack([b["c1"][1] for b in blocks])                     # (d, 1, c_mid)
    w2 = jnp.concatenate([b["c2"][0].reshape(9, c_mid, c_blk) for b in blocks],
                         axis=0).astype(bf)                          # (9d, c_mid, c_blk)
    b2 = jnp.stack([b["c2"][1] for b in blocks])                     # (d, 1, c_blk)
    wtrs, wtrb = wtr[:half], wtr[half:]                              # f32 final layer

    def const(shape):
        return pl.BlockSpec(shape, lambda b: (0,) * len(shape))

    out = pl.pallas_call(
        functools.partial(_cross_stage_kernel, wp=wp, off=off, depth=depth,
                          ngrp=ngrp, exp_act=not cross_linear),
        out_shape=jax.ShapeDtypeStruct((n_steps, qr, ngrp * c_out), jnp.float32),
        grid=(n_steps,),
        in_specs=[
            pl.BlockSpec((None, m_tot, 9 * cin), lambda b: (b, 0, 0)),    # xd
            const((m_tot, 1)),                                            # mask
            const((9 * cin, c_down)), const((1, c_down)),                 # conv_down
            const((c_down, half)), const((1, half)),                      # conv_exp (xs)
            const((c_down, half)), const((1, half)),                      # conv_exp (xb)
            const((depth, half, c_mid)), const((depth, 1, c_mid)),        # block c1
            const((9 * depth, c_mid, c_blk)), const((depth, 1, c_blk)),   # block c2
            const((c_blk, half)), const((1, half)),                       # transition_b
            const((half, c_out)), const((half, c_out)), const((1, c_out)),  # transition
        ],
        out_specs=pl.BlockSpec((None, qr, ngrp * c_out), lambda b: (b, 0, 0)),
        scratch_shapes=[pltpu.VMEM((prows, c_mid), jnp.float32)],
        compiler_params=pltpu.CompilerParams(
            dimension_semantics=("parallel",),              # v7x: both TCs get work
            vmem_limit_bytes=32 * 1024 * 1024),
    )(xd, mask, wd2, bd, wes, bes, web, beb, w1, b1, w2, b2,
      wtb.astype(bf), btb, wtrs, wtrb, btr)

    # Undo the lane-dense packing, drop gap rows and pad columns.
    out = out.reshape(n_steps, qr, ngrp, c_out)
    out = jnp.transpose(out, (0, 2, 1, 3)).reshape(n_steps, m_tot, c_out)
    out = out.reshape(n_steps, bsz, f_img, c_out)[:, :, :m, :]
    out = out.reshape(n, ho, wp, c_out)[:, :, :wo, :]
    return jnp.transpose(out, (0, 3, 1, 2))                 # NHWC -> NCHW


# ----------------------------- parameters -----------------------------

def _fold_bn(w, gamma, beta, mean, var):
    scale = gamma / jnp.sqrt(var + BN_EPS)
    return w * scale, (beta - mean * scale).reshape(1, -1)


def _make_conv_bn(key, cin, cout, ksize):
    kw, kg, kb, km, kv = jax.random.split(key, 5)
    if ksize == 1:
        w = jax.random.normal(kw, (cin, cout), jnp.float32) * 0.08
    else:
        w = jax.random.normal(kw, (ksize, ksize, cin, cout), jnp.float32) * 0.08
    gamma = jax.random.uniform(kg, (cout,), jnp.float32, 0.5, 1.5)
    beta = jax.random.normal(kb, (cout,), jnp.float32) * 0.1
    mean = jax.random.normal(km, (cout,), jnp.float32) * 0.1
    var = jax.random.uniform(kv, (cout,), jnp.float32, 0.5, 1.5)
    return _fold_bn(w, gamma, beta, mean, var)


def init_cross_stage_params(key, in_channels, out_channels, stride, depth,
                            block_ratio, bottle_ratio, expand_ratio,
                            down_growth, cross_linear):
    down_channels = out_channels if down_growth else in_channels
    expand_channels = int(round(out_channels * expand_ratio))
    block_out = int(round(out_channels * block_ratio))
    keys = jax.random.split(key, 4 + 2 * depth)
    params = {}
    prev = in_channels
    if stride != 1:
        params["conv_down"] = _make_conv_bn(keys[0], in_channels, down_channels, 3)
        prev = down_channels
    params["conv_exp"] = _make_conv_bn(keys[1], prev, expand_channels, 1)
    prev = expand_channels // 2
    blocks = []
    for i in range(depth):
        mid = int(round(block_out * bottle_ratio))
        blocks.append({
            "c1": _make_conv_bn(keys[2 + 2 * i], prev, mid, 1),
            "c2": _make_conv_bn(keys[3 + 2 * i], mid, block_out, 3),
        })
        prev = block_out
    params["blocks"] = blocks
    params["conv_transition_b"] = _make_conv_bn(keys[2 + 2 * depth], prev,
                                                expand_channels // 2, 1)
    params["conv_transition"] = _make_conv_bn(keys[3 + 2 * depth],
                                              expand_channels, out_channels, 1)
    return params, expand_channels


# ----------------------------- pure-JAX reference -----------------------------

def _ref_cna(x, w, b, stride, padding, act):
    w4 = w.reshape(1, 1, *w.shape) if w.ndim == 2 else w
    y = lax.conv_general_dilated(
        x, w4, (stride, stride), ((padding, padding), (padding, padding)),
        dimension_numbers=("NHWC", "HWIO", "NHWC")) + b.reshape(1, 1, 1, -1)
    return _leaky(y) if act else y


def cross_stage_reference(x_nchw, params, *, stride, expand_channels, cross_linear):
    x = jnp.transpose(x_nchw, (0, 2, 3, 1))
    if stride != 1:
        w, b = params["conv_down"]
        x = _ref_cna(x, w, b, stride, 1, True)
    w, b = params["conv_exp"]
    x = _ref_cna(x, w, b, 1, 0, not cross_linear)
    half = expand_channels // 2
    xs, xb = x[..., :half], x[..., half:]
    for blk in params["blocks"]:
        shortcut = xb
        w1, b1 = blk["c1"]
        xb = _ref_cna(xb, w1, b1, 1, 0, True)
        w2, b2 = blk["c2"]
        xb = _ref_cna(xb, w2, b2, 1, 1, True) + shortcut
    w, b = params["conv_transition_b"]
    xb = _ref_cna(xb, w, b, 1, 0, True)
    w, b = params["conv_transition"]
    out = _ref_cna(jnp.concatenate([xs, xb], axis=-1), w, b, 1, 0, True)
    return jnp.transpose(out, (0, 3, 1, 2))


# ----------------------------- main -----------------------------

if __name__ == "__main__":
    in_channels, out_channels = 16, 32
    stride, depth = 2, 2
    block_ratio, bottle_ratio, expand_ratio = 1.0, 0.5, 2.0
    down_growth, cross_linear = False, False

    key = jax.random.PRNGKey(0)
    kx, kp = jax.random.split(key)
    x = jax.random.normal(kx, (2, in_channels, 16, 16), jnp.float32)   # NCHW

    params, expand_channels = init_cross_stage_params(
        kp, in_channels, out_channels, stride, depth,
        block_ratio, bottle_ratio, expand_ratio, down_growth, cross_linear)

    fwd = jax.jit(functools.partial(
        cross_stage_forward, stride=stride,
        expand_channels=expand_channels, cross_linear=cross_linear))
    out = fwd(x, params)
    jax.block_until_ready(out)

    ref = cross_stage_reference(x, params, stride=stride,
                                expand_channels=expand_channels,
                                cross_linear=cross_linear)
    assert out.shape == (2, out_channels, 8, 8), out.shape
    # bf16 MXU operands across the stacked conv layers (final layer f32) =>
    # slightly loose tolerance vs. the pure-f32 reference.
    np.testing.assert_allclose(np.asarray(out), np.asarray(ref),
                               rtol=5e-2, atol=5e-2)
    print("KERNEL_OK")
</pallas_src>

<mosaic_0001>
module attributes {stable_mosaic.version = 11 : i64} {
  func.func @_cross_stage_kernel(%arg0: i32, %arg1: memref<1x192x144xbf16, #tpu.memory_space<vmem>>, %arg2: memref<192x1xf32, #tpu.memory_space<vmem>>, %arg3: memref<144x16xbf16, #tpu.memory_space<vmem>>, %arg4: memref<1x16xf32, #tpu.memory_space<vmem>>, %arg5: memref<16x32xbf16, #tpu.memory_space<vmem>>, %arg6: memref<1x32xf32, #tpu.memory_space<vmem>>, %arg7: memref<16x32xbf16, #tpu.memory_space<vmem>>, %arg8: memref<1x32xf32, #tpu.memory_space<vmem>>, %arg9: memref<2x32x16xbf16, #tpu.memory_space<vmem>>, %arg10: memref<2x1x16xf32, #tpu.memory_space<vmem>>, %arg11: memref<18x16x32xbf16, #tpu.memory_space<vmem>>, %arg12: memref<2x1x32xf32, #tpu.memory_space<vmem>>, %arg13: memref<32x32xbf16, #tpu.memory_space<vmem>>, %arg14: memref<1x32xf32, #tpu.memory_space<vmem>>, %arg15: memref<32x32xf32, #tpu.memory_space<vmem>>, %arg16: memref<32x32xf32, #tpu.memory_space<vmem>>, %arg17: memref<1x32xf32, #tpu.memory_space<vmem>>, %arg18: memref<1x48x128xf32, #tpu.memory_space<vmem>>, %arg19: memref<224x16xf32, #tpu.memory_space<vmem>>) attributes {dimension_semantics = [#tpu.dimension_semantics<parallel>], iteration_bounds = array<i64: 1>, scalar_prefetch = 0 : i64, scratch_operands = 1 : i64, tpu.core_type = #tpu.core_type<tc>, window_params = [{transform_indices = @transform_0, window_bounds = array<i64: 1, 192, 144>}, {pipeline_mode = #tpu.pipeline_mode<synchronous>, transform_indices = @transform_1, window_bounds = array<i64: 192, 1>}, {pipeline_mode = #tpu.pipeline_mode<synchronous>, transform_indices = @transform_2, window_bounds = array<i64: 144, 16>}, {pipeline_mode = #tpu.pipeline_mode<synchronous>, transform_indices = @transform_3, window_bounds = array<i64: 1, 16>}, {pipeline_mode = #tpu.pipeline_mode<synchronous>, transform_indices = @transform_4, window_bounds = array<i64: 16, 32>}, {pipeline_mode = #tpu.pipeline_mode<synchronous>, transform_indices = @transform_5, window_bounds = array<i64: 1, 32>}, {pipeline_mode = #tpu.pipeline_mode<synchronous>, transform_indices = @transform_6, window_bounds = array<i64: 16, 32>}, {pipeline_mode = #tpu.pipeline_mode<synchronous>, transform_indices = @transform_7, window_bounds = array<i64: 1, 32>}, {pipeline_mode = #tpu.pipeline_mode<synchronous>, transform_indices = @transform_8, window_bounds = array<i64: 2, 32, 16>}, {pipeline_mode = #tpu.pipeline_mode<synchronous>, transform_indices = @transform_9, window_bounds = array<i64: 2, 1, 16>}, {pipeline_mode = #tpu.pipeline_mode<synchronous>, transform_indices = @transform_10, window_bounds = array<i64: 18, 16, 32>}, {pipeline_mode = #tpu.pipeline_mode<synchronous>, transform_indices = @transform_11, window_bounds = array<i64: 2, 1, 32>}, {pipeline_mode = #tpu.pipeline_mode<synchronous>, transform_indices = @transform_12, window_bounds = array<i64: 32, 32>}, {pipeline_mode = #tpu.pipeline_mode<synchronous>, transform_indices = @transform_13, window_bounds = array<i64: 1, 32>}, {pipeline_mode = #tpu.pipeline_mode<synchronous>, transform_indices = @transform_14, window_bounds = array<i64: 32, 32>}, {pipeline_mode = #tpu.pipeline_mode<synchronous>, transform_indices = @transform_15, window_bounds = array<i64: 32, 32>}, {pipeline_mode = #tpu.pipeline_mode<synchronous>, transform_indices = @transform_16, window_bounds = array<i64: 1, 32>}, {transform_indices = @transform_17, window_bounds = array<i64: 1, 48, 128>}]} {
    %cst = arith.constant 0.000000e+00 : f32
    %0 = vector.broadcast %cst : f32 to vector<16x16xf32>
    %c0 = arith.constant 0 : index
    %c0_0 = arith.constant 0 : index
    %1 = vector.load %arg19[%c0, %c0_0] : memref<224x16xf32, #tpu.memory_space<vmem>>, vector<16x16xf32>
    tpu.vector_store %arg19[%c0, %c0_0], %0 {strides = array<i32>} : memref<224x16xf32, #tpu.memory_space<vmem>>, vector<16x16xf32>,
    %cst_1 = arith.constant 0.000000e+00 : f32
    %2 = vector.broadcast %cst_1 : f32 to vector<16x16xf32>
    %c208 = arith.constant 208 : index
    %c0_2 = arith.constant 0 : index
    %3 = vector.load %arg19[%c208, %c0_2] : memref<224x16xf32, #tpu.memory_space<vmem>>, vector<16x16xf32>
    tpu.vector_store %arg19[%c208, %c0_2], %2 {strides = array<i32>} : memref<224x16xf32, #tpu.memory_space<vmem>>, vector<16x16xf32>,
    %c0_3 = arith.constant 0 : index
    %c0_4 = arith.constant 0 : index
    %4 = vector.load %arg2[%c0_3, %c0_4] : memref<192x1xf32, #tpu.memory_space<vmem>>, vector<192x1xf32>
    %5 = vector.shape_cast %4 : vector<192x1xf32> to vector<192x1xf32>
    %6 = vector.broadcast %5 : vector<192x1xf32> to vector<192x16xf32>
    %c0_5 = arith.constant 0 : index
    %c0_6 = arith.constant 0 : index
    %c0_7 = arith.constant 0 : index
    %7 = vector.load %arg1[%c0_5, %c0_6, %c0_7] : memref<1x192x144xbf16, #tpu.memory_space<vmem>>, vector<1x192x144xbf16>
    %8 = vector.shape_cast %7 : vector<1x192x144xbf16> to vector<192x144xbf16>
    %c0_8 = arith.constant 0 : index
    %c0_9 = arith.constant 0 : index
    %9 = vector.load %arg3[%c0_8, %c0_9] : memref<144x16xbf16, #tpu.memory_space<vmem>>, vector<144x16xbf16>
    %c0_10 = arith.constant 0 : index
    %c0_11 = arith.constant 0 : index
    %10 = vector.load %arg4[%c0_10, %c0_11] : memref<1x16xf32, #tpu.memory_space<vmem>>, vector<1x16xf32>
    %cst_12 = arith.constant dense<0.000000e+00> : vector<192x16xf32>
    %11 = tpu.matmul %8, %9, %cst_12 {dimension_numbers = #tpu.dot_dimension_numbers<[1], [0], [0], [1], [0, 0, 1, 1], [], []>} : vector<192x144xbf16>, vector<144x16xbf16>, vector<192x16xf32> -> vector<192x16xf32>
    %12 = vector.broadcast %10 : vector<1x16xf32> to vector<192x16xf32>
    %13 = arith.addf %11, %12 : vector<192x16xf32>
    %cst_13 = arith.constant 0.000000e+00 : f32
    %14 = vector.broadcast %cst_13 : f32 to vector<192x16xf32>
    %15 = arith.cmpf ogt, %13, %14 : vector<192x16xf32>
    %cst_14 = arith.constant 0.00999999977 : f32
    %16 = vector.broadcast %cst_14 : f32 to vector<192x16xf32>
    %17 = arith.mulf %16, %13 : vector<192x16xf32>
    %18 = arith.select %15, %13, %17 : vector<192x16xi1>, vector<192x16xf32>
    %19 = arith.truncf %18 : vector<192x16xf32> to vector<192x16xbf16>
    %c0_15 = arith.constant 0 : index
    %c0_16 = arith.constant 0 : index
    %20 = vector.load %arg5[%c0_15, %c0_16] : memref<16x32xbf16, #tpu.memory_space<vmem>>, vector<16x32xbf16>
    %c0_17 = arith.constant 0 : index
    %c0_18 = arith.constant 0 : index
    %21 = vector.load %arg6[%c0_17, %c0_18] : memref<1x32xf32, #tpu.memory_space<vmem>>, vector<1x32xf32>
    %cst_19 = arith.constant dense<0.000000e+00> : vector<192x32xf32>
    %22 = tpu.matmul %19, %20, %cst_19 {dimension_numbers = #tpu.dot_dimension_numbers<[1], [0], [0], [1], [0, 0, 1, 1], [], []>} : vector<192x16xbf16>, vector<16x32xbf16>, vector<192x32xf32> -> vector<192x32xf32>
    %23 = vector.broadcast %21 : vector<1x32xf32> to vector<192x32xf32>
    %24 = arith.addf %22, %23 : vector<192x32xf32>
    %cst_20 = arith.constant 0.000000e+00 : f32
    %25 = vector.broadcast %cst_20 : f32 to vector<192x32xf32>
    %26 = arith.cmpf ogt, %24, %25 : vector<192x32xf32>
    %cst_21 = arith.constant 0.00999999977 : f32
    %27 = vector.broadcast %cst_21 : f32 to vector<192x32xf32>
    %28 = arith.mulf %27, %24 : vector<192x32xf32>
    %29 = arith.select %26, %24, %28 : vector<192x32xi1>, vector<192x32xf32>
    %c0_22 = arith.constant 0 : index
    %c0_23 = arith.constant 0 : index
    %30 = vector.load %arg7[%c0_22, %c0_23] : memref<16x32xbf16, #tpu.memory_space<vmem>>, vector<16x32xbf16>
    %c0_24 = arith.constant 0 : index
    %c0_25 = arith.constant 0 : index
    %31 = vector.load %arg8[%c0_24, %c0_25] : memref<1x32xf32, #tpu.memory_space<vmem>>, vector<1x32xf32>
    %cst_26 = arith.constant dense<0.000000e+00> : vector<192x32xf32>
    %32 = tpu.matmul %19, %30, %cst_26 {dimension_numbers = #tpu.dot_dimension_numbers<[1], [0], [0], [1], [0, 0, 1, 1], [], []>} : vector<192x16xbf16>, vector<16x32xbf16>, vector<192x32xf32> -> vector<192x32xf32>
    %33 = vector.broadcast %31 : vector<1x32xf32> to vector<192x32xf32>
    %34 = arith.addf %32, %33 : vector<192x32xf32>
    %cst_27 = arith.constant 0.000000e+00 : f32
    %35 = vector.broadcast %cst_27 : f32 to vector<192x32xf32>
    %36 = arith.cmpf ogt, %34, %35 : vector<192x32xf32>
    %cst_28 = arith.constant 0.00999999977 : f32
    %37 = vector.broadcast %cst_28 : f32 to vector<192x32xf32>
    %38 = arith.mulf %37, %34 : vector<192x32xf32>
    %39 = arith.select %36, %34, %38 : vector<192x32xi1>, vector<192x32xf32>
    %c0_29 = arith.constant 0 : index
    %c0_30 = arith.constant 0 : index
    %c0_31 = arith.constant 0 : index
    %40 = vector.load %arg9[%c0_29, %c0_30, %c0_31] : memref<2x32x16xbf16, #tpu.memory_space<vmem>>, vector<1x32x16xbf16>
    %41 = vector.shape_cast %40 : vector<1x32x16xbf16> to vector<32x16xbf16>
    %c0_32 = arith.constant 0 : index
    %c0_33 = arith.constant 0 : index
    %c0_34 = arith.constant 0 : index
    %42 = vector.load %arg10[%c0_32, %c0_33, %c0_34] : memref<2x1x16xf32, #tpu.memory_space<vmem>>, vector<1x1x16xf32>
    %43 = vector.shape_cast %42 : vector<1x1x16xf32> to vector<1x16xf32>
    %44 = arith.truncf %39 : vector<192x32xf32> to vector<192x32xbf16>
    %cst_35 = arith.constant dense<0.000000e+00> : vector<192x16xf32>
    %45 = tpu.matmul %44, %41, %cst_35 {dimension_numbers = #tpu.dot_dimension_numbers<[1], [0], [0], [1], [0, 0, 1, 1], [], []>} : vector<192x32xbf16>, vector<32x16xbf16>, vector<192x16xf32> -> vector<192x16xf32>
    %46 = vector.broadcast %43 : vector<1x16xf32> to vector<192x16xf32>
    %47 = arith.addf %45, %46 : vector<192x16xf32>
    %cst_36 = arith.constant 0.000000e+00 : f32
    %48 = vector.broadcast %cst_36 : f32 to vector<192x16xf32>
    %49 = arith.cmpf ogt, %47, %48 : vector<192x16xf32>
    %cst_37 = arith.constant 0.00999999977 : f32
    %50 = vector.broadcast %cst_37 : f32 to vector<192x16xf32>
    %51 = arith.mulf %50, %47 : vector<192x16xf32>
    %52 = arith.select %49, %47, %51 : vector<192x16xi1>, vector<192x16xf32>
    %53 = arith.mulf %52, %6 : vector<192x16xf32>
    %c16 = arith.constant 16 : index
    %c0_38 = arith.constant 0 : index
    %54 = vector.load %arg19[%c16, %c0_38] : memref<224x16xf32, #tpu.memory_space<vmem>>, vector<192x16xf32>
    tpu.vector_store %arg19[%c16, %c0_38], %53 {strides = array<i32>} : memref<224x16xf32, #tpu.memory_space<vmem>>, vector<192x16xf32>,
    %c0_39 = arith.constant 0 : index
    %c0_40 = arith.constant 0 : index
    %c0_41 = arith.constant 0 : index
    %55 = vector.load %arg12[%c0_39, %c0_40, %c0_41] : memref<2x1x32xf32, #tpu.memory_space<vmem>>, vector<1x1x32xf32>
    %56 = vector.shape_cast %55 : vector<1x1x32xf32> to vector<1x32xf32>
    %c5 = arith.constant 5 : index
    %c0_42 = arith.constant 0 : index
    %57 = vector.load %arg19[%c5, %c0_42] : memref<224x16xf32, #tpu.memory_space<vmem>>, vector<192x16xf32>
    %58 = arith.truncf %57 : vector<192x16xf32> to vector<192x16xbf16>
    %c0_43 = arith.constant 0 : index
    %c0_44 = arith.constant 0 : index
    %c0_45 = arith.constant 0 : index
    %59 = vector.load %arg11[%c0_43, %c0_44, %c0_45] : memref<18x16x32xbf16, #tpu.memory_space<vmem>>, vector<1x16x32xbf16>
    %60 = vector.shape_cast %59 : vector<1x16x32xbf16> to vector<16x32xbf16>
    %cst_46 = arith.constant dense<0.000000e+00> : vector<192x32xf32>
    %61 = tpu.matmul %58, %60, %cst_46 {dimension_numbers = #tpu.dot_dimension_numbers<[1], [0], [0], [1], [0, 0, 1, 1], [], []>} : vector<192x16xbf16>, vector<16x32xbf16>, vector<192x32xf32> -> vector<192x32xf32>
    %62 = vector.broadcast %56 : vector<1x32xf32> to vector<192x32xf32>
    %63 = arith.addf %62, %61 : vector<192x32xf32>
    %c6 = arith.constant 6 : index
    %c0_47 = arith.constant 0 : index
    %64 = vector.load %arg19[%c6, %c0_47] : memref<224x16xf32, #tpu.memory_space<vmem>>, vector<192x16xf32>
    %65 = arith.truncf %64 : vector<192x16xf32> to vector<192x16xbf16>
    %c1 = arith.constant 1 : index
    %c0_48 = arith.constant 0 : index
    %c0_49 = arith.constant 0 : index
    %66 = vector.load %arg11[%c1, %c0_48, %c0_49] : memref<18x16x32xbf16, #tpu.memory_space<vmem>>, vector<1x16x32xbf16>
    %67 = vector.shape_cast %66 : vector<1x16x32xbf16> to vector<16x32xbf16>
    %cst_50 = arith.constant dense<0.000000e+00> : vector<192x32xf32>
    %68 = tpu.matmul %65, %67, %cst_50 {dimension_numbers = #tpu.dot_dimension_numbers<[1], [0], [0], [1], [0, 0, 1, 1], [], []>} : vector<192x16xbf16>, vector<16x32xbf16>, vector<192x32xf32> -> vector<192x32xf32>
    %69 = arith.addf %63, %68 : vector<192x32xf32>
    %c7 = arith.constant 7 : index
    %c0_51 = arith.constant 0 : index
    %70 = vector.load %arg19[%c7, %c0_51] : memref<224x16xf32, #tpu.memory_space<vmem>>, vector<192x16xf32>
    %71 = arith.truncf %70 : vector<192x16xf32> to vector<192x16xbf16>
    %c2 = arith.constant 2 : index
    %c0_52 = arith.constant 0 : index
    %c0_53 = arith.constant 0 : index
    %72 = vector.load %arg11[%c2, %c0_52, %c0_53] : memref<18x16x32xbf16, #tpu.memory_space<vmem>>, vector<1x16x32xbf16>
    %73 = vector.shape_cast %72 : vector<1x16x32xbf16> to vector<16x32xbf16>
    %cst_54 = arith.constant dense<0.000000e+00> : vector<192x32xf32>
    %74 = tpu.matmul %71, %73, %cst_54 {dimension_numbers = #tpu.dot_dimension_numbers<[1], [0], [0], [1], [0, 0, 1, 1], [], []>} : vector<192x16xbf16>, vector<16x32xbf16>, vector<192x32xf32> -> vector<192x32xf32>
    %75 = arith.addf %69, %74 : vector<192x32xf32>
    %c15 = arith.constant 15 : index
    %c0_55 = arith.constant 0 : index
    %76 = vector.load %arg19[%c15, %c0_55] : memref<224x16xf32, #tpu.memory_space<vmem>>, vector<192x16xf32>
    %77 = arith.truncf %76 : vector<192x16xf32> to vector<192x16xbf16>
    %c3 = arith.constant 3 : index
    %c0_56 = arith.constant 0 : index
    %c0_57 = arith.constant 0 : index
    %78 = vector.load %arg11[%c3, %c0_56, %c0_57] : memref<18x16x32xbf16, #tpu.memory_space<vmem>>, vector<1x16x32xbf16>
    %79 = vector.shape_cast %78 : vector<1x16x32xbf16> to vector<16x32xbf16>
    %cst_58 = arith.constant dense<0.000000e+00> : vector<192x32xf32>
    %80 = tpu.matmul %77, %79, %cst_58 {dimension_numbers = #tpu.dot_dimension_numbers<[1], [0], [0], [1], [0, 0, 1, 1], [], []>} : vector<192x16xbf16>, vector<16x32xbf16>, vector<192x32xf32> -> vector<192x32xf32>
    %81 = arith.addf %75, %80 : vector<192x32xf32>
    %c16_59 = arith.constant 16 : index
    %c0_60 = arith.constant 0 : index
    %82 = vector.load %arg19[%c16_59, %c0_60] : memref<224x16xf32, #tpu.memory_space<vmem>>, vector<192x16xf32>
    %83 = arith.truncf %82 : vector<192x16xf32> to vector<192x16xbf16>
    %c4 = arith.constant 4 : index
    %c0_61 = arith.constant 0 : index
    %c0_62 = arith.constant 0 : index
    %84 = vector.load %arg11[%c4, %c0_61, %c0_62] : memref<18x16x32xbf16, #tpu.memory_space<vmem>>, vector<1x16x32xbf16>
    %85 = vector.shape_cast %84 : vector<1x16x32xbf16> to vector<16x32xbf16>
    %cst_63 = arith.constant dense<0.000000e+00> : vector<192x32xf32>
    %86 = tpu.matmul %83, %85, %cst_63 {dimension_numbers = #tpu.dot_dimension_numbers<[1], [0], [0], [1], [0, 0, 1, 1], [], []>} : vector<192x16xbf16>, vector<16x32xbf16>, vector<192x32xf32> -> vector<192x32xf32>
    %87 = arith.addf %81, %86 : vector<192x32xf32>
    %c17 = arith.constant 17 : index
    %c0_64 = arith.constant 0 : index
    %88 = vector.load %arg19[%c17, %c0_64] : memref<224x16xf32, #tpu.memory_space<vmem>>, vector<192x16xf32>
    %89 = arith.truncf %88 : vector<192x16xf32> to vector<192x16xbf16>
    %c5_65 = arith.constant 5 : index
    %c0_66 = arith.constant 0 : index
    %c0_67 = arith.constant 0 : index
    %90 = vector.load %arg11[%c5_65, %c0_66, %c0_67] : memref<18x16x32xbf16, #tpu.memory_space<vmem>>, vector<1x16x32xbf16>
    %91 = vector.shape_cast %90 : vector<1x16x32xbf16> to vector<16x32xbf16>
    %cst_68 = arith.constant dense<0.000000e+00> : vector<192x32xf32>
    %92 = tpu.matmul %89, %91, %cst_68 {dimension_numbers = #tpu.dot_dimension_numbers<[1], [0], [0], [1], [0, 0, 1, 1], [], []>} : vector<192x16xbf16>, vector<16x32xbf16>, vector<192x32xf32> -> vector<192x32xf32>
    %93 = arith.addf %87, %92 : vector<192x32xf32>
    %c25 = arith.constant 25 : index
    %c0_69 = arith.constant 0 : index
    %94 = vector.load %arg19[%c25, %c0_69] : memref<224x16xf32, #tpu.memory_space<vmem>>, vector<192x16xf32>
    %95 = arith.truncf %94 : vector<192x16xf32> to vector<192x16xbf16>
    %c6_70 = arith.constant 6 : index
    %c0_71 = arith.constant 0 : index
    %c0_72 = arith.constant 0 : index
    %96 = vector.load %arg11[%c6_70, %c0_71, %c0_72] : memref<18x16x32xbf16, #tpu.memory_space<vmem>>, vector<1x16x32xbf16>
    %97 = vector.shape_cast %96 : vector<1x16x32xbf16> to vector<16x32xbf16>
    %cst_73 = arith.constant dense<0.000000e+00> : vector<192x32xf32>
    %98 = tpu.matmul %95, %97, %cst_73 {dimension_numbers = #tpu.dot_dimension_numbers<[1], [0], [0], [1], [0, 0, 1, 1], [], []>} : vector<192x16xbf16>, vector<16x32xbf16>, vector<192x32xf32> -> vector<192x32xf32>
    %99 = arith.addf %93, %98 : vector<192x32xf32>
    %c26 = arith.constant 26 : index
    %c0_74 = arith.constant 0 : index
    %100 = vector.load %arg19[%c26, %c0_74] : memref<224x16xf32, #tpu.memory_space<vmem>>, vector<192x16xf32>
    %101 = arith.truncf %100 : vector<192x16xf32> to vector<192x16xbf16>
    %c7_75 = arith.constant 7 : index
    %c0_76 = arith.constant 0 : index
    %c0_77 = arith.constant 0 : index
    %102 = vector.load %arg11[%c7_75, %c0_76, %c0_77] : memref<18x16x32xbf16, #tpu.memory_space<vmem>>, vector<1x16x32xbf16>
    %103 = vector.shape_cast %102 : vector<1x16x32xbf16> to vector<16x32xbf16>
    %cst_78 = arith.constant dense<0.000000e+00> : vector<192x32xf32>
    %104 = tpu.matmul %101, %103, %cst_78 {dimension_numbers = #tpu.dot_dimension_numbers<[1], [0], [0], [1], [0, 0, 1, 1], [], []>} : vector<192x16xbf16>, vector<16x32xbf16>, vector<192x32xf32> -> vector<192x32xf32>
    %105 = arith.addf %99, %104 : vector<192x32xf32>
    %c27 = arith.constant 27 : index
    %c0_79 = arith.constant 0 : index
    %106 = vector.load %arg19[%c27, %c0_79] : memref<224x16xf32, #tpu.memory_space<vmem>>, vector<192x16xf32>
    %107 = arith.truncf %106 : vector<192x16xf32> to vector<192x16xbf16>
    %c8 = arith.constant 8 : index
    %c0_80 = arith.constant 0 : index
    %c0_81 = arith.constant 0 : index
    %108 = vector.load %arg11[%c8, %c0_80, %c0_81] : memref<18x16x32xbf16, #tpu.memory_space<vmem>>, vector<1x16x32xbf16>
    %109 = vector.shape_cast %108 : vector<1x16x32xbf16> to vector<16x32xbf16>
    %cst_82 = arith.constant dense<0.000000e+00> : vector<192x32xf32>
    %110 = tpu.matmul %107, %109, %cst_82 {dimension_numbers = #tpu.dot_dimension_numbers<[1], [0], [0], [1], [0, 0, 1, 1], [], []>} : vector<192x16xbf16>, vector<16x32xbf16>, vector<192x32xf32> -> vector<192x32xf32>
    %111 = arith.addf %105, %110 : vector<192x32xf32>
    %cst_83 = arith.constant 0.000000e+00 : f32
    %112 = vector.broadcast %cst_83 : f32 to vector<192x32xf32>
    %113 = arith.cmpf ogt, %111, %112 : vector<192x32xf32>
    %cst_84 = arith.constant 0.00999999977 : f32
    %114 = vector.broadcast %cst_84 : f32 to vector<192x32xf32>
    %115 = arith.mulf %114, %111 : vector<192x32xf32>
    %116 = arith.select %113, %111, %115 : vector<192x32xi1>, vector<192x32xf32>
    %117 = arith.addf %116, %39 : vector<192x32xf32>
    %c1_85 = arith.constant 1 : index
    %c0_86 = arith.constant 0 : index
    %c0_87 = arith.constant 0 : index
    %118 = vector.load %arg9[%c1_85, %c0_86, %c0_87] : memref<2x32x16xbf16, #tpu.memory_space<vmem>>, vector<1x32x16xbf16>
    %119 = vector.shape_cast %118 : vector<1x32x16xbf16> to vector<32x16xbf16>
    %c1_88 = arith.constant 1 : index
    %c0_89 = arith.constant 0 : index
    %c0_90 = arith.constant 0 : index
    %120 = vector.load %arg10[%c1_88, %c0_89, %c0_90] : memref<2x1x16xf32, #tpu.memory_space<vmem>>, vector<1x1x16xf32>
    %121 = vector.shape_cast %120 : vector<1x1x16xf32> to vector<1x16xf32>
    %122 = arith.truncf %117 : vector<192x32xf32> to vector<192x32xbf16>
    %cst_91 = arith.constant dense<0.000000e+00> : vector<192x16xf32>
    %123 = tpu.matmul %122, %119, %cst_91 {dimension_numbers = #tpu.dot_dimension_numbers<[1], [0], [0], [1], [0, 0, 1, 1], [], []>} : vector<192x32xbf16>, vector<32x16xbf16>, vector<192x16xf32> -> vector<192x16xf32>
    %124 = vector.broadcast %121 : vector<1x16xf32> to vector<192x16xf32>
    %125 = arith.addf %123, %124 : vector<192x16xf32>
    %cst_92 = arith.constant 0.000000e+00 : f32
    %126 = vector.broadcast %cst_92 : f32 to vector<192x16xf32>
    %127 = arith.cmpf ogt, %125, %126 : vector<192x16xf32>
    %cst_93 = arith.constant 0.00999999977 : f32
    %128 = vector.broadcast %cst_93 : f32 to vector<192x16xf32>
    %129 = arith.mulf %128, %125 : vector<192x16xf32>
    %130 = arith.select %127, %125, %129 : vector<192x16xi1>, vector<192x16xf32>
    %131 = arith.mulf %130, %6 : vector<192x16xf32>
    %c16_94 = arith.constant 16 : index
    %c0_95 = arith.constant 0 : index
    %132 = vector.load %arg19[%c16_94, %c0_95] : memref<224x16xf32, #tpu.memory_space<vmem>>, vector<192x16xf32>
    tpu.vector_store %arg19[%c16_94, %c0_95], %131 {strides = array<i32>} : memref<224x16xf32, #tpu.memory_space<vmem>>, vector<192x16xf32>,
    %c1_96 = arith.constant 1 : index
    %c0_97 = arith.constant 0 : index
    %c0_98 = arith.constant 0 : index
    %133 = vector.load %arg12[%c1_96, %c0_97, %c0_98] : memref<2x1x32xf32, #tpu.memory_space<vmem>>, vector<1x1x32xf32>
    %134 = vector.shape_cast %133 : vector<1x1x32xf32> to vector<1x32xf32>
    %c5_99 = arith.constant 5 : index
    %c0_100 = arith.constant 0 : index
    %135 = vector.load %arg19[%c5_99, %c0_100] : memref<224x16xf32, #tpu.memory_space<vmem>>, vector<192x16xf32>
    %136 = arith.truncf %135 : vector<192x16xf32> to vector<192x16xbf16>
    %c9 = arith.constant 9 : index
    %c0_101 = arith.constant 0 : index
    %c0_102 = arith.constant 0 : index
    %137 = vector.load %arg11[%c9, %c0_101, %c0_102] : memref<18x16x32xbf16, #tpu.memory_space<vmem>>, vector<1x16x32xbf16>
    %138 = vector.shape_cast %137 : vector<1x16x32xbf16> to vector<16x32xbf16>
    %cst_103 = arith.constant dense<0.000000e+00> : vector<192x32xf32>
    %139 = tpu.matmul %136, %138, %cst_103 {dimension_numbers = #tpu.dot_dimension_numbers<[1], [0], [0], [1], [0, 0, 1, 1], [], []>} : vector<192x16xbf16>, vector<16x32xbf16>, vector<192x32xf32> -> vector<192x32xf32>
    %140 = vector.broadcast %134 : vector<1x32xf32> to vector<192x32xf32>
    %141 = arith.addf %140, %139 : vector<192x32xf32>
    %c6_104 = arith.constant 6 : index
    %c0_105 = arith.constant 0 : index
    %142 = vector.load %arg19[%c6_104, %c0_105] : memref<224x16xf32, #tpu.memory_space<vmem>>, vector<192x16xf32>
    %143 = arith.truncf %142 : vector<192x16xf32> to vector<192x16xbf16>
    %c10 = arith.constant 10 : index
    %c0_106 = arith.constant 0 : index
    %c0_107 = arith.constant 0 : index
    %144 = vector.load %arg11[%c10, %c0_106, %c0_107] : memref<18x16x32xbf16, #tpu.memory_space<vmem>>, vector<1x16x32xbf16>
    %145 = vector.shape_cast %144 : vector<1x16x32xbf16> to vector<16x32xbf16>
    %cst_108 = arith.constant dense<0.000000e+00> : vector<192x32xf32>
    %146 = tpu.matmul %143, %145, %cst_108 {dimension_numbers = #tpu.dot_dimension_numbers<[1], [0], [0], [1], [0, 0, 1, 1], [], []>} : vector<192x16xbf16>, vector<16x32xbf16>, vector<192x32xf32> -> vector<192x32xf32>
    %147 = arith.addf %141, %146 : vector<192x32xf32>
    %c7_109 = arith.constant 7 : index
    %c0_110 = arith.constant 0 : index
    %148 = vector.load %arg19[%c7_109, %c0_110] : memref<224x16xf32, #tpu.memory_space<vmem>>, vector<192x16xf32>
    %149 = arith.truncf %148 : vector<192x16xf32> to vector<192x16xbf16>
    %c11 = arith.constant 11 : index
    %c0_111 = arith.constant 0 : index
    %c0_112 = arith.constant 0 : index
    %150 = vector.load %arg11[%c11, %c0_111, %c0_112] : memref<18x16x32xbf16, #tpu.memory_space<vmem>>, vector<1x16x32xbf16>
    %151 = vector.shape_cast %150 : vector<1x16x32xbf16> to vector<16x32xbf16>
    %cst_113 = arith.constant dense<0.000000e+00> : vector<192x32xf32>
    %152 = tpu.matmul %149, %151, %cst_113 {dimension_numbers = #tpu.dot_dimension_numbers<[1], [0], [0], [1], [0, 0, 1, 1], [], []>} : vector<192x16xbf16>, vector<16x32xbf16>, vector<192x32xf32> -> vector<192x32xf32>
    %153 = arith.addf %147, %152 : vector<192x32xf32>
    %c15_114 = arith.constant 15 : index
    %c0_115 = arith.constant 0 : index
    %154 = vector.load %arg19[%c15_114, %c0_115] : memref<224x16xf32, #tpu.memory_space<vmem>>, vector<192x16xf32>
    %155 = arith.truncf %154 : vector<192x16xf32> to vector<192x16xbf16>
    %c12 = arith.constant 12 : index
    %c0_116 = arith.constant 0 : index
    %c0_117 = arith.constant 0 : index
    %156 = vector.load %arg11[%c12, %c0_116, %c0_117] : memref<18x16x32xbf16, #tpu.memory_space<vmem>>, vector<1x16x32xbf16>
    %157 = vector.shape_cast %156 : vector<1x16x32xbf16> to vector<16x32xbf16>
    %cst_118 = arith.constant dense<0.000000e+00> : vector<192x32xf32>
    %158 = tpu.matmul %155, %157, %cst_118 {dimension_numbers = #tpu.dot_dimension_numbers<[1], [0], [0], [1], [0, 0, 1, 1], [], []>} : vector<192x16xbf16>, vector<16x32xbf16>, vector<192x32xf32> -> vector<192x32xf32>
    %159 = arith.addf %153, %158 : vector<192x32xf32>
    %c16_119 = arith.constant 16 : index
    %c0_120 = arith.constant 0 : index
    %160 = vector.load %arg19[%c16_119, %c0_120] : memref<224x16xf32, #tpu.memory_space<vmem>>, vector<192x16xf32>
    %161 = arith.truncf %160 : vector<192x16xf32> to vector<192x16xbf16>
    %c13 = arith.constant 13 : index
    %c0_121 = arith.constant 0 : index
    %c0_122 = arith.constant 0 : index
    %162 = vector.load %arg11[%c13, %c0_121, %c0_122] : memref<18x16x32xbf16, #tpu.memory_space<vmem>>, vector<1x16x32xbf16>
    %163 = vector.shape_cast %162 : vector<1x16x32xbf16> to vector<16x32xbf16>
    %cst_123 = arith.constant dense<0.000000e+00> : vector<192x32xf32>
    %164 = tpu.matmul %161, %163, %cst_123 {dimension_numbers = #tpu.dot_dimension_numbers<[1], [0], [0], [1], [0, 0, 1, 1], [], []>} : vector<192x16xbf16>, vector<16x32xbf16>, vector<192x32xf32> -> vector<192x32xf32>
    %165 = arith.addf %159, %164 : vector<192x32xf32>
    %c17_124 = arith.constant 17 : index
    %c0_125 = arith.constant 0 : index
    %166 = vector.load %arg19[%c17_124, %c0_125] : memref<224x16xf32, #tpu.memory_space<vmem>>, vector<192x16xf32>
    %167 = arith.truncf %166 : vector<192x16xf32> to vector<192x16xbf16>
    %c14 = arith.constant 14 : index
    %c0_126 = arith.constant 0 : index
    %c0_127 = arith.constant 0 : index
    %168 = vector.load %arg11[%c14, %c0_126, %c0_127] : memref<18x16x32xbf16, #tpu.memory_space<vmem>>, vector<1x16x32xbf16>
    %169 = vector.shape_cast %168 : vector<1x16x32xbf16> to vector<16x32xbf16>
    %cst_128 = arith.constant dense<0.000000e+00> : vector<192x32xf32>
    %170 = tpu.matmul %167, %169, %cst_128 {dimension_numbers = #tpu.dot_dimension_numbers<[1], [0], [0], [1], [0, 0, 1, 1], [], []>} : vector<192x16xbf16>, vector<16x32xbf16>, vector<192x32xf32> -> vector<192x32xf32>
    %171 = arith.addf %165, %170 : vector<192x32xf32>
    %c25_129 = arith.constant 25 : index
    %c0_130 = arith.constant 0 : index
    %172 = vector.load %arg19[%c25_129, %c0_130] : memref<224x16xf32, #tpu.memory_space<vmem>>, vector<192x16xf32>
    %173 = arith.truncf %172 : vector<192x16xf32> to vector<192x16xbf16>
    %c15_131 = arith.constant 15 : index
    %c0_132 = arith.constant 0 : index
    %c0_133 = arith.constant 0 : index
    %174 = vector.load %arg11[%c15_131, %c0_132, %c0_133] : memref<18x16x32xbf16, #tpu.memory_space<vmem>>, vector<1x16x32xbf16>
    %175 = vector.shape_cast %174 : vector<1x16x32xbf16> to vector<16x32xbf16>
    %cst_134 = arith.constant dense<0.000000e+00> : vector<192x32xf32>
    %176 = tpu.matmul %173, %175, %cst_134 {dimension_numbers = #tpu.dot_dimension_numbers<[1], [0], [0], [1], [0, 0, 1, 1], [], []>} : vector<192x16xbf16>, vector<16x32xbf16>, vector<192x32xf32> -> vector<192x32xf32>
    %177 = arith.addf %171, %176 : vector<192x32xf32>
    %c26_135 = arith.constant 26 : index
    %c0_136 = arith.constant 0 : index
    %178 = vector.load %arg19[%c26_135, %c0_136] : memref<224x16xf32, #tpu.memory_space<vmem>>, vector<192x16xf32>
    %179 = arith.truncf %178 : vector<192x16xf32> to vector<192x16xbf16>
    %c16_137 = arith.constant 16 : index
    %c0_138 = arith.constant 0 : index
    %c0_139 = arith.constant 0 : index
    %180 = vector.load %arg11[%c16_137, %c0_138, %c0_139] : memref<18x16x32xbf16, #tpu.memory_space<vmem>>, vector<1x16x32xbf16>
    %181 = vector.shape_cast %180 : vector<1x16x32xbf16> to vector<16x32xbf16>
    %cst_140 = arith.constant dense<0.000000e+00> : vector<192x32xf32>
    %182 = tpu.matmul %179, %181, %cst_140 {dimension_numbers = #tpu.dot_dimension_numbers<[1], [0], [0], [1], [0, 0, 1, 1], [], []>} : vector<192x16xbf16>, vector<16x32xbf16>, vector<192x32xf32> -> vector<192x32xf32>
    %183 = arith.addf %177, %182 : vector<192x32xf32>
    %c27_141 = arith.constant 27 : index
    %c0_142 = arith.constant 0 : index
    %184 = vector.load %arg19[%c27_141, %c0_142] : memref<224x16xf32, #tpu.memory_space<vmem>>, vector<192x16xf32>
    %185 = arith.truncf %184 : vector<192x16xf32> to vector<192x16xbf16>
    %c17_143 = arith.constant 17 : index
    %c0_144 = arith.constant 0 : index
    %c0_145 = arith.constant 0 : index
    %186 = vector.load %arg11[%c17_143, %c0_144, %c0_145] : memref<18x16x32xbf16, #tpu.memory_space<vmem>>, vector<1x16x32xbf16>
    %187 = vector.shape_cast %186 : vector<1x16x32xbf16> to vector<16x32xbf16>
    %cst_146 = arith.constant dense<0.000000e+00> : vector<192x32xf32>
    %188 = tpu.matmul %185, %187, %cst_146 {dimension_numbers = #tpu.dot_dimension_numbers<[1], [0], [0], [1], [0, 0, 1, 1], [], []>} : vector<192x16xbf16>, vector<16x32xbf16>, vector<192x32xf32> -> vector<192x32xf32>
    %189 = arith.addf %183, %188 : vector<192x32xf32>
    %cst_147 = arith.constant 0.000000e+00 : f32
    %190 = vector.broadcast %cst_147 : f32 to vector<192x32xf32>
    %191 = arith.cmpf ogt, %189, %190 : vector<192x32xf32>
    %cst_148 = arith.constant 0.00999999977 : f32
    %192 = vector.broadcast %cst_148 : f32 to vector<192x32xf32>
    %193 = arith.mulf %192, %189 : vector<192x32xf32>
    %194 = arith.select %191, %189, %193 : vector<192x32xi1>, vector<192x32xf32>
    %195 = arith.addf %194, %117 : vector<192x32xf32>
    %c0_149 = arith.constant 0 : index
    %c0_150 = arith.constant 0 : index
    %196 = vector.load %arg13[%c0_149, %c0_150] : memref<32x32xbf16, #tpu.memory_space<vmem>>, vector<32x32xbf16>
    %c0_151 = arith.constant 0 : index
    %c0_152 = arith.constant 0 : index
    %197 = vector.load %arg14[%c0_151, %c0_152] : memref<1x32xf32, #tpu.memory_space<vmem>>, vector<1x32xf32>
    %198 = arith.truncf %195 : vector<192x32xf32> to vector<192x32xbf16>
    %cst_153 = arith.constant dense<0.000000e+00> : vector<192x32xf32>
    %199 = tpu.matmul %198, %196, %cst_153 {dimension_numbers = #tpu.dot_dimension_numbers<[1], [0], [0], [1], [0, 0, 1, 1], [], []>} : vector<192x32xbf16>, vector<32x32xbf16>, vector<192x32xf32> -> vector<192x32xf32>
    %200 = vector.broadcast %197 : vector<1x32xf32> to vector<192x32xf32>
    %201 = arith.addf %199, %200 : vector<192x32xf32>
    %cst_154 = arith.constant 0.000000e+00 : f32
    %202 = vector.broadcast %cst_154 : f32 to vector<192x32xf32>
    %203 = arith.cmpf ogt, %201, %202 : vector<192x32xf32>
    %cst_155 = arith.constant 0.00999999977 : f32
    %204 = vector.broadcast %cst_155 : f32 to vector<192x32xf32>
    %205 = arith.mulf %204, %201 : vector<192x32xf32>
    %206 = arith.select %203, %201, %205 : vector<192x32xi1>, vector<192x32xf32>
    %c0_156 = arith.constant 0 : index
    %c0_157 = arith.constant 0 : index
    %207 = vector.load %arg15[%c0_156, %c0_157] : memref<32x32xf32, #tpu.memory_space<vmem>>, vector<32x32xf32>
    %cst_158 = arith.constant dense<0.000000e+00> : vector<192x32xf32>
    %208 = tpu.matmul %29, %207, %cst_158 {dimension_numbers = #tpu.dot_dimension_numbers<[1], [0], [0], [1], [0, 0, 1, 1], [], []>} : vector<192x32xf32>, vector<32x32xf32>, vector<192x32xf32> -> vector<192x32xf32>
    %c0_159 = arith.constant 0 : index
    %c0_160 = arith.constant 0 : index
    %209 = vector.load %arg16[%c0_159, %c0_160] : memref<32x32xf32, #tpu.memory_space<vmem>>, vector<32x32xf32>
    %cst_161 = arith.constant dense<0.000000e+00> : vector<192x32xf32>
    %210 = tpu.matmul %206, %209, %cst_161 {dimension_numbers = #tpu.dot_dimension_numbers<[1], [0], [0], [1], [0, 0, 1, 1], [], []>} : vector<192x32xf32>, vector<32x32xf32>, vector<192x32xf32> -> vector<192x32xf32>
    %211 = arith.addf %208, %210 : vector<192x32xf32>
    %c0_162 = arith.constant 0 : index
    %c0_163 = arith.constant 0 : index
    %212 = vector.load %arg17[%c0_162, %c0_163] : memref<1x32xf32, #tpu.memory_space<vmem>>, vector<1x32xf32>
    %213 = vector.broadcast %212 : vector<1x32xf32> to vector<192x32xf32>
    %214 = arith.addf %211, %213 : vector<192x32xf32>
    %cst_164 = arith.constant 0.000000e+00 : f32
    %215 = vector.broadcast %cst_164 : f32 to vector<192x32xf32>
    %216 = arith.cmpf ogt, %214, %215 : vector<192x32xf32>
    %cst_165 = arith.constant 0.00999999977 : f32
    %217 = vector.broadcast %cst_165 : f32 to vector<192x32xf32>
    %218 = arith.mulf %217, %214 : vector<192x32xf32>
    %219 = arith.select %216, %214, %218 : vector<192x32xi1>, vector<192x32xf32>
    %220 = vector.extract_strided_slice %219 {offsets = [0, 0], sizes = [48, 32], strides = [1, 1]} : vector<192x32xf32> to vector<48x32xf32>
    %221 = vector.extract_strided_slice %219 {offsets = [48, 0], sizes = [48, 32], strides = [1, 1]} : vector<192x32xf32> to vector<48x32xf32>
    %222 = vector.extract_strided_slice %219 {offsets = [96, 0], sizes = [48, 32], strides = [1, 1]} : vector<192x32xf32> to vector<48x32xf32>
    %223 = vector.extract_strided_slice %219 {offsets = [144, 0], sizes = [48, 32], strides = [1, 1]} : vector<192x32xf32> to vector<48x32xf32>
    %224 = tpu.concatenate %220, %221, %222, %223 in 1 : vector<48x32xf32>, vector<48x32xf32>, vector<48x32xf32>, vector<48x32xf32> -> vector<48x128xf32>
    %c0_166 = arith.constant 0 : index
    %c0_167 = arith.constant 0 : index
    %c0_168 = arith.constant 0 : index
    %225 = vector.load %arg18[%c0_166, %c0_167, %c0_168] : memref<1x48x128xf32, #tpu.memory_space<vmem>>, vector<1x48x128xf32>
    %226 = vector.shape_cast %225 : vector<1x48x128xf32> to vector<48x128xf32>
    %227 = vector.shape_cast %224 : vector<48x128xf32> to vector<1x48x128xf32>
    tpu.vector_store %arg18[%c0_166, %c0_167, %c0_168], %227 {strides = array<i32>} : memref<1x48x128xf32, #tpu.memory_space<vmem>>, vector<1x48x128xf32>,
    return
  }
  func.func @transform_0(%arg0: i32) -> (i32, i32, i32) {
    %c0_i32 = arith.constant 0 : i32
    %c0_i32_0 = arith.constant 0 : i32
    %c0_i32_1 = arith.constant 0 : i32
    return %arg0, %c0_i32, %c0_i32_0 : i32, i32, i32
  }
  func.func @transform_1(%arg0: i32) -> (i32, i32) {
    %c0_i32 = arith.constant 0 : i32
    %c0_i32_0 = arith.constant 0 : i32
    %c0_i32_1 = arith.constant 0 : i32
    return %c0_i32, %c0_i32_0 : i32, i32
  }
  func.func @transform_2(%arg0: i32) -> (i32, i32) {
    %c0_i32 = arith.constant 0 : i32
    %c0_i32_0 = arith.constant 0 : i32
    %c0_i32_1 = arith.constant 0 : i32
    return %c0_i32, %c0_i32_0 : i32, i32
  }
  func.func @transform_3(%arg0: i32) -> (i32, i32) {
    %c0_i32 = arith.constant 0 : i32
    %c0_i32_0 = arith.constant 0 : i32
    %c0_i32_1 = arith.constant 0 : i32
    return %c0_i32, %c0_i32_0 : i32, i32
  }
  func.func @transform_4(%arg0: i32) -> (i32, i32) {
    %c0_i32 = arith.constant 0 : i32
    %c0_i32_0 = arith.constant 0 : i32
    %c0_i32_1 = arith.constant 0 : i32
    return %c0_i32, %c0_i32_0 : i32, i32
  }
  func.func @transform_5(%arg0: i32) -> (i32, i32) {
    %c0_i32 = arith.constant 0 : i32
    %c0_i32_0 = arith.constant 0 : i32
    %c0_i32_1 = arith.constant 0 : i32
    return %c0_i32, %c0_i32_0 : i32, i32
  }
  func.func @transform_6(%arg0: i32) -> (i32, i32) {
    %c0_i32 = arith.constant 0 : i32
    %c0_i32_0 = arith.constant 0 : i32
    %c0_i32_1 = arith.constant 0 : i32
    return %c0_i32, %c0_i32_0 : i32, i32
  }
  func.func @transform_7(%arg0: i32) -> (i32, i32) {
    %c0_i32 = arith.constant 0 : i32
    %c0_i32_0 = arith.constant 0 : i32
    %c0_i32_1 = arith.constant 0 : i32
    return %c0_i32, %c0_i32_0 : i32, i32
  }
  func.func @transform_8(%arg0: i32) -> (i32, i32, i32) {
    %c0_i32 = arith.constant 0 : i32
    %c0_i32_0 = arith.constant 0 : i32
    %c0_i32_1 = arith.constant 0 : i32
    %c0_i32_2 = arith.constant 0 : i32
    return %c0_i32, %c0_i32_0, %c0_i32_1 : i32, i32, i32
  }
  func.func @transform_9(%arg0: i32) -> (i32, i32, i32) {
    %c0_i32 = arith.constant 0 : i32
    %c0_i32_0 = arith.constant 0 : i32
    %c0_i32_1 = arith.constant 0 : i32
    %c0_i32_2 = arith.constant 0 : i32
    return %c0_i32, %c0_i32_0, %c0_i32_1 : i32, i32, i32
  }
  func.func @transform_10(%arg0: i32) -> (i32, i32, i32) {
    %c0_i32 = arith.constant 0 : i32
    %c0_i32_0 = arith.constant 0 : i32
    %c0_i32_1 = arith.constant 0 : i32
    %c0_i32_2 = arith.constant 0 : i32
    return %c0_i32, %c0_i32_0, %c0_i32_1 : i32, i32, i32
  }
  func.func @transform_11(%arg0: i32) -> (i32, i32, i32) {
    %c0_i32 = arith.constant 0 : i32
    %c0_i32_0 = arith.constant 0 : i32
    %c0_i32_1 = arith.constant 0 : i32
    %c0_i32_2 = arith.constant 0 : i32
    return %c0_i32, %c0_i32_0, %c0_i32_1 : i32, i32, i32
  }
  func.func @transform_12(%arg0: i32) -> (i32, i32) {
    %c0_i32 = arith.constant 0 : i32
    %c0_i32_0 = arith.constant 0 : i32
    %c0_i32_1 = arith.constant 0 : i32
    return %c0_i32, %c0_i32_0 : i32, i32
  }
  func.func @transform_13(%arg0: i32) -> (i32, i32) {
    %c0_i32 = arith.constant 0 : i32
    %c0_i32_0 = arith.constant 0 : i32
    %c0_i32_1 = arith.constant 0 : i32
    return %c0_i32, %c0_i32_0 : i32, i32
  }
  func.func @transform_14(%arg0: i32) -> (i32, i32) {
    %c0_i32 = arith.constant 0 : i32
    %c0_i32_0 = arith.constant 0 : i32
    %c0_i32_1 = arith.constant 0 : i32
    return %c0_i32, %c0_i32_0 : i32, i32
  }
  func.func @transform_15(%arg0: i32) -> (i32, i32) {
    %c0_i32 = arith.constant 0 : i32
    %c0_i32_0 = arith.constant 0 : i32
    %c0_i32_1 = arith.constant 0 : i32
    return %c0_i32, %c0_i32_0 : i32, i32
  }
  func.func @transform_16(%arg0: i32) -> (i32, i32) {
    %c0_i32 = arith.constant 0 : i32
    %c0_i32_0 = arith.constant 0 : i32
    %c0_i32_1 = arith.constant 0 : i32
    return %c0_i32, %c0_i32_0 : i32, i32
  }
  func.func @transform_17(%arg0: i32) -> (i32, i32, i32) {
    %c0_i32 = arith.constant 0 : i32
    %c0_i32_0 = arith.constant 0 : i32
    %c0_i32_1 = arith.constant 0 : i32
    return %arg0, %c0_i32, %c0_i32_0 : i32, i32, i32
  }
}

</mosaic_0001>

<llo_original>
// kernel: cross_stage_forward.1
$region0: #{cross_stage_forward.1}
  #allocation0 [shape = 'u32[]', space=smem, size = 0x4, offset = 0x4, fixed_abs, tag = 'smem constant byte address 0x4 - core index']
  #allocation1 [shape = 'u32[144,128]{1,0:T(1,128)}', space=vmem, size = 0x12000, scoped, tag = 'internal scratch']
  #allocation2 [shape = 'f32[224,16]{1,0:T(8,128)}', space=vmem, size = 0x1c000, scoped, tag = 'scratch operand']
  %s0 = inlined_call_operand.vmem [shape: bf16[1,192,144], index: 0, kind: input, shape index: {}]
  %s1 = inlined_call_operand.vmem [shape: f32[192,1], index: 1, kind: input, shape index: {}]
  %s2 = inlined_call_operand.vmem [shape: bf16[144,16], index: 2, kind: input, shape index: {}]
  %s3 = inlined_call_operand.vmem [shape: f32[1,16], index: 3, kind: input, shape index: {}]
  %s4 = inlined_call_operand.vmem [shape: bf16[16,32], index: 4, kind: input, shape index: {}]
  %s5 = inlined_call_operand.vmem [shape: f32[1,32], index: 5, kind: input, shape index: {}]
  %s6 = inlined_call_operand.vmem [shape: bf16[16,32], index: 6, kind: input, shape index: {}]
  %s7 = inlined_call_operand.vmem [shape: f32[1,32], index: 7, kind: input, shape index: {}]
  %s8 = inlined_call_operand.vmem [shape: bf16[2,32,16], index: 8, kind: input, shape index: {}]
  %s9 = inlined_call_operand.vmem [shape: f32[2,1,16], index: 9, kind: input, shape index: {}]
  %s10 = inlined_call_operand.vmem [shape: bf16[18,16,32], index: 10, kind: input, shape index: {}]
  %s11 = inlined_call_operand.vmem [shape: f32[2,1,32], index: 11, kind: input, shape index: {}]
  %s12 = inlined_call_operand.vmem [shape: bf16[32,32], index: 12, kind: input, shape index: {}]
  %s13 = inlined_call_operand.vmem [shape: f32[1,32], index: 13, kind: input, shape index: {}]
  %s14 = inlined_call_operand.vmem [shape: f32[32,32], index: 14, kind: input, shape index: {}]
  %s15 = inlined_call_operand.vmem [shape: f32[32,32], index: 15, kind: input, shape index: {}]
  %s16 = inlined_call_operand.vmem [shape: f32[1,32], index: 16, kind: input, shape index: {}]
  %s17 = inlined_call_operand.vmem [shape: f32[1,48,128], index: 17, kind: output, shape index: {}]
  %s18 = sld [smem:[#allocation0]]
  $region78: #{cross_stage_forward.1} parent=0
    _
  %s20 = ssub.s32 1, %s18
  %s21 = scalar_select 0, %s20, %s18
  // Predicated region
  $region2: #{cross_stage_forward.1} parent=0 // pred_check
    _
  $region3: #{cross_stage_forward.1} parent=0 // pred_check_branch
    %23 = sbr.rel (0) target = $region5
  $region4: #{cross_stage_forward.1} parent=0 // pred_region
    _
  $region5: #{cross_stage_forward.1} parent=0 // pred_fallthru
    _
  // Predicated region
  $region6: #{cross_stage_forward.1} parent=0 // pred_check
    _
  $region7: #{cross_stage_forward.1} parent=0 // pred_check_branch
    %25 = sbr.rel (0) target = $region9
  $region8: #{cross_stage_forward.1} parent=0 // pred_region
    _
  $region9: #{cross_stage_forward.1} parent=0 // pred_fallthru
    _
  // Predicated region
  $region10: #{cross_stage_forward.1} parent=0 // pred_check
    _
  $region11: #{cross_stage_forward.1} parent=0 // pred_check_branch
    %27 = sbr.rel (0) target = $region13
  $region12: #{cross_stage_forward.1} parent=0 // pred_region
    _
  $region13: #{cross_stage_forward.1} parent=0 // pred_fallthru
    _
  // Predicated region
  $region14: #{cross_stage_forward.1} parent=0 // pred_check
    _
  $region15: #{cross_stage_forward.1} parent=0 // pred_check_branch
    %29 = sbr.rel (0) target = $region17
  $region16: #{cross_stage_forward.1} parent=0 // pred_region
    _
  $region17: #{cross_stage_forward.1} parent=0 // pred_fallthru
    _
  // Predicated region
  $region18: #{cross_stage_forward.1} parent=0 // pred_check
    _
  $region19: #{cross_stage_forward.1} parent=0 // pred_check_branch
    %31 = sbr.rel (0) target = $region21
  $region20: #{cross_stage_forward.1} parent=0 // pred_region
    _
  $region21: #{cross_stage_forward.1} parent=0 // pred_fallthru
    _
  // Predicated region
  $region22: #{cross_stage_forward.1} parent=0 // pred_check
    _
  $region23: #{cross_stage_forward.1} parent=0 // pred_check_branch
    %33 = sbr.rel (0) target = $region25
  $region24: #{cross_stage_forward.1} parent=0 // pred_region
    _
  $region25: #{cross_stage_forward.1} parent=0 // pred_fallthru
    _
  // Predicated region
  $region26: #{cross_stage_forward.1} parent=0 // pred_check
    _
  $region27: #{cross_stage_forward.1} parent=0 // pred_check_branch
    %35 = sbr.rel (0) target = $region29
  $region28: #{cross_stage_forward.1} parent=0 // pred_region
    _
  $region29: #{cross_stage_forward.1} parent=0 // pred_fallthru
    _
  // Predicated region
  $region30: #{cross_stage_forward.1} parent=0 // pred_check
    _
  $region31: #{cross_stage_forward.1} parent=0 // pred_check_branch
    %37 = sbr.rel (0) target = $region33
  $region32: #{cross_stage_forward.1} parent=0 // pred_region
    _
  $region33: #{cross_stage_forward.1} parent=0 // pred_fallthru
    _
  // Predicated region
  $region34: #{cross_stage_forward.1} parent=0 // pred_check
    _
  $region35: #{cross_stage_forward.1} parent=0 // pred_check_branch
    %39 = sbr.rel (0) target = $region37
  $region36: #{cross_stage_forward.1} parent=0 // pred_region
    _
  $region37: #{cross_stage_forward.1} parent=0 // pred_fallthru
    _
  // Predicated region
  $region38: #{cross_stage_forward.1} parent=0 // pred_check
    _
  $region39: #{cross_stage_forward.1} parent=0 // pred_check_branch
    %41 = sbr.rel (0) target = $region41
  $region40: #{cross_stage_forward.1} parent=0 // pred_region
    _
  $region41: #{cross_stage_forward.1} parent=0 // pred_fallthru
    _
  // Predicated region
  $region42: #{cross_stage_forward.1} parent=0 // pred_check
    _
  $region43: #{cross_stage_forward.1} parent=0 // pred_check_branch
    %43 = sbr.rel (0) target = $region45
  $region44: #{cross_stage_forward.1} parent=0 // pred_region
    _
  $region45: #{cross_stage_forward.1} parent=0 // pred_fallthru
    _
  // Predicated region
  $region46: #{cross_stage_forward.1} parent=0 // pred_check
    _
  $region47: #{cross_stage_forward.1} parent=0 // pred_check_branch
    %45 = sbr.rel (0) target = $region49
  $region48: #{cross_stage_forward.1} parent=0 // pred_region
    _
  $region49: #{cross_stage_forward.1} parent=0 // pred_fallthru
    _
  // Predicated region
  $region50: #{cross_stage_forward.1} parent=0 // pred_check
    _
  $region51: #{cross_stage_forward.1} parent=0 // pred_check_branch
    %47 = sbr.rel (0) target = $region53
  $region52: #{cross_stage_forward.1} parent=0 // pred_region
    _
  $region53: #{cross_stage_forward.1} parent=0 // pred_fallthru
    _
  // Predicated region
  $region54: #{cross_stage_forward.1} parent=0 // pred_check
    _
  $region55: #{cross_stage_forward.1} parent=0 // pred_check_branch
    %49 = sbr.rel (0) target = $region57
  $region56: #{cross_stage_forward.1} parent=0 // pred_region
    _
  $region57: #{cross_stage_forward.1} parent=0 // pred_fallthru
    _
  // Predicated region
  $region58: #{cross_stage_forward.1} parent=0 // pred_check
    _
  $region59: #{cross_stage_forward.1} parent=0 // pred_check_branch
    %51 = sbr.rel (0) target = $region61
  $region60: #{cross_stage_forward.1} parent=0 // pred_region
    _
  $region61: #{cross_stage_forward.1} parent=0 // pred_fallthru
    _
  // Predicated region
  $region62: #{cross_stage_forward.1} parent=0 // pred_check
    _
  $region63: #{cross_stage_forward.1} parent=0 // pred_check_branch
    %53 = sbr.rel (0) target = $region65
  $region64: #{cross_stage_forward.1} parent=0 // pred_region
    _
  $region65: #{cross_stage_forward.1} parent=0 // pred_fallthru
    _
  // Predicated region
  $region66: #{cross_stage_forward.1} parent=0 // pred_check
    _
  $region67: #{cross_stage_forward.1} parent=0 // pred_check_branch
    %55 = sbr.rel (0) target = $region69
  $region68: #{cross_stage_forward.1} parent=0 // pred_region
    _
  $region69: #{cross_stage_forward.1} parent=0 // pred_fallthru
    _
  %vm57 = vcmask 130048
  %58 = vst.msk [vmem:[#allocation2] sm:$0xff] %vm57, 0.0
  %59 = vst.msk [vmem:[#allocation2 + $0x8] sm:$0xff] %vm57, 0.0
  %60 = vst.msk [vmem:[#allocation2 + $0xd0] sm:$0xff] %vm57, 0.0
  %61 = vst.msk [vmem:[#allocation2 + $0xd8] sm:$0xff] %vm57, 0.0
  %v62 = vld [vmem:[%s1] sm:$0xff]
  %v63 = vld [vmem:[%s1 + $0x8] sm:$0xff]
  %v64 = vld [vmem:[%s1 + $0x10] sm:$0xff]
  %v65 = vld [vmem:[%s1 + $0x18] sm:$0xff]
  %v66 = vld [vmem:[%s1 + $0x20] sm:$0xff]
  %v67 = vld [vmem:[%s1 + $0x28] sm:$0xff]
  %v68 = vld [vmem:[%s1 + $0x30] sm:$0xff]
  %v69 = vld [vmem:[%s1 + $0x38] sm:$0xff]
  %v70 = vld [vmem:[%s1 + $0x40] sm:$0xff]
  %v71 = vld [vmem:[%s1 + $0x48] sm:$0xff]
  %v72 = vld [vmem:[%s1 + $0x50] sm:$0xff]
  %v73 = vld [vmem:[%s1 + $0x58] sm:$0xff]
  %v74 = vld [vmem:[%s1 + $0x60] sm:$0xff]
  %v75 = vld [vmem:[%s1 + $0x68] sm:$0xff]
  %v76 = vld [vmem:[%s1 + $0x70] sm:$0xff]
  %v77 = vld [vmem:[%s1 + $0x78] sm:$0xff]
  %v78 = vld [vmem:[%s1 + $0x80] sm:$0xff]
  %v79 = vld [vmem:[%s1 + $0x88] sm:$0xff]
  %v80 = vld [vmem:[%s1 + $0x90] sm:$0xff]
  %v81 = vld [vmem:[%s1 + $0x98] sm:$0xff]
  %v82 = vld [vmem:[%s1 + $0xa0] sm:$0xff]
  %v83 = vld [vmem:[%s1 + $0xa8] sm:$0xff]
  %v84 = vld [vmem:[%s1 + $0xb0] sm:$0xff]
  %v85 = vld [vmem:[%s1 + $0xb8] sm:$0xff]
  %87 = vset.pattern.permute.xlu0 0
  %88 = vperm.xlu0 %87, %v62
  %v89 = vpop.permute.xlu0 %88
  %92 = vset.pattern.permute.xlu0 0
  %93 = vperm.xlu0 %92, %v63
  %v94 = vpop.permute.xlu0 %93
  %97 = vset.pattern.permute.xlu0 0
  %98 = vperm.xlu0 %97, %v64
  %v99 = vpop.permute.xlu0 %98
  %102 = vset.pattern.permute.xlu0 0
  %103 = vperm.xlu0 %102, %v65
  %v104 = vpop.permute.xlu0 %103
  %107 = vset.pattern.permute.xlu0 0
  %108 = vperm.xlu0 %107, %v66
  %v109 = vpop.permute.xlu0 %108
  %112 = vset.pattern.permute.xlu0 0
  %113 = vperm.xlu0 %112, %v67
  %v114 = vpop.permute.xlu0 %113
  %117 = vset.pattern.permute.xlu0 0
  %118 = vperm.xlu0 %117, %v68
  %v119 = vpop.permute.xlu0 %118
  %122 = vset.pattern.permute.xlu0 0
  %123 = vperm.xlu0 %122, %v69
  %v124 = vpop.permute.xlu0 %123
  %127 = vset.pattern.permute.xlu0 0
  %128 = vperm.xlu0 %127, %v70
  %v129 = vpop.permute.xlu0 %128
  %132 = vset.pattern.permute.xlu0 0
  %133 = vperm.xlu0 %132, %v71
  %v134 = vpop.permute.xlu0 %133
  %137 = vset.pattern.permute.xlu0 0
  %138 = vperm.xlu0 %137, %v72
  %v139 = vpop.permute.xlu0 %138
  %142 = vset.pattern.permute.xlu0 0
  %143 = vperm.xlu0 %142, %v73
  %v144 = vpop.permute.xlu0 %143
  %147 = vset.pattern.permute.xlu0 0
  %148 = vperm.xlu0 %147, %v74
  %v149 = vpop.permute.xlu0 %148
  %152 = vset.pattern.permute.xlu0 0
  %153 = vperm.xlu0 %152, %v75
  %v154 = vpop.permute.xlu0 %153
  %157 = vset.pattern.permute.xlu0 0
  %158 = vperm.xlu0 %157, %v76
  %v159 = vpop.permute.xlu0 %158
  %162 = vset.pattern.permute.xlu0 0
  %163 = vperm.xlu0 %162, %v77
  %v164 = vpop.permute.xlu0 %163
  %167 = vset.pattern.permute.xlu0 0
  %168 = vperm.xlu0 %167, %v78
  %v169 = vpop.permute.xlu0 %168
  %172 = vset.pattern.permute.xlu0 0
  %173 = vperm.xlu0 %172, %v79
  %v174 = vpop.permute.xlu0 %173
  %177 = vset.pattern.permute.xlu0 0
  %178 = vperm.xlu0 %177, %v80
  %v179 = vpop.permute.xlu0 %178
  %182 = vset.pattern.permute.xlu0 0
  %183 = vperm.xlu0 %182, %v81
  %v184 = vpop.permute.xlu0 %183
  %187 = vset.pattern.permute.xlu0 0
  %188 = vperm.xlu0 %187, %v82
  %v189 = vpop.permute.xlu0 %188
  %192 = vset.pattern.permute.xlu0 0
  %193 = vperm.xlu0 %192, %v83
  %v194 = vpop.permute.xlu0 %193
  %197 = vset.pattern.permute.xlu0 0
  %198 = vperm.xlu0 %197, %v84
  %v199 = vpop.permute.xlu0 %198
  %202 = vset.pattern.permute.xlu0 0
  %203 = vperm.xlu0 %202, %v85
  %v204 = vpop.permute.xlu0 %203
  %v206 = vld [vmem:[%s0] sm:$0xff]
  %v207 = vld [vmem:[%s0 + $0x8] sm:$0xff]
  %v208 = vld [vmem:[%s0 + $0x10] sm:$0xff]
  %v209 = vld [vmem:[%s0 + $0x18] sm:$0xff]
  %v210 = vld [vmem:[%s0 + $0x20] sm:$0xff]
  %v211 = vld [vmem:[%s0 + $0x28] sm:$0xff]
  %v212 = vld [vmem:[%s0 + $0x30] sm:$0xff]
  %v213 = vld [vmem:[%s0 + $0x38] sm:$0xff]
  %v214 = vld [vmem:[%s0 + $0x40] sm:$0xff]
  %v215 = vld [vmem:[%s0 + $0x48] sm:$0xff]
  %v216 = vld [vmem:[%s0 + $0x50] sm:$0xff]
  %v217 = vld [vmem:[%s0 + $0x58] sm:$0xff]
  %v218 = vld [vmem:[%s0 + $0x60] sm:$0xff]
  %v219 = vld [vmem:[%s0 + $0x68] sm:$0xff]
  %v220 = vld [vmem:[%s0 + $0x70] sm:$0xff]
  %v221 = vld [vmem:[%s0 + $0x78] sm:$0xff]
  %v222 = vld [vmem:[%s0 + $0x80] sm:$0xff]
  %v223 = vld [vmem:[%s0 + $0x88] sm:$0xff]
  %v224 = vld [vmem:[%s0 + $0x90] sm:$0xff]
  %v225 = vld [vmem:[%s0 + $0x98] sm:$0xff]
  %v226 = vld [vmem:[%s0 + $0xa0] sm:$0xff]
  %v227 = vld [vmem:[%s0 + $0xa8] sm:$0xff]
  %v228 = vld [vmem:[%s0 + $0xb0] sm:$0xff]
  %v229 = vld [vmem:[%s0 + $0xb8] sm:$0xff]
  %v230 = vld [vmem:[%s2] sm:$0xf]
  %v231 = vld [vmem:[%s2 + $0x4] sm:$0xf]
  %v232 = vld [vmem:[%s2 + $0x8] sm:$0xf]
  %v233 = vld [vmem:[%s2 + $0xc] sm:$0xf]
  %v234 = vld [vmem:[%s2 + $0x10] sm:$0xf]
  %v235 = vld [vmem:[%s2 + $0x14] sm:$0xf]
  %v236 = vld [vmem:[%s2 + $0x18] sm:$0xf]
  %v237 = vld [vmem:[%s2 + $0x1c] sm:$0xf]
  %v238 = vld [vmem:[%s2 + $0x20] sm:$0xf]
  %v239 = vld [vmem:[%s2 + $0x24] sm:$0xf]
  %v240 = vld [vmem:[%s2 + $0x28] sm:$0xf]
  %v241 = vld [vmem:[%s2 + $0x2c] sm:$0xf]
  %v242 = vld [vmem:[%s2 + $0x30] sm:$0xf]
  %v243 = vld [vmem:[%s2 + $0x34] sm:$0xf]
  %v244 = vld [vmem:[%s2 + $0x38] sm:$0xf]
  %v245 = vld [vmem:[%s2 + $0x3c] sm:$0xf]
  %v246 = vld [vmem:[%s2 + $0x40] sm:$0xf]
  %v247 = vld [vmem:[%s2 + $0x44] sm:$0xf]
  %v248 = vld [vmem:[%s3] sm:$0x1]
  %v250 = vlaneseq
  %v251 = vshrl.u32 %v250, 7
  %v252 = vsub.s32 0, %v251
  %v253 = vrot.slane %v248, %v252
  %v279 = vunpack.c.l.b16 %v206
  %v280 = vunpack.c.h.b16 %v206
  %v281 = vunpack.c.l.b16 %v207
  %v282 = vunpack.c.h.b16 %v207
  %v283 = vunpack.c.l.b16 %v208
  %v284 = vunpack.c.h.b16 %v208
  %v285 = vunpack.c.l.b16 %v209
  %v286 = vunpack.c.h.b16 %v209
  %v287 = vunpack.c.l.b16 %v210
  %v288 = vunpack.c.h.b16 %v210
  %v289 = vunpack.c.l.b16 %v211
  %v290 = vunpack.c.h.b16 %v211
  %v291 = vunpack.c.l.b16 %v212
  %v292 = vunpack.c.h.b16 %v212
  %v293 = vunpack.c.l.b16 %v213
  %v294 = vunpack.c.h.b16 %v213
  %v295 = vunpack.c.l.b16 %v214
  %v296 = vunpack.c.h.b16 %v214
  %v297 = vunpack.c.l.b16 %v215
  %v298 = vunpack.c.h.b16 %v215
  %v299 = vunpack.c.l.b16 %v216
  %v300 = vunpack.c.h.b16 %v216
  %v301 = vunpack.c.l.b16 %v217
  %v302 = vunpack.c.h.b16 %v217
  %v303 = vunpack.c.l.b16 %v218
  %v304 = vunpack.c.h.b16 %v218
  %v305 = vunpack.c.l.b16 %v219
  %v306 = vunpack.c.h.b16 %v219
  %v307 = vunpack.c.l.b16 %v220
  %v308 = vunpack.c.h.b16 %v220
  %v309 = vunpack.c.l.b16 %v221
  %v310 = vunpack.c.h.b16 %v221
  %v311 = vunpack.c.l.b16 %v222
  %v312 = vunpack.c.h.b16 %v222
  %v313 = vunpack.c.l.b16 %v223
  %v314 = vunpack.c.h.b16 %v223
  %v315 = vunpack.c.l.b16 %v224
  %v316 = vunpack.c.h.b16 %v224
  %v317 = vunpack.c.l.b16 %v225
  %v318 = vunpack.c.h.b16 %v225
  %v319 = vunpack.c.l.b16 %v226
  %v320 = vunpack.c.h.b16 %v226
  %v321 = vunpack.c.l.b16 %v227
  %v322 = vunpack.c.h.b16 %v227
  %v323 = vunpack.c.l.b16 %v228
  %v324 = vunpack.c.h.b16 %v228
  %v325 = vunpack.c.l.b16 %v229
  %v326 = vunpack.c.h.b16 %v229
  %v327 = vpack.c.b16 %v281, %v279
  %v328 = vpack.c.b16 %v282, %v280
  %v329 = vpack.c.b16 %v285, %v283
  %v330 = vpack.c.b16 %v286, %v284
  %v331 = vpack.c.b16 %v289, %v287
  %v332 = vpack.c.b16 %v290, %v288
  %v333 = vpack.c.b16 %v293, %v291
  %v334 = vpack.c.b16 %v294, %v292
  %v335 = vpack.c.b16 %v297, %v295
  %v336 = vpack.c.b16 %v298, %v296
  %v337 = vpack.c.b16 %v301, %v299
  %v338 = vpack.c.b16 %v302, %v300
  %v339 = vpack.c.b16 %v305, %v303
  %v340 = vpack.c.b16 %v306, %v304
  %v341 = vpack.c.b16 %v309, %v307
  %v342 = vpack.c.b16 %v310, %v308
  %v343 = vpack.c.b16 %v313, %v311
  %v344 = vpack.c.b16 %v314, %v312
  %v345 = vpack.c.b16 %v317, %v315
  %v346 = vpack.c.b16 %v318, %v316
  %v347 = vpack.c.b16 %v321, %v319
  %v348 = vpack.c.b16 %v322, %v320
  %v349 = vpack.c.b16 %v325, %v323
  %v350 = vpack.c.b16 %v326, %v324
  %v381 = vunpack.c.l.b16 %v230
  %v382 = vunpack.c.l.b16 %v231
  %v383 = vunpack.c.l.b16 %v232
  %v384 = vunpack.c.l.b16 %v233
  %v385 = vunpack.c.l.b16 %v234
  %v386 = vunpack.c.l.b16 %v235
  %v387 = vunpack.c.l.b16 %v236
  %v388 = vunpack.c.l.b16 %v237
  %v389 = vunpack.c.l.b16 %v238
  %v390 = vunpack.c.l.b16 %v239
  %v391 = vunpack.c.l.b16 %v240
  %v392 = vunpack.c.l.b16 %v241
  %v393 = vunpack.c.l.b16 %v242
  %v394 = vunpack.c.l.b16 %v243
  %v395 = vunpack.c.l.b16 %v244
  %v396 = vunpack.c.l.b16 %v245
  %v397 = vunpack.c.l.b16 %v246
  %v398 = vunpack.c.l.b16 %v247
  %v399 = vpack.c.b16 %v382, %v381
  %v400 = vpack.c.b16 %v384, %v383
  %v401 = vpack.c.b16 %v386, %v385
  %v402 = vpack.c.b16 %v388, %v387
  %v403 = vpack.c.b16 %v390, %v389
  %v404 = vpack.c.b16 %v392, %v391
  %v405 = vpack.c.b16 %v394, %v393
  %v406 = vpack.c.b16 %v396, %v395
  %v407 = vpack.c.b16 %v398, %v397
  %v418 = vsel %vm57, %v328, 0
  %v421 = vsel %vm57, %v330, 0
  %v424 = vsel %vm57, %v332, 0
  %v427 = vsel %vm57, %v334, 0
  %v430 = vsel %vm57, %v336, 0
  %v433 = vsel %vm57, %v338, 0
  %v436 = vsel %vm57, %v340, 0
  %v439 = vsel %vm57, %v342, 0
  %v442 = vsel %vm57, %v344, 0
  %v445 = vsel %vm57, %v346, 0
  %v448 = vsel %vm57, %v348, 0
  %v451 = vsel %vm57, %v350, 0
  %453 = vmatprep.subr.bf16.mxu0 0
  %454 = vmatpush1.bf16.msra.mxu0 %v399
  %455 = vmatprep.subr.bf16.mxu0 0
  %456 = vmatpush1.bf16.msra.mxu0 %v400
  %457 = vmatprep.subr.bf16.mxu0 0
  %458 = vmatpush1.bf16.msra.mxu0 %v401
  %459 = vmatprep.subr.bf16.mxu0 0
  %460 = vmatpush1.bf16.msra.mxu0 %v402
  %461 = vmatprep.subr.bf16.mxu0 0
  %462 = vmatpush1.bf16.msra.mxu0 %v403
  %463 = vmatprep.subr.bf16.mxu0 0
  %464 = vmatpush1.bf16.msra.mxu0 %v404
  %465 = vmatprep.subr.bf16.mxu0 0
  %466 = vmatpush1.bf16.msra.mxu0 %v405
  %467 = vmatprep.subr.bf16.mxu0 0
  %468 = vmatpush1.bf16.msra.mxu0 %v406
  %469 = vmatprep.subr.bf16.mxu0 0
  %470 = vmatpush1.bf16.msra.mxu0 %v407
  %471 = vmatprep.subr.bf16.mxu0 0
  %472 = vmatpush1.bf16.msra.mxu0 0
  %473 = vmatprep.subr.bf16.mxu0 0
  %474 = vmatpush1.bf16.msra.mxu0 0
  %475 = vmatprep.subr.bf16.mxu0 0
  %476 = vmatpush1.bf16.msra.mxu0 0
  %477 = vmatprep.subr.bf16.mxu0 0
  %478 = vmatpush1.bf16.msra.mxu0 0
  %479 = vmatprep.subr.bf16.mxu0 0
  %480 = vmatpush1.bf16.msra.mxu0 0
  %481 = vmatprep.subr.bf16.mxu0 0
  %482 = vmatpush1.bf16.msra.mxu0 0
  %483 = vmatprep.subr.bf16.mxu0 0
  %484 = vmatpush1.bf16.msra.mxu0 0
  %485 = vmatprep.mubr.bf16.mxu0 %v418
  %486 = vmatmul.mubr.bf16.gmra.mrb[0].mxu0 %v327
  %v487 = vpop.f32.mrb[0].mxu0
  %v488 = vadd.f32 %v253, %v487
  %v489 = vpop.f32.mrb[0].mxu0
  %v490 = vpop.f32.mrb[0].mxu0
  %v491 = vadd.f32 %v253, %v490
  %v492 = vpop.f32.mrb[0].mxu0
  %493 = vmatprep.mubr.bf16.mxu0 %v421
  %494 = vmatmul.mubr.bf16.gmra.mrb[0].mxu0 %v329
  %v495 = vpop.f32.mrb[0].mxu0
  %v496 = vadd.f32 %v253, %v495
  %v497 = vpop.f32.mrb[0].mxu0
  %v498 = vpop.f32.mrb[0].mxu0
  %v499 = vadd.f32 %v253, %v498
  %v500 = vpop.f32.mrb[0].mxu0
  %501 = vmatprep.mubr.bf16.mxu0 %v424
  %502 = vmatmul.mubr.bf16.gmra.mrb[0].mxu0 %v331
  %v503 = vpop.f32.mrb[0].mxu0
  %v504 = vadd.f32 %v253, %v503
  %v505 = vpop.f32.mrb[0].mxu0
  %v506 = vpop.f32.mrb[0].mxu0
  %v507 = vadd.f32 %v253, %v506
  %v508 = vpop.f32.mrb[0].mxu0
  %509 = vmatprep.mubr.bf16.mxu0 %v427
  %510 = vmatmul.mubr.bf16.gmra.mrb[0].mxu0 %v333
  %v511 = vpop.f32.mrb[0].mxu0
  %v512 = vadd.f32 %v253, %v511
  %v513 = vpop.f32.mrb[0].mxu0
  %v514 = vpop.f32.mrb[0].mxu0
  %v515 = vadd.f32 %v253, %v514
  %v516 = vpop.f32.mrb[0].mxu0
  %517 = vmatprep.mubr.bf16.mxu0 %v430
  %518 = vmatmul.mubr.bf16.gmra.mrb[0].mxu0 %v335
  %v519 = vpop.f32.mrb[0].mxu0
  %v520 = vadd.f32 %v253, %v519
  %v521 = vpop.f32.mrb[0].mxu0
  %v522 = vpop.f32.mrb[0].mxu0
  %v523 = vadd.f32 %v253, %v522
  %v524 = vpop.f32.mrb[0].mxu0
  %525 = vmatprep.mubr.bf16.mxu0 %v433
  %526 = vmatmul.mubr.bf16.gmra.mrb[0].mxu0 %v337
  %v527 = vpop.f32.mrb[0].mxu0
  %v528 = vadd.f32 %v253, %v527
  %v529 = vpop.f32.mrb[0].mxu0
  %v530 = vpop.f32.mrb[0].mxu0
  %v531 = vadd.f32 %v253, %v530
  %v532 = vpop.f32.mrb[0].mxu0
  %533 = vmatprep.mubr.bf16.mxu0 %v436
  %534 = vmatmul.mubr.bf16.gmra.mrb[0].mxu0 %v339
  %v535 = vpop.f32.mrb[0].mxu0
  %v536 = vadd.f32 %v253, %v535
  %v537 = vpop.f32.mrb[0].mxu0
  %v538 = vpop.f32.mrb[0].mxu0
  %v539 = vadd.f32 %v253, %v538
  %v540 = vpop.f32.mrb[0].mxu0
  %541 = vmatprep.mubr.bf16.mxu0 %v439
  %542 = vmatmul.mubr.bf16.gmra.mrb[0].mxu0 %v341
  %v543 = vpop.f32.mrb[0].mxu0
  %v544 = vadd.f32 %v253, %v543
  %v545 = vpop.f32.mrb[0].mxu0
  %v546 = vpop.f32.mrb[0].mxu0
  %v547 = vadd.f32 %v253, %v546
  %v548 = vpop.f32.mrb[0].mxu0
  %549 = vmatprep.mubr.bf16.mxu0 %v442
  %550 = vmatmul.mubr.bf16.gmra.mrb[0].mxu0 %v343
  %v551 = vpop.f32.mrb[0].mxu0
  %v552 = vadd.f32 %v253, %v551
  %v553 = vpop.f32.mrb[0].mxu0
  %v554 = vpop.f32.mrb[0].mxu0
  %v555 = vadd.f32 %v253, %v554
  %v556 = vpop.f32.mrb[0].mxu0
  %557 = vmatprep.mubr.bf16.mxu0 %v445
  %558 = vmatmul.mubr.bf16.gmra.mrb[0].mxu0 %v345
  %v559 = vpop.f32.mrb[0].mxu0
  %v560 = vadd.f32 %v253, %v559
  %v561 = vpop.f32.mrb[0].mxu0
  %v562 = vpop.f32.mrb[0].mxu0
  %v563 = vadd.f32 %v253, %v562
  %v564 = vpop.f32.mrb[0].mxu0
  %565 = vmatprep.mubr.bf16.mxu0 %v448
  %566 = vmatmul.mubr.bf16.gmra.mrb[0].mxu0 %v347
  %v567 = vpop.f32.mrb[0].mxu0
  %v568 = vadd.f32 %v253, %v567
  %v569 = vpop.f32.mrb[0].mxu0
  %v570 = vpop.f32.mrb[0].mxu0
  %v571 = vadd.f32 %v253, %v570
  %v572 = vpop.f32.mrb[0].mxu0
  %573 = vmatprep.mubr.bf16.mxu0 %v451
  %574 = vmatmul.mubr.bf16.gmra.mrb[0].mxu0 %v349
  %v575 = vpop.f32.mrb[0].mxu0
  %v576 = vadd.f32 %v253, %v575
  %v577 = vpop.f32.mrb[0].mxu0
  %v578 = vpop.f32.mrb[0].mxu0
  %v579 = vadd.f32 %v253, %v578
  %v580 = vpop.f32.mrb[0].mxu0
  %581 = vdwg.mxu0
  %vm582 = vcmp.gt.f32.partialorder %v488, 0.0
  %vm583 = vcmp.gt.f32.partialorder %v491, 0.0
  %vm584 = vcmp.gt.f32.partialorder %v496, 0.0
  %vm585 = vcmp.gt.f32.partialorder %v499, 0.0
  %vm586 = vcmp.gt.f32.partialorder %v504, 0.0
  %vm587 = vcmp.gt.f32.partialorder %v507, 0.0
  %vm588 = vcmp.gt.f32.partialorder %v512, 0.0
  %vm589 = vcmp.gt.f32.partialorder %v515, 0.0
  %vm590 = vcmp.gt.f32.partialorder %v520, 0.0
  %vm591 = vcmp.gt.f32.partialorder %v523, 0.0
  %vm592 = vcmp.gt.f32.partialorder %v528, 0.0
  %vm593 = vcmp.gt.f32.partialorder %v531, 0.0
  %vm594 = vcmp.gt.f32.partialorder %v536, 0.0
  %vm595 = vcmp.gt.f32.partialorder %v539, 0.0
  %vm596 = vcmp.gt.f32.partialorder %v544, 0.0
  %vm597 = vcmp.gt.f32.partialorder %v547, 0.0
  %vm598 = vcmp.gt.f32.partialorder %v552, 0.0
  %vm599 = vcmp.gt.f32.partialorder %v555, 0.0
  %vm600 = vcmp.gt.f32.partialorder %v560, 0.0
  %vm601 = vcmp.gt.f32.partialorder %v563, 0.0
  %vm602 = vcmp.gt.f32.partialorder %v568, 0.0
  %vm603 = vcmp.gt.f32.partialorder %v571, 0.0
  %vm604 = vcmp.gt.f32.partialorder %v576, 0.0
  %vm605 = vcmp.gt.f32.partialorder %v579, 0.0
  %v606 = vmul.f32 %v488, 0.01
  %v607 = vmul.f32 %v491, 0.01
  %v608 = vmul.f32 %v496, 0.01
  %v609 = vmul.f32 %v499, 0.01
  %v610 = vmul.f32 %v504, 0.01
  %v611 = vmul.f32 %v507, 0.01
  %v612 = vmul.f32 %v512, 0.01
  %v613 = vmul.f32 %v515, 0.01
  %v614 = vmul.f32 %v520, 0.01
  %v615 = vmul.f32 %v523, 0.01
  %v616 = vmul.f32 %v528, 0.01
  %v617 = vmul.f32 %v531, 0.01
  %v618 = vmul.f32 %v536, 0.01
  %v619 = vmul.f32 %v539, 0.01
  %v620 = vmul.f32 %v544, 0.01
  %v621 = vmul.f32 %v547, 0.01
  %v622 = vmul.f32 %v552, 0.01
  %v623 = vmul.f32 %v555, 0.01
  %v624 = vmul.f32 %v560, 0.01
  %v625 = vmul.f32 %v563, 0.01
  %v626 = vmul.f32 %v568, 0.01
  %v627 = vmul.f32 %v571, 0.01
  %v628 = vmul.f32 %v576, 0.01
  %v629 = vmul.f32 %v579, 0.01
  %v630 = vsel %vm582, %v488, %v606
  %v631 = vsel %vm583, %v491, %v607
  %v632 = vsel %vm584, %v496, %v608
  %v633 = vsel %vm585, %v499, %v609
  %v634 = vsel %vm586, %v504, %v610
  %v635 = vsel %vm587, %v507, %v611
  %v636 = vsel %vm588, %v512, %v612
  %v637 = vsel %vm589, %v515, %v613
  %v638 = vsel %vm590, %v520, %v614
  %v639 = vsel %vm591, %v523, %v615
  %v640 = vsel %vm592, %v528, %v616
  %v641 = vsel %vm593, %v531, %v617
  %v642 = vsel %vm594, %v536, %v618
  %v643 = vsel %vm595, %v539, %v619
  %v644 = vsel %vm596, %v544, %v620
  %v645 = vsel %vm597, %v547, %v621
  %v646 = vsel %vm598, %v552, %v622
  %v647 = vsel %vm599, %v555, %v623
  %v648 = vsel %vm600, %v560, %v624
  %v649 = vsel %vm601, %v563, %v625
  %v650 = vsel %vm602, %v568, %v626
  %v651 = vsel %vm603, %v571, %v627
  %v652 = vsel %vm604, %v576, %v628
  %v653 = vsel %vm605, %v579, %v629
  %v654 = vpack.c.bf16 %v631, %v630
  %v655 = vpack.c.bf16 %v633, %v632
  %v656 = vpack.c.bf16 %v635, %v634
  %v657 = vpack.c.bf16 %v637, %v636
  %v658 = vpack.c.bf16 %v639, %v638
  %v659 = vpack.c.bf16 %v641, %v640
  %v660 = vpack.c.bf16 %v643, %v642
  %v661 = vpack.c.bf16 %v645, %v644
  %v662 = vpack.c.bf16 %v647, %v646
  %v663 = vpack.c.bf16 %v649, %v648
  %v664 = vpack.c.bf16 %v651, %v650
  %v665 = vpack.c.bf16 %v653, %v652
  %v666 = vld [vmem:[%s4] sm:$0xf]
  %v667 = vld [vmem:[%s4 + $0x4] sm:$0xf]
  %v668 = vld [vmem:[%s5] sm:$0x1]
  %v670 = vlaneseq
  %v671 = vshrl.u32 %v670, 7
  %v672 = vsub.s32 0, %v671
  %v673 = vrot.slane %v668, %v672
  %v677 = vunpack.c.l.b16 %v666
  %v678 = vunpack.c.l.b16 %v667
  %v679 = vpack.c.b16 %v678, %v677
  %v682 = vsel %vm57, %v654, 0
  %v685 = vsel %vm57, %v655, 0
  %v688 = vsel %vm57, %v656, 0
  %v691 = vsel %vm57, %v657, 0
  %v694 = vsel %vm57, %v658, 0
  %v697 = vsel %vm57, %v659, 0
  %v700 = vsel %vm57, %v660, 0
  %v703 = vsel %vm57, %v661, 0
  %v706 = vsel %vm57, %v662, 0
  %v709 = vsel %vm57, %v663, 0
  %v712 = vsel %vm57, %v664, 0
  %v715 = vsel %vm57, %v665, 0
  %717 = vmatprep.subr.bf16.mxu0 0
  %718 = vmatpush1.bf16.msra.mxu0 %v679
  %719 = vmatprep.subr.bf16.mxu0 0
  %720 = vmatpush1.bf16.msra.mxu0 0
  %721 = vmatprep.subr.bf16.mxu0 0
  %722 = vmatpush1.bf16.msra.mxu0 0
  %723 = vmatprep.subr.bf16.mxu0 0
  %724 = vmatpush1.bf16.msra.mxu0 0
  %725 = vmatprep.subr.bf16.mxu0 0
  %726 = vmatpush1.bf16.msra.mxu0 0
  %727 = vmatprep.subr.bf16.mxu0 0
  %728 = vmatpush1.bf16.msra.mxu0 0
  %729 = vmatprep.subr.bf16.mxu0 0
  %730 = vmatpush1.bf16.msra.mxu0 0
  %731 = vmatprep.subr.bf16.mxu0 0
  %732 = vmatpush1.bf16.msra.mxu0 0
  %733 = vmatprep.subr.bf16.mxu0 0
  %734 = vmatpush1.bf16.msra.mxu0 0
  %735 = vmatprep.subr.bf16.mxu0 0
  %736 = vmatpush1.bf16.msra.mxu0 0
  %737 = vmatprep.subr.bf16.mxu0 0
  %738 = vmatpush1.bf16.msra.mxu0 0
  %739 = vmatprep.subr.bf16.mxu0 0
  %740 = vmatpush1.bf16.msra.mxu0 0
  %741 = vmatprep.subr.bf16.mxu0 0
  %742 = vmatpush1.bf16.msra.mxu0 0
  %743 = vmatprep.subr.bf16.mxu0 0
  %744 = vmatpush1.bf16.msra.mxu0 0
  %745 = vmatprep.subr.bf16.mxu0 0
  %746 = vmatpush1.bf16.msra.mxu0 0
  %747 = vmatprep.subr.bf16.mxu0 0
  %748 = vmatpush1.bf16.msra.mxu0 0
  %749 = vmatprep.mubr.bf16.mxu0 0
  %750 = vmatmul.mubr.bf16.gmra.mrb[0].mxu0 %v682
  %v751 = vpop.f32.mrb[0].mxu0
  %v752 = vadd.f32 %v673, %v751
  %v753 = vpop.f32.mrb[0].mxu0
  %v754 = vpop.f32.mrb[0].mxu0
  %v755 = vadd.f32 %v673, %v754
  %v756 = vpop.f32.mrb[0].mxu0
  %757 = vmatprep.mubr.bf16.mxu0 0
  %758 = vmatmul.mubr.bf16.gmra.mrb[0].mxu0 %v685
  %v759 = vpop.f32.mrb[0].mxu0
  %v760 = vadd.f32 %v673, %v759
  %v761 = vpop.f32.mrb[0].mxu0
  %v762 = vpop.f32.mrb[0].mxu0
  %v763 = vadd.f32 %v673, %v762
  %v764 = vpop.f32.mrb[0].mxu0
  %765 = vmatprep.mubr.bf16.mxu0 0
  %766 = vmatmul.mubr.bf16.gmra.mrb[0].mxu0 %v688
  %v767 = vpop.f32.mrb[0].mxu0
  %v768 = vadd.f32 %v673, %v767
  %v769 = vpop.f32.mrb[0].mxu0
  %v770 = vpop.f32.mrb[0].mxu0
  %v771 = vadd.f32 %v673, %v770
  %v772 = vpop.f32.mrb[0].mxu0
  %773 = vmatprep.mubr.bf16.mxu0 0
  %774 = vmatmul.mubr.bf16.gmra.mrb[0].mxu0 %v691
  %v775 = vpop.f32.mrb[0].mxu0
  %v776 = vadd.f32 %v673, %v775
  %v777 = vpop.f32.mrb[0].mxu0
  %v778 = vpop.f32.mrb[0].mxu0
  %v779 = vadd.f32 %v673, %v778
  %v780 = vpop.f32.mrb[0].mxu0
  %781 = vmatprep.mubr.bf16.mxu0 0
  %782 = vmatmul.mubr.bf16.gmra.mrb[0].mxu0 %v694
  %v783 = vpop.f32.mrb[0].mxu0
  %v784 = vadd.f32 %v673, %v783
  %v785 = vpop.f32.mrb[0].mxu0
  %v786 = vpop.f32.mrb[0].mxu0
  %v787 = vadd.f32 %v673, %v786
  %v788 = vpop.f32.mrb[0].mxu0
  %789 = vmatprep.mubr.bf16.mxu0 0
  %790 = vmatmul.mubr.bf16.gmra.mrb[0].mxu0 %v697
  %v791 = vpop.f32.mrb[0].mxu0
  %v792 = vadd.f32 %v673, %v791
  %v793 = vpop.f32.mrb[0].mxu0
  %v794 = vpop.f32.mrb[0].mxu0
  %v795 = vadd.f32 %v673, %v794
  %v796 = vpop.f32.mrb[0].mxu0
  %797 = vmatprep.mubr.bf16.mxu0 0
  %798 = vmatmul.mubr.bf16.gmra.mrb[0].mxu0 %v700
  %v799 = vpop.f32.mrb[0].mxu0
  %v800 = vadd.f32 %v673, %v799
  %v801 = vpop.f32.mrb[0].mxu0
  %v802 = vpop.f32.mrb[0].mxu0
  %v803 = vadd.f32 %v673, %v802
  %v804 = vpop.f32.mrb[0].mxu0
  %805 = vmatprep.mubr.bf16.mxu0 0
  %806 = vmatmul.mubr.bf16.gmra.mrb[0].mxu0 %v703
  %v807 = vpop.f32.mrb[0].mxu0
  %v808 = vadd.f32 %v673, %v807
  %v809 = vpop.f32.mrb[0].mxu0
  %v810 = vpop.f32.mrb[0].mxu0
  %v811 = vadd.f32 %v673, %v810
  %v812 = vpop.f32.mrb[0].mxu0
  %813 = vmatprep.mubr.bf16.mxu0 0
  %814 = vmatmul.mubr.bf16.gmra.mrb[0].mxu0 %v706
  %v815 = vpop.f32.mrb[0].mxu0
  %v816 = vadd.f32 %v673, %v815
  %v817 = vpop.f32.mrb[0].mxu0
  %v818 = vpop.f32.mrb[0].mxu0
  %v819 = vadd.f32 %v673, %v818
  %v820 = vpop.f32.mrb[0].mxu0
  %821 = vmatprep.mubr.bf16.mxu0 0
  %822 = vmatmul.mubr.bf16.gmra.mrb[0].mxu0 %v709
  %v823 = vpop.f32.mrb[0].mxu0
  %v824 = vadd.f32 %v673, %v823
  %v825 = vpop.f32.mrb[0].mxu0
  %v826 = vpop.f32.mrb[0].mxu0
  %v827 = vadd.f32 %v673, %v826
  %v828 = vpop.f32.mrb[0].mxu0
  %829 = vmatprep.mubr.bf16.mxu0 0
  %830 = vmatmul.mubr.bf16.gmra.mrb[0].mxu0 %v712
  %v831 = vpop.f32.mrb[0].mxu0
  %v832 = vadd.f32 %v673, %v831
  %v833 = vpop.f32.mrb[0].mxu0
  %v834 = vpop.f32.mrb[0].mxu0
  %v835 = vadd.f32 %v673, %v834
  %v836 = vpop.f32.mrb[0].mxu0
  %837 = vmatprep.mubr.bf16.mxu0 0
  %838 = vmatmul.mubr.bf16.gmra.mrb[0].mxu0 %v715
  %v839 = vpop.f32.mrb[0].mxu0
  %v840 = vadd.f32 %v673, %v839
  %v841 = vpop.f32.mrb[0].mxu0
  %v842 = vpop.f32.mrb[0].mxu0
  %v843 = vadd.f32 %v673, %v842
  %v844 = vpop.f32.mrb[0].mxu0
  %845 = vdwg.mxu0
  %vm846 = vcmp.gt.f32.partialorder %v752, 0.0
  %vm847 = vcmp.gt.f32.partialorder %v755, 0.0
  %vm848 = vcmp.gt.f32.partialorder %v760, 0.0
  %vm849 = vcmp.gt.f32.partialorder %v763, 0.0
  %vm850 = vcmp.gt.f32.partialorder %v768, 0.0
  %vm851 = vcmp.gt.f32.partialorder %v771, 0.0
  %vm852 = vcmp.gt.f32.partialorder %v776, 0.0
  %vm853 = vcmp.gt.f32.partialorder %v779, 0.0
  %vm854 = vcmp.gt.f32.partialorder %v784, 0.0
  %vm855 = vcmp.gt.f32.partialorder %v787, 0.0
  %vm856 = vcmp.gt.f32.partialorder %v792, 0.0
  %vm857 = vcmp.gt.f32.partialorder %v795, 0.0
  %vm858 = vcmp.gt.f32.partialorder %v800, 0.0
  %vm859 = vcmp.gt.f32.partialorder %v803, 0.0
  %vm860 = vcmp.gt.f32.partialorder %v808, 0.0
  %vm861 = vcmp.gt.f32.partialorder %v811, 0.0
  %vm862 = vcmp.gt.f32.partialorder %v816, 0.0
  %vm863 = vcmp.gt.f32.partialorder %v819, 0.0
  %vm864 = vcmp.gt.f32.partialorder %v824, 0.0
  %vm865 = vcmp.gt.f32.partialorder %v827, 0.0
  %vm866 = vcmp.gt.f32.partialorder %v832, 0.0
  %vm867 = vcmp.gt.f32.partialorder %v835, 0.0
  %vm868 = vcmp.gt.f32.partialorder %v840, 0.0
  %vm869 = vcmp.gt.f32.partialorder %v843, 0.0
  %v870 = vmul.f32 %v752, 0.01
  %v871 = vmul.f32 %v755, 0.01
  %v872 = vmul.f32 %v760, 0.01
  %v873 = vmul.f32 %v763, 0.01
  %v874 = vmul.f32 %v768, 0.01
  %v875 = vmul.f32 %v771, 0.01
  %v876 = vmul.f32 %v776, 0.01
  %v877 = vmul.f32 %v779, 0.01
  %v878 = vmul.f32 %v784, 0.01
  %v879 = vmul.f32 %v787, 0.01
  %v880 = vmul.f32 %v792, 0.01
  %v881 = vmul.f32 %v795, 0.01
  %v882 = vmul.f32 %v800, 0.01
  %v883 = vmul.f32 %v803, 0.01
  %v884 = vmul.f32 %v808, 0.01
  %v885 = vmul.f32 %v811, 0.01
  %v886 = vmul.f32 %v816, 0.01
  %v887 = vmul.f32 %v819, 0.01
  %v888 = vmul.f32 %v824, 0.01
  %v889 = vmul.f32 %v827, 0.01
  %v890 = vmul.f32 %v832, 0.01
  %v891 = vmul.f32 %v835, 0.01
  %v892 = vmul.f32 %v840, 0.01
  %v893 = vmul.f32 %v843, 0.01
  %v894 = vsel %vm846, %v752, %v870
  %v895 = vsel %vm847, %v755, %v871
  %v896 = vsel %vm848, %v760, %v872
  %v897 = vsel %vm849, %v763, %v873
  %v898 = vsel %vm850, %v768, %v874
  %v899 = vsel %vm851, %v771, %v875
  %v900 = vsel %vm852, %v776, %v876
  %v901 = vsel %vm853, %v779, %v877
  %v902 = vsel %vm854, %v784, %v878
  %v903 = vsel %vm855, %v787, %v879
  %v904 = vsel %vm856, %v792, %v880
  %v905 = vsel %vm857, %v795, %v881
  %v906 = vsel %vm858, %v800, %v882
  %v907 = vsel %vm859, %v803, %v883
  %v908 = vsel %vm860, %v808, %v884
  %v909 = vsel %vm861, %v811, %v885
  %v910 = vsel %vm862, %v816, %v886
  %v911 = vsel %vm863, %v819, %v887
  %v912 = vsel %vm864, %v824, %v888
  %v913 = vsel %vm865, %v827, %v889
  %v914 = vsel %vm866, %v832, %v890
  %v915 = vsel %vm867, %v835, %v891
  %v916 = vsel %vm868, %v840, %v892
  %v917 = vsel %vm869, %v843, %v893
  %v918 = vld [vmem:[%s6] sm:$0xf]
  %v919 = vld [vmem:[%s6 + $0x4] sm:$0xf]
  %v920 = vld [vmem:[%s7] sm:$0x1]
  %v922 = vlaneseq
  %v923 = vshrl.u32 %v922, 7
  %v924 = vsub.s32 0, %v923
  %v925 = vrot.slane %v920, %v924
  %v929 = vunpack.c.l.b16 %v918
  %v930 = vunpack.c.l.b16 %v919
  %v931 = vpack.c.b16 %v930, %v929
  %933 = vmatprep.subr.bf16.mxu0 0
  %934 = vmatpush1.bf16.msra.mxu0 %v931
  %935 = vmatprep.subr.bf16.mxu0 0
  %936 = vmatpush1.bf16.msra.mxu0 0
  %937 = vmatprep.subr.bf16.mxu0 0
  %938 = vmatpush1.bf16.msra.mxu0 0
  %939 = vmatprep.subr.bf16.mxu0 0
  %940 = vmatpush1.bf16.msra.mxu0 0
  %941 = vmatprep.subr.bf16.mxu0 0
  %942 = vmatpush1.bf16.msra.mxu0 0
  %943 = vmatprep.subr.bf16.mxu0 0
  %944 = vmatpush1.bf16.msra.mxu0 0
  %945 = vmatprep.subr.bf16.mxu0 0
  %946 = vmatpush1.bf16.msra.mxu0 0
  %947 = vmatprep.subr.bf16.mxu0 0
  %948 = vmatpush1.bf16.msra.mxu0 0
  %949 = vmatprep.subr.bf16.mxu0 0
  %950 = vmatpush1.bf16.msra.mxu0 0
  %951 = vmatprep.subr.bf16.mxu0 0
  %952 = vmatpush1.bf16.msra.mxu0 0
  %953 = vmatprep.subr.bf16.mxu0 0
  %954 = vmatpush1.bf16.msra.mxu0 0
  %955 = vmatprep.subr.bf16.mxu0 0
  %956 = vmatpush1.bf16.msra.mxu0 0
  %957 = vmatprep.subr.bf16.mxu0 0
  %958 = vmatpush1.bf16.msra.mxu0 0
  %959 = vmatprep.subr.bf16.mxu0 0
  %960 = vmatpush1.bf16.msra.mxu0 0
  %961 = vmatprep.subr.bf16.mxu0 0
  %962 = vmatpush1.bf16.msra.mxu0 0
  %963 = vmatprep.subr.bf16.mxu0 0
  %964 = vmatpush1.bf16.msra.mxu0 0
  %965 = vmatprep.mubr.bf16.mxu0 0
  %966 = vmatmul.mubr.bf16.gmra.mrb[0].mxu0 %v682
  %v967 = vpop.f32.mrb[0].mxu0
  %v968 = vadd.f32 %v925, %v967
  %v969 = vpop.f32.mrb[0].mxu0
  %v970 = vpop.f32.mrb[0].mxu0
  %v971 = vadd.f32 %v925, %v970
  %v972 = vpop.f32.mrb[0].mxu0
  %973 = vmatprep.mubr.bf16.mxu0 0
  %974 = vmatmul.mubr.bf16.gmra.mrb[0].mxu0 %v685
  %v975 = vpop.f32.mrb[0].mxu0
  %v976 = vadd.f32 %v925, %v975
  %v977 = vpop.f32.mrb[0].mxu0
  %v978 = vpop.f32.mrb[0].mxu0
  %v979 = vadd.f32 %v925, %v978
  %v980 = vpop.f32.mrb[0].mxu0
  %981 = vmatprep.mubr.bf16.mxu0 0
  %982 = vmatmul.mubr.bf16.gmra.mrb[0].mxu0 %v688
  %v983 = vpop.f32.mrb[0].mxu0
  %v984 = vadd.f32 %v925, %v983
  %v985 = vpop.f32.mrb[0].mxu0
  %v986 = vpop.f32.mrb[0].mxu0
  %v987 = vadd.f32 %v925, %v986
  %v988 = vpop.f32.mrb[0].mxu0
  %989 = vmatprep.mubr.bf16.mxu0 0
  %990 = vmatmul.mubr.bf16.gmra.mrb[0].mxu0 %v691
  %v991 = vpop.f32.mrb[0].mxu0
  %v992 = vadd.f32 %v925, %v991
  %v993 = vpop.f32.mrb[0].mxu0
  %v994 = vpop.f32.mrb[0].mxu0
  %v995 = vadd.f32 %v925, %v994
  %v996 = vpop.f32.mrb[0].mxu0
  %997 = vmatprep.mubr.bf16.mxu0 0
  %998 = vmatmul.mubr.bf16.gmra.mrb[0].mxu0 %v694
  %v999 = vpop.f32.mrb[0].mxu0
  %v1000 = vadd.f32 %v925, %v999
  %v1001 = vpop.f32.mrb[0].mxu0
  %v1002 = vpop.f32.mrb[0].mxu0
  %v1003 = vadd.f32 %v925, %v1002
  %v1004 = vpop.f32.mrb[0].mxu0
  %1005 = vmatprep.mubr.bf16.mxu0 0
  %1006 = vmatmul.mubr.bf16.gmra.mrb[0].mxu0 %v697
  %v1007 = vpop.f32.mrb[0].mxu0
  %v1008 = vadd.f32 %v925, %v1007
  %v1009 = vpop.f32.mrb[0].mxu0
  %v1010 = vpop.f32.mrb[0].mxu0
  %v1011 = vadd.f32 %v925, %v1010
  %v1012 = vpop.f32.mrb[0].mxu0
  %1013 = vmatprep.mubr.bf16.mxu0 0
  %1014 = vmatmul.mubr.bf16.gmra.mrb[0].mxu0 %v700
  %v1015 = vpop.f32.mrb[0].mxu0
  %v1016 = vadd.f32 %v925, %v1015
  %v1017 = vpop.f32.mrb[0].mxu0
  %v1018 = vpop.f32.mrb[0].mxu0
  %v1019 = vadd.f32 %v925, %v1018
  %v1020 = vpop.f32.mrb[0].mxu0
  %1021 = vmatprep.mubr.bf16.mxu0 0
  %1022 = vmatmul.mubr.bf16.gmra.mrb[0].mxu0 %v703
  %v1023 = vpop.f32.mrb[0].mxu0
  %v1024 = vadd.f32 %v925, %v1023
  %v1025 = vpop.f32.mrb[0].mxu0
  %v1026 = vpop.f32.mrb[0].mxu0
  %v1027 = vadd.f32 %v925, %v1026
  %v1028 = vpop.f32.mrb[0].mxu0
  %1029 = vmatprep.mubr.bf16.mxu0 0
  %1030 = vmatmul.mubr.bf16.gmra.mrb[0].mxu0 %v706
  %v1031 = vpop.f32.mrb[0].mxu0
  %v1032 = vadd.f32 %v925, %v1031
  %v1033 = vpop.f32.mrb[0].mxu0
  %v1034 = vpop.f32.mrb[0].mxu0
  %v1035 = vadd.f32 %v925, %v1034
  %v1036 = vpop.f32.mrb[0].mxu0
  %1037 = vmatprep.mubr.bf16.mxu0 0
  %1038 = vmatmul.mubr.bf16.gmra.mrb[0].mxu0 %v709
  %v1039 = vpop.f32.mrb[0].mxu0
  %v1040 = vadd.f32 %v925, %v1039
  %v1041 = vpop.f32.mrb[0].mxu0
  %v1042 = vpop.f32.mrb[0].mxu0
  %v1043 = vadd.f32 %v925, %v1042
  %v1044 = vpop.f32.mrb[0].mxu0
  %1045 = vmatprep.mubr.bf16.mxu0 0
  %1046 = vmatmul.mubr.bf16.gmra.mrb[0].mxu0 %v712
  %v1047 = vpop.f32.mrb[0].mxu0
  %v1048 = vadd.f32 %v925, %v1047
  %v1049 = vpop.f32.mrb[0].mxu0
  %v1050 = vpop.f32.mrb[0].mxu0
  %v1051 = vadd.f32 %v925, %v1050
  %v1052 = vpop.f32.mrb[0].mxu0
  %1053 = vmatprep.mubr.bf16.mxu0 0
  %1054 = vmatmul.mubr.bf16.gmra.mrb[0].mxu0 %v715
  %v1055 = vpop.f32.mrb[0].mxu0
  %v1056 = vadd.f32 %v925, %v1055
  %v1057 = vpop.f32.mrb[0].mxu0
  %v1058 = vpop.f32.mrb[0].mxu0
  %v1059 = vadd.f32 %v925, %v1058
  %v1060 = vpop.f32.mrb[0].mxu0
  %1061 = vdwg.mxu0
  %vm1062 = vcmp.gt.f32.partialorder %v968, 0.0
  %vm1063 = vcmp.gt.f32.partialorder %v971, 0.0
  %vm1064 = vcmp.gt.f32.partialorder %v976, 0.0
  %vm1065 = vcmp.gt.f32.partialorder %v979, 0.0
  %vm1066 = vcmp.gt.f32.partialorder %v984, 0.0
  %vm1067 = vcmp.gt.f32.partialorder %v987, 0.0
  %vm1068 = vcmp.gt.f32.partialorder %v992, 0.0
  %vm1069 = vcmp.gt.f32.partialorder %v995, 0.0
  %vm1070 = vcmp.gt.f32.partialorder %v1000, 0.0
  %vm1071 = vcmp.gt.f32.partialorder %v1003, 0.0
  %vm1072 = vcmp.gt.f32.partialorder %v1008, 0.0
  %vm1073 = vcmp.gt.f32.partialorder %v1011, 0.0
  %vm1074 = vcmp.gt.f32.partialorder %v1016, 0.0
  %vm1075 = vcmp.gt.f32.partialorder %v1019, 0.0
  %vm1076 = vcmp.gt.f32.partialorder %v1024, 0.0
  %vm1077 = vcmp.gt.f32.partialorder %v1027, 0.0
  %vm1078 = vcmp.gt.f32.partialorder %v1032, 0.0
  %vm1079 = vcmp.gt.f32.partialorder %v1035, 0.0
  %vm1080 = vcmp.gt.f32.partialorder %v1040, 0.0
  %vm1081 = vcmp.gt.f32.partialorder %v1043, 0.0
  %vm1082 = vcmp.gt.f32.partialorder %v1048, 0.0
  %vm1083 = vcmp.gt.f32.partialorder %v1051, 0.0
  %vm1084 = vcmp.gt.f32.partialorder %v1056, 0.0
  %vm1085 = vcmp.gt.f32.partialorder %v1059, 0.0
  %v1086 = vmul.f32 %v968, 0.01
  %v1087 = vmul.f32 %v971, 0.01
  %v1088 = vmul.f32 %v976, 0.01
  %v1089 = vmul.f32 %v979, 0.01
  %v1090 = vmul.f32 %v984, 0.01
  %v1091 = vmul.f32 %v987, 0.01
  %v1092 = vmul.f32 %v992, 0.01
  %v1093 = vmul.f32 %v995, 0.01
  %v1094 = vmul.f32 %v1000, 0.01
  %v1095 = vmul.f32 %v1003, 0.01
  %v1096 = vmul.f32 %v1008, 0.01
  %v1097 = vmul.f32 %v1011, 0.01
  %v1098 = vmul.f32 %v1016, 0.01
  %v1099 = vmul.f32 %v1019, 0.01
  %v1100 = vmul.f32 %v1024, 0.01
  %v1101 = vmul.f32 %v1027, 0.01
  %v1102 = vmul.f32 %v1032, 0.01
  %v1103 = vmul.f32 %v1035, 0.01
  %v1104 = vmul.f32 %v1040, 0.01
  %v1105 = vmul.f32 %v1043, 0.01
  %v1106 = vmul.f32 %v1048, 0.01
  %v1107 = vmul.f32 %v1051, 0.01
  %v1108 = vmul.f32 %v1056, 0.01
  %v1109 = vmul.f32 %v1059, 0.01
  %v1110 = vsel %vm1062, %v968, %v1086
  %v1111 = vsel %vm1063, %v971, %v1087
  %v1112 = vsel %vm1064, %v976, %v1088
  %v1113 = vsel %vm1065, %v979, %v1089
  %v1114 = vsel %vm1066, %v984, %v1090
  %v1115 = vsel %vm1067, %v987, %v1091
  %v1116 = vsel %vm1068, %v992, %v1092
  %v1117 = vsel %vm1069, %v995, %v1093
  %v1118 = vsel %vm1070, %v1000, %v1094
  %v1119 = vsel %vm1071, %v1003, %v1095
  %v1120 = vsel %vm1072, %v1008, %v1096
  %v1121 = vsel %vm1073, %v1011, %v1097
  %v1122 = vsel %vm1074, %v1016, %v1098
  %v1123 = vsel %vm1075, %v1019, %v1099
  %v1124 = vsel %vm1076, %v1024, %v1100
  %v1125 = vsel %vm1077, %v1027, %v1101
  %v1126 = vsel %vm1078, %v1032, %v1102
  %v1127 = vsel %vm1079, %v1035, %v1103
  %v1128 = vsel %vm1080, %v1040, %v1104
  %v1129 = vsel %vm1081, %v1043, %v1105
  %v1130 = vsel %vm1082, %v1048, %v1106
  %v1131 = vsel %vm1083, %v1051, %v1107
  %v1132 = vsel %vm1084, %v1056, %v1108
  %v1133 = vsel %vm1085, %v1059, %v1109
  %v1134 = vld [vmem:[%s8] sm:$0xf]
  %v1135 = vld [vmem:[%s8 + $0x4] sm:$0xf]
  %v1136 = vld [vmem:[%s8 + $0x8] sm:$0xf]
  %v1137 = vld [vmem:[%s8 + $0xc] sm:$0xf]
  %v1138 = vld [vmem:[%s9] sm:$0x1]
  %v1139 = vpack.c.bf16 %v1111, %v1110
  %v1140 = vpack.c.bf16 %v1113, %v1112
  %v1141 = vpack.c.bf16 %v1115, %v1114
  %v1142 = vpack.c.bf16 %v1117, %v1116
  %v1143 = vpack.c.bf16 %v1119, %v1118
  %v1144 = vpack.c.bf16 %v1121, %v1120
  %v1145 = vpack.c.bf16 %v1123, %v1122
  %v1146 = vpack.c.bf16 %v1125, %v1124
  %v1147 = vpack.c.bf16 %v1127, %v1126
  %v1148 = vpack.c.bf16 %v1129, %v1128
  %v1149 = vpack.c.bf16 %v1131, %v1130
  %v1150 = vpack.c.bf16 %v1133, %v1132
  %v1152 = vlaneseq
  %v1153 = vshrl.u32 %v1152, 7
  %v1154 = vsub.s32 0, %v1153
  %v1155 = vrot.slane %v1138, %v1154
  %v1161 = vunpack.c.l.b16 %v1134
  %v1162 = vunpack.c.l.b16 %v1135
  %v1163 = vunpack.c.l.b16 %v1136
  %v1164 = vunpack.c.l.b16 %v1137
  %v1165 = vpack.c.b16 %v1162, %v1161
  %v1166 = vpack.c.b16 %v1164, %v1163
  %vm1169 = vcmask 261120
  %v1171 = vsel %vm1169, %v1139, 0
  %v1174 = vsel %vm1169, %v1140, 0
  %v1177 = vsel %vm1169, %v1141, 0
  %v1180 = vsel %vm1169, %v1142, 0
  %v1183 = vsel %vm1169, %v1143, 0
  %v1186 = vsel %vm1169, %v1144, 0
  %v1189 = vsel %vm1169, %v1145, 0
  %v1192 = vsel %vm1169, %v1146, 0
  %v1195 = vsel %vm1169, %v1147, 0
  %v1198 = vsel %vm1169, %v1148, 0
  %v1201 = vsel %vm1169, %v1149, 0
  %v1204 = vsel %vm1169, %v1150, 0
  %1206 = vmatprep.subr.bf16.mxu0 0
  %1207 = vmatpush1.bf16.msra.mxu0 %v1165
  %1208 = vmatprep.subr.bf16.mxu0 0
  %1209 = vmatpush1.bf16.msra.mxu0 %v1166
  %1210 = vmatprep.subr.bf16.mxu0 0
  %1211 = vmatpush1.bf16.msra.mxu0 0
  %1212 = vmatprep.subr.bf16.mxu0 0
  %1213 = vmatpush1.bf16.msra.mxu0 0
  %1214 = vmatprep.subr.bf16.mxu0 0
  %1215 = vmatpush1.bf16.msra.mxu0 0
  %1216 = vmatprep.subr.bf16.mxu0 0
  %1217 = vmatpush1.bf16.msra.mxu0 0
  %1218 = vmatprep.subr.bf16.mxu0 0
  %1219 = vmatpush1.bf16.msra.mxu0 0
  %1220 = vmatprep.subr.bf16.mxu0 0
  %1221 = vmatpush1.bf16.msra.mxu0 0
  %1222 = vmatprep.subr.bf16.mxu0 0
  %1223 = vmatpush1.bf16.msra.mxu0 0
  %1224 = vmatprep.subr.bf16.mxu0 0
  %1225 = vmatpush1.bf16.msra.mxu0 0
  %1226 = vmatprep.subr.bf16.mxu0 0
  %1227 = vmatpush1.bf16.msra.mxu0 0
  %1228 = vmatprep.subr.bf16.mxu0 0
  %1229 = vmatpush1.bf16.msra.mxu0 0
  %1230 = vmatprep.subr.bf16.mxu0 0
  %1231 = vmatpush1.bf16.msra.mxu0 0
  %1232 = vmatprep.subr.bf16.mxu0 0
  %1233 = vmatpush1.bf16.msra.mxu0 0
  %1234 = vmatprep.subr.bf16.mxu0 0
  %1235 = vmatpush1.bf16.msra.mxu0 0
  %1236 = vmatprep.subr.bf16.mxu0 0
  %1237 = vmatpush1.bf16.msra.mxu0 0
  %1238 = vmatprep.mubr.bf16.mxu0 0
  %1239 = vmatmul.mubr.bf16.gmra.mrb[0].mxu0 %v1171
  %v1240 = vpop.f32.mrb[0].mxu0
  %v1241 = vadd.f32 %v1155, %v1240
  %v1242 = vpop.f32.mrb[0].mxu0
  %v1243 = vpop.f32.mrb[0].mxu0
  %v1244 = vadd.f32 %v1155, %v1243
  %v1245 = vpop.f32.mrb[0].mxu0
  %1246 = vmatprep.mubr.bf16.mxu0 0
  %1247 = vmatmul.mubr.bf16.gmra.mrb[0].mxu0 %v1174
  %v1248 = vpop.f32.mrb[0].mxu0
  %v1249 = vadd.f32 %v1155, %v1248
  %v1250 = vpop.f32.mrb[0].mxu0
  %v1251 = vpop.f32.mrb[0].mxu0
  %v1252 = vadd.f32 %v1155, %v1251
  %v1253 = vpop.f32.mrb[0].mxu0
  %1254 = vmatprep.mubr.bf16.mxu0 0
  %1255 = vmatmul.mubr.bf16.gmra.mrb[0].mxu0 %v1177
  %v1256 = vpop.f32.mrb[0].mxu0
  %v1257 = vadd.f32 %v1155, %v1256
  %v1258 = vpop.f32.mrb[0].mxu0
  %v1259 = vpop.f32.mrb[0].mxu0
  %v1260 = vadd.f32 %v1155, %v1259
  %v1261 = vpop.f32.mrb[0].mxu0
  %1262 = vmatprep.mubr.bf16.mxu0 0
  %1263 = vmatmul.mubr.bf16.gmra.mrb[0].mxu0 %v1180
  %v1264 = vpop.f32.mrb[0].mxu0
  %v1265 = vadd.f32 %v1155, %v1264
  %v1266 = vpop.f32.mrb[0].mxu0
  %v1267 = vpop.f32.mrb[0].mxu0
  %v1268 = vadd.f32 %v1155, %v1267
  %v1269 = vpop.f32.mrb[0].mxu0
  %1270 = vmatprep.mubr.bf16.mxu0 0
  %1271 = vmatmul.mubr.bf16.gmra.mrb[0].mxu0 %v1183
  %v1272 = vpop.f32.mrb[0].mxu0
  %v1273 = vadd.f32 %v1155, %v1272
  %v1274 = vpop.f32.mrb[0].mxu0
  %v1275 = vpop.f32.mrb[0].mxu0
  %v1276 = vadd.f32 %v1155, %v1275
  %v1277 = vpop.f32.mrb[0].mxu0
  %1278 = vmatprep.mubr.bf16.mxu0 0
  %1279 = vmatmul.mubr.bf16.gmra.mrb[0].mxu0 %v1186
  %v1280 = vpop.f32.mrb[0].mxu0
  %v1281 = vadd.f32 %v1155, %v1280
  %v1282 = vpop.f32.mrb[0].mxu0
  %v1283 = vpop.f32.mrb[0].mxu0
  %v1284 = vadd.f32 %v1155, %v1283
  %v1285 = vpop.f32.mrb[0].mxu0
  %1286 = vmatprep.mubr.bf16.mxu0 0
  %1287 = vmatmul.mubr.bf16.gmra.mrb[0].mxu0 %v1189
  %v1288 = vpop.f32.mrb[0].mxu0
  %v1289 = vadd.f32 %v1155, %v1288
  %v1290 = vpop.f32.mrb[0].mxu0
  %v1291 = vpop.f32.mrb[0].mxu0
  %v1292 = vadd.f32 %v1155, %v1291
  %v1293 = vpop.f32.mrb[0].mxu0
  %1294 = vmatprep.mubr.bf16.mxu0 0
  %1295 = vmatmul.mubr.bf16.gmra.mrb[0].mxu0 %v1192
  %v1296 = vpop.f32.mrb[0].mxu0
  %v1297 = vadd.f32 %v1155, %v1296
  %v1298 = vpop.f32.mrb[0].mxu0
  %v1299 = vpop.f32.mrb[0].mxu0
  %v1300 = vadd.f32 %v1155, %v1299
  %v1301 = vpop.f32.mrb[0].mxu0
  %1302 = vmatprep.mubr.bf16.mxu0 0
  %1303 = vmatmul.mubr.bf16.gmra.mrb[0].mxu0 %v1195
  %v1304 = vpop.f32.mrb[0].mxu0
  %v1305 = vadd.f32 %v1155, %v1304
  %v1306 = vpop.f32.mrb[0].mxu0
  %v1307 = vpop.f32.mrb[0].mxu0
  %v1308 = vadd.f32 %v1155, %v1307
  %v1309 = vpop.f32.mrb[0].mxu0
  %1310 = vmatprep.mubr.bf16.mxu0 0
  %1311 = vmatmul.mubr.bf16.gmra.mrb[0].mxu0 %v1198
  %v1312 = vpop.f32.mrb[0].mxu0
  %v1313 = vadd.f32 %v1155, %v1312
  %v1314 = vpop.f32.mrb[0].mxu0
  %v1315 = vpop.f32.mrb[0].mxu0
  %v1316 = vadd.f32 %v1155, %v1315
  %v1317 = vpop.f32.mrb[0].mxu0
  %1318 = vmatprep.mubr.bf16.mxu0 0
  %1319 = vmatmul.mubr.bf16.gmra.mrb[0].mxu0 %v1201
  %v1320 = vpop.f32.mrb[0].mxu0
  %v1321 = vadd.f32 %v1155, %v1320
  %v1322 = vpop.f32.mrb[0].mxu0
  %v1323 = vpop.f32.mrb[0].mxu0
  %v1324 = vadd.f32 %v1155, %v1323
  %v1325 = vpop.f32.mrb[0].mxu0
  %1326 = vmatprep.mubr.bf16.mxu0 0
  %1327 = vmatmul.mubr.bf16.gmra.mrb[0].mxu0 %v1204
  %v1328 = vpop.f32.mrb[0].mxu0
  %v1329 = vadd.f32 %v1155, %v1328
  %v1330 = vpop.f32.mrb[0].mxu0
  %v1331 = vpop.f32.mrb[0].mxu0
  %v1332 = vadd.f32 %v1155, %v1331
  %v1333 = vpop.f32.mrb[0].mxu0
  %1334 = vdwg.mxu0
  %vm1335 = vcmp.gt.f32.partialorder %v1241, 0.0
  %vm1336 = vcmp.gt.f32.partialorder %v1244, 0.0
  %vm1337 = vcmp.gt.f32.partialorder %v1249, 0.0
  %vm1338 = vcmp.gt.f32.partialorder %v1252, 0.0
  %vm1339 = vcmp.gt.f32.partialorder %v1257, 0.0
  %vm1340 = vcmp.gt.f32.partialorder %v1260, 0.0
  %vm1341 = vcmp.gt.f32.partialorder %v1265, 0.0
  %vm1342 = vcmp.gt.f32.partialorder %v1268, 0.0
  %vm1343 = vcmp.gt.f32.partialorder %v1273, 0.0
  %vm1344 = vcmp.gt.f32.partialorder %v1276, 0.0
  %vm1345 = vcmp.gt.f32.partialorder %v1281, 0.0
  %vm1346 = vcmp.gt.f32.partialorder %v1284, 0.0
  %vm1347 = vcmp.gt.f32.partialorder %v1289, 0.0
  %vm1348 = vcmp.gt.f32.partialorder %v1292, 0.0
  %vm1349 = vcmp.gt.f32.partialorder %v1297, 0.0
  %vm1350 = vcmp.gt.f32.partialorder %v1300, 0.0
  %vm1351 = vcmp.gt.f32.partialorder %v1305, 0.0
  %vm1352 = vcmp.gt.f32.partialorder %v1308, 0.0
  %vm1353 = vcmp.gt.f32.partialorder %v1313, 0.0
  %vm1354 = vcmp.gt.f32.partialorder %v1316, 0.0
  %vm1355 = vcmp.gt.f32.partialorder %v1321, 0.0
  %vm1356 = vcmp.gt.f32.partialorder %v1324, 0.0
  %vm1357 = vcmp.gt.f32.partialorder %v1329, 0.0
  %vm1358 = vcmp.gt.f32.partialorder %v1332, 0.0
  %v1359 = vmul.f32 %v1241, 0.01
  %v1360 = vmul.f32 %v1244, 0.01
  %v1361 = vmul.f32 %v1249, 0.01
  %v1362 = vmul.f32 %v1252, 0.01
  %v1363 = vmul.f32 %v1257, 0.01
  %v1364 = vmul.f32 %v1260, 0.01
  %v1365 = vmul.f32 %v1265, 0.01
  %v1366 = vmul.f32 %v1268, 0.01
  %v1367 = vmul.f32 %v1273, 0.01
  %v1368 = vmul.f32 %v1276, 0.01
  %v1369 = vmul.f32 %v1281, 0.01
  %v1370 = vmul.f32 %v1284, 0.01
  %v1371 = vmul.f32 %v1289, 0.01
  %v1372 = vmul.f32 %v1292, 0.01
  %v1373 = vmul.f32 %v1297, 0.01
  %v1374 = vmul.f32 %v1300, 0.01
  %v1375 = vmul.f32 %v1305, 0.01
  %v1376 = vmul.f32 %v1308, 0.01
  %v1377 = vmul.f32 %v1313, 0.01
  %v1378 = vmul.f32 %v1316, 0.01
  %v1379 = vmul.f32 %v1321, 0.01
  %v1380 = vmul.f32 %v1324, 0.01
  %v1381 = vmul.f32 %v1329, 0.01
  %v1382 = vmul.f32 %v1332, 0.01
  %v1383 = vsel %vm1335, %v1241, %v1359
  %v1384 = vsel %vm1336, %v1244, %v1360
  %v1385 = vsel %vm1337, %v1249, %v1361
  %v1386 = vsel %vm1338, %v1252, %v1362
  %v1387 = vsel %vm1339, %v1257, %v1363
  %v1388 = vsel %vm1340, %v1260, %v1364
  %v1389 = vsel %vm1341, %v1265, %v1365
  %v1390 = vsel %vm1342, %v1268, %v1366
  %v1391 = vsel %vm1343, %v1273, %v1367
  %v1392 = vsel %vm1344, %v1276, %v1368
  %v1393 = vsel %vm1345, %v1281, %v1369
  %v1394 = vsel %vm1346, %v1284, %v1370
  %v1395 = vsel %vm1347, %v1289, %v1371
  %v1396 = vsel %vm1348, %v1292, %v1372
  %v1397 = vsel %vm1349, %v1297, %v1373
  %v1398 = vsel %vm1350, %v1300, %v1374
  %v1399 = vsel %vm1351, %v1305, %v1375
  %v1400 = vsel %vm1352, %v1308, %v1376
  %v1401 = vsel %vm1353, %v1313, %v1377
  %v1402 = vsel %vm1354, %v1316, %v1378
  %v1403 = vsel %vm1355, %v1321, %v1379
  %v1404 = vsel %vm1356, %v1324, %v1380
  %v1405 = vsel %vm1357, %v1329, %v1381
  %v1406 = vsel %vm1358, %v1332, %v1382
  %v1407 = vmul.f32 %v1383, %v89
  %v1408 = vmul.f32 %v1384, %v94
  %v1409 = vmul.f32 %v1385, %v99
  %v1410 = vmul.f32 %v1386, %v104
  %v1411 = vmul.f32 %v1387, %v109
  %v1412 = vmul.f32 %v1388, %v114
  %v1413 = vmul.f32 %v1389, %v119
  %v1414 = vmul.f32 %v1390, %v124
  %v1415 = vmul.f32 %v1391, %v129
  %v1416 = vmul.f32 %v1392, %v134
  %v1417 = vmul.f32 %v1393, %v139
  %v1418 = vmul.f32 %v1394, %v144
  %v1419 = vmul.f32 %v1395, %v149
  %v1420 = vmul.f32 %v1396, %v154
  %v1421 = vmul.f32 %v1397, %v159
  %v1422 = vmul.f32 %v1398, %v164
  %v1423 = vmul.f32 %v1399, %v169
  %v1424 = vmul.f32 %v1400, %v174
  %v1425 = vmul.f32 %v1401, %v179
  %v1426 = vmul.f32 %v1402, %v184
  %v1427 = vmul.f32 %v1403, %v189
  %v1428 = vmul.f32 %v1404, %v194
  %v1429 = vmul.f32 %v1405, %v199
  %v1430 = vmul.f32 %v1406, %v204
  %1431 = vst.msk [vmem:[#allocation2 + $0x10] sm:$0xff] %vm57, %v1407
  %1432 = vst.msk [vmem:[#allocation2 + $0x18] sm:$0xff] %vm57, %v1408
  %1433 = vst.msk [vmem:[#allocation2 + $0x20] sm:$0xff] %vm57, %v1409
  %1434 = vst.msk [vmem:[#allocation2 + $0x28] sm:$0xff] %vm57, %v1410
  %1435 = vst.msk [vmem:[#allocation2 + $0x30] sm:$0xff] %vm57, %v1411
  %1436 = vst.msk [vmem:[#allocation2 + $0x38] sm:$0xff] %vm57, %v1412
  %1437 = vst.msk [vmem:[#allocation2 + $0x40] sm:$0xff] %vm57, %v1413
  %1438 = vst.msk [vmem:[#allocation2 + $0x48] sm:$0xff] %vm57, %v1414
  %1439 = vst.msk [vmem:[#allocation2 + $0x50] sm:$0xff] %vm57, %v1415
  %1440 = vst.msk [vmem:[#allocation2 + $0x58] sm:$0xff] %vm57, %v1416
  %1441 = vst.msk [vmem:[#allocation2 + $0x60] sm:$0xff] %vm57, %v1417
  %1442 = vst.msk [vmem:[#allocation2 + $0x68] sm:$0xff] %vm57, %v1418
  %1443 = vst.msk [vmem:[#allocation2 + $0x70] sm:$0xff] %vm57, %v1419
  %1444 = vst.msk [vmem:[#allocation2 + $0x78] sm:$0xff] %vm57, %v1420
  %1445 = vst.msk [vmem:[#allocation2 + $0x80] sm:$0xff] %vm57, %v1421
  %1446 = vst.msk [vmem:[#allocation2 + $0x88] sm:$0xff] %vm57, %v1422
  %1447 = vst.msk [vmem:[#allocation2 + $0x90] sm:$0xff] %vm57, %v1423
  %1448 = vst.msk [vmem:[#allocation2 + $0x98] sm:$0xff] %vm57, %v1424
  %1449 = vst.msk [vmem:[#allocation2 + $0xa0] sm:$0xff] %vm57, %v1425
  %1450 = vst.msk [vmem:[#allocation2 + $0xa8] sm:$0xff] %vm57, %v1426
  %1451 = vst.msk [vmem:[#allocation2 + $0xb0] sm:$0xff] %vm57, %v1427
  %1452 = vst.msk [vmem:[#allocation2 + $0xb8] sm:$0xff] %vm57, %v1428
  %1453 = vst.msk [vmem:[#allocation2 + $0xc0] sm:$0xff] %vm57, %v1429
  %1454 = vst.msk [vmem:[#allocation2 + $0xc8] sm:$0xff] %vm57, %v1430
  %v1455 = vld [vmem:[%s11] sm:$0x1]
  %v1456 = vld [vmem:[#allocation2 + $0x5] sm:$0xff]
  %v1457 = vld [vmem:[#allocation2 + $0xd] sm:$0xff]
  %v1458 = vld [vmem:[#allocation2 + $0x15] sm:$0xff]
  %v1459 = vld [vmem:[#allocation2 + $0x1d] sm:$0xff]
  %v1460 = vld [vmem:[#allocation2 + $0x25] sm:$0xff]
  %v1461 = vld [vmem:[#allocation2 + $0x2d] sm:$0xff]
  %v1462 = vld [vmem:[#allocation2 + $0x35] sm:$0xff]
  %v1463 = vld [vmem:[#allocation2 + $0x3d] sm:$0xff]
  %v1464 = vld [vmem:[#allocation2 + $0x45] sm:$0xff]
  %v1465 = vld [vmem:[#allocation2 + $0x4d] sm:$0xff]
  %v1466 = vld [vmem:[#allocation2 + $0x55] sm:$0xff]
  %v1467 = vld [vmem:[#allocation2 + $0x5d] sm:$0xff]
  %v1468 = vld [vmem:[#allocation2 + $0x65] sm:$0xff]
  %v1469 = vld [vmem:[#allocation2 + $0x6d] sm:$0xff]
  %v1470 = vld [vmem:[#allocation2 + $0x75] sm:$0xff]
  %v1471 = vld [vmem:[#allocation2 + $0x7d] sm:$0xff]
  %v1472 = vld [vmem:[#allocation2 + $0x85] sm:$0xff]
  %v1473 = vld [vmem:[#allocation2 + $0x8d] sm:$0xff]
  %v1474 = vld [vmem:[#allocation2 + $0x95] sm:$0xff]
  %v1475 = vld [vmem:[#allocation2 + $0x9d] sm:$0xff]
  %v1476 = vld [vmem:[#allocation2 + $0xa5] sm:$0xff]
  %v1477 = vld [vmem:[#allocation2 + $0xad] sm:$0xff]
  %v1478 = vld [vmem:[#allocation2 + $0xb5] sm:$0xff]
  %v1479 = vld [vmem:[#allocation2 + $0xbd] sm:$0xff]
  %v1480 = vpack.c.bf16 %v1457, %v1456
  %v1481 = vpack.c.bf16 %v1459, %v1458
  %v1482 = vpack.c.bf16 %v1461, %v1460
  %v1483 = vpack.c.bf16 %v1463, %v1462
  %v1484 = vpack.c.bf16 %v1465, %v1464
  %v1485 = vpack.c.bf16 %v1467, %v1466
  %v1486 = vpack.c.bf16 %v1469, %v1468
  %v1487 = vpack.c.bf16 %v1471, %v1470
  %v1488 = vpack.c.bf16 %v1473, %v1472
  %v1489 = vpack.c.bf16 %v1475, %v1474
  %v1490 = vpack.c.bf16 %v1477, %v1476
  %v1491 = vpack.c.bf16 %v1479, %v1478
  %v1492 = vld [vmem:[%s10] sm:$0xf]
  %v1493 = vld [vmem:[%s10 + $0x4] sm:$0xf]
  %v1496 = vunpack.c.l.b16 %v1492
  %v1497 = vunpack.c.l.b16 %v1493
  %v1498 = vpack.c.b16 %v1497, %v1496
  %v1501 = vsel %vm57, %v1480, 0
  %v1504 = vsel %vm57, %v1481, 0
  %v1507 = vsel %vm57, %v1482, 0
  %v1510 = vsel %vm57, %v1483, 0
  %v1513 = vsel %vm57, %v1484, 0
  %v1516 = vsel %vm57, %v1485, 0
  %v1519 = vsel %vm57, %v1486, 0
  %v1522 = vsel %vm57, %v1487, 0
  %v1525 = vsel %vm57, %v1488, 0
  %v1528 = vsel %vm57, %v1489, 0
  %v1531 = vsel %vm57, %v1490, 0
  %v1534 = vsel %vm57, %v1491, 0
  %1536 = vmatprep.subr.bf16.mxu0 0
  %1537 = vmatpush1.bf16.msra.mxu0 %v1498
  %1538 = vmatprep.subr.bf16.mxu0 0
  %1539 = vmatpush1.bf16.msra.mxu0 0
  %1540 = vmatprep.subr.bf16.mxu0 0
  %1541 = vmatpush1.bf16.msra.mxu0 0
  %1542 = vmatprep.subr.bf16.mxu0 0
  %1543 = vmatpush1.bf16.msra.mxu0 0
  %1544 = vmatprep.subr.bf16.mxu0 0
  %1545 = vmatpush1.bf16.msra.mxu0 0
  %1546 = vmatprep.subr.bf16.mxu0 0
  %1547 = vmatpush1.bf16.msra.mxu0 0
  %1548 = vmatprep.subr.bf16.mxu0 0
  %1549 = vmatpush1.bf16.msra.mxu0 0
  %1550 = vmatprep.subr.bf16.mxu0 0
  %1551 = vmatpush1.bf16.msra.mxu0 0
  %1552 = vmatprep.subr.bf16.mxu0 0
  %1553 = vmatpush1.bf16.msra.mxu0 0
  %1554 = vmatprep.subr.bf16.mxu0 0
  %1555 = vmatpush1.bf16.msra.mxu0 0
  %1556 = vmatprep.subr.bf16.mxu0 0
  %1557 = vmatpush1.bf16.msra.mxu0 0
  %1558 = vmatprep.subr.bf16.mxu0 0
  %1559 = vmatpush1.bf16.msra.mxu0 0
  %1560 = vmatprep.subr.bf16.mxu0 0
  %1561 = vmatpush1.bf16.msra.mxu0 0
  %1562 = vmatprep.subr.bf16.mxu0 0
  %1563 = vmatpush1.bf16.msra.mxu0 0
  %1564 = vmatprep.subr.bf16.mxu0 0
  %1565 = vmatpush1.bf16.msra.mxu0 0
  %1566 = vmatprep.subr.bf16.mxu0 0
  %1567 = vmatpush1.bf16.msra.mxu0 0
  %1568 = vmatprep.mubr.bf16.mxu0 0
  %1569 = vmatmul.mubr.bf16.gmra.mrb[0].mxu0 %v1501
  %v1570 = vpop.f32.mrb[0].mxu0
  %v1571 = vadd.f32 0.0, %v1570
  %v1572 = vpop.f32.mrb[0].mxu0
  %v1573 = vpop.f32.mrb[0].mxu0
  %v1574 = vadd.f32 0.0, %v1573
  %v1575 = vpop.f32.mrb[0].mxu0
  %1576 = vmatprep.mubr.bf16.mxu0 0
  %1577 = vmatmul.mubr.bf16.gmra.mrb[0].mxu0 %v1504
  %v1578 = vpop.f32.mrb[0].mxu0
  %v1579 = vadd.f32 0.0, %v1578
  %v1580 = vpop.f32.mrb[0].mxu0
  %v1581 = vpop.f32.mrb[0].mxu0
  %v1582 = vadd.f32 0.0, %v1581
  %v1583 = vpop.f32.mrb[0].mxu0
  %1584 = vmatprep.mubr.bf16.mxu0 0
  %1585 = vmatmul.mubr.bf16.gmra.mrb[0].mxu0 %v1507
  %v1586 = vpop.f32.mrb[0].mxu0
  %v1587 = vadd.f32 0.0, %v1586
  %v1588 = vpop.f32.mrb[0].mxu0
  %v1589 = vpop.f32.mrb[0].mxu0
  %v1590 = vadd.f32 0.0, %v1589
  %v1591 = vpop.f32.mrb[0].mxu0
  %1592 = vmatprep.mubr.bf16.mxu0 0
  %1593 = vmatmul.mubr.bf16.gmra.mrb[0].mxu0 %v1510
  %v1594 = vpop.f32.mrb[0].mxu0
  %v1595 = vadd.f32 0.0, %v1594
  %v1596 = vpop.f32.mrb[0].mxu0
  %v1597 = vpop.f32.mrb[0].mxu0
  %v1598 = vadd.f32 0.0, %v1597
  %v1599 = vpop.f32.mrb[0].mxu0
  %1600 = vmatprep.mubr.bf16.mxu0 0
  %1601 = vmatmul.mubr.bf16.gmra.mrb[0].mxu0 %v1513
  %v1602 = vpop.f32.mrb[0].mxu0
  %v1603 = vadd.f32 0.0, %v1602
  %v1604 = vpop.f32.mrb[0].mxu0
  %v1605 = vpop.f32.mrb[0].mxu0
  %v1606 = vadd.f32 0.0, %v1605
  %v1607 = vpop.f32.mrb[0].mxu0
  %1608 = vmatprep.mubr.bf16.mxu0 0
  %1609 = vmatmul.mubr.bf16.gmra.mrb[0].mxu0 %v1516
  %v1610 = vpop.f32.mrb[0].mxu0
  %v1611 = vadd.f32 0.0, %v1610
  %v1612 = vpop.f32.mrb[0].mxu0
  %v1613 = vpop.f32.mrb[0].mxu0
  %v1614 = vadd.f32 0.0, %v1613
  %v1615 = vpop.f32.mrb[0].mxu0
  %1616 = vmatprep.mubr.bf16.mxu0 0
  %1617 = vmatmul.mubr.bf16.gmra.mrb[0].mxu0 %v1519
  %v1618 = vpop.f32.mrb[0].mxu0
  %v1619 = vadd.f32 0.0, %v1618
  %v1620 = vpop.f32.mrb[0].mxu0
  %v1621 = vpop.f32.mrb[0].mxu0
  %v1622 = vadd.f32 0.0, %v1621
  %v1623 = vpop.f32.mrb[0].mxu0
  %1624 = vmatprep.mubr.bf16.mxu0 0
  %1625 = vmatmul.mubr.bf16.gmra.mrb[0].mxu0 %v1522
  %v1626 = vpop.f32.mrb[0].mxu0
  %v1627 = vadd.f32 0.0, %v1626
  %v1628 = vpop.f32.mrb[0].mxu0
  %v1629 = vpop.f32.mrb[0].mxu0
  %v1630 = vadd.f32 0.0, %v1629
  %v1631 = vpop.f32.mrb[0].mxu0
  %1632 = vmatprep.mubr.bf16.mxu0 0
  %1633 = vmatmul.mubr.bf16.gmra.mrb[0].mxu0 %v1525
  %v1634 = vpop.f32.mrb[0].mxu0
  %v1635 = vadd.f32 0.0, %v1634
  %v1636 = vpop.f32.mrb[0].mxu0
  %v1637 = vpop.f32.mrb[0].mxu0
  %v1638 = vadd.f32 0.0, %v1637
  %v1639 = vpop.f32.mrb[0].mxu0
  %1640 = vmatprep.mubr.bf16.mxu0 0
  %1641 = vmatmul.mubr.bf16.gmra.mrb[0].mxu0 %v1528
  %v1642 = vpop.f32.mrb[0].mxu0
  %v1643 = vadd.f32 0.0, %v1642
  %v1644 = vpop.f32.mrb[0].mxu0
  %v1645 = vpop.f32.mrb[0].mxu0
  %v1646 = vadd.f32 0.0, %v1645
  %v1647 = vpop.f32.mrb[0].mxu0
  %1648 = vmatprep.mubr.bf16.mxu0 0
  %1649 = vmatmul.mubr.bf16.gmra.mrb[0].mxu0 %v1531
  %v1650 = vpop.f32.mrb[0].mxu0
  %v1651 = vadd.f32 0.0, %v1650
  %v1652 = vpop.f32.mrb[0].mxu0
  %v1653 = vpop.f32.mrb[0].mxu0
  %v1654 = vadd.f32 0.0, %v1653
  %v1655 = vpop.f32.mrb[0].mxu0
  %1656 = vmatprep.mubr.bf16.mxu0 0
  %1657 = vmatmul.mubr.bf16.gmra.mrb[0].mxu0 %v1534
  %v1658 = vpop.f32.mrb[0].mxu0
  %v1659 = vadd.f32 0.0, %v1658
  %v1660 = vpop.f32.mrb[0].mxu0
  %v1661 = vpop.f32.mrb[0].mxu0
  %v1662 = vadd.f32 0.0, %v1661
  %v1663 = vpop.f32.mrb[0].mxu0
  %1664 = vdwg.mxu0
  %v1666 = vlaneseq
  %v1667 = vshrl.u32 %v1666, 7
  %v1668 = vsub.s32 0, %v1667
  %v1669 = vrot.slane %v1455, %v1668
  %v1671 = vadd.f32 %v1669, %v1571
  %v1672 = vadd.f32 %v1669, %v1574
  %v1673 = vadd.f32 %v1669, %v1579
  %v1674 = vadd.f32 %v1669, %v1582
  %v1675 = vadd.f32 %v1669, %v1587
  %v1676 = vadd.f32 %v1669, %v1590
  %v1677 = vadd.f32 %v1669, %v1595
  %v1678 = vadd.f32 %v1669, %v1598
  %v1679 = vadd.f32 %v1669, %v1603
  %v1680 = vadd.f32 %v1669, %v1606
  %v1681 = vadd.f32 %v1669, %v1611
  %v1682 = vadd.f32 %v1669, %v1614
  %v1683 = vadd.f32 %v1669, %v1619
  %v1684 = vadd.f32 %v1669, %v1622
  %v1685 = vadd.f32 %v1669, %v1627
  %v1686 = vadd.f32 %v1669, %v1630
  %v1687 = vadd.f32 %v1669, %v1635
  %v1688 = vadd.f32 %v1669, %v1638
  %v1689 = vadd.f32 %v1669, %v1643
  %v1690 = vadd.f32 %v1669, %v1646
  %v1691 = vadd.f32 %v1669, %v1651
  %v1692 = vadd.f32 %v1669, %v1654
  %v1693 = vadd.f32 %v1669, %v1659
  %v1694 = vadd.f32 %v1669, %v1662
  %v1695 = vld [vmem:[#allocation2 + $0x6] sm:$0xff]
  %v1696 = vld [vmem:[#allocation2 + $0xe] sm:$0xff]
  %v1697 = vld [vmem:[#allocation2 + $0x16] sm:$0xff]
  %v1698 = vld [vmem:[#allocation2 + $0x1e] sm:$0xff]
  %v1699 = vld [vmem:[#allocation2 + $0x26] sm:$0xff]
  %v1700 = vld [vmem:[#allocation2 + $0x2e] sm:$0xff]
  %v1701 = vld [vmem:[#allocation2 + $0x36] sm:$0xff]
  %v1702 = vld [vmem:[#allocation2 + $0x3e] sm:$0xff]
  %v1703 = vld [vmem:[#allocation2 + $0x46] sm:$0xff]
  %v1704 = vld [vmem:[#allocation2 + $0x4e] sm:$0xff]
  %v1705 = vld [vmem:[#allocation2 + $0x56] sm:$0xff]
  %v1706 = vld [vmem:[#allocation2 + $0x5e] sm:$0xff]
  %v1707 = vld [vmem:[#allocation2 + $0x66] sm:$0xff]
  %v1708 = vld [vmem:[#allocation2 + $0x6e] sm:$0xff]
  %v1709 = vld [vmem:[#allocation2 + $0x76] sm:$0xff]
  %v1710 = vld [vmem:[#allocation2 + $0x7e] sm:$0xff]
  %v1711 = vld [vmem:[#allocation2 + $0x86] sm:$0xff]
  %v1712 = vld [vmem:[#allocation2 + $0x8e] sm:$0xff]
  %v1713 = vld [vmem:[#allocation2 + $0x96] sm:$0xff]
  %v1714 = vld [vmem:[#allocation2 + $0x9e] sm:$0xff]
  %v1715 = vld [vmem:[#allocation2 + $0xa6] sm:$0xff]
  %v1716 = vld [vmem:[#allocation2 + $0xae] sm:$0xff]
  %v1717 = vld [vmem:[#allocation2 + $0xb6] sm:$0xff]
  %v1718 = vld [vmem:[#allocation2 + $0xbe] sm:$0xff]
  %v1719 = vpack.c.bf16 %v1696, %v1695
  %v1720 = vpack.c.bf16 %v1698, %v1697
  %v1721 = vpack.c.bf16 %v1700, %v1699
  %v1722 = vpack.c.bf16 %v1702, %v1701
  %v1723 = vpack.c.bf16 %v1704, %v1703
  %v1724 = vpack.c.bf16 %v1706, %v1705
  %v1725 = vpack.c.bf16 %v1708, %v1707
  %v1726 = vpack.c.bf16 %v1710, %v1709
  %v1727 = vpack.c.bf16 %v1712, %v1711
  %v1728 = vpack.c.bf16 %v1714, %v1713
  %v1729 = vpack.c.bf16 %v1716, %v1715
  %v1730 = vpack.c.bf16 %v1718, %v1717
  %s1731 = scalar_lea.vmem %s10, 8
  %v1732 = vld [vmem:[%s1731] sm:$0xf]
  %v1733 = vld [vmem:[%s1731 + $0x4] sm:$0xf]
  %v1736 = vunpack.c.l.b16 %v1732
  %v1737 = vunpack.c.l.b16 %v1733
  %v1738 = vpack.c.b16 %v1737, %v1736
  %v1741 = vsel %vm57, %v1719, 0
  %v1744 = vsel %vm57, %v1720, 0
  %v1747 = vsel %vm57, %v1721, 0
  %v1750 = vsel %vm57, %v1722, 0
  %v1753 = vsel %vm57, %v1723, 0
  %v1756 = vsel %vm57, %v1724, 0
  %v1759 = vsel %vm57, %v1725, 0
  %v1762 = vsel %vm57, %v1726, 0
  %v1765 = vsel %vm57, %v1727, 0
  %v1768 = vsel %vm57, %v1728, 0
  %v1771 = vsel %vm57, %v1729, 0
  %v1774 = vsel %vm57, %v1730, 0
  %1776 = vmatprep.subr.bf16.mxu0 0
  %1777 = vmatpush1.bf16.msra.mxu0 %v1738
  %1778 = vmatprep.subr.bf16.mxu0 0
  %1779 = vmatpush1.bf16.msra.mxu0 0
  %1780 = vmatprep.subr.bf16.mxu0 0
  %1781 = vmatpush1.bf16.msra.mxu0 0
  %1782 = vmatprep.subr.bf16.mxu0 0
  %1783 = vmatpush1.bf16.msra.mxu0 0
  %1784 = vmatprep.subr.bf16.mxu0 0
  %1785 = vmatpush1.bf16.msra.mxu0 0
  %1786 = vmatprep.subr.bf16.mxu0 0
  %1787 = vmatpush1.bf16.msra.mxu0 0
  %1788 = vmatprep.subr.bf16.mxu0 0
  %1789 = vmatpush1.bf16.msra.mxu0 0
  %1790 = vmatprep.subr.bf16.mxu0 0
  %1791 = vmatpush1.bf16.msra.mxu0 0
  %1792 = vmatprep.subr.bf16.mxu0 0
  %1793 = vmatpush1.bf16.msra.mxu0 0
  %1794 = vmatprep.subr.bf16.mxu0 0
  %1795 = vmatpush1.bf16.msra.mxu0 0
  %1796 = vmatprep.subr.bf16.mxu0 0
  %1797 = vmatpush1.bf16.msra.mxu0 0
  %1798 = vmatprep.subr.bf16.mxu0 0
  %1799 = vmatpush1.bf16.msra.mxu0 0
  %1800 = vmatprep.subr.bf16.mxu0 0
  %1801 = vmatpush1.bf16.msra.mxu0 0
  %1802 = vmatprep.subr.bf16.mxu0 0
  %1803 = vmatpush1.bf16.msra.mxu0 0
  %1804 = vmatprep.subr.bf16.mxu0 0
  %1805 = vmatpush1.bf16.msra.mxu0 0
  %1806 = vmatprep.subr.bf16.mxu0 0
  %1807 = vmatpush1.bf16.msra.mxu0 0
  %1808 = vmatprep.mubr.bf16.mxu0 0
  %1809 = vmatmul.mubr.bf16.gmra.mrb[0].mxu0 %v1741
  %v1810 = vpop.f32.mrb[0].mxu0
  %v1811 = vadd.f32 0.0, %v1810
  %v1812 = vpop.f32.mrb[0].mxu0
  %v1813 = vpop.f32.mrb[0].mxu0
  %v1814 = vadd.f32 0.0, %v1813
  %v1815 = vpop.f32.mrb[0].mxu0
  %1816 = vmatprep.mubr.bf16.mxu0 0
  %1817 = vmatmul.mubr.bf16.gmra.mrb[0].mxu0 %v1744
  %v1818 = vpop.f32.mrb[0].mxu0
  %v1819 = vadd.f32 0.0, %v1818
  %v1820 = vpop.f32.mrb[0].mxu0
  %v1821 = vpop.f32.mrb[0].mxu0
  %v1822 = vadd.f32 0.0, %v1821
  %v1823 = vpop.f32.mrb[0].mxu0
  %1824 = vmatprep.mubr.bf16.mxu0 0
  %1825 = vmatmul.mubr.bf16.gmra.mrb[0].mxu0 %v1747
  %v1826 = vpop.f32.mrb[0].mxu0
  %v1827 = vadd.f32 0.0, %v1826
  %v1828 = vpop.f32.mrb[0].mxu0
  %v1829 = vpop.f32.mrb[0].mxu0
  %v1830 = vadd.f32 0.0, %v1829
  %v1831 = vpop.f32.mrb[0].mxu0
  %1832 = vmatprep.mubr.bf16.mxu0 0
  %1833 = vmatmul.mubr.bf16.gmra.mrb[0].mxu0 %v1750
  %v1834 = vpop.f32.mrb[0].mxu0
  %v1835 = vadd.f32 0.0, %v1834
  %v1836 = vpop.f32.mrb[0].mxu0
  %v1837 = vpop.f32.mrb[0].mxu0
  %v1838 = vadd.f32 0.0, %v1837
  %v1839 = vpop.f32.mrb[0].mxu0
  %1840 = vmatprep.mubr.bf16.mxu0 0
  %1841 = vmatmul.mubr.bf16.gmra.mrb[0].mxu0 %v1753
  %v1842 = vpop.f32.mrb[0].mxu0
  %v1843 = vadd.f32 0.0, %v1842
  %v1844 = vpop.f32.mrb[0].mxu0
  %v1845 = vpop.f32.mrb[0].mxu0
  %v1846 = vadd.f32 0.0, %v1845
  %v1847 = vpop.f32.mrb[0].mxu0
  %1848 = vmatprep.mubr.bf16.mxu0 0
  %1849 = vmatmul.mubr.bf16.gmra.mrb[0].mxu0 %v1756
  %v1850 = vpop.f32.mrb[0].mxu0
  %v1851 = vadd.f32 0.0, %v1850
  %v1852 = vpop.f32.mrb[0].mxu0
  %v1853 = vpop.f32.mrb[0].mxu0
  %v1854 = vadd.f32 0.0, %v1853
  %v1855 = vpop.f32.mrb[0].mxu0
  %1856 = vmatprep.mubr.bf16.mxu0 0
  %1857 = vmatmul.mubr.bf16.gmra.mrb[0].mxu0 %v1759
  %v1858 = vpop.f32.mrb[0].mxu0
  %v1859 = vadd.f32 0.0, %v1858
  %v1860 = vpop.f32.mrb[0].mxu0
  %v1861 = vpop.f32.mrb[0].mxu0
  %v1862 = vadd.f32 0.0, %v1861
  %v1863 = vpop.f32.mrb[0].mxu0
  %1864 = vmatprep.mubr.bf16.mxu0 0
  %1865 = vmatmul.mubr.bf16.gmra.mrb[0].mxu0 %v1762
  %v1866 = vpop.f32.mrb[0].mxu0
  %v1867 = vadd.f32 0.0, %v1866
  %v1868 = vpop.f32.mrb[0].mxu0
  %v1869 = vpop.f32.mrb[0].mxu0
  %v1870 = vadd.f32 0.0, %v1869
  %v1871 = vpop.f32.mrb[0].mxu0
  %1872 = vmatprep.mubr.bf16.mxu0 0
  %1873 = vmatmul.mubr.bf16.gmra.mrb[0].mxu0 %v1765
  %v1874 = vpop.f32.mrb[0].mxu0
  %v1875 = vadd.f32 0.0, %v1874
  %v1876 = vpop.f32.mrb[0].mxu0
  %v1877 = vpop.f32.mrb[0].mxu0
  %v1878 = vadd.f32 0.0, %v1877
  %v1879 = vpop.f32.mrb[0].mxu0
  %1880 = vmatprep.mubr.bf16.mxu0 0
  %1881 = vmatmul.mubr.bf16.gmra.mrb[0].mxu0 %v1768
  %v1882 = vpop.f32.mrb[0].mxu0
  %v1883 = vadd.f32 0.0, %v1882
  %v1884 = vpop.f32.mrb[0].mxu0
  %v1885 = vpop.f32.mrb[0].mxu0
  %v1886 = vadd.f32 0.0, %v1885
  %v1887 = vpop.f32.mrb[0].mxu0
  %1888 = vmatprep.mubr.bf16.mxu0 0
  %1889 = vmatmul.mubr.bf16.gmra.mrb[0].mxu0 %v1771
  %v1890 = vpop.f32.mrb[0].mxu0
  %v1891 = vadd.f32 0.0, %v1890
  %v1892 = vpop.f32.mrb[0].mxu0
  %v1893 = vpop.f32.mrb[0].mxu0
  %v1894 = vadd.f32 0.0, %v1893
  %v1895 = vpop.f32.mrb[0].mxu0
  %1896 = vmatprep.mubr.bf16.mxu0 0
  %1897 = vmatmul.mubr.bf16.gmra.mrb[0].mxu0 %v1774
  %v1898 = vpop.f32.mrb[0].mxu0
  %v1899 = vadd.f32 0.0, %v1898
  %v1900 = vpop.f32.mrb[0].mxu0
  %v1901 = vpop.f32.mrb[0].mxu0
  %v1902 = vadd.f32 0.0, %v1901
  %v1903 = vpop.f32.mrb[0].mxu0
  %1904 = vdwg.mxu0
  %v1905 = vadd.f32 %v1671, %v1811
  %v1906 = vadd.f32 %v1672, %v1814
  %v1907 = vadd.f32 %v1673, %v1819
  %v1908 = vadd.f32 %v1674, %v1822
  %v1909 = vadd.f32 %v1675, %v1827
  %v1910 = vadd.f32 %v1676, %v1830
  %v1911 = vadd.f32 %v1677, %v1835
  %v1912 = vadd.f32 %v1678, %v1838
  %v1913 = vadd.f32 %v1679, %v1843
  %v1914 = vadd.f32 %v1680, %v1846
  %v1915 = vadd.f32 %v1681, %v1851
  %v1916 = vadd.f32 %v1682, %v1854
  %v1917 = vadd.f32 %v1683, %v1859
  %v1918 = vadd.f32 %v1684, %v1862
  %v1919 = vadd.f32 %v1685, %v1867
  %v1920 = vadd.f32 %v1686, %v1870
  %v1921 = vadd.f32 %v1687, %v1875
  %v1922 = vadd.f32 %v1688, %v1878
  %v1923 = vadd.f32 %v1689, %v1883
  %v1924 = vadd.f32 %v1690, %v1886
  %v1925 = vadd.f32 %v1691, %v1891
  %v1926 = vadd.f32 %v1692, %v1894
  %v1927 = vadd.f32 %v1693, %v1899
  %v1928 = vadd.f32 %v1694, %v1902
  %v1929 = vld [vmem:[#allocation2 + $0x7] sm:$0xff]
  %v1930 = vld [vmem:[#allocation2 + $0xf] sm:$0xff]
  %v1931 = vld [vmem:[#allocation2 + $0x17] sm:$0xff]
  %v1932 = vld [vmem:[#allocation2 + $0x1f] sm:$0xff]
  %v1933 = vld [vmem:[#allocation2 + $0x27] sm:$0xff]
  %v1934 = vld [vmem:[#allocation2 + $0x2f] sm:$0xff]
  %v1935 = vld [vmem:[#allocation2 + $0x37] sm:$0xff]
  %v1936 = vld [vmem:[#allocation2 + $0x3f] sm:$0xff]
  %v1937 = vld [vmem:[#allocation2 + $0x47] sm:$0xff]
  %v1938 = vld [vmem:[#allocation2 + $0x4f] sm:$0xff]
  %v1939 = vld [vmem:[#allocation2 + $0x57] sm:$0xff]
  %v1940 = vld [vmem:[#allocation2 + $0x5f] sm:$0xff]
  %v1941 = vld [vmem:[#allocation2 + $0x67] sm:$0xff]
  %v1942 = vld [vmem:[#allocation2 + $0x6f] sm:$0xff]
  %v1943 = vld [vmem:[#allocation2 + $0x77] sm:$0xff]
  %v1944 = vld [vmem:[#allocation2 + $0x7f] sm:$0xff]
  %v1945 = vld [vmem:[#allocation2 + $0x87] sm:$0xff]
  %v1946 = vld [vmem:[#allocation2 + $0x8f] sm:$0xff]
  %v1947 = vld [vmem:[#allocation2 + $0x97] sm:$0xff]
  %v1948 = vld [vmem:[#allocation2 + $0x9f] sm:$0xff]
  %v1949 = vld [vmem:[#allocation2 + $0xa7] sm:$0xff]
  %v1950 = vld [vmem:[#allocation2 + $0xaf] sm:$0xff]
  %v1951 = vld [vmem:[#allocation2 + $0xb7] sm:$0xff]
  %v1952 = vld [vmem:[#allocation2 + $0xbf] sm:$0xff]
  %v1953 = vpack.c.bf16 %v1930, %v1929
  %v1954 = vpack.c.bf16 %v1932, %v1931
  %v1955 = vpack.c.bf16 %v1934, %v1933
  %v1956 = vpack.c.bf16 %v1936, %v1935
  %v1957 = vpack.c.bf16 %v1938, %v1937
  %v1958 = vpack.c.bf16 %v1940, %v1939
  %v1959 = vpack.c.bf16 %v1942, %v1941
  %v1960 = vpack.c.bf16 %v1944, %v1943
  %v1961 = vpack.c.bf16 %v1946, %v1945
  %v1962 = vpack.c.bf16 %v1948, %v1947
  %v1963 = vpack.c.bf16 %v1950, %v1949
  %v1964 = vpack.c.bf16 %v1952, %v1951
  %s1965 = scalar_lea.vmem %s10, 16
  %v1966 = vld [vmem:[%s1965] sm:$0xf]
  %v1967 = vld [vmem:[%s1965 + $0x4] sm:$0xf]
  %v1970 = vunpack.c.l.b16 %v1966
  %v1971 = vunpack.c.l.b16 %v1967
  %v1972 = vpack.c.b16 %v1971, %v1970
  %v1975 = vsel %vm57, %v1953, 0
  %v1978 = vsel %vm57, %v1954, 0
  %v1981 = vsel %vm57, %v1955, 0
  %v1984 = vsel %vm57, %v1956, 0
  %v1987 = vsel %vm57, %v1957, 0
  %v1990 = vsel %vm57, %v1958, 0
  %v1993 = vsel %vm57, %v1959, 0
  %v1996 = vsel %vm57, %v1960, 0
  %v1999 = vsel %vm57, %v1961, 0
  %v2002 = vsel %vm57, %v1962, 0
  %v2005 = vsel %vm57, %v1963, 0
  %v2008 = vsel %vm57, %v1964, 0
  %2010 = vmatprep.subr.bf16.mxu0 0
  %2011 = vmatpush1.bf16.msra.mxu0 %v1972
  %2012 = vmatprep.subr.bf16.mxu0 0
  %2013 = vmatpush1.bf16.msra.mxu0 0
  %2014 = vmatprep.subr.bf16.mxu0 0
  %2015 = vmatpush1.bf16.msra.mxu0 0
  %2016 = vmatprep.subr.bf16.mxu0 0
  %2017 = vmatpush1.bf16.msra.mxu0 0
  %2018 = vmatprep.subr.bf16.mxu0 0
  %2019 = vmatpush1.bf16.msra.mxu0 0
  %2020 = vmatprep.subr.bf16.mxu0 0
  %2021 = vmatpush1.bf16.msra.mxu0 0
  %2022 = vmatprep.subr.bf16.mxu0 0
  %2023 = vmatpush1.bf16.msra.mxu0 0
  %2024 = vmatprep.subr.bf16.mxu0 0
  %2025 = vmatpush1.bf16.msra.mxu0 0
  %2026 = vmatprep.subr.bf16.mxu0 0
  %2027 = vmatpush1.bf16.msra.mxu0 0
  %2028 = vmatprep.subr.bf16.mxu0 0
  %2029 = vmatpush1.bf16.msra.mxu0 0
  %2030 = vmatprep.subr.bf16.mxu0 0
  %2031 = vmatpush1.bf16.msra.mxu0 0
  %2032 = vmatprep.subr.bf16.mxu0 0
  %2033 = vmatpush1.bf16.msra.mxu0 0
  %2034 = vmatprep.subr.bf16.mxu0 0
  %2035 = vmatpush1.bf16.msra.mxu0 0
  %2036 = vmatprep.subr.bf16.mxu0 0
  %2037 = vmatpush1.bf16.msra.mxu0 0
  %2038 = vmatprep.subr.bf16.mxu0 0
  %2039 = vmatpush1.bf16.msra.mxu0 0
  %2040 = vmatprep.subr.bf16.mxu0 0
  %2041 = vmatpush1.bf16.msra.mxu0 0
  %2042 = vmatprep.mubr.bf16.mxu0 0
  %2043 = vmatmul.mubr.bf16.gmra.mrb[0].mxu0 %v1975
  %v2044 = vpop.f32.mrb[0].mxu0
  %v2045 = vadd.f32 0.0, %v2044
  %v2046 = vpop.f32.mrb[0].mxu0
  %v2047 = vpop.f32.mrb[0].mxu0
  %v2048 = vadd.f32 0.0, %v2047
  %v2049 = vpop.f32.mrb[0].mxu0
  %2050 = vmatprep.mubr.bf16.mxu0 0
  %2051 = vmatmul.mubr.bf16.gmra.mrb[0].mxu0 %v1978
  %v2052 = vpop.f32.mrb[0].mxu0
  %v2053 = vadd.f32 0.0, %v2052
  %v2054 = vpop.f32.mrb[0].mxu0
  %v2055 = vpop.f32.mrb[0].mxu0
  %v2056 = vadd.f32 0.0, %v2055
  %v2057 = vpop.f32.mrb[0].mxu0
  %2058 = vmatprep.mubr.bf16.mxu0 0
  %2059 = vmatmul.mubr.bf16.gmra.mrb[0].mxu0 %v1981
  %v2060 = vpop.f32.mrb[0].mxu0
  %v2061 = vadd.f32 0.0, %v2060
  %v2062 = vpop.f32.mrb[0].mxu0
  %v2063 = vpop.f32.mrb[0].mxu0
  %v2064 = vadd.f32 0.0, %v2063
  %v2065 = vpop.f32.mrb[0].mxu0
  %2066 = vmatprep.mubr.bf16.mxu0 0
  %2067 = vmatmul.mubr.bf16.gmra.mrb[0].mxu0 %v1984
  %v2068 = vpop.f32.mrb[0].mxu0
  %v2069 = vadd.f32 0.0, %v2068
  %v2070 = vpop.f32.mrb[0].mxu0
  %v2071 = vpop.f32.mrb[0].mxu0
  %v2072 = vadd.f32 0.0, %v2071
  %v2073 = vpop.f32.mrb[0].mxu0
  %2074 = vmatprep.mubr.bf16.mxu0 0
  %2075 = vmatmul.mubr.bf16.gmra.mrb[0].mxu0 %v1987
  %v2076 = vpop.f32.mrb[0].mxu0
  %v2077 = vadd.f32 0.0, %v2076
  %v2078 = vpop.f32.mrb[0].mxu0
  %v2079 = vpop.f32.mrb[0].mxu0
  %v2080 = vadd.f32 0.0, %v2079
  %v2081 = vpop.f32.mrb[0].mxu0
  %2082 = vmatprep.mubr.bf16.mxu0 0
  %2083 = vmatmul.mubr.bf16.gmra.mrb[0].mxu0 %v1990
  %v2084 = vpop.f32.mrb[0].mxu0
  %v2085 = vadd.f32 0.0, %v2084
  %v2086 = vpop.f32.mrb[0].mxu0
  %v2087 = vpop.f32.mrb[0].mxu0
  %v2088 = vadd.f32 0.0, %v2087
  %v2089 = vpop.f32.mrb[0].mxu0
  %2090 = vmatprep.mubr.bf16.mxu0 0
  %2091 = vmatmul.mubr.bf16.gmra.mrb[0].mxu0 %v1993
  %v2092 = vpop.f32.mrb[0].mxu0
  %v2093 = vadd.f32 0.0, %v2092
  %v2094 = vpop.f32.mrb[0].mxu0
  %v2095 = vpop.f32.mrb[0].mxu0
  %v2096 = vadd.f32 0.0, %v2095
  %v2097 = vpop.f32.mrb[0].mxu0
  %2098 = vmatprep.mubr.bf16.mxu0 0
  %2099 = vmatmul.mubr.bf16.gmra.mrb[0].mxu0 %v1996
  %v2100 = vpop.f32.mrb[0].mxu0
  %v2101 = vadd.f32 0.0, %v2100
  %v2102 = vpop.f32.mrb[0].mxu0
  %v2103 = vpop.f32.mrb[0].mxu0
  %v2104 = vadd.f32 0.0, %v2103
  %v2105 = vpop.f32.mrb[0].mxu0
  %2106 = vmatprep.mubr.bf16.mxu0 0
  %2107 = vmatmul.mubr.bf16.gmra.mrb[0].mxu0 %v1999
  %v2108 = vpop.f32.mrb[0].mxu0
  %v2109 = vadd.f32 0.0, %v2108
  %v2110 = vpop.f32.mrb[0].mxu0
  %v2111 = vpop.f32.mrb[0].mxu0
  %v2112 = vadd.f32 0.0, %v2111
  %v2113 = vpop.f32.mrb[0].mxu0
  %2114 = vmatprep.mubr.bf16.mxu0 0
  %2115 = vmatmul.mubr.bf16.gmra.mrb[0].mxu0 %v2002
  %v2116 = vpop.f32.mrb[0].mxu0
  %v2117 = vadd.f32 0.0, %v2116
  %v2118 = vpop.f32.mrb[0].mxu0
  %v2119 = vpop.f32.mrb[0].mxu0
  %v2120 = vadd.f32 0.0, %v2119
  %v2121 = vpop.f32.mrb[0].mxu0
  %2122 = vmatprep.mubr.bf16.mxu0 0
  %2123 = vmatmul.mubr.bf16.gmra.mrb[0].mxu0 %v2005
  %v2124 = vpop.f32.mrb[0].mxu0
  %v2125 = vadd.f32 0.0, %v2124
  %v2126 = vpop.f32.mrb[0].mxu0
  %v2127 = vpop.f32.mrb[0].mxu0
  %v2128 = vadd.f32 0.0, %v2127
  %v2129 = vpop.f32.mrb[0].mxu0
  %2130 = vmatprep.mubr.bf16.mxu0 0
  %2131 = vmatmul.mubr.bf16.gmra.mrb[0].mxu0 %v2008
  %v2132 = vpop.f32.mrb[0].mxu0
  %v2133 = vadd.f32 0.0, %v2132
  %v2134 = vpop.f32.mrb[0].mxu0
  %v2135 = vpop.f32.mrb[0].mxu0
  %v2136 = vadd.f32 0.0, %v2135
  %v2137 = vpop.f32.mrb[0].mxu0
  %2138 = vdwg.mxu0
  %v2139 = vadd.f32 %v1905, %v2045
  %v2140 = vadd.f32 %v1906, %v2048
  %v2141 = vadd.f32 %v1907, %v2053
  %v2142 = vadd.f32 %v1908, %v2056
  %v2143 = vadd.f32 %v1909, %v2061
  %v2144 = vadd.f32 %v1910, %v2064
  %v2145 = vadd.f32 %v1911, %v2069
  %v2146 = vadd.f32 %v1912, %v2072
  %v2147 = vadd.f32 %v1913, %v2077
  %v2148 = vadd.f32 %v1914, %v2080
  %v2149 = vadd.f32 %v1915, %v2085
  %v2150 = vadd.f32 %v1916, %v2088
  %v2151 = vadd.f32 %v1917, %v2093
  %v2152 = vadd.f32 %v1918, %v2096
  %v2153 = vadd.f32 %v1919, %v2101
  %v2154 = vadd.f32 %v1920, %v2104
  %v2155 = vadd.f32 %v1921, %v2109
  %v2156 = vadd.f32 %v1922, %v2112
  %v2157 = vadd.f32 %v1923, %v2117
  %v2158 = vadd.f32 %v1924, %v2120
  %v2159 = vadd.f32 %v1925, %v2125
  %v2160 = vadd.f32 %v1926, %v2128
  %v2161 = vadd.f32 %v1927, %v2133
  %v2162 = vadd.f32 %v1928, %v2136
  %v2163 = vld [vmem:[#allocation2 + $0xf] sm:$0xff]
  %v2164 = vld [vmem:[#allocation2 + $0x17] sm:$0xff]
  %v2165 = vld [vmem:[#allocation2 + $0x1f] sm:$0xff]
  %v2166 = vld [vmem:[#allocation2 + $0x27] sm:$0xff]
  %v2167 = vld [vmem:[#allocation2 + $0x2f] sm:$0xff]
  %v2168 = vld [vmem:[#allocation2 + $0x37] sm:$0xff]
  %v2169 = vld [vmem:[#allocation2 + $0x3f] sm:$0xff]
  %v2170 = vld [vmem:[#allocation2 + $0x47] sm:$0xff]
  %v2171 = vld [vmem:[#allocation2 + $0x4f] sm:$0xff]
  %v2172 = vld [vmem:[#allocation2 + $0x57] sm:$0xff]
  %v2173 = vld [vmem:[#allocation2 + $0x5f] sm:$0xff]
  %v2174 = vld [vmem:[#allocation2 + $0x67] sm:$0xff]
  %v2175 = vld [vmem:[#allocation2 + $0x6f] sm:$0xff]
  %v2176 = vld [vmem:[#allocation2 + $0x77] sm:$0xff]
  %v2177 = vld [vmem:[#allocation2 + $0x7f] sm:$0xff]
  %v2178 = vld [vmem:[#allocation2 + $0x87] sm:$0xff]
  %v2179 = vld [vmem:[#allocation2 + $0x8f] sm:$0xff]
  %v2180 = vld [vmem:[#allocation2 + $0x97] sm:$0xff]
  %v2181 = vld [vmem:[#allocation2 + $0x9f] sm:$0xff]
  %v2182 = vld [vmem:[#allocation2 + $0xa7] sm:$0xff]
  %v2183 = vld [vmem:[#allocation2 + $0xaf] sm:$0xff]
  %v2184 = vld [vmem:[#allocation2 + $0xb7] sm:$0xff]
  %v2185 = vld [vmem:[#allocation2 + $0xbf] sm:$0xff]
  %v2186 = vld [vmem:[#allocation2 + $0xc7] sm:$0xff]
  %v2187 = vpack.c.bf16 %v2164, %v2163
  %v2188 = vpack.c.bf16 %v2166, %v2165
  %v2189 = vpack.c.bf16 %v2168, %v2167
  %v2190 = vpack.c.bf16 %v2170, %v2169
  %v2191 = vpack.c.bf16 %v2172, %v2171
  %v2192 = vpack.c.bf16 %v2174, %v2173
  %v2193 = vpack.c.bf16 %v2176, %v2175
  %v2194 = vpack.c.bf16 %v2178, %v2177
  %v2195 = vpack.c.bf16 %v2180, %v2179
  %v2196 = vpack.c.bf16 %v2182, %v2181
  %v2197 = vpack.c.bf16 %v2184, %v2183
  %v2198 = vpack.c.bf16 %v2186, %v2185
  %s2199 = scalar_lea.vmem %s10, 24
  %v2200 = vld [vmem:[%s2199] sm:$0xf]
  %v2201 = vld [vmem:[%s2199 + $0x4] sm:$0xf]
  %v2204 = vunpack.c.l.b16 %v2200
  %v2205 = vunpack.c.l.b16 %v2201
  %v2206 = vpack.c.b16 %v2205, %v2204
  %v2209 = vsel %vm57, %v2187, 0
  %v2212 = vsel %vm57, %v2188, 0
  %v2215 = vsel %vm57, %v2189, 0
  %v2218 = vsel %vm57, %v2190, 0
  %v2221 = vsel %vm57, %v2191, 0
  %v2224 = vsel %vm57, %v2192, 0
  %v2227 = vsel %vm57, %v2193, 0
  %v2230 = vsel %vm57, %v2194, 0
  %v2233 = vsel %vm57, %v2195, 0
  %v2236 = vsel %vm57, %v2196, 0
  %v2239 = vsel %vm57, %v2197, 0
  %v2242 = vsel %vm57, %v2198, 0
  %2244 = vmatprep.subr.bf16.mxu0 0
  %2245 = vmatpush1.bf16.msra.mxu0 %v2206
  %2246 = vmatprep.subr.bf16.mxu0 0
  %2247 = vmatpush1.bf16.msra.mxu0 0
  %2248 = vmatprep.subr.bf16.mxu0 0
  %2249 = vmatpush1.bf16.msra.mxu0 0
  %2250 = vmatprep.subr.bf16.mxu0 0
  %2251 = vmatpush1.bf16.msra.mxu0 0
  %2252 = vmatprep.subr.bf16.mxu0 0
  %2253 = vmatpush1.bf16.msra.mxu0 0
  %2254 = vmatprep.subr.bf16.mxu0 0
  %2255 = vmatpush1.bf16.msra.mxu0 0
  %2256 = vmatprep.subr.bf16.mxu0 0
  %2257 = vmatpush1.bf16.msra.mxu0 0
  %2258 = vmatprep.subr.bf16.mxu0 0
  %2259 = vmatpush1.bf16.msra.mxu0 0
  %2260 = vmatprep.subr.bf16.mxu0 0
  %2261 = vmatpush1.bf16.msra.mxu0 0
  %2262 = vmatprep.subr.bf16.mxu0 0
  %2263 = vmatpush1.bf16.msra.mxu0 0
  %2264 = vmatprep.subr.bf16.mxu0 0
  %2265 = vmatpush1.bf16.msra.mxu0 0
  %2266 = vmatprep.subr.bf16.mxu0 0
  %2267 = vmatpush1.bf16.msra.mxu0 0
  %2268 = vmatprep.subr.bf16.mxu0 0
  %2269 = vmatpush1.bf16.msra.mxu0 0
  %2270 = vmatprep.subr.bf16.mxu0 0
  %2271 = vmatpush1.bf16.msra.mxu0 0
  %2272 = vmatprep.subr.bf16.mxu0 0
  %2273 = vmatpush1.bf16.msra.mxu0 0
  %2274 = vmatprep.subr.bf16.mxu0 0
  %2275 = vmatpush1.bf16.msra.mxu0 0
  %2276 = vmatprep.mubr.bf16.mxu0 0
  %2277 = vmatmul.mubr.bf16.gmra.mrb[0].mxu0 %v2209
  %v2278 = vpop.f32.mrb[0].mxu0
  %v2279 = vadd.f32 0.0, %v2278
  %v2280 = vpop.f32.mrb[0].mxu0
  %v2281 = vpop.f32.mrb[0].mxu0
  %v2282 = vadd.f32 0.0, %v2281
  %v2283 = vpop.f32.mrb[0].mxu0
  %2284 = vmatprep.mubr.bf16.mxu0 0
  %2285 = vmatmul.mubr.bf16.gmra.mrb[0].mxu0 %v2212
  %v2286 = vpop.f32.mrb[0].mxu0
  %v2287 = vadd.f32 0.0, %v2286
  %v2288 = vpop.f32.mrb[0].mxu0
  %v2289 = vpop.f32.mrb[0].mxu0
  %v2290 = vadd.f32 0.0, %v2289
  %v2291 = vpop.f32.mrb[0].mxu0
  %2292 = vmatprep.mubr.bf16.mxu0 0
  %2293 = vmatmul.mubr.bf16.gmra.mrb[0].mxu0 %v2215
  %v2294 = vpop.f32.mrb[0].mxu0
  %v2295 = vadd.f32 0.0, %v2294
  %v2296 = vpop.f32.mrb[0].mxu0
  %v2297 = vpop.f32.mrb[0].mxu0
  %v2298 = vadd.f32 0.0, %v2297
  %v2299 = vpop.f32.mrb[0].mxu0
  %2300 = vmatprep.mubr.bf16.mxu0 0
  %2301 = vmatmul.mubr.bf16.gmra.mrb[0].mxu0 %v2218
  %v2302 = vpop.f32.mrb[0].mxu0
  %v2303 = vadd.f32 0.0, %v2302
  %v2304 = vpop.f32.mrb[0].mxu0
  %v2305 = vpop.f32.mrb[0].mxu0
  %v2306 = vadd.f32 0.0, %v2305
  %v2307 = vpop.f32.mrb[0].mxu0
  %2308 = vmatprep.mubr.bf16.mxu0 0
  %2309 = vmatmul.mubr.bf16.gmra.mrb[0].mxu0 %v2221
  %v2310 = vpop.f32.mrb[0].mxu0
  %v2311 = vadd.f32 0.0, %v2310
  %v2312 = vpop.f32.mrb[0].mxu0
  %v2313 = vpop.f32.mrb[0].mxu0
  %v2314 = vadd.f32 0.0, %v2313
  %v2315 = vpop.f32.mrb[0].mxu0
  %2316 = vmatprep.mubr.bf16.mxu0 0
  %2317 = vmatmul.mubr.bf16.gmra.mrb[0].mxu0 %v2224
  %v2318 = vpop.f32.mrb[0].mxu0
  %v2319 = vadd.f32 0.0, %v2318
  %v2320 = vpop.f32.mrb[0].mxu0
  %v2321 = vpop.f32.mrb[0].mxu0
  %v2322 = vadd.f32 0.0, %v2321
  %v2323 = vpop.f32.mrb[0].mxu0
  %2324 = vmatprep.mubr.bf16.mxu0 0
  %2325 = vmatmul.mubr.bf16.gmra.mrb[0].mxu0 %v2227
  %v2326 = vpop.f32.mrb[0].mxu0
  %v2327 = vadd.f32 0.0, %v2326
  %v2328 = vpop.f32.mrb[0].mxu0
  %v2329 = vpop.f32.mrb[0].mxu0
  %v2330 = vadd.f32 0.0, %v2329
  %v2331 = vpop.f32.mrb[0].mxu0
  %2332 = vmatprep.mubr.bf16.mxu0 0
  %2333 = vmatmul.mubr.bf16.gmra.mrb[0].mxu0 %v2230
  %v2334 = vpop.f32.mrb[0].mxu0
  %v2335 = vadd.f32 0.0, %v2334
  %v2336 = vpop.f32.mrb[0].mxu0
  %v2337 = vpop.f32.mrb[0].mxu0
  %v2338 = vadd.f32 0.0, %v2337
  %v2339 = vpop.f32.mrb[0].mxu0
  %2340 = vmatprep.mubr.bf16.mxu0 0
  %2341 = vmatmul.mubr.bf16.gmra.mrb[0].mxu0 %v2233
  %v2342 = vpop.f32.mrb[0].mxu0
  %v2343 = vadd.f32 0.0, %v2342
  %v2344 = vpop.f32.mrb[0].mxu0
  %v2345 = vpop.f32.mrb[0].mxu0
  %v2346 = vadd.f32 0.0, %v2345
  %v2347 = vpop.f32.mrb[0].mxu0
  %2348 = vmatprep.mubr.bf16.mxu0 0
  %2349 = vmatmul.mubr.bf16.gmra.mrb[0].mxu0 %v2236
  %v2350 = vpop.f32.mrb[0].mxu0
  %v2351 = vadd.f32 0.0, %v2350
  %v2352 = vpop.f32.mrb[0].mxu0
  %v2353 = vpop.f32.mrb[0].mxu0
  %v2354 = vadd.f32 0.0, %v2353
  %v2355 = vpop.f32.mrb[0].mxu0
  %2356 = vmatprep.mubr.bf16.mxu0 0
  %2357 = vmatmul.mubr.bf16.gmra.mrb[0].mxu0 %v2239
  %v2358 = vpop.f32.mrb[0].mxu0
  %v2359 = vadd.f32 0.0, %v2358
  %v2360 = vpop.f32.mrb[0].mxu0
  %v2361 = vpop.f32.mrb[0].mxu0
  %v2362 = vadd.f32 0.0, %v2361
  %v2363 = vpop.f32.mrb[0].mxu0
  %2364 = vmatprep.mubr.bf16.mxu0 0
  %2365 = vmatmul.mubr.bf16.gmra.mrb[0].mxu0 %v2242
  %v2366 = vpop.f32.mrb[0].mxu0
  %v2367 = vadd.f32 0.0, %v2366
  %v2368 = vpop.f32.mrb[0].mxu0
  %v2369 = vpop.f32.mrb[0].mxu0
  %v2370 = vadd.f32 0.0, %v2369
  %v2371 = vpop.f32.mrb[0].mxu0
  %2372 = vdwg.mxu0
  %v2373 = vadd.f32 %v2139, %v2279
  %v2374 = vadd.f32 %v2140, %v2282
  %v2375 = vadd.f32 %v2141, %v2287
  %v2376 = vadd.f32 %v2142, %v2290
  %v2377 = vadd.f32 %v2143, %v2295
  %v2378 = vadd.f32 %v2144, %v2298
  %v2379 = vadd.f32 %v2145, %v2303
  %v2380 = vadd.f32 %v2146, %v2306
  %v2381 = vadd.f32 %v2147, %v2311
  %v2382 = vadd.f32 %v2148, %v2314
  %v2383 = vadd.f32 %v2149, %v2319
  %v2384 = vadd.f32 %v2150, %v2322
  %v2385 = vadd.f32 %v2151, %v2327
  %v2386 = vadd.f32 %v2152, %v2330
  %v2387 = vadd.f32 %v2153, %v2335
  %v2388 = vadd.f32 %v2154, %v2338
  %v2389 = vadd.f32 %v2155, %v2343
  %v2390 = vadd.f32 %v2156, %v2346
  %v2391 = vadd.f32 %v2157, %v2351
  %v2392 = vadd.f32 %v2158, %v2354
  %v2393 = vadd.f32 %v2159, %v2359
  %v2394 = vadd.f32 %v2160, %v2362
  %v2395 = vadd.f32 %v2161, %v2367
  %v2396 = vadd.f32 %v2162, %v2370
  %v2397 = vld [vmem:[#allocation2 + $0x10] sm:$0xff]
  %v2398 = vld [vmem:[#allocation2 + $0x18] sm:$0xff]
  %v2399 = vld [vmem:[#allocation2 + $0x20] sm:$0xff]
  %v2400 = vld [vmem:[#allocation2 + $0x28] sm:$0xff]
  %v2401 = vld [vmem:[#allocation2 + $0x30] sm:$0xff]
  %v2402 = vld [vmem:[#allocation2 + $0x38] sm:$0xff]
  %v2403 = vld [vmem:[#allocation2 + $0x40] sm:$0xff]
  %v2404 = vld [vmem:[#allocation2 + $0x48] sm:$0xff]
  %v2405 = vld [vmem:[#allocation2 + $0x50] sm:$0xff]
  %v2406 = vld [vmem:[#allocation2 + $0x58] sm:$0xff]
  %v2407 = vld [vmem:[#allocation2 + $0x60] sm:$0xff]
  %v2408 = vld [vmem:[#allocation2 + $0x68] sm:$0xff]
  %v2409 = vld [vmem:[#allocation2 + $0x70] sm:$0xff]
  %v2410 = vld [vmem:[#allocation2 + $0x78] sm:$0xff]
  %v2411 = vld [vmem:[#allocation2 + $0x80] sm:$0xff]
  %v2412 = vld [vmem:[#allocation2 + $0x88] sm:$0xff]
  %v2413 = vld [vmem:[#allocation2 + $0x90] sm:$0xff]
  %v2414 = vld [vmem:[#allocation2 + $0x98] sm:$0xff]
  %v2415 = vld [vmem:[#allocation2 + $0xa0] sm:$0xff]
  %v2416 = vld [vmem:[#allocation2 + $0xa8] sm:$0xff]
  %v2417 = vld [vmem:[#allocation2 + $0xb0] sm:$0xff]
  %v2418 = vld [vmem:[#allocation2 + $0xb8] sm:$0xff]
  %v2419 = vld [vmem:[#allocation2 + $0xc0] sm:$0xff]
  %v2420 = vld [vmem:[#allocation2 + $0xc8] sm:$0xff]
  %v2421 = vpack.c.bf16 %v2398, %v2397
  %v2422 = vpack.c.bf16 %v2400, %v2399
  %v2423 = vpack.c.bf16 %v2402, %v2401
  %v2424 = vpack.c.bf16 %v2404, %v2403
  %v2425 = vpack.c.bf16 %v2406, %v2405
  %v2426 = vpack.c.bf16 %v2408, %v2407
  %v2427 = vpack.c.bf16 %v2410, %v2409
  %v2428 = vpack.c.bf16 %v2412, %v2411
  %v2429 = vpack.c.bf16 %v2414, %v2413
  %v2430 = vpack.c.bf16 %v2416, %v2415
  %v2431 = vpack.c.bf16 %v2418, %v2417
  %v2432 = vpack.c.bf16 %v2420, %v2419
  %s2433 = scalar_lea.vmem %s10, 32
  %v2434 = vld [vmem:[%s2433] sm:$0xf]
  %v2435 = vld [vmem:[%s2433 + $0x4] sm:$0xf]
  %v2438 = vunpack.c.l.b16 %v2434
  %v2439 = vunpack.c.l.b16 %v2435
  %v2440 = vpack.c.b16 %v2439, %v2438
  %v2443 = vsel %vm57, %v2421, 0
  %v2446 = vsel %vm57, %v2422, 0
  %v2449 = vsel %vm57, %v2423, 0
  %v2452 = vsel %vm57, %v2424, 0
  %v2455 = vsel %vm57, %v2425, 0
  %v2458 = vsel %vm57, %v2426, 0
  %v2461 = vsel %vm57, %v2427, 0
  %v2464 = vsel %vm57, %v2428, 0
  %v2467 = vsel %vm57, %v2429, 0
  %v2470 = vsel %vm57, %v2430, 0
  %v2473 = vsel %vm57, %v2431, 0
  %v2476 = vsel %vm57, %v2432, 0
  %2478 = vmatprep.subr.bf16.mxu0 0
  %2479 = vmatpush1.bf16.msra.mxu0 %v2440
  %2480 = vmatprep.subr.bf16.mxu0 0
  %2481 = vmatpush1.bf16.msra.mxu0 0
  %2482 = vmatprep.subr.bf16.mxu0 0
  %2483 = vmatpush1.bf16.msra.mxu0 0
  %2484 = vmatprep.subr.bf16.mxu0 0
  %2485 = vmatpush1.bf16.msra.mxu0 0
  %2486 = vmatprep.subr.bf16.mxu0 0
  %2487 = vmatpush1.bf16.msra.mxu0 0
  %2488 = vmatprep.subr.bf16.mxu0 0
  %2489 = vmatpush1.bf16.msra.mxu0 0
  %2490 = vmatprep.subr.bf16.mxu0 0
  %2491 = vmatpush1.bf16.msra.mxu0 0
  %2492 = vmatprep.subr.bf16.mxu0 0
  %2493 = vmatpush1.bf16.msra.mxu0 0
  %2494 = vmatprep.subr.bf16.mxu0 0
  %2495 = vmatpush1.bf16.msra.mxu0 0
  %2496 = vmatprep.subr.bf16.mxu0 0
  %2497 = vmatpush1.bf16.msra.mxu0 0
  %2498 = vmatprep.subr.bf16.mxu0 0
  %2499 = vmatpush1.bf16.msra.mxu0 0
  %2500 = vmatprep.subr.bf16.mxu0 0
  %2501 = vmatpush1.bf16.msra.mxu0 0
  %2502 = vmatprep.subr.bf16.mxu0 0
  %2503 = vmatpush1.bf16.msra.mxu0 0
  %2504 = vmatprep.subr.bf16.mxu0 0
  %2505 = vmatpush1.bf16.msra.mxu0 0
  %2506 = vmatprep.subr.bf16.mxu0 0
  %2507 = vmatpush1.bf16.msra.mxu0 0
  %2508 = vmatprep.subr.bf16.mxu0 0
  %2509 = vmatpush1.bf16.msra.mxu0 0
  %2510 = vmatprep.mubr.bf16.mxu0 0
  %2511 = vmatmul.mubr.bf16.gmra.mrb[0].mxu0 %v2443
  %v2512 = vpop.f32.mrb[0].mxu0
  %v2513 = vadd.f32 0.0, %v2512
  %v2514 = vpop.f32.mrb[0].mxu0
  %v2515 = vpop.f32.mrb[0].mxu0
  %v2516 = vadd.f32 0.0, %v2515
  %v2517 = vpop.f32.mrb[0].mxu0
  %2518 = vmatprep.mubr.bf16.mxu0 0
  %2519 = vmatmul.mubr.bf16.gmra.mrb[0].mxu0 %v2446
  %v2520 = vpop.f32.mrb[0].mxu0
  %v2521 = vadd.f32 0.0, %v2520
  %v2522 = vpop.f32.mrb[0].mxu0
  %v2523 = vpop.f32.mrb[0].mxu0
  %v2524 = vadd.f32 0.0, %v2523
  %v2525 = vpop.f32.mrb[0].mxu0
  %2526 = vmatprep.mubr.bf16.mxu0 0
  %2527 = vmatmul.mubr.bf16.gmra.mrb[0].mxu0 %v2449
  %v2528 = vpop.f32.mrb[0].mxu0
  %v2529 = vadd.f32 0.0, %v2528
  %v2530 = vpop.f32.mrb[0].mxu0
  %v2531 = vpop.f32.mrb[0].mxu0
  %v2532 = vadd.f32 0.0, %v2531
  %v2533 = vpop.f32.mrb[0].mxu0
  %2534 = vmatprep.mubr.bf16.mxu0 0
  %2535 = vmatmul.mubr.bf16.gmra.mrb[0].mxu0 %v2452
  %v2536 = vpop.f32.mrb[0].mxu0
  %v2537 = vadd.f32 0.0, %v2536
  %v2538 = vpop.f32.mrb[0].mxu0
  %v2539 = vpop.f32.mrb[0].mxu0
  %v2540 = vadd.f32 0.0, %v2539
  %v2541 = vpop.f32.mrb[0].mxu0
  %2542 = vmatprep.mubr.bf16.mxu0 0
  %2543 = vmatmul.mubr.bf16.gmra.mrb[0].mxu0 %v2455
  %v2544 = vpop.f32.mrb[0].mxu0
  %v2545 = vadd.f32 0.0, %v2544
  %v2546 = vpop.f32.mrb[0].mxu0
  %v2547 = vpop.f32.mrb[0].mxu0
  %v2548 = vadd.f32 0.0, %v2547
  %v2549 = vpop.f32.mrb[0].mxu0
  %2550 = vmatprep.mubr.bf16.mxu0 0
  %2551 = vmatmul.mubr.bf16.gmra.mrb[0].mxu0 %v2458
  %v2552 = vpop.f32.mrb[0].mxu0
  %v2553 = vadd.f32 0.0, %v2552
  %v2554 = vpop.f32.mrb[0].mxu0
  %v2555 = vpop.f32.mrb[0].mxu0
  %v2556 = vadd.f32 0.0, %v2555
  %v2557 = vpop.f32.mrb[0].mxu0
  %2558 = vmatprep.mubr.bf16.mxu0 0
  %2559 = vmatmul.mubr.bf16.gmra.mrb[0].mxu0 %v2461
  %v2560 = vpop.f32.mrb[0].mxu0
  %v2561 = vadd.f32 0.0, %v2560
  %v2562 = vpop.f32.mrb[0].mxu0
  %v2563 = vpop.f32.mrb[0].mxu0
  %v2564 = vadd.f32 0.0, %v2563
  %v2565 = vpop.f32.mrb[0].mxu0
  %2566 = vmatprep.mubr.bf16.mxu0 0
  %2567 = vmatmul.mubr.bf16.gmra.mrb[0].mxu0 %v2464
  %v2568 = vpop.f32.mrb[0].mxu0
  %v2569 = vadd.f32 0.0, %v2568
  %v2570 = vpop.f32.mrb[0].mxu0
  %v2571 = vpop.f32.mrb[0].mxu0
  %v2572 = vadd.f32 0.0, %v2571
  %v2573 = vpop.f32.mrb[0].mxu0
  %2574 = vmatprep.mubr.bf16.mxu0 0
  %2575 = vmatmul.mubr.bf16.gmra.mrb[0].mxu0 %v2467
  %v2576 = vpop.f32.mrb[0].mxu0
  %v2577 = vadd.f32 0.0, %v2576
  %v2578 = vpop.f32.mrb[0].mxu0
  %v2579 = vpop.f32.mrb[0].mxu0
  %v2580 = vadd.f32 0.0, %v2579
  %v2581 = vpop.f32.mrb[0].mxu0
  %2582 = vmatprep.mubr.bf16.mxu0 0
  %2583 = vmatmul.mubr.bf16.gmra.mrb[0].mxu0 %v2470
  %v2584 = vpop.f32.mrb[0].mxu0
  %v2585 = vadd.f32 0.0, %v2584
  %v2586 = vpop.f32.mrb[0].mxu0
  %v2587 = vpop.f32.mrb[0].mxu0
  %v2588 = vadd.f32 0.0, %v2587
  %v2589 = vpop.f32.mrb[0].mxu0
  %2590 = vmatprep.mubr.bf16.mxu0 0
  %2591 = vmatmul.mubr.bf16.gmra.mrb[0].mxu0 %v2473
  %v2592 = vpop.f32.mrb[0].mxu0
  %v2593 = vadd.f32 0.0, %v2592
  %v2594 = vpop.f32.mrb[0].mxu0
  %v2595 = vpop.f32.mrb[0].mxu0
  %v2596 = vadd.f32 0.0, %v2595
  %v2597 = vpop.f32.mrb[0].mxu0
  %2598 = vmatprep.mubr.bf16.mxu0 0
  %2599 = vmatmul.mubr.bf16.gmra.mrb[0].mxu0 %v2476
  %v2600 = vpop.f32.mrb[0].mxu0
  %v2601 = vadd.f32 0.0, %v2600
  %v2602 = vpop.f32.mrb[0].mxu0
  %v2603 = vpop.f32.mrb[0].mxu0
  %v2604 = vadd.f32 0.0, %v2603
  %v2605 = vpop.f32.mrb[0].mxu0
  %2606 = vdwg.mxu0
  %v2607 = vadd.f32 %v2373, %v2513
  %v2608 = vadd.f32 %v2374, %v2516
  %v2609 = vadd.f32 %v2375, %v2521
  %v2610 = vadd.f32 %v2376, %v2524
  %v2611 = vadd.f32 %v2377, %v2529
  %v2612 = vadd.f32 %v2378, %v2532
  %v2613 = vadd.f32 %v2379, %v2537
  %v2614 = vadd.f32 %v2380, %v2540
  %v2615 = vadd.f32 %v2381, %v2545
  %v2616 = vadd.f32 %v2382, %v2548
  %v2617 = vadd.f32 %v2383, %v2553
  %v2618 = vadd.f32 %v2384, %v2556
  %v2619 = vadd.f32 %v2385, %v2561
  %v2620 = vadd.f32 %v2386, %v2564
  %v2621 = vadd.f32 %v2387, %v2569
  %v2622 = vadd.f32 %v2388, %v2572
  %v2623 = vadd.f32 %v2389, %v2577
  %v2624 = vadd.f32 %v2390, %v2580
  %v2625 = vadd.f32 %v2391, %v2585
  %v2626 = vadd.f32 %v2392, %v2588
  %v2627 = vadd.f32 %v2393, %v2593
  %v2628 = vadd.f32 %v2394, %v2596
  %v2629 = vadd.f32 %v2395, %v2601
  %v2630 = vadd.f32 %v2396, %v2604
  %v2631 = vld [vmem:[#allocation2 + $0x11] sm:$0xff]
  %v2632 = vld [vmem:[#allocation2 + $0x19] sm:$0xff]
  %v2633 = vld [vmem:[#allocation2 + $0x21] sm:$0xff]
  %v2634 = vld [vmem:[#allocation2 + $0x29] sm:$0xff]
  %v2635 = vld [vmem:[#allocation2 + $0x31] sm:$0xff]
  %v2636 = vld [vmem:[#allocation2 + $0x39] sm:$0xff]
  %v2637 = vld [vmem:[#allocation2 + $0x41] sm:$0xff]
  %v2638 = vld [vmem:[#allocation2 + $0x49] sm:$0xff]
  %v2639 = vld [vmem:[#allocation2 + $0x51] sm:$0xff]
  %v2640 = vld [vmem:[#allocation2 + $0x59] sm:$0xff]
  %v2641 = vld [vmem:[#allocation2 + $0x61] sm:$0xff]
  %v2642 = vld [vmem:[#allocation2 + $0x69] sm:$0xff]
  %v2643 = vld [vmem:[#allocation2 + $0x71] sm:$0xff]
  %v2644 = vld [vmem:[#allocation2 + $0x79] sm:$0xff]
  %v2645 = vld [vmem:[#allocation2 + $0x81] sm:$0xff]
  %v2646 = vld [vmem:[#allocation2 + $0x89] sm:$0xff]
  %v2647 = vld [vmem:[#allocation2 + $0x91] sm:$0xff]
  %v2648 = vld [vmem:[#allocation2 + $0x99] sm:$0xff]
  %v2649 = vld [vmem:[#allocation2 + $0xa1] sm:$0xff]
  %v2650 = vld [vmem:[#allocation2 + $0xa9] sm:$0xff]
  %v2651 = vld [vmem:[#allocation2 + $0xb1] sm:$0xff]
  %v2652 = vld [vmem:[#allocation2 + $0xb9] sm:$0xff]
  %v2653 = vld [vmem:[#allocation2 + $0xc1] sm:$0xff]
  %v2654 = vld [vmem:[#allocation2 + $0xc9] sm:$0xff]
  %v2655 = vpack.c.bf16 %v2632, %v2631
  %v2656 = vpack.c.bf16 %v2634, %v2633
  %v2657 = vpack.c.bf16 %v2636, %v2635
  %v2658 = vpack.c.bf16 %v2638, %v2637
  %v2659 = vpack.c.bf16 %v2640, %v2639
  %v2660 = vpack.c.bf16 %v2642, %v2641
  %v2661 = vpack.c.bf16 %v2644, %v2643
  %v2662 = vpack.c.bf16 %v2646, %v2645
  %v2663 = vpack.c.bf16 %v2648, %v2647
  %v2664 = vpack.c.bf16 %v2650, %v2649
  %v2665 = vpack.c.bf16 %v2652, %v2651
  %v2666 = vpack.c.bf16 %v2654, %v2653
  %s2667 = scalar_lea.vmem %s10, 40
  %v2668 = vld [vmem:[%s2667] sm:$0xf]
  %v2669 = vld [vmem:[%s2667 + $0x4] sm:$0xf]
  %v2672 = vunpack.c.l.b16 %v2668
  %v2673 = vunpack.c.l.b16 %v2669
  %v2674 = vpack.c.b16 %v2673, %v2672
  %v2677 = vsel %vm57, %v2655, 0
  %v2680 = vsel %vm57, %v2656, 0
  %v2683 = vsel %vm57, %v2657, 0
  %v2686 = vsel %vm57, %v2658, 0
  %v2689 = vsel %vm57, %v2659, 0
  %v2692 = vsel %vm57, %v2660, 0
  %v2695 = vsel %vm57, %v2661, 0
  %v2698 = vsel %vm57, %v2662, 0
  %v2701 = vsel %vm57, %v2663, 0
  %v2704 = vsel %vm57, %v2664, 0
  %v2707 = vsel %vm57, %v2665, 0
  %v2710 = vsel %vm57, %v2666, 0
  %2712 = vmatprep.subr.bf16.mxu0 0
  %2713 = vmatpush1.bf16.msra.mxu0 %v2674
  %2714 = vmatprep.subr.bf16.mxu0 0
  %2715 = vmatpush1.bf16.msra.mxu0 0
  %2716 = vmatprep.subr.bf16.mxu0 0
  %2717 = vmatpush1.bf16.msra.mxu0 0
  %2718 = vmatprep.subr.bf16.mxu0 0
  %2719 = vmatpush1.bf16.msra.mxu0 0
  %2720 = vmatprep.subr.bf16.mxu0 0
  %2721 = vmatpush1.bf16.msra.mxu0 0
  %2722 = vmatprep.subr.bf16.mxu0 0
  %2723 = vmatpush1.bf16.msra.mxu0 0
  %2724 = vmatprep.subr.bf16.mxu0 0
  %2725 = vmatpush1.bf16.msra.mxu0 0
  %2726 = vmatprep.subr.bf16.mxu0 0
  %2727 = vmatpush1.bf16.msra.mxu0 0
  %2728 = vmatprep.subr.bf16.mxu0 0
  %2729 = vmatpush1.bf16.msra.mxu0 0
  %2730 = vmatprep.subr.bf16.mxu0 0
  %2731 = vmatpush1.bf16.msra.mxu0 0
  %2732 = vmatprep.subr.bf16.mxu0 0
  %2733 = vmatpush1.bf16.msra.mxu0 0
  %2734 = vmatprep.subr.bf16.mxu0 0
  %2735 = vmatpush1.bf16.msra.mxu0 0
  %2736 = vmatprep.subr.bf16.mxu0 0
  %2737 = vmatpush1.bf16.msra.mxu0 0
  %2738 = vmatprep.subr.bf16.mxu0 0
  %2739 = vmatpush1.bf16.msra.mxu0 0
  %2740 = vmatprep.subr.bf16.mxu0 0
  %2741 = vmatpush1.bf16.msra.mxu0 0
  %2742 = vmatprep.subr.bf16.mxu0 0
  %2743 = vmatpush1.bf16.msra.mxu0 0
  %2744 = vmatprep.mubr.bf16.mxu0 0
  %2745 = vmatmul.mubr.bf16.gmra.mrb[0].mxu0 %v2677
  %v2746 = vpop.f32.mrb[0].mxu0
  %v2747 = vadd.f32 0.0, %v2746
  %v2748 = vpop.f32.mrb[0].mxu0
  %v2749 = vpop.f32.mrb[0].mxu0
  %v2750 = vadd.f32 0.0, %v2749
  %v2751 = vpop.f32.mrb[0].mxu0
  %2752 = vmatprep.mubr.bf16.mxu0 0
  %2753 = vmatmul.mubr.bf16.gmra.mrb[0].mxu0 %v2680
  %v2754 = vpop.f32.mrb[0].mxu0
  %v2755 = vadd.f32 0.0, %v2754
  %v2756 = vpop.f32.mrb[0].mxu0
  %v2757 = vpop.f32.mrb[0].mxu0
  %v2758 = vadd.f32 0.0, %v2757
  %v2759 = vpop.f32.mrb[0].mxu0
  %2760 = vmatprep.mubr.bf16.mxu0 0
  %2761 = vmatmul.mubr.bf16.gmra.mrb[0].mxu0 %v2683
  %v2762 = vpop.f32.mrb[0].mxu0
  %v2763 = vadd.f32 0.0, %v2762
  %v2764 = vpop.f32.mrb[0].mxu0
  %v2765 = vpop.f32.mrb[0].mxu0
  %v2766 = vadd.f32 0.0, %v2765
  %v2767 = vpop.f32.mrb[0].mxu0
  %2768 = vmatprep.mubr.bf16.mxu0 0
  %2769 = vmatmul.mubr.bf16.gmra.mrb[0].mxu0 %v2686
  %v2770 = vpop.f32.mrb[0].mxu0
  %v2771 = vadd.f32 0.0, %v2770
  %v2772 = vpop.f32.mrb[0].mxu0
  %v2773 = vpop.f32.mrb[0].mxu0
  %v2774 = vadd.f32 0.0, %v2773
  %v2775 = vpop.f32.mrb[0].mxu0
  %2776 = vmatprep.mubr.bf16.mxu0 0
  %2777 = vmatmul.mubr.bf16.gmra.mrb[0].mxu0 %v2689
  %v2778 = vpop.f32.mrb[0].mxu0
  %v2779 = vadd.f32 0.0, %v2778
  %v2780 = vpop.f32.mrb[0].mxu0
  %v2781 = vpop.f32.mrb[0].mxu0
  %v2782 = vadd.f32 0.0, %v2781
  %v2783 = vpop.f32.mrb[0].mxu0
  %2784 = vmatprep.mubr.bf16.mxu0 0
  %2785 = vmatmul.mubr.bf16.gmra.mrb[0].mxu0 %v2692
  %v2786 = vpop.f32.mrb[0].mxu0
  %v2787 = vadd.f32 0.0, %v2786
  %v2788 = vpop.f32.mrb[0].mxu0
  %v2789 = vpop.f32.mrb[0].mxu0
  %v2790 = vadd.f32 0.0, %v2789
  %v2791 = vpop.f32.mrb[0].mxu0
  %2792 = vmatprep.mubr.bf16.mxu0 0
  %2793 = vmatmul.mubr.bf16.gmra.mrb[0].mxu0 %v2695
  %v2794 = vpop.f32.mrb[0].mxu0
  %v2795 = vadd.f32 0.0, %v2794
  %v2796 = vpop.f32.mrb[0].mxu0
  %v2797 = vpop.f32.mrb[0].mxu0
  %v2798 = vadd.f32 0.0, %v2797
  %v2799 = vpop.f32.mrb[0].mxu0
  %2800 = vmatprep.mubr.bf16.mxu0 0
  %2801 = vmatmul.mubr.bf16.gmra.mrb[0].mxu0 %v2698
  %v2802 = vpop.f32.mrb[0].mxu0
  %v2803 = vadd.f32 0.0, %v2802
  %v2804 = vpop.f32.mrb[0].mxu0
  %v2805 = vpop.f32.mrb[0].mxu0
  %v2806 = vadd.f32 0.0, %v2805
  %v2807 = vpop.f32.mrb[0].mxu0
  %2808 = vmatprep.mubr.bf16.mxu0 0
  %2809 = vmatmul.mubr.bf16.gmra.mrb[0].mxu0 %v2701
  %v2810 = vpop.f32.mrb[0].mxu0
  %v2811 = vadd.f32 0.0, %v2810
  %v2812 = vpop.f32.mrb[0].mxu0
  %v2813 = vpop.f32.mrb[0].mxu0
  %v2814 = vadd.f32 0.0, %v2813
  %v2815 = vpop.f32.mrb[0].mxu0
  %2816 = vmatprep.mubr.bf16.mxu0 0
  %2817 = vmatmul.mubr.bf16.gmra.mrb[0].mxu0 %v2704
  %v2818 = vpop.f32.mrb[0].mxu0
  %v2819 = vadd.f32 0.0, %v2818
  %v2820 = vpop.f32.mrb[0].mxu0
  %v2821 = vpop.f32.mrb[0].mxu0
  %v2822 = vadd.f32 0.0, %v2821
  %v2823 = vpop.f32.mrb[0].mxu0
  %2824 = vmatprep.mubr.bf16.mxu0 0
  %2825 = vmatmul.mubr.bf16.gmra.mrb[0].mxu0 %v2707
  %v2826 = vpop.f32.mrb[0].mxu0
  %v2827 = vadd.f32 0.0, %v2826
  %v2828 = vpop.f32.mrb[0].mxu0
  %v2829 = vpop.f32.mrb[0].mxu0
  %v2830 = vadd.f32 0.0, %v2829
  %v2831 = vpop.f32.mrb[0].mxu0
  %2832 = vmatprep.mubr.bf16.mxu0 0
  %2833 = vmatmul.mubr.bf16.gmra.mrb[0].mxu0 %v2710
  %v2834 = vpop.f32.mrb[0].mxu0
  %v2835 = vadd.f32 0.0, %v2834
  %v2836 = vpop.f32.mrb[0].mxu0
  %v2837 = vpop.f32.mrb[0].mxu0
  %v2838 = vadd.f32 0.0, %v2837
  %v2839 = vpop.f32.mrb[0].mxu0
  %2840 = vdwg.mxu0
  %v2841 = vadd.f32 %v2607, %v2747
  %v2842 = vadd.f32 %v2608, %v2750
  %v2843 = vadd.f32 %v2609, %v2755
  %v2844 = vadd.f32 %v2610, %v2758
  %v2845 = vadd.f32 %v2611, %v2763
  %v2846 = vadd.f32 %v2612, %v2766
  %v2847 = vadd.f32 %v2613, %v2771
  %v2848 = vadd.f32 %v2614, %v2774
  %v2849 = vadd.f32 %v2615, %v2779
  %v2850 = vadd.f32 %v2616, %v2782
  %v2851 = vadd.f32 %v2617, %v2787
  %v2852 = vadd.f32 %v2618, %v2790
  %v2853 = vadd.f32 %v2619, %v2795
  %v2854 = vadd.f32 %v2620, %v2798
  %v2855 = vadd.f32 %v2621, %v2803
  %v2856 = vadd.f32 %v2622, %v2806
  %v2857 = vadd.f32 %v2623, %v2811
  %v2858 = vadd.f32 %v2624, %v2814
  %v2859 = vadd.f32 %v2625, %v2819
  %v2860 = vadd.f32 %v2626, %v2822
  %v2861 = vadd.f32 %v2627, %v2827
  %v2862 = vadd.f32 %v2628, %v2830
  %v2863 = vadd.f32 %v2629, %v2835
  %v2864 = vadd.f32 %v2630, %v2838
  %v2865 = vld [vmem:[#allocation2 + $0x19] sm:$0xff]
  %v2866 = vld [vmem:[#allocation2 + $0x21] sm:$0xff]
  %v2867 = vld [vmem:[#allocation2 + $0x29] sm:$0xff]
  %v2868 = vld [vmem:[#allocation2 + $0x31] sm:$0xff]
  %v2869 = vld [vmem:[#allocation2 + $0x39] sm:$0xff]
  %v2870 = vld [vmem:[#allocation2 + $0x41] sm:$0xff]
  %v2871 = vld [vmem:[#allocation2 + $0x49] sm:$0xff]
  %v2872 = vld [vmem:[#allocation2 + $0x51] sm:$0xff]
  %v2873 = vld [vmem:[#allocation2 + $0x59] sm:$0xff]
  %v2874 = vld [vmem:[#allocation2 + $0x61] sm:$0xff]
  %v2875 = vld [vmem:[#allocation2 + $0x69] sm:$0xff]
  %v2876 = vld [vmem:[#allocation2 + $0x71] sm:$0xff]
  %v2877 = vld [vmem:[#allocation2 + $0x79] sm:$0xff]
  %v2878 = vld [vmem:[#allocation2 + $0x81] sm:$0xff]
  %v2879 = vld [vmem:[#allocation2 + $0x89] sm:$0xff]
  %v2880 = vld [vmem:[#allocation2 + $0x91] sm:$0xff]
  %v2881 = vld [vmem:[#allocation2 + $0x99] sm:$0xff]
  %v2882 = vld [vmem:[#allocation2 + $0xa1] sm:$0xff]
  %v2883 = vld [vmem:[#allocation2 + $0xa9] sm:$0xff]
  %v2884 = vld [vmem:[#allocation2 + $0xb1] sm:$0xff]
  %v2885 = vld [vmem:[#allocation2 + $0xb9] sm:$0xff]
  %v2886 = vld [vmem:[#allocation2 + $0xc1] sm:$0xff]
  %v2887 = vld [vmem:[#allocation2 + $0xc9] sm:$0xff]
  %v2888 = vld [vmem:[#allocation2 + $0xd1] sm:$0xff]
  %v2889 = vpack.c.bf16 %v2866, %v2865
  %v2890 = vpack.c.bf16 %v2868, %v2867
  %v2891 = vpack.c.bf16 %v2870, %v2869
  %v2892 = vpack.c.bf16 %v2872, %v2871
  %v2893 = vpack.c.bf16 %v2874, %v2873
  %v2894 = vpack.c.bf16 %v2876, %v2875
  %v2895 = vpack.c.bf16 %v2878, %v2877
  %v2896 = vpack.c.bf16 %v2880, %v2879
  %v2897 = vpack.c.bf16 %v2882, %v2881
  %v2898 = vpack.c.bf16 %v2884, %v2883
  %v2899 = vpack.c.bf16 %v2886, %v2885
  %v2900 = vpack.c.bf16 %v2888, %v2887
  %s2901 = scalar_lea.vmem %s10, 48
  %v2902 = vld [vmem:[%s2901] sm:$0xf]
  %v2903 = vld [vmem:[%s2901 + $0x4] sm:$0xf]
  %v2906 = vunpack.c.l.b16 %v2902
  %v2907 = vunpack.c.l.b16 %v2903
  %v2908 = vpack.c.b16 %v2907, %v2906
  %v2911 = vsel %vm57, %v2889, 0
  %v2914 = vsel %vm57, %v2890, 0
  %v2917 = vsel %vm57, %v2891, 0
  %v2920 = vsel %vm57, %v2892, 0
  %v2923 = vsel %vm57, %v2893, 0
  %v2926 = vsel %vm57, %v2894, 0
  %v2929 = vsel %vm57, %v2895, 0
  %v2932 = vsel %vm57, %v2896, 0
  %v2935 = vsel %vm57, %v2897, 0
  %v2938 = vsel %vm57, %v2898, 0
  %v2941 = vsel %vm57, %v2899, 0
  %v2944 = vsel %vm57, %v2900, 0
  %2946 = vmatprep.subr.bf16.mxu0 0
  %2947 = vmatpush1.bf16.msra.mxu0 %v2908
  %2948 = vmatprep.subr.bf16.mxu0 0
  %2949 = vmatpush1.bf16.msra.mxu0 0
  %2950 = vmatprep.subr.bf16.mxu0 0
  %2951 = vmatpush1.bf16.msra.mxu0 0
  %2952 = vmatprep.subr.bf16.mxu0 0
  %2953 = vmatpush1.bf16.msra.mxu0 0
  %2954 = vmatprep.subr.bf16.mxu0 0
  %2955 = vmatpush1.bf16.msra.mxu0 0
  %2956 = vmatprep.subr.bf16.mxu0 0
  %2957 = vmatpush1.bf16.msra.mxu0 0
  %2958 = vmatprep.subr.bf16.mxu0 0
  %2959 = vmatpush1.bf16.msra.mxu0 0
  %2960 = vmatprep.subr.bf16.mxu0 0
  %2961 = vmatpush1.bf16.msra.mxu0 0
  %2962 = vmatprep.subr.bf16.mxu0 0
  %2963 = vmatpush1.bf16.msra.mxu0 0
  %2964 = vmatprep.subr.bf16.mxu0 0
  %2965 = vmatpush1.bf16.msra.mxu0 0
  %2966 = vmatprep.subr.bf16.mxu0 0
  %2967 = vmatpush1.bf16.msra.mxu0 0
  %2968 = vmatprep.subr.bf16.mxu0 0
  %2969 = vmatpush1.bf16.msra.mxu0 0
  %2970 = vmatprep.subr.bf16.mxu0 0
  %2971 = vmatpush1.bf16.msra.mxu0 0
  %2972 = vmatprep.subr.bf16.mxu0 0
  %2973 = vmatpush1.bf16.msra.mxu0 0
  %2974 = vmatprep.subr.bf16.mxu0 0
  %2975 = vmatpush1.bf16.msra.mxu0 0
  %2976 = vmatprep.subr.bf16.mxu0 0
  %2977 = vmatpush1.bf16.msra.mxu0 0
  %2978 = vmatprep.mubr.bf16.mxu0 0
  %2979 = vmatmul.mubr.bf16.gmra.mrb[0].mxu0 %v2911
  %v2980 = vpop.f32.mrb[0].mxu0
  %v2981 = vadd.f32 0.0, %v2980
  %v2982 = vpop.f32.mrb[0].mxu0
  %v2983 = vpop.f32.mrb[0].mxu0
  %v2984 = vadd.f32 0.0, %v2983
  %v2985 = vpop.f32.mrb[0].mxu0
  %2986 = vmatprep.mubr.bf16.mxu0 0
  %2987 = vmatmul.mubr.bf16.gmra.mrb[0].mxu0 %v2914
  %v2988 = vpop.f32.mrb[0].mxu0
  %v2989 = vadd.f32 0.0, %v2988
  %v2990 = vpop.f32.mrb[0].mxu0
  %v2991 = vpop.f32.mrb[0].mxu0
  %v2992 = vadd.f32 0.0, %v2991
  %v2993 = vpop.f32.mrb[0].mxu0
  %2994 = vmatprep.mubr.bf16.mxu0 0
  %2995 = vmatmul.mubr.bf16.gmra.mrb[0].mxu0 %v2917
  %v2996 = vpop.f32.mrb[0].mxu0
  %v2997 = vadd.f32 0.0, %v2996
  %v2998 = vpop.f32.mrb[0].mxu0
  %v2999 = vpop.f32.mrb[0].mxu0
  %v3000 = vadd.f32 0.0, %v2999
  %v3001 = vpop.f32.mrb[0].mxu0
  %3002 = vmatprep.mubr.bf16.mxu0 0
  %3003 = vmatmul.mubr.bf16.gmra.mrb[0].mxu0 %v2920
  %v3004 = vpop.f32.mrb[0].mxu0
  %v3005 = vadd.f32 0.0, %v3004
  %v3006 = vpop.f32.mrb[0].mxu0
  %v3007 = vpop.f32.mrb[0].mxu0
  %v3008 = vadd.f32 0.0, %v3007
  %v3009 = vpop.f32.mrb[0].mxu0
  %3010 = vmatprep.mubr.bf16.mxu0 0
  %3011 = vmatmul.mubr.bf16.gmra.mrb[0].mxu0 %v2923
  %v3012 = vpop.f32.mrb[0].mxu0
  %v3013 = vadd.f32 0.0, %v3012
  %v3014 = vpop.f32.mrb[0].mxu0
  %v3015 = vpop.f32.mrb[0].mxu0
  %v3016 = vadd.f32 0.0, %v3015
  %v3017 = vpop.f32.mrb[0].mxu0
  %3018 = vmatprep.mubr.bf16.mxu0 0
  %3019 = vmatmul.mubr.bf16.gmra.mrb[0].mxu0 %v2926
  %v3020 = vpop.f32.mrb[0].mxu0
  %v3021 = vadd.f32 0.0, %v3020
  %v3022 = vpop.f32.mrb[0].mxu0
  %v3023 = vpop.f32.mrb[0].mxu0
  %v3024 = vadd.f32 0.0, %v3023
  %v3025 = vpop.f32.mrb[0].mxu0
  %3026 = vmatprep.mubr.bf16.mxu0 0
  %3027 = vmatmul.mubr.bf16.gmra.mrb[0].mxu0 %v2929
  %v3028 = vpop.f32.mrb[0].mxu0
  %v3029 = vadd.f32 0.0, %v3028
  %v3030 = vpop.f32.mrb[0].mxu0
  %v3031 = vpop.f32.mrb[0].mxu0
  %v3032 = vadd.f32 0.0, %v3031
  %v3033 = vpop.f32.mrb[0].mxu0
  %3034 = vmatprep.mubr.bf16.mxu0 0
  %3035 = vmatmul.mubr.bf16.gmra.mrb[0].mxu0 %v2932
  %v3036 = vpop.f32.mrb[0].mxu0
  %v3037 = vadd.f32 0.0, %v3036
  %v3038 = vpop.f32.mrb[0].mxu0
  %v3039 = vpop.f32.mrb[0].mxu0
  %v3040 = vadd.f32 0.0, %v3039
  %v3041 = vpop.f32.mrb[0].mxu0
  %3042 = vmatprep.mubr.bf16.mxu0 0
  %3043 = vmatmul.mubr.bf16.gmra.mrb[0].mxu0 %v2935
  %v3044 = vpop.f32.mrb[0].mxu0
  %v3045 = vadd.f32 0.0, %v3044
  %v3046 = vpop.f32.mrb[0].mxu0
  %v3047 = vpop.f32.mrb[0].mxu0
  %v3048 = vadd.f32 0.0, %v3047
  %v3049 = vpop.f32.mrb[0].mxu0
  %3050 = vmatprep.mubr.bf16.mxu0 0
  %3051 = vmatmul.mubr.bf16.gmra.mrb[0].mxu0 %v2938
  %v3052 = vpop.f32.mrb[0].mxu0
  %v3053 = vadd.f32 0.0, %v3052
  %v3054 = vpop.f32.mrb[0].mxu0
  %v3055 = vpop.f32.mrb[0].mxu0
  %v3056 = vadd.f32 0.0, %v3055
  %v3057 = vpop.f32.mrb[0].mxu0
  %3058 = vmatprep.mubr.bf16.mxu0 0
  %3059 = vmatmul.mubr.bf16.gmra.mrb[0].mxu0 %v2941
  %v3060 = vpop.f32.mrb[0].mxu0
  %v3061 = vadd.f32 0.0, %v3060
  %v3062 = vpop.f32.mrb[0].mxu0
  %v3063 = vpop.f32.mrb[0].mxu0
  %v3064 = vadd.f32 0.0, %v3063
  %v3065 = vpop.f32.mrb[0].mxu0
  %3066 = vmatprep.mubr.bf16.mxu0 0
  %3067 = vmatmul.mubr.bf16.gmra.mrb[0].mxu0 %v2944
  %v3068 = vpop.f32.mrb[0].mxu0
  %v3069 = vadd.f32 0.0, %v3068
  %v3070 = vpop.f32.mrb[0].mxu0
  %v3071 = vpop.f32.mrb[0].mxu0
  %v3072 = vadd.f32 0.0, %v3071
  %v3073 = vpop.f32.mrb[0].mxu0
  %3074 = vdwg.mxu0
  %v3075 = vadd.f32 %v2841, %v2981
  %v3076 = vadd.f32 %v2842, %v2984
  %v3077 = vadd.f32 %v2843, %v2989
  %v3078 = vadd.f32 %v2844, %v2992
  %v3079 = vadd.f32 %v2845, %v2997
  %v3080 = vadd.f32 %v2846, %v3000
  %v3081 = vadd.f32 %v2847, %v3005
  %v3082 = vadd.f32 %v2848, %v3008
  %v3083 = vadd.f32 %v2849, %v3013
  %v3084 = vadd.f32 %v2850, %v3016
  %v3085 = vadd.f32 %v2851, %v3021
  %v3086 = vadd.f32 %v2852, %v3024
  %v3087 = vadd.f32 %v2853, %v3029
  %v3088 = vadd.f32 %v2854, %v3032
  %v3089 = vadd.f32 %v2855, %v3037
  %v3090 = vadd.f32 %v2856, %v3040
  %v3091 = vadd.f32 %v2857, %v3045
  %v3092 = vadd.f32 %v2858, %v3048
  %v3093 = vadd.f32 %v2859, %v3053
  %v3094 = vadd.f32 %v2860, %v3056
  %v3095 = vadd.f32 %v2861, %v3061
  %v3096 = vadd.f32 %v2862, %v3064
  %v3097 = vadd.f32 %v2863, %v3069
  %v3098 = vadd.f32 %v2864, %v3072
  %v3099 = vld [vmem:[#allocation2 + $0x1a] sm:$0xff]
  %v3100 = vld [vmem:[#allocation2 + $0x22] sm:$0xff]
  %v3101 = vld [vmem:[#allocation2 + $0x2a] sm:$0xff]
  %v3102 = vld [vmem:[#allocation2 + $0x32] sm:$0xff]
  %v3103 = vld [vmem:[#allocation2 + $0x3a] sm:$0xff]
  %v3104 = vld [vmem:[#allocation2 + $0x42] sm:$0xff]
  %v3105 = vld [vmem:[#allocation2 + $0x4a] sm:$0xff]
  %v3106 = vld [vmem:[#allocation2 + $0x52] sm:$0xff]
  %v3107 = vld [vmem:[#allocation2 + $0x5a] sm:$0xff]
  %v3108 = vld [vmem:[#allocation2 + $0x62] sm:$0xff]
  %v3109 = vld [vmem:[#allocation2 + $0x6a] sm:$0xff]
  %v3110 = vld [vmem:[#allocation2 + $0x72] sm:$0xff]
  %v3111 = vld [vmem:[#allocation2 + $0x7a] sm:$0xff]
  %v3112 = vld [vmem:[#allocation2 + $0x82] sm:$0xff]
  %v3113 = vld [vmem:[#allocation2 + $0x8a] sm:$0xff]
  %v3114 = vld [vmem:[#allocation2 + $0x92] sm:$0xff]
  %v3115 = vld [vmem:[#allocation2 + $0x9a] sm:$0xff]
  %v3116 = vld [vmem:[#allocation2 + $0xa2] sm:$0xff]
  %v3117 = vld [vmem:[#allocation2 + $0xaa] sm:$0xff]
  %v3118 = vld [vmem:[#allocation2 + $0xb2] sm:$0xff]
  %v3119 = vld [vmem:[#allocation2 + $0xba] sm:$0xff]
  %v3120 = vld [vmem:[#allocation2 + $0xc2] sm:$0xff]
  %v3121 = vld [vmem:[#allocation2 + $0xca] sm:$0xff]
  %v3122 = vld [vmem:[#allocation2 + $0xd2] sm:$0xff]
  %v3123 = vpack.c.bf16 %v3100, %v3099
  %v3124 = vpack.c.bf16 %v3102, %v3101
  %v3125 = vpack.c.bf16 %v3104, %v3103
  %v3126 = vpack.c.bf16 %v3106, %v3105
  %v3127 = vpack.c.bf16 %v3108, %v3107
  %v3128 = vpack.c.bf16 %v3110, %v3109
  %v3129 = vpack.c.bf16 %v3112, %v3111
  %v3130 = vpack.c.bf16 %v3114, %v3113
  %v3131 = vpack.c.bf16 %v3116, %v3115
  %v3132 = vpack.c.bf16 %v3118, %v3117
  %v3133 = vpack.c.bf16 %v3120, %v3119
  %v3134 = vpack.c.bf16 %v3122, %v3121
  %s3135 = scalar_lea.vmem %s10, 56
  %v3136 = vld [vmem:[%s3135] sm:$0xf]
  %v3137 = vld [vmem:[%s3135 + $0x4] sm:$0xf]
  %v3140 = vunpack.c.l.b16 %v3136
  %v3141 = vunpack.c.l.b16 %v3137
  %v3142 = vpack.c.b16 %v3141, %v3140
  %v3145 = vsel %vm57, %v3123, 0
  %v3148 = vsel %vm57, %v3124, 0
  %v3151 = vsel %vm57, %v3125, 0
  %v3154 = vsel %vm57, %v3126, 0
  %v3157 = vsel %vm57, %v3127, 0
  %v3160 = vsel %vm57, %v3128, 0
  %v3163 = vsel %vm57, %v3129, 0
  %v3166 = vsel %vm57, %v3130, 0
  %v3169 = vsel %vm57, %v3131, 0
  %v3172 = vsel %vm57, %v3132, 0
  %v3175 = vsel %vm57, %v3133, 0
  %v3178 = vsel %vm57, %v3134, 0
  %3180 = vmatprep.subr.bf16.mxu0 0
  %3181 = vmatpush1.bf16.msra.mxu0 %v3142
  %3182 = vmatprep.subr.bf16.mxu0 0
  %3183 = vmatpush1.bf16.msra.mxu0 0
  %3184 = vmatprep.subr.bf16.mxu0 0
  %3185 = vmatpush1.bf16.msra.mxu0 0
  %3186 = vmatprep.subr.bf16.mxu0 0
  %3187 = vmatpush1.bf16.msra.mxu0 0
  %3188 = vmatprep.subr.bf16.mxu0 0
  %3189 = vmatpush1.bf16.msra.mxu0 0
  %3190 = vmatprep.subr.bf16.mxu0 0
  %3191 = vmatpush1.bf16.msra.mxu0 0
  %3192 = vmatprep.subr.bf16.mxu0 0
  %3193 = vmatpush1.bf16.msra.mxu0 0
  %3194 = vmatprep.subr.bf16.mxu0 0
  %3195 = vmatpush1.bf16.msra.mxu0 0
  %3196 = vmatprep.subr.bf16.mxu0 0
  %3197 = vmatpush1.bf16.msra.mxu0 0
  %3198 = vmatprep.subr.bf16.mxu0 0
  %3199 = vmatpush1.bf16.msra.mxu0 0
  %3200 = vmatprep.subr.bf16.mxu0 0
  %3201 = vmatpush1.bf16.msra.mxu0 0
  %3202 = vmatprep.subr.bf16.mxu0 0
  %3203 = vmatpush1.bf16.msra.mxu0 0
  %3204 = vmatprep.subr.bf16.mxu0 0
  %3205 = vmatpush1.bf16.msra.mxu0 0
  %3206 = vmatprep.subr.bf16.mxu0 0
  %3207 = vmatpush1.bf16.msra.mxu0 0
  %3208 = vmatprep.subr.bf16.mxu0 0
  %3209 = vmatpush1.bf16.msra.mxu0 0
  %3210 = vmatprep.subr.bf16.mxu0 0
  %3211 = vmatpush1.bf16.msra.mxu0 0
  %3212 = vmatprep.mubr.bf16.mxu0 0
  %3213 = vmatmul.mubr.bf16.gmra.mrb[0].mxu0 %v3145
  %v3214 = vpop.f32.mrb[0].mxu0
  %v3215 = vadd.f32 0.0, %v3214
  %v3216 = vpop.f32.mrb[0].mxu0
  %v3217 = vpop.f32.mrb[0].mxu0
  %v3218 = vadd.f32 0.0, %v3217
  %v3219 = vpop.f32.mrb[0].mxu0
  %3220 = vmatprep.mubr.bf16.mxu0 0
  %3221 = vmatmul.mubr.bf16.gmra.mrb[0].mxu0 %v3148
  %v3222 = vpop.f32.mrb[0].mxu0
  %v3223 = vadd.f32 0.0, %v3222
  %v3224 = vpop.f32.mrb[0].mxu0
  %v3225 = vpop.f32.mrb[0].mxu0
  %v3226 = vadd.f32 0.0, %v3225
  %v3227 = vpop.f32.mrb[0].mxu0
  %3228 = vmatprep.mubr.bf16.mxu0 0
  %3229 = vmatmul.mubr.bf16.gmra.mrb[0].mxu0 %v3151
  %v3230 = vpop.f32.mrb[0].mxu0
  %v3231 = vadd.f32 0.0, %v3230
  %v3232 = vpop.f32.mrb[0].mxu0
  %v3233 = vpop.f32.mrb[0].mxu0
  %v3234 = vadd.f32 0.0, %v3233
  %v3235 = vpop.f32.mrb[0].mxu0
  %3236 = vmatprep.mubr.bf16.mxu0 0
  %3237 = vmatmul.mubr.bf16.gmra.mrb[0].mxu0 %v3154
  %v3238 = vpop.f32.mrb[0].mxu0
  %v3239 = vadd.f32 0.0, %v3238
  %v3240 = vpop.f32.mrb[0].mxu0
  %v3241 = vpop.f32.mrb[0].mxu0
  %v3242 = vadd.f32 0.0, %v3241
  %v3243 = vpop.f32.mrb[0].mxu0
  %3244 = vmatprep.mubr.bf16.mxu0 0
  %3245 = vmatmul.mubr.bf16.gmra.mrb[0].mxu0 %v3157
  %v3246 = vpop.f32.mrb[0].mxu0
  %v3247 = vadd.f32 0.0, %v3246
  %v3248 = vpop.f32.mrb[0].mxu0
  %v3249 = vpop.f32.mrb[0].mxu0
  %v3250 = vadd.f32 0.0, %v3249
  %v3251 = vpop.f32.mrb[0].mxu0
  %3252 = vmatprep.mubr.bf16.mxu0 0
  %3253 = vmatmul.mubr.bf16.gmra.mrb[0].mxu0 %v3160
  %v3254 = vpop.f32.mrb[0].mxu0
  %v3255 = vadd.f32 0.0, %v3254
  %v3256 = vpop.f32.mrb[0].mxu0
  %v3257 = vpop.f32.mrb[0].mxu0
  %v3258 = vadd.f32 0.0, %v3257
  %v3259 = vpop.f32.mrb[0].mxu0
  %3260 = vmatprep.mubr.bf16.mxu0 0
  %3261 = vmatmul.mubr.bf16.gmra.mrb[0].mxu0 %v3163
  %v3262 = vpop.f32.mrb[0].mxu0
  %v3263 = vadd.f32 0.0, %v3262
  %v3264 = vpop.f32.mrb[0].mxu0
  %v3265 = vpop.f32.mrb[0].mxu0
  %v3266 = vadd.f32 0.0, %v3265
  %v3267 = vpop.f32.mrb[0].mxu0
  %3268 = vmatprep.mubr.bf16.mxu0 0
  %3269 = vmatmul.mubr.bf16.gmra.mrb[0].mxu0 %v3166
  %v3270 = vpop.f32.mrb[0].mxu0
  %v3271 = vadd.f32 0.0, %v3270
  %v3272 = vpop.f32.mrb[0].mxu0
  %v3273 = vpop.f32.mrb[0].mxu0
  %v3274 = vadd.f32 0.0, %v3273
  %v3275 = vpop.f32.mrb[0].mxu0
  %3276 = vmatprep.mubr.bf16.mxu0 0
  %3277 = vmatmul.mubr.bf16.gmra.mrb[0].mxu0 %v3169
  %v3278 = vpop.f32.mrb[0].mxu0
  %v3279 = vadd.f32 0.0, %v3278
  %v3280 = vpop.f32.mrb[0].mxu0
  %v3281 = vpop.f32.mrb[0].mxu0
  %v3282 = vadd.f32 0.0, %v3281
  %v3283 = vpop.f32.mrb[0].mxu0
  %3284 = vmatprep.mubr.bf16.mxu0 0
  %3285 = vmatmul.mubr.bf16.gmra.mrb[0].mxu0 %v3172
  %v3286 = vpop.f32.mrb[0].mxu0
  %v3287 = vadd.f32 0.0, %v3286
  %v3288 = vpop.f32.mrb[0].mxu0
  %v3289 = vpop.f32.mrb[0].mxu0
  %v3290 = vadd.f32 0.0, %v3289
  %v3291 = vpop.f32.mrb[0].mxu0
  %3292 = vmatprep.mubr.bf16.mxu0 0
  %3293 = vmatmul.mubr.bf16.gmra.mrb[0].mxu0 %v3175
  %v3294 = vpop.f32.mrb[0].mxu0
  %v3295 = vadd.f32 0.0, %v3294
  %v3296 = vpop.f32.mrb[0].mxu0
  %v3297 = vpop.f32.mrb[0].mxu0
  %v3298 = vadd.f32 0.0, %v3297
  %v3299 = vpop.f32.mrb[0].mxu0
  %3300 = vmatprep.mubr.bf16.mxu0 0
  %3301 = vmatmul.mubr.bf16.gmra.mrb[0].mxu0 %v3178
  %v3302 = vpop.f32.mrb[0].mxu0
  %v3303 = vadd.f32 0.0, %v3302
  %v3304 = vpop.f32.mrb[0].mxu0
  %v3305 = vpop.f32.mrb[0].mxu0
  %v3306 = vadd.f32 0.0, %v3305
  %v3307 = vpop.f32.mrb[0].mxu0
  %3308 = vdwg.mxu0
  %v3309 = vadd.f32 %v3075, %v3215
  %v3310 = vadd.f32 %v3076, %v3218
  %v3311 = vadd.f32 %v3077, %v3223
  %v3312 = vadd.f32 %v3078, %v3226
  %v3313 = vadd.f32 %v3079, %v3231
  %v3314 = vadd.f32 %v3080, %v3234
  %v3315 = vadd.f32 %v3081, %v3239
  %v3316 = vadd.f32 %v3082, %v3242
  %v3317 = vadd.f32 %v3083, %v3247
  %v3318 = vadd.f32 %v3084, %v3250
  %v3319 = vadd.f32 %v3085, %v3255
  %v3320 = vadd.f32 %v3086, %v3258
  %v3321 = vadd.f32 %v3087, %v3263
  %v3322 = vadd.f32 %v3088, %v3266
  %v3323 = vadd.f32 %v3089, %v3271
  %v3324 = vadd.f32 %v3090, %v3274
  %v3325 = vadd.f32 %v3091, %v3279
  %v3326 = vadd.f32 %v3092, %v3282
  %v3327 = vadd.f32 %v3093, %v3287
  %v3328 = vadd.f32 %v3094, %v3290
  %v3329 = vadd.f32 %v3095, %v3295
  %v3330 = vadd.f32 %v3096, %v3298
  %v3331 = vadd.f32 %v3097, %v3303
  %v3332 = vadd.f32 %v3098, %v3306
  %v3333 = vld [vmem:[#allocation2 + $0x1b] sm:$0xff]
  %v3334 = vld [vmem:[#allocation2 + $0x23] sm:$0xff]
  %v3335 = vld [vmem:[#allocation2 + $0x2b] sm:$0xff]
  %v3336 = vld [vmem:[#allocation2 + $0x33] sm:$0xff]
  %v3337 = vld [vmem:[#allocation2 + $0x3b] sm:$0xff]
  %v3338 = vld [vmem:[#allocation2 + $0x43] sm:$0xff]
  %v3339 = vld [vmem:[#allocation2 + $0x4b] sm:$0xff]
  %v3340 = vld [vmem:[#allocation2 + $0x53] sm:$0xff]
  %v3341 = vld [vmem:[#allocation2 + $0x5b] sm:$0xff]
  %v3342 = vld [vmem:[#allocation2 + $0x63] sm:$0xff]
  %v3343 = vld [vmem:[#allocation2 + $0x6b] sm:$0xff]
  %v3344 = vld [vmem:[#allocation2 + $0x73] sm:$0xff]
  %v3345 = vld [vmem:[#allocation2 + $0x7b] sm:$0xff]
  %v3346 = vld [vmem:[#allocation2 + $0x83] sm:$0xff]
  %v3347 = vld [vmem:[#allocation2 + $0x8b] sm:$0xff]
  %v3348 = vld [vmem:[#allocation2 + $0x93] sm:$0xff]
  %v3349 = vld [vmem:[#allocation2 + $0x9b] sm:$0xff]
  %v3350 = vld [vmem:[#allocation2 + $0xa3] sm:$0xff]
  %v3351 = vld [vmem:[#allocation2 + $0xab] sm:$0xff]
  %v3352 = vld [vmem:[#allocation2 + $0xb3] sm:$0xff]
  %v3353 = vld [vmem:[#allocation2 + $0xbb] sm:$0xff]
  %v3354 = vld [vmem:[#allocation2 + $0xc3] sm:$0xff]
  %v3355 = vld [vmem:[#allocation2 + $0xcb] sm:$0xff]
  %v3356 = vld [vmem:[#allocation2 + $0xd3] sm:$0xff]
  %v3357 = vpack.c.bf16 %v3334, %v3333
  %v3358 = vpack.c.bf16 %v3336, %v3335
  %v3359 = vpack.c.bf16 %v3338, %v3337
  %v3360 = vpack.c.bf16 %v3340, %v3339
  %v3361 = vpack.c.bf16 %v3342, %v3341
  %v3362 = vpack.c.bf16 %v3344, %v3343
  %v3363 = vpack.c.bf16 %v3346, %v3345
  %v3364 = vpack.c.bf16 %v3348, %v3347
  %v3365 = vpack.c.bf16 %v3350, %v3349
  %v3366 = vpack.c.bf16 %v3352, %v3351
  %v3367 = vpack.c.bf16 %v3354, %v3353
  %v3368 = vpack.c.bf16 %v3356, %v3355
  %s3369 = scalar_lea.vmem %s10, 64
  %v3370 = vld [vmem:[%s3369] sm:$0xf]
  %v3371 = vld [vmem:[%s3369 + $0x4] sm:$0xf]
  %v3374 = vunpack.c.l.b16 %v3370
  %v3375 = vunpack.c.l.b16 %v3371
  %v3376 = vpack.c.b16 %v3375, %v3374
  %v3379 = vsel %vm57, %v3357, 0
  %v3382 = vsel %vm57, %v3358, 0
  %v3385 = vsel %vm57, %v3359, 0
  %v3388 = vsel %vm57, %v3360, 0
  %v3391 = vsel %vm57, %v3361, 0
  %v3394 = vsel %vm57, %v3362, 0
  %v3397 = vsel %vm57, %v3363, 0
  %v3400 = vsel %vm57, %v3364, 0
  %v3403 = vsel %vm57, %v3365, 0
  %v3406 = vsel %vm57, %v3366, 0
  %v3409 = vsel %vm57, %v3367, 0
  %v3412 = vsel %vm57, %v3368, 0
  %3414 = vmatprep.subr.bf16.mxu0 0
  %3415 = vmatpush1.bf16.msra.mxu0 %v3376
  %3416 = vmatprep.subr.bf16.mxu0 0
  %3417 = vmatpush1.bf16.msra.mxu0 0
  %3418 = vmatprep.subr.bf16.mxu0 0
  %3419 = vmatpush1.bf16.msra.mxu0 0
  %3420 = vmatprep.subr.bf16.mxu0 0
  %3421 = vmatpush1.bf16.msra.mxu0 0
  %3422 = vmatprep.subr.bf16.mxu0 0
  %3423 = vmatpush1.bf16.msra.mxu0 0
  %3424 = vmatprep.subr.bf16.mxu0 0
  %3425 = vmatpush1.bf16.msra.mxu0 0
  %3426 = vmatprep.subr.bf16.mxu0 0
  %3427 = vmatpush1.bf16.msra.mxu0 0
  %3428 = vmatprep.subr.bf16.mxu0 0
  %3429 = vmatpush1.bf16.msra.mxu0 0
  %3430 = vmatprep.subr.bf16.mxu0 0
  %3431 = vmatpush1.bf16.msra.mxu0 0
  %3432 = vmatprep.subr.bf16.mxu0 0
  %3433 = vmatpush1.bf16.msra.mxu0 0
  %3434 = vmatprep.subr.bf16.mxu0 0
  %3435 = vmatpush1.bf16.msra.mxu0 0
  %3436 = vmatprep.subr.bf16.mxu0 0
  %3437 = vmatpush1.bf16.msra.mxu0 0
  %3438 = vmatprep.subr.bf16.mxu0 0
  %3439 = vmatpush1.bf16.msra.mxu0 0
  %3440 = vmatprep.subr.bf16.mxu0 0
  %3441 = vmatpush1.bf16.msra.mxu0 0
  %3442 = vmatprep.subr.bf16.mxu0 0
  %3443 = vmatpush1.bf16.msra.mxu0 0
  %3444 = vmatprep.subr.bf16.mxu0 0
  %3445 = vmatpush1.bf16.msra.mxu0 0
  %3446 = vmatprep.mubr.bf16.mxu0 0
  %3447 = vmatmul.mubr.bf16.gmra.mrb[0].mxu0 %v3379
  %v3448 = vpop.f32.mrb[0].mxu0
  %v3449 = vadd.f32 0.0, %v3448
  %v3450 = vpop.f32.mrb[0].mxu0
  %v3451 = vpop.f32.mrb[0].mxu0
  %v3452 = vadd.f32 0.0, %v3451
  %v3453 = vpop.f32.mrb[0].mxu0
  %3454 = vmatprep.mubr.bf16.mxu0 0
  %3455 = vmatmul.mubr.bf16.gmra.mrb[0].mxu0 %v3382
  %v3456 = vpop.f32.mrb[0].mxu0
  %v3457 = vadd.f32 0.0, %v3456
  %v3458 = vpop.f32.mrb[0].mxu0
  %v3459 = vpop.f32.mrb[0].mxu0
  %v3460 = vadd.f32 0.0, %v3459
  %v3461 = vpop.f32.mrb[0].mxu0
  %3462 = vmatprep.mubr.bf16.mxu0 0
  %3463 = vmatmul.mubr.bf16.gmra.mrb[0].mxu0 %v3385
  %v3464 = vpop.f32.mrb[0].mxu0
  %v3465 = vadd.f32 0.0, %v3464
  %v3466 = vpop.f32.mrb[0].mxu0
  %v3467 = vpop.f32.mrb[0].mxu0
  %v3468 = vadd.f32 0.0, %v3467
  %v3469 = vpop.f32.mrb[0].mxu0
  %3470 = vmatprep.mubr.bf16.mxu0 0
  %3471 = vmatmul.mubr.bf16.gmra.mrb[0].mxu0 %v3388
  %v3472 = vpop.f32.mrb[0].mxu0
  %v3473 = vadd.f32 0.0, %v3472
  %v3474 = vpop.f32.mrb[0].mxu0
  %v3475 = vpop.f32.mrb[0].mxu0
  %v3476 = vadd.f32 0.0, %v3475
  %v3477 = vpop.f32.mrb[0].mxu0
  %3478 = vmatprep.mubr.bf16.mxu0 0
  %3479 = vmatmul.mubr.bf16.gmra.mrb[0].mxu0 %v3391
  %v3480 = vpop.f32.mrb[0].mxu0
  %v3481 = vadd.f32 0.0, %v3480
  %v3482 = vpop.f32.mrb[0].mxu0
  %v3483 = vpop.f32.mrb[0].mxu0
  %v3484 = vadd.f32 0.0, %v3483
  %v3485 = vpop.f32.mrb[0].mxu0
  %3486 = vmatprep.mubr.bf16.mxu0 0
  %3487 = vmatmul.mubr.bf16.gmra.mrb[0].mxu0 %v3394
  %v3488 = vpop.f32.mrb[0].mxu0
  %v3489 = vadd.f32 0.0, %v3488
  %v3490 = vpop.f32.mrb[0].mxu0
  %v3491 = vpop.f32.mrb[0].mxu0
  %v3492 = vadd.f32 0.0, %v3491
  %v3493 = vpop.f32.mrb[0].mxu0
  %3494 = vmatprep.mubr.bf16.mxu0 0
  %3495 = vmatmul.mubr.bf16.gmra.mrb[0].mxu0 %v3397
  %v3496 = vpop.f32.mrb[0].mxu0
  %v3497 = vadd.f32 0.0, %v3496
  %v3498 = vpop.f32.mrb[0].mxu0
  %v3499 = vpop.f32.mrb[0].mxu0
  %v3500 = vadd.f32 0.0, %v3499
  %v3501 = vpop.f32.mrb[0].mxu0
  %3502 = vmatprep.mubr.bf16.mxu0 0
  %3503 = vmatmul.mubr.bf16.gmra.mrb[0].mxu0 %v3400
  %v3504 = vpop.f32.mrb[0].mxu0
  %v3505 = vadd.f32 0.0, %v3504
  %v3506 = vpop.f32.mrb[0].mxu0
  %v3507 = vpop.f32.mrb[0].mxu0
  %v3508 = vadd.f32 0.0, %v3507
  %v3509 = vpop.f32.mrb[0].mxu0
  %3510 = vmatprep.mubr.bf16.mxu0 0
  %3511 = vmatmul.mubr.bf16.gmra.mrb[0].mxu0 %v3403
  %v3512 = vpop.f32.mrb[0].mxu0
  %v3513 = vadd.f32 0.0, %v3512
  %v3514 = vpop.f32.mrb[0].mxu0
  %v3515 = vpop.f32.mrb[0].mxu0
  %v3516 = vadd.f32 0.0, %v3515
  %v3517 = vpop.f32.mrb[0].mxu0
  %3518 = vmatprep.mubr.bf16.mxu0 0
  %3519 = vmatmul.mubr.bf16.gmra.mrb[0].mxu0 %v3406
  %v3520 = vpop.f32.mrb[0].mxu0
  %v3521 = vadd.f32 0.0, %v3520
  %v3522 = vpop.f32.mrb[0].mxu0
  %v3523 = vpop.f32.mrb[0].mxu0
  %v3524 = vadd.f32 0.0, %v3523
  %v3525 = vpop.f32.mrb[0].mxu0
  %3526 = vmatprep.mubr.bf16.mxu0 0
  %3527 = vmatmul.mubr.bf16.gmra.mrb[0].mxu0 %v3409
  %v3528 = vpop.f32.mrb[0].mxu0
  %v3529 = vadd.f32 0.0, %v3528
  %v3530 = vpop.f32.mrb[0].mxu0
  %v3531 = vpop.f32.mrb[0].mxu0
  %v3532 = vadd.f32 0.0, %v3531
  %v3533 = vpop.f32.mrb[0].mxu0
  %3534 = vmatprep.mubr.bf16.mxu0 0
  %3535 = vmatmul.mubr.bf16.gmra.mrb[0].mxu0 %v3412
  %v3536 = vpop.f32.mrb[0].mxu0
  %v3537 = vadd.f32 0.0, %v3536
  %v3538 = vpop.f32.mrb[0].mxu0
  %v3539 = vpop.f32.mrb[0].mxu0
  %v3540 = vadd.f32 0.0, %v3539
  %v3541 = vpop.f32.mrb[0].mxu0
  %3542 = vdwg.mxu0
  %v3543 = vadd.f32 %v3309, %v3449
  %v3544 = vadd.f32 %v3310, %v3452
  %v3545 = vadd.f32 %v3311, %v3457
  %v3546 = vadd.f32 %v3312, %v3460
  %v3547 = vadd.f32 %v3313, %v3465
  %v3548 = vadd.f32 %v3314, %v3468
  %v3549 = vadd.f32 %v3315, %v3473
  %v3550 = vadd.f32 %v3316, %v3476
  %v3551 = vadd.f32 %v3317, %v3481
  %v3552 = vadd.f32 %v3318, %v3484
  %v3553 = vadd.f32 %v3319, %v3489
  %v3554 = vadd.f32 %v3320, %v3492
  %v3555 = vadd.f32 %v3321, %v3497
  %v3556 = vadd.f32 %v3322, %v3500
  %v3557 = vadd.f32 %v3323, %v3505
  %v3558 = vadd.f32 %v3324, %v3508
  %v3559 = vadd.f32 %v3325, %v3513
  %v3560 = vadd.f32 %v3326, %v3516
  %v3561 = vadd.f32 %v3327, %v3521
  %v3562 = vadd.f32 %v3328, %v3524
  %v3563 = vadd.f32 %v3329, %v3529
  %v3564 = vadd.f32 %v3330, %v3532
  %v3565 = vadd.f32 %v3331, %v3537
  %v3566 = vadd.f32 %v3332, %v3540
  %vm3567 = vcmp.gt.f32.partialorder %v3543, 0.0
  %vm3568 = vcmp.gt.f32.partialorder %v3544, 0.0
  %vm3569 = vcmp.gt.f32.partialorder %v3545, 0.0
  %vm3570 = vcmp.gt.f32.partialorder %v3546, 0.0
  %vm3571 = vcmp.gt.f32.partialorder %v3547, 0.0
  %vm3572 = vcmp.gt.f32.partialorder %v3548, 0.0
  %vm3573 = vcmp.gt.f32.partialorder %v3549, 0.0
  %vm3574 = vcmp.gt.f32.partialorder %v3550, 0.0
  %vm3575 = vcmp.gt.f32.partialorder %v3551, 0.0
  %vm3576 = vcmp.gt.f32.partialorder %v3552, 0.0
  %vm3577 = vcmp.gt.f32.partialorder %v3553, 0.0
  %vm3578 = vcmp.gt.f32.partialorder %v3554, 0.0
  %vm3579 = vcmp.gt.f32.partialorder %v3555, 0.0
  %vm3580 = vcmp.gt.f32.partialorder %v3556, 0.0
  %vm3581 = vcmp.gt.f32.partialorder %v3557, 0.0
  %vm3582 = vcmp.gt.f32.partialorder %v3558, 0.0
  %vm3583 = vcmp.gt.f32.partialorder %v3559, 0.0
  %vm3584 = vcmp.gt.f32.partialorder %v3560, 0.0
  %vm3585 = vcmp.gt.f32.partialorder %v3561, 0.0
  %vm3586 = vcmp.gt.f32.partialorder %v3562, 0.0
  %vm3587 = vcmp.gt.f32.partialorder %v3563, 0.0
  %vm3588 = vcmp.gt.f32.partialorder %v3564, 0.0
  %vm3589 = vcmp.gt.f32.partialorder %v3565, 0.0
  %vm3590 = vcmp.gt.f32.partialorder %v3566, 0.0
  %v3591 = vmul.f32 %v3543, 0.01
  %v3592 = vmul.f32 %v3544, 0.01
  %v3593 = vmul.f32 %v3545, 0.01
  %v3594 = vmul.f32 %v3546, 0.01
  %v3595 = vmul.f32 %v3547, 0.01
  %v3596 = vmul.f32 %v3548, 0.01
  %v3597 = vmul.f32 %v3549, 0.01
  %v3598 = vmul.f32 %v3550, 0.01
  %v3599 = vmul.f32 %v3551, 0.01
  %v3600 = vmul.f32 %v3552, 0.01
  %v3601 = vmul.f32 %v3553, 0.01
  %v3602 = vmul.f32 %v3554, 0.01
  %v3603 = vmul.f32 %v3555, 0.01
  %v3604 = vmul.f32 %v3556, 0.01
  %v3605 = vmul.f32 %v3557, 0.01
  %v3606 = vmul.f32 %v3558, 0.01
  %v3607 = vmul.f32 %v3559, 0.01
  %v3608 = vmul.f32 %v3560, 0.01
  %v3609 = vmul.f32 %v3561, 0.01
  %v3610 = vmul.f32 %v3562, 0.01
  %v3611 = vmul.f32 %v3563, 0.01
  %v3612 = vmul.f32 %v3564, 0.01
  %v3613 = vmul.f32 %v3565, 0.01
  %v3614 = vmul.f32 %v3566, 0.01
  %v3615 = vsel %vm3567, %v3543, %v3591
  %v3616 = vsel %vm3568, %v3544, %v3592
  %v3617 = vsel %vm3569, %v3545, %v3593
  %v3618 = vsel %vm3570, %v3546, %v3594
  %v3619 = vsel %vm3571, %v3547, %v3595
  %v3620 = vsel %vm3572, %v3548, %v3596
  %v3621 = vsel %vm3573, %v3549, %v3597
  %v3622 = vsel %vm3574, %v3550, %v3598
  %v3623 = vsel %vm3575, %v3551, %v3599
  %v3624 = vsel %vm3576, %v3552, %v3600
  %v3625 = vsel %vm3577, %v3553, %v3601
  %v3626 = vsel %vm3578, %v3554, %v3602
  %v3627 = vsel %vm3579, %v3555, %v3603
  %v3628 = vsel %vm3580, %v3556, %v3604
  %v3629 = vsel %vm3581, %v3557, %v3605
  %v3630 = vsel %vm3582, %v3558, %v3606
  %v3631 = vsel %vm3583, %v3559, %v3607
  %v3632 = vsel %vm3584, %v3560, %v3608
  %v3633 = vsel %vm3585, %v3561, %v3609
  %v3634 = vsel %vm3586, %v3562, %v3610
  %v3635 = vsel %vm3587, %v3563, %v3611
  %v3636 = vsel %vm3588, %v3564, %v3612
  %v3637 = vsel %vm3589, %v3565, %v3613
  %v3638 = vsel %vm3590, %v3566, %v3614
  %v3639 = vadd.f32 %v3615, %v1110
  %v3640 = vadd.f32 %v3616, %v1111
  %v3641 = vadd.f32 %v3617, %v1112
  %v3642 = vadd.f32 %v3618, %v1113
  %v3643 = vadd.f32 %v3619, %v1114
  %v3644 = vadd.f32 %v3620, %v1115
  %v3645 = vadd.f32 %v3621, %v1116
  %v3646 = vadd.f32 %v3622, %v1117
  %v3647 = vadd.f32 %v3623, %v1118
  %v3648 = vadd.f32 %v3624, %v1119
  %v3649 = vadd.f32 %v3625, %v1120
  %v3650 = vadd.f32 %v3626, %v1121
  %v3651 = vadd.f32 %v3627, %v1122
  %v3652 = vadd.f32 %v3628, %v1123
  %v3653 = vadd.f32 %v3629, %v1124
  %v3654 = vadd.f32 %v3630, %v1125
  %v3655 = vadd.f32 %v3631, %v1126
  %v3656 = vadd.f32 %v3632, %v1127
  %v3657 = vadd.f32 %v3633, %v1128
  %v3658 = vadd.f32 %v3634, %v1129
  %v3659 = vadd.f32 %v3635, %v1130
  %v3660 = vadd.f32 %v3636, %v1131
  %v3661 = vadd.f32 %v3637, %v1132
  %v3662 = vadd.f32 %v3638, %v1133
  %s3663 = scalar_lea.vmem %s8, 16
  %v3664 = vld [vmem:[%s3663] sm:$0xf]
  %v3665 = vld [vmem:[%s3663 + $0x4] sm:$0xf]
  %v3666 = vld [vmem:[%s3663 + $0x8] sm:$0xf]
  %v3667 = vld [vmem:[%s3663 + $0xc] sm:$0xf]
  %s3668 = scalar_lea.vmem %s9, 1
  %v3669 = vld [vmem:[%s3668] sm:$0x1]
  %v3670 = vpack.c.bf16 %v3640, %v3639
  %v3671 = vpack.c.bf16 %v3642, %v3641
  %v3672 = vpack.c.bf16 %v3644, %v3643
  %v3673 = vpack.c.bf16 %v3646, %v3645
  %v3674 = vpack.c.bf16 %v3648, %v3647
  %v3675 = vpack.c.bf16 %v3650, %v3649
  %v3676 = vpack.c.bf16 %v3652, %v3651
  %v3677 = vpack.c.bf16 %v3654, %v3653
  %v3678 = vpack.c.bf16 %v3656, %v3655
  %v3679 = vpack.c.bf16 %v3658, %v3657
  %v3680 = vpack.c.bf16 %v3660, %v3659
  %v3681 = vpack.c.bf16 %v3662, %v3661
  %v3683 = vlaneseq
  %v3684 = vshrl.u32 %v3683, 7
  %v3685 = vsub.s32 0, %v3684
  %v3686 = vrot.slane %v3669, %v3685
  %v3692 = vunpack.c.l.b16 %v3664
  %v3693 = vunpack.c.l.b16 %v3665
  %v3694 = vunpack.c.l.b16 %v3666
  %v3695 = vunpack.c.l.b16 %v3667
  %v3696 = vpack.c.b16 %v3693, %v3692
  %v3697 = vpack.c.b16 %v3695, %v3694
  %v3701 = vsel %vm1169, %v3670, 0
  %v3704 = vsel %vm1169, %v3671, 0
  %v3707 = vsel %vm1169, %v3672, 0
  %v3710 = vsel %vm1169, %v3673, 0
  %v3713 = vsel %vm1169, %v3674, 0
  %v3716 = vsel %vm1169, %v3675, 0
  %v3719 = vsel %vm1169, %v3676, 0
  %v3722 = vsel %vm1169, %v3677, 0
  %v3725 = vsel %vm1169, %v3678, 0
  %v3728 = vsel %vm1169, %v3679, 0
  %v3731 = vsel %vm1169, %v3680, 0
  %v3734 = vsel %vm1169, %v3681, 0
  %3736 = vmatprep.subr.bf16.mxu0 0
  %3737 = vmatpush1.bf16.msra.mxu0 %v3696
  %3738 = vmatprep.subr.bf16.mxu0 0
  %3739 = vmatpush1.bf16.msra.mxu0 %v3697
  %3740 = vmatprep.subr.bf16.mxu0 0
  %3741 = vmatpush1.bf16.msra.mxu0 0
  %3742 = vmatprep.subr.bf16.mxu0 0
  %3743 = vmatpush1.bf16.msra.mxu0 0
  %3744 = vmatprep.subr.bf16.mxu0 0
  %3745 = vmatpush1.bf16.msra.mxu0 0
  %3746 = vmatprep.subr.bf16.mxu0 0
  %3747 = vmatpush1.bf16.msra.mxu0 0
  %3748 = vmatprep.subr.bf16.mxu0 0
  %3749 = vmatpush1.bf16.msra.mxu0 0
  %3750 = vmatprep.subr.bf16.mxu0 0
  %3751 = vmatpush1.bf16.msra.mxu0 0
  %3752 = vmatprep.subr.bf16.mxu0 0
  %3753 = vmatpush1.bf16.msra.mxu0 0
  %3754 = vmatprep.subr.bf16.mxu0 0
  %3755 = vmatpush1.bf16.msra.mxu0 0
  %3756 = vmatprep.subr.bf16.mxu0 0
  %3757 = vmatpush1.bf16.msra.mxu0 0
  %3758 = vmatprep.subr.bf16.mxu0 0
  %3759 = vmatpush1.bf16.msra.mxu0 0
  %3760 = vmatprep.subr.bf16.mxu0 0
  %3761 = vmatpush1.bf16.msra.mxu0 0
  %3762 = vmatprep.subr.bf16.mxu0 0
  %3763 = vmatpush1.bf16.msra.mxu0 0
  %3764 = vmatprep.subr.bf16.mxu0 0
  %3765 = vmatpush1.bf16.msra.mxu0 0
  %3766 = vmatprep.subr.bf16.mxu0 0
  %3767 = vmatpush1.bf16.msra.mxu0 0
  %3768 = vmatprep.mubr.bf16.mxu0 0
  %3769 = vmatmul.mubr.bf16.gmra.mrb[0].mxu0 %v3701
  %v3770 = vpop.f32.mrb[0].mxu0
  %v3771 = vadd.f32 %v3686, %v3770
  %v3772 = vpop.f32.mrb[0].mxu0
  %v3773 = vpop.f32.mrb[0].mxu0
  %v3774 = vadd.f32 %v3686, %v3773
  %v3775 = vpop.f32.mrb[0].mxu0
  %3776 = vmatprep.mubr.bf16.mxu0 0
  %3777 = vmatmul.mubr.bf16.gmra.mrb[0].mxu0 %v3704
  %v3778 = vpop.f32.mrb[0].mxu0
  %v3779 = vadd.f32 %v3686, %v3778
  %v3780 = vpop.f32.mrb[0].mxu0
  %v3781 = vpop.f32.mrb[0].mxu0
  %v3782 = vadd.f32 %v3686, %v3781
  %v3783 = vpop.f32.mrb[0].mxu0
  %3784 = vmatprep.mubr.bf16.mxu0 0
  %3785 = vmatmul.mubr.bf16.gmra.mrb[0].mxu0 %v3707
  %v3786 = vpop.f32.mrb[0].mxu0
  %v3787 = vadd.f32 %v3686, %v3786
  %v3788 = vpop.f32.mrb[0].mxu0
  %v3789 = vpop.f32.mrb[0].mxu0
  %v3790 = vadd.f32 %v3686, %v3789
  %v3791 = vpop.f32.mrb[0].mxu0
  %3792 = vmatprep.mubr.bf16.mxu0 0
  %3793 = vmatmul.mubr.bf16.gmra.mrb[0].mxu0 %v3710
  %v3794 = vpop.f32.mrb[0].mxu0
  %v3795 = vadd.f32 %v3686, %v3794
  %v3796 = vpop.f32.mrb[0].mxu0
  %v3797 = vpop.f32.mrb[0].mxu0
  %v3798 = vadd.f32 %v3686, %v3797
  %v3799 = vpop.f32.mrb[0].mxu0
  %3800 = vmatprep.mubr.bf16.mxu0 0
  %3801 = vmatmul.mubr.bf16.gmra.mrb[0].mxu0 %v3713
  %v3802 = vpop.f32.mrb[0].mxu0
  %v3803 = vadd.f32 %v3686, %v3802
  %v3804 = vpop.f32.mrb[0].mxu0
  %v3805 = vpop.f32.mrb[0].mxu0
  %v3806 = vadd.f32 %v3686, %v3805
  %v3807 = vpop.f32.mrb[0].mxu0
  %3808 = vmatprep.mubr.bf16.mxu0 0
  %3809 = vmatmul.mubr.bf16.gmra.mrb[0].mxu0 %v3716
  %v3810 = vpop.f32.mrb[0].mxu0
  %v3811 = vadd.f32 %v3686, %v3810
  %v3812 = vpop.f32.mrb[0].mxu0
  %v3813 = vpop.f32.mrb[0].mxu0
  %v3814 = vadd.f32 %v3686, %v3813
  %v3815 = vpop.f32.mrb[0].mxu0
  %3816 = vmatprep.mubr.bf16.mxu0 0
  %3817 = vmatmul.mubr.bf16.gmra.mrb[0].mxu0 %v3719
  %v3818 = vpop.f32.mrb[0].mxu0
  %v3819 = vadd.f32 %v3686, %v3818
  %v3820 = vpop.f32.mrb[0].mxu0
  %v3821 = vpop.f32.mrb[0].mxu0
  %v3822 = vadd.f32 %v3686, %v3821
  %v3823 = vpop.f32.mrb[0].mxu0
  %3824 = vmatprep.mubr.bf16.mxu0 0
  %3825 = vmatmul.mubr.bf16.gmra.mrb[0].mxu0 %v3722
  %v3826 = vpop.f32.mrb[0].mxu0
  %v3827 = vadd.f32 %v3686, %v3826
  %v3828 = vpop.f32.mrb[0].mxu0
  %v3829 = vpop.f32.mrb[0].mxu0
  %v3830 = vadd.f32 %v3686, %v3829
  %v3831 = vpop.f32.mrb[0].mxu0
  %3832 = vmatprep.mubr.bf16.mxu0 0
  %3833 = vmatmul.mubr.bf16.gmra.mrb[0].mxu0 %v3725
  %v3834 = vpop.f32.mrb[0].mxu0
  %v3835 = vadd.f32 %v3686, %v3834
  %v3836 = vpop.f32.mrb[0].mxu0
  %v3837 = vpop.f32.mrb[0].mxu0
  %v3838 = vadd.f32 %v3686, %v3837
  %v3839 = vpop.f32.mrb[0].mxu0
  %3840 = vmatprep.mubr.bf16.mxu0 0
  %3841 = vmatmul.mubr.bf16.gmra.mrb[0].mxu0 %v3728
  %v3842 = vpop.f32.mrb[0].mxu0
  %v3843 = vadd.f32 %v3686, %v3842
  %v3844 = vpop.f32.mrb[0].mxu0
  %v3845 = vpop.f32.mrb[0].mxu0
  %v3846 = vadd.f32 %v3686, %v3845
  %v3847 = vpop.f32.mrb[0].mxu0
  %3848 = vmatprep.mubr.bf16.mxu0 0
  %3849 = vmatmul.mubr.bf16.gmra.mrb[0].mxu0 %v3731
  %v3850 = vpop.f32.mrb[0].mxu0
  %v3851 = vadd.f32 %v3686, %v3850
  %v3852 = vpop.f32.mrb[0].mxu0
  %v3853 = vpop.f32.mrb[0].mxu0
  %v3854 = vadd.f32 %v3686, %v3853
  %v3855 = vpop.f32.mrb[0].mxu0
  %3856 = vmatprep.mubr.bf16.mxu0 0
  %3857 = vmatmul.mubr.bf16.gmra.mrb[0].mxu0 %v3734
  %v3858 = vpop.f32.mrb[0].mxu0
  %v3859 = vadd.f32 %v3686, %v3858
  %v3860 = vpop.f32.mrb[0].mxu0
  %v3861 = vpop.f32.mrb[0].mxu0
  %v3862 = vadd.f32 %v3686, %v3861
  %v3863 = vpop.f32.mrb[0].mxu0
  %3864 = vdwg.mxu0
  %vm3865 = vcmp.gt.f32.partialorder %v3771, 0.0
  %vm3866 = vcmp.gt.f32.partialorder %v3774, 0.0
  %vm3867 = vcmp.gt.f32.partialorder %v3779, 0.0
  %vm3868 = vcmp.gt.f32.partialorder %v3782, 0.0
  %vm3869 = vcmp.gt.f32.partialorder %v3787, 0.0
  %vm3870 = vcmp.gt.f32.partialorder %v3790, 0.0
  %vm3871 = vcmp.gt.f32.partialorder %v3795, 0.0
  %vm3872 = vcmp.gt.f32.partialorder %v3798, 0.0
  %vm3873 = vcmp.gt.f32.partialorder %v3803, 0.0
  %vm3874 = vcmp.gt.f32.partialorder %v3806, 0.0
  %vm3875 = vcmp.gt.f32.partialorder %v3811, 0.0
  %vm3876 = vcmp.gt.f32.partialorder %v3814, 0.0
  %vm3877 = vcmp.gt.f32.partialorder %v3819, 0.0
  %vm3878 = vcmp.gt.f32.partialorder %v3822, 0.0
  %vm3879 = vcmp.gt.f32.partialorder %v3827, 0.0
  %vm3880 = vcmp.gt.f32.partialorder %v3830, 0.0
  %vm3881 = vcmp.gt.f32.partialorder %v3835, 0.0
  %vm3882 = vcmp.gt.f32.partialorder %v3838, 0.0
  %vm3883 = vcmp.gt.f32.partialorder %v3843, 0.0
  %vm3884 = vcmp.gt.f32.partialorder %v3846, 0.0
  %vm3885 = vcmp.gt.f32.partialorder %v3851, 0.0
  %vm3886 = vcmp.gt.f32.partialorder %v3854, 0.0
  %vm3887 = vcmp.gt.f32.partialorder %v3859, 0.0
  %vm3888 = vcmp.gt.f32.partialorder %v3862, 0.0
  %v3889 = vmul.f32 %v3771, 0.01
  %v3890 = vmul.f32 %v3774, 0.01
  %v3891 = vmul.f32 %v3779, 0.01
  %v3892 = vmul.f32 %v3782, 0.01
  %v3893 = vmul.f32 %v3787, 0.01
  %v3894 = vmul.f32 %v3790, 0.01
  %v3895 = vmul.f32 %v3795, 0.01
  %v3896 = vmul.f32 %v3798, 0.01
  %v3897 = vmul.f32 %v3803, 0.01
  %v3898 = vmul.f32 %v3806, 0.01
  %v3899 = vmul.f32 %v3811, 0.01
  %v3900 = vmul.f32 %v3814, 0.01
  %v3901 = vmul.f32 %v3819, 0.01
  %v3902 = vmul.f32 %v3822, 0.01
  %v3903 = vmul.f32 %v3827, 0.01
  %v3904 = vmul.f32 %v3830, 0.01
  %v3905 = vmul.f32 %v3835, 0.01
  %v3906 = vmul.f32 %v3838, 0.01
  %v3907 = vmul.f32 %v3843, 0.01
  %v3908 = vmul.f32 %v3846, 0.01
  %v3909 = vmul.f32 %v3851, 0.01
  %v3910 = vmul.f32 %v3854, 0.01
  %v3911 = vmul.f32 %v3859, 0.01
  %v3912 = vmul.f32 %v3862, 0.01
  %v3913 = vsel %vm3865, %v3771, %v3889
  %v3914 = vsel %vm3866, %v3774, %v3890
  %v3915 = vsel %vm3867, %v3779, %v3891
  %v3916 = vsel %vm3868, %v3782, %v3892
  %v3917 = vsel %vm3869, %v3787, %v3893
  %v3918 = vsel %vm3870, %v3790, %v3894
  %v3919 = vsel %vm3871, %v3795, %v3895
  %v3920 = vsel %vm3872, %v3798, %v3896
  %v3921 = vsel %vm3873, %v3803, %v3897
  %v3922 = vsel %vm3874, %v3806, %v3898
  %v3923 = vsel %vm3875, %v3811, %v3899
  %v3924 = vsel %vm3876, %v3814, %v3900
  %v3925 = vsel %vm3877, %v3819, %v3901
  %v3926 = vsel %vm3878, %v3822, %v3902
  %v3927 = vsel %vm3879, %v3827, %v3903
  %v3928 = vsel %vm3880, %v3830, %v3904
  %v3929 = vsel %vm3881, %v3835, %v3905
  %v3930 = vsel %vm3882, %v3838, %v3906
  %v3931 = vsel %vm3883, %v3843, %v3907
  %v3932 = vsel %vm3884, %v3846, %v3908
  %v3933 = vsel %vm3885, %v3851, %v3909
  %v3934 = vsel %vm3886, %v3854, %v3910
  %v3935 = vsel %vm3887, %v3859, %v3911
  %v3936 = vsel %vm3888, %v3862, %v3912
  %v3937 = vmul.f32 %v3913, %v89
  %v3938 = vmul.f32 %v3914, %v94
  %v3939 = vmul.f32 %v3915, %v99
  %v3940 = vmul.f32 %v3916, %v104
  %v3941 = vmul.f32 %v3917, %v109
  %v3942 = vmul.f32 %v3918, %v114
  %v3943 = vmul.f32 %v3919, %v119
  %v3944 = vmul.f32 %v3920, %v124
  %v3945 = vmul.f32 %v3921, %v129
  %v3946 = vmul.f32 %v3922, %v134
  %v3947 = vmul.f32 %v3923, %v139
  %v3948 = vmul.f32 %v3924, %v144
  %v3949 = vmul.f32 %v3925, %v149
  %v3950 = vmul.f32 %v3926, %v154
  %v3951 = vmul.f32 %v3927, %v159
  %v3952 = vmul.f32 %v3928, %v164
  %v3953 = vmul.f32 %v3929, %v169
  %v3954 = vmul.f32 %v3930, %v174
  %v3955 = vmul.f32 %v3931, %v179
  %v3956 = vmul.f32 %v3932, %v184
  %v3957 = vmul.f32 %v3933, %v189
  %v3958 = vmul.f32 %v3934, %v194
  %v3959 = vmul.f32 %v3935, %v199
  %v3960 = vmul.f32 %v3936, %v204
  %3961 = vst.msk [vmem:[#allocation2 + $0x10] sm:$0xff] %vm57, %v3937
  %3962 = vst.msk [vmem:[#allocation2 + $0x18] sm:$0xff] %vm57, %v3938
  %3963 = vst.msk [vmem:[#allocation2 + $0x20] sm:$0xff] %vm57, %v3939
  %3964 = vst.msk [vmem:[#allocation2 + $0x28] sm:$0xff] %vm57, %v3940
  %3965 = vst.msk [vmem:[#allocation2 + $0x30] sm:$0xff] %vm57, %v3941
  %3966 = vst.msk [vmem:[#allocation2 + $0x38] sm:$0xff] %vm57, %v3942
  %3967 = vst.msk [vmem:[#allocation2 + $0x40] sm:$0xff] %vm57, %v3943
  %3968 = vst.msk [vmem:[#allocation2 + $0x48] sm:$0xff] %vm57, %v3944
  %3969 = vst.msk [vmem:[#allocation2 + $0x50] sm:$0xff] %vm57, %v3945
  %3970 = vst.msk [vmem:[#allocation2 + $0x58] sm:$0xff] %vm57, %v3946
  %3971 = vst.msk [vmem:[#allocation2 + $0x60] sm:$0xff] %vm57, %v3947
  %3972 = vst.msk [vmem:[#allocation2 + $0x68] sm:$0xff] %vm57, %v3948
  %3973 = vst.msk [vmem:[#allocation2 + $0x70] sm:$0xff] %vm57, %v3949
  %3974 = vst.msk [vmem:[#allocation2 + $0x78] sm:$0xff] %vm57, %v3950
  %3975 = vst.msk [vmem:[#allocation2 + $0x80] sm:$0xff] %vm57, %v3951
  %3976 = vst.msk [vmem:[#allocation2 + $0x88] sm:$0xff] %vm57, %v3952
  %3977 = vst.msk [vmem:[#allocation2 + $0x90] sm:$0xff] %vm57, %v3953
  %3978 = vst.msk [vmem:[#allocation2 + $0x98] sm:$0xff] %vm57, %v3954
  %3979 = vst.msk [vmem:[#allocation2 + $0xa0] sm:$0xff] %vm57, %v3955
  %3980 = vst.msk [vmem:[#allocation2 + $0xa8] sm:$0xff] %vm57, %v3956
  %3981 = vst.msk [vmem:[#allocation2 + $0xb0] sm:$0xff] %vm57, %v3957
  %3982 = vst.msk [vmem:[#allocation2 + $0xb8] sm:$0xff] %vm57, %v3958
  %3983 = vst.msk [vmem:[#allocation2 + $0xc0] sm:$0xff] %vm57, %v3959
  %3984 = vst.msk [vmem:[#allocation2 + $0xc8] sm:$0xff] %vm57, %v3960
  %s3985 = scalar_lea.vmem %s11, 1
  %v3986 = vld [vmem:[%s3985] sm:$0x1]
  %v3987 = vld [vmem:[#allocation2 + $0x5] sm:$0xff]
  %v3988 = vld [vmem:[#allocation2 + $0xd] sm:$0xff]
  %v3989 = vld [vmem:[#allocation2 + $0x15] sm:$0xff]
  %v3990 = vld [vmem:[#allocation2 + $0x1d] sm:$0xff]
  %v3991 = vld [vmem:[#allocation2 + $0x25] sm:$0xff]
  %v3992 = vld [vmem:[#allocation2 + $0x2d] sm:$0xff]
  %v3993 = vld [vmem:[#allocation2 + $0x35] sm:$0xff]
  %v3994 = vld [vmem:[#allocation2 + $0x3d] sm:$0xff]
  %v3995 = vld [vmem:[#allocation2 + $0x45] sm:$0xff]
  %v3996 = vld [vmem:[#allocation2 + $0x4d] sm:$0xff]
  %v3997 = vld [vmem:[#allocation2 + $0x55] sm:$0xff]
  %v3998 = vld [vmem:[#allocation2 + $0x5d] sm:$0xff]
  %v3999 = vld [vmem:[#allocation2 + $0x65] sm:$0xff]
  %v4000 = vld [vmem:[#allocation2 + $0x6d] sm:$0xff]
  %v4001 = vld [vmem:[#allocation2 + $0x75] sm:$0xff]
  %v4002 = vld [vmem:[#allocation2 + $0x7d] sm:$0xff]
  %v4003 = vld [vmem:[#allocation2 + $0x85] sm:$0xff]
  %v4004 = vld [vmem:[#allocation2 + $0x8d] sm:$0xff]
  %v4005 = vld [vmem:[#allocation2 + $0x95] sm:$0xff]
  %v4006 = vld [vmem:[#allocation2 + $0x9d] sm:$0xff]
  %v4007 = vld [vmem:[#allocation2 + $0xa5] sm:$0xff]
  %v4008 = vld [vmem:[#allocation2 + $0xad] sm:$0xff]
  %v4009 = vld [vmem:[#allocation2 + $0xb5] sm:$0xff]
  %v4010 = vld [vmem:[#allocation2 + $0xbd] sm:$0xff]
  %v4011 = vpack.c.bf16 %v3988, %v3987
  %v4012 = vpack.c.bf16 %v3990, %v3989
  %v4013 = vpack.c.bf16 %v3992, %v3991
  %v4014 = vpack.c.bf16 %v3994, %v3993
  %v4015 = vpack.c.bf16 %v3996, %v3995
  %v4016 = vpack.c.bf16 %v3998, %v3997
  %v4017 = vpack.c.bf16 %v4000, %v3999
  %v4018 = vpack.c.bf16 %v4002, %v4001
  %v4019 = vpack.c.bf16 %v4004, %v4003
  %v4020 = vpack.c.bf16 %v4006, %v4005
  %v4021 = vpack.c.bf16 %v4008, %v4007
  %v4022 = vpack.c.bf16 %v4010, %v4009
  %s4023 = scalar_lea.vmem %s10, 72
  %v4024 = vld [vmem:[%s4023] sm:$0xf]
  %v4025 = vld [vmem:[%s4023 + $0x4] sm:$0xf]
  %v4028 = vunpack.c.l.b16 %v4024
  %v4029 = vunpack.c.l.b16 %v4025
  %v4030 = vpack.c.b16 %v4029, %v4028
  %v4033 = vsel %vm57, %v4011, 0
  %v4036 = vsel %vm57, %v4012, 0
  %v4039 = vsel %vm57, %v4013, 0
  %v4042 = vsel %vm57, %v4014, 0
  %v4045 = vsel %vm57, %v4015, 0
  %v4048 = vsel %vm57, %v4016, 0
  %v4051 = vsel %vm57, %v4017, 0
  %v4054 = vsel %vm57, %v4018, 0
  %v4057 = vsel %vm57, %v4019, 0
  %v4060 = vsel %vm57, %v4020, 0
  %v4063 = vsel %vm57, %v4021, 0
  %v4066 = vsel %vm57, %v4022, 0
  %4068 = vmatprep.subr.bf16.mxu0 0
  %4069 = vmatpush1.bf16.msra.mxu0 %v4030
  %4070 = vmatprep.subr.bf16.mxu0 0
  %4071 = vmatpush1.bf16.msra.mxu0 0
  %4072 = vmatprep.subr.bf16.mxu0 0
  %4073 = vmatpush1.bf16.msra.mxu0 0
  %4074 = vmatprep.subr.bf16.mxu0 0
  %4075 = vmatpush1.bf16.msra.mxu0 0
  %4076 = vmatprep.subr.bf16.mxu0 0
  %4077 = vmatpush1.bf16.msra.mxu0 0
  %4078 = vmatprep.subr.bf16.mxu0 0
  %4079 = vmatpush1.bf16.msra.mxu0 0
  %4080 = vmatprep.subr.bf16.mxu0 0
  %4081 = vmatpush1.bf16.msra.mxu0 0
  %4082 = vmatprep.subr.bf16.mxu0 0
  %4083 = vmatpush1.bf16.msra.mxu0 0
  %4084 = vmatprep.subr.bf16.mxu0 0
  %4085 = vmatpush1.bf16.msra.mxu0 0
  %4086 = vmatprep.subr.bf16.mxu0 0
  %4087 = vmatpush1.bf16.msra.mxu0 0
  %4088 = vmatprep.subr.bf16.mxu0 0
  %4089 = vmatpush1.bf16.msra.mxu0 0
  %4090 = vmatprep.subr.bf16.mxu0 0
  %4091 = vmatpush1.bf16.msra.mxu0 0
  %4092 = vmatprep.subr.bf16.mxu0 0
  %4093 = vmatpush1.bf16.msra.mxu0 0
  %4094 = vmatprep.subr.bf16.mxu0 0
  %4095 = vmatpush1.bf16.msra.mxu0 0
  %4096 = vmatprep.subr.bf16.mxu0 0
  %4097 = vmatpush1.bf16.msra.mxu0 0
  %4098 = vmatprep.subr.bf16.mxu0 0
  %4099 = vmatpush1.bf16.msra.mxu0 0
  %4100 = vmatprep.mubr.bf16.mxu0 0
  %4101 = vmatmul.mubr.bf16.gmra.mrb[0].mxu0 %v4033
  %v4102 = vpop.f32.mrb[0].mxu0
  %v4103 = vadd.f32 0.0, %v4102
  %v4104 = vpop.f32.mrb[0].mxu0
  %v4105 = vpop.f32.mrb[0].mxu0
  %v4106 = vadd.f32 0.0, %v4105
  %v4107 = vpop.f32.mrb[0].mxu0
  %4108 = vmatprep.mubr.bf16.mxu0 0
  %4109 = vmatmul.mubr.bf16.gmra.mrb[0].mxu0 %v4036
  %v4110 = vpop.f32.mrb[0].mxu0
  %v4111 = vadd.f32 0.0, %v4110
  %v4112 = vpop.f32.mrb[0].mxu0
  %v4113 = vpop.f32.mrb[0].mxu0
  %v4114 = vadd.f32 0.0, %v4113
  %v4115 = vpop.f32.mrb[0].mxu0
  %4116 = vmatprep.mubr.bf16.mxu0 0
  %4117 = vmatmul.mubr.bf16.gmra.mrb[0].mxu0 %v4039
  %v4118 = vpop.f32.mrb[0].mxu0
  %v4119 = vadd.f32 0.0, %v4118
  %v4120 = vpop.f32.mrb[0].mxu0
  %v4121 = vpop.f32.mrb[0].mxu0
  %v4122 = vadd.f32 0.0, %v4121
  %v4123 = vpop.f32.mrb[0].mxu0
  %4124 = vmatprep.mubr.bf16.mxu0 0
  %4125 = vmatmul.mubr.bf16.gmra.mrb[0].mxu0 %v4042
  %v4126 = vpop.f32.mrb[0].mxu0
  %v4127 = vadd.f32 0.0, %v4126
  %v4128 = vpop.f32.mrb[0].mxu0
  %v4129 = vpop.f32.mrb[0].mxu0
  %v4130 = vadd.f32 0.0, %v4129
  %v4131 = vpop.f32.mrb[0].mxu0
  %4132 = vmatprep.mubr.bf16.mxu0 0
  %4133 = vmatmul.mubr.bf16.gmra.mrb[0].mxu0 %v4045
  %v4134 = vpop.f32.mrb[0].mxu0
  %v4135 = vadd.f32 0.0, %v4134
  %v4136 = vpop.f32.mrb[0].mxu0
  %v4137 = vpop.f32.mrb[0].mxu0
  %v4138 = vadd.f32 0.0, %v4137
  %v4139 = vpop.f32.mrb[0].mxu0
  %4140 = vmatprep.mubr.bf16.mxu0 0
  %4141 = vmatmul.mubr.bf16.gmra.mrb[0].mxu0 %v4048
  %v4142 = vpop.f32.mrb[0].mxu0
  %v4143 = vadd.f32 0.0, %v4142
  %v4144 = vpop.f32.mrb[0].mxu0
  %v4145 = vpop.f32.mrb[0].mxu0
  %v4146 = vadd.f32 0.0, %v4145
  %v4147 = vpop.f32.mrb[0].mxu0
  %4148 = vmatprep.mubr.bf16.mxu0 0
  %4149 = vmatmul.mubr.bf16.gmra.mrb[0].mxu0 %v4051
  %v4150 = vpop.f32.mrb[0].mxu0
  %v4151 = vadd.f32 0.0, %v4150
  %v4152 = vpop.f32.mrb[0].mxu0
  %v4153 = vpop.f32.mrb[0].mxu0
  %v4154 = vadd.f32 0.0, %v4153
  %v4155 = vpop.f32.mrb[0].mxu0
  %4156 = vmatprep.mubr.bf16.mxu0 0
  %4157 = vmatmul.mubr.bf16.gmra.mrb[0].mxu0 %v4054
  %v4158 = vpop.f32.mrb[0].mxu0
  %v4159 = vadd.f32 0.0, %v4158
  %v4160 = vpop.f32.mrb[0].mxu0
  %v4161 = vpop.f32.mrb[0].mxu0
  %v4162 = vadd.f32 0.0, %v4161
  %v4163 = vpop.f32.mrb[0].mxu0
  %4164 = vmatprep.mubr.bf16.mxu0 0
  %4165 = vmatmul.mubr.bf16.gmra.mrb[0].mxu0 %v4057
  %v4166 = vpop.f32.mrb[0].mxu0
  %v4167 = vadd.f32 0.0, %v4166
  %v4168 = vpop.f32.mrb[0].mxu0
  %v4169 = vpop.f32.mrb[0].mxu0
  %v4170 = vadd.f32 0.0, %v4169
  %v4171 = vpop.f32.mrb[0].mxu0
  %4172 = vmatprep.mubr.bf16.mxu0 0
  %4173 = vmatmul.mubr.bf16.gmra.mrb[0].mxu0 %v4060
  %v4174 = vpop.f32.mrb[0].mxu0
  %v4175 = vadd.f32 0.0, %v4174
  %v4176 = vpop.f32.mrb[0].mxu0
  %v4177 = vpop.f32.mrb[0].mxu0
  %v4178 = vadd.f32 0.0, %v4177
  %v4179 = vpop.f32.mrb[0].mxu0
  %4180 = vmatprep.mubr.bf16.mxu0 0
  %4181 = vmatmul.mubr.bf16.gmra.mrb[0].mxu0 %v4063
  %v4182 = vpop.f32.mrb[0].mxu0
  %v4183 = vadd.f32 0.0, %v4182
  %v4184 = vpop.f32.mrb[0].mxu0
  %v4185 = vpop.f32.mrb[0].mxu0
  %v4186 = vadd.f32 0.0, %v4185
  %v4187 = vpop.f32.mrb[0].mxu0
  %4188 = vmatprep.mubr.bf16.mxu0 0
  %4189 = vmatmul.mubr.bf16.gmra.mrb[0].mxu0 %v4066
  %v4190 = vpop.f32.mrb[0].mxu0
  %v4191 = vadd.f32 0.0, %v4190
  %v4192 = vpop.f32.mrb[0].mxu0
  %v4193 = vpop.f32.mrb[0].mxu0
  %v4194 = vadd.f32 0.0, %v4193
  %v4195 = vpop.f32.mrb[0].mxu0
  %4196 = vdwg.mxu0
  %v4198 = vlaneseq
  %v4199 = vshrl.u32 %v4198, 7
  %v4200 = vsub.s32 0, %v4199
  %v4201 = vrot.slane %v3986, %v4200
  %v4203 = vadd.f32 %v4201, %v4103
  %v4204 = vadd.f32 %v4201, %v4106
  %v4205 = vadd.f32 %v4201, %v4111
  %v4206 = vadd.f32 %v4201, %v4114
  %v4207 = vadd.f32 %v4201, %v4119
  %v4208 = vadd.f32 %v4201, %v4122
  %v4209 = vadd.f32 %v4201, %v4127
  %v4210 = vadd.f32 %v4201, %v4130
  %v4211 = vadd.f32 %v4201, %v4135
  %v4212 = vadd.f32 %v4201, %v4138
  %v4213 = vadd.f32 %v4201, %v4143
  %v4214 = vadd.f32 %v4201, %v4146
  %v4215 = vadd.f32 %v4201, %v4151
  %v4216 = vadd.f32 %v4201, %v4154
  %v4217 = vadd.f32 %v4201, %v4159
  %v4218 = vadd.f32 %v4201, %v4162
  %v4219 = vadd.f32 %v4201, %v4167
  %v4220 = vadd.f32 %v4201, %v4170
  %v4221 = vadd.f32 %v4201, %v4175
  %v4222 = vadd.f32 %v4201, %v4178
  %v4223 = vadd.f32 %v4201, %v4183
  %v4224 = vadd.f32 %v4201, %v4186
  %v4225 = vadd.f32 %v4201, %v4191
  %v4226 = vadd.f32 %v4201, %v4194
  %v4227 = vld [vmem:[#allocation2 + $0x6] sm:$0xff]
  %v4228 = vld [vmem:[#allocation2 + $0xe] sm:$0xff]
  %v4229 = vld [vmem:[#allocation2 + $0x16] sm:$0xff]
  %v4230 = vld [vmem:[#allocation2 + $0x1e] sm:$0xff]
  %v4231 = vld [vmem:[#allocation2 + $0x26] sm:$0xff]
  %v4232 = vld [vmem:[#allocation2 + $0x2e] sm:$0xff]
  %v4233 = vld [vmem:[#allocation2 + $0x36] sm:$0xff]
  %v4234 = vld [vmem:[#allocation2 + $0x3e] sm:$0xff]
  %v4235 = vld [vmem:[#allocation2 + $0x46] sm:$0xff]
  %v4236 = vld [vmem:[#allocation2 + $0x4e] sm:$0xff]
  %v4237 = vld [vmem:[#allocation2 + $0x56] sm:$0xff]
  %v4238 = vld [vmem:[#allocation2 + $0x5e] sm:$0xff]
  %v4239 = vld [vmem:[#allocation2 + $0x66] sm:$0xff]
  %v4240 = vld [vmem:[#allocation2 + $0x6e] sm:$0xff]
  %v4241 = vld [vmem:[#allocation2 + $0x76] sm:$0xff]
  %v4242 = vld [vmem:[#allocation2 + $0x7e] sm:$0xff]
  %v4243 = vld [vmem:[#allocation2 + $0x86] sm:$0xff]
  %v4244 = vld [vmem:[#allocation2 + $0x8e] sm:$0xff]
  %v4245 = vld [vmem:[#allocation2 + $0x96] sm:$0xff]
  %v4246 = vld [vmem:[#allocation2 + $0x9e] sm:$0xff]
  %v4247 = vld [vmem:[#allocation2 + $0xa6] sm:$0xff]
  %v4248 = vld [vmem:[#allocation2 + $0xae] sm:$0xff]
  %v4249 = vld [vmem:[#allocation2 + $0xb6] sm:$0xff]
  %v4250 = vld [vmem:[#allocation2 + $0xbe] sm:$0xff]
  %v4251 = vpack.c.bf16 %v4228, %v4227
  %v4252 = vpack.c.bf16 %v4230, %v4229
  %v4253 = vpack.c.bf16 %v4232, %v4231
  %v4254 = vpack.c.bf16 %v4234, %v4233
  %v4255 = vpack.c.bf16 %v4236, %v4235
  %v4256 = vpack.c.bf16 %v4238, %v4237
  %v4257 = vpack.c.bf16 %v4240, %v4239
  %v4258 = vpack.c.bf16 %v4242, %v4241
  %v4259 = vpack.c.bf16 %v4244, %v4243
  %v4260 = vpack.c.bf16 %v4246, %v4245
  %v4261 = vpack.c.bf16 %v4248, %v4247
  %v4262 = vpack.c.bf16 %v4250, %v4249
  %s4263 = scalar_lea.vmem %s10, 80
  %v4264 = vld [vmem:[%s4263] sm:$0xf]
  %v4265 = vld [vmem:[%s4263 + $0x4] sm:$0xf]
  %v4268 = vunpack.c.l.b16 %v4264
  %v4269 = vunpack.c.l.b16 %v4265
  %v4270 = vpack.c.b16 %v4269, %v4268
  %v4273 = vsel %vm57, %v4251, 0
  %v4276 = vsel %vm57, %v4252, 0
  %v4279 = vsel %vm57, %v4253, 0
  %v4282 = vsel %vm57, %v4254, 0
  %v4285 = vsel %vm57, %v4255, 0
  %v4288 = vsel %vm57, %v4256, 0
  %v4291 = vsel %vm57, %v4257, 0
  %v4294 = vsel %vm57, %v4258, 0
  %v4297 = vsel %vm57, %v4259, 0
  %v4300 = vsel %vm57, %v4260, 0
  %v4303 = vsel %vm57, %v4261, 0
  %v4306 = vsel %vm57, %v4262, 0
  %4308 = vmatprep.subr.bf16.mxu0 0
  %4309 = vmatpush1.bf16.msra.mxu0 %v4270
  %4310 = vmatprep.subr.bf16.mxu0 0
  %4311 = vmatpush1.bf16.msra.mxu0 0
  %4312 = vmatprep.subr.bf16.mxu0 0
  %4313 = vmatpush1.bf16.msra.mxu0 0
  %4314 = vmatprep.subr.bf16.mxu0 0
  %4315 = vmatpush1.bf16.msra.mxu0 0
  %4316 = vmatprep.subr.bf16.mxu0 0
  %4317 = vmatpush1.bf16.msra.mxu0 0
  %4318 = vmatprep.subr.bf16.mxu0 0
  %4319 = vmatpush1.bf16.msra.mxu0 0
  %4320 = vmatprep.subr.bf16.mxu0 0
  %4321 = vmatpush1.bf16.msra.mxu0 0
  %4322 = vmatprep.subr.bf16.mxu0 0
  %4323 = vmatpush1.bf16.msra.mxu0 0
  %4324 = vmatprep.subr.bf16.mxu0 0
  %4325 = vmatpush1.bf16.msra.mxu0 0
  %4326 = vmatprep.subr.bf16.mxu0 0
  %4327 = vmatpush1.bf16.msra.mxu0 0
  %4328 = vmatprep.subr.bf16.mxu0 0
  %4329 = vmatpush1.bf16.msra.mxu0 0
  %4330 = vmatprep.subr.bf16.mxu0 0
  %4331 = vmatpush1.bf16.msra.mxu0 0
  %4332 = vmatprep.subr.bf16.mxu0 0
  %4333 = vmatpush1.bf16.msra.mxu0 0
  %4334 = vmatprep.subr.bf16.mxu0 0
  %4335 = vmatpush1.bf16.msra.mxu0 0
  %4336 = vmatprep.subr.bf16.mxu0 0
  %4337 = vmatpush1.bf16.msra.mxu0 0
  %4338 = vmatprep.subr.bf16.mxu0 0
  %4339 = vmatpush1.bf16.msra.mxu0 0
  %4340 = vmatprep.mubr.bf16.mxu0 0
  %4341 = vmatmul.mubr.bf16.gmra.mrb[0].mxu0 %v4273
  %v4342 = vpop.f32.mrb[0].mxu0
  %v4343 = vadd.f32 0.0, %v4342
  %v4344 = vpop.f32.mrb[0].mxu0
  %v4345 = vpop.f32.mrb[0].mxu0
  %v4346 = vadd.f32 0.0, %v4345
  %v4347 = vpop.f32.mrb[0].mxu0
  %4348 = vmatprep.mubr.bf16.mxu0 0
  %4349 = vmatmul.mubr.bf16.gmra.mrb[0].mxu0 %v4276
  %v4350 = vpop.f32.mrb[0].mxu0
  %v4351 = vadd.f32 0.0, %v4350
  %v4352 = vpop.f32.mrb[0].mxu0
  %v4353 = vpop.f32.mrb[0].mxu0
  %v4354 = vadd.f32 0.0, %v4353
  %v4355 = vpop.f32.mrb[0].mxu0
  %4356 = vmatprep.mubr.bf16.mxu0 0
  %4357 = vmatmul.mubr.bf16.gmra.mrb[0].mxu0 %v4279
  %v4358 = vpop.f32.mrb[0].mxu0
  %v4359 = vadd.f32 0.0, %v4358
  %v4360 = vpop.f32.mrb[0].mxu0
  %v4361 = vpop.f32.mrb[0].mxu0
  %v4362 = vadd.f32 0.0, %v4361
  %v4363 = vpop.f32.mrb[0].mxu0
  %4364 = vmatprep.mubr.bf16.mxu0 0
  %4365 = vmatmul.mubr.bf16.gmra.mrb[0].mxu0 %v4282
  %v4366 = vpop.f32.mrb[0].mxu0
  %v4367 = vadd.f32 0.0, %v4366
  %v4368 = vpop.f32.mrb[0].mxu0
  %v4369 = vpop.f32.mrb[0].mxu0
  %v4370 = vadd.f32 0.0, %v4369
  %v4371 = vpop.f32.mrb[0].mxu0
  %4372 = vmatprep.mubr.bf16.mxu0 0
  %4373 = vmatmul.mubr.bf16.gmra.mrb[0].mxu0 %v4285
  %v4374 = vpop.f32.mrb[0].mxu0
  %v4375 = vadd.f32 0.0, %v4374
  %v4376 = vpop.f32.mrb[0].mxu0
  %v4377 = vpop.f32.mrb[0].mxu0
  %v4378 = vadd.f32 0.0, %v4377
  %v4379 = vpop.f32.mrb[0].mxu0
  %4380 = vmatprep.mubr.bf16.mxu0 0
  %4381 = vmatmul.mubr.bf16.gmra.mrb[0].mxu0 %v4288
  %v4382 = vpop.f32.mrb[0].mxu0
  %v4383 = vadd.f32 0.0, %v4382
  %v4384 = vpop.f32.mrb[0].mxu0
  %v4385 = vpop.f32.mrb[0].mxu0
  %v4386 = vadd.f32 0.0, %v4385
  %v4387 = vpop.f32.mrb[0].mxu0
  %4388 = vmatprep.mubr.bf16.mxu0 0
  %4389 = vmatmul.mubr.bf16.gmra.mrb[0].mxu0 %v4291
  %v4390 = vpop.f32.mrb[0].mxu0
  %v4391 = vadd.f32 0.0, %v4390
  %v4392 = vpop.f32.mrb[0].mxu0
  %v4393 = vpop.f32.mrb[0].mxu0
  %v4394 = vadd.f32 0.0, %v4393
  %v4395 = vpop.f32.mrb[0].mxu0
  %4396 = vmatprep.mubr.bf16.mxu0 0
  %4397 = vmatmul.mubr.bf16.gmra.mrb[0].mxu0 %v4294
  %v4398 = vpop.f32.mrb[0].mxu0
  %v4399 = vadd.f32 0.0, %v4398
  %v4400 = vpop.f32.mrb[0].mxu0
  %v4401 = vpop.f32.mrb[0].mxu0
  %v4402 = vadd.f32 0.0, %v4401
  %v4403 = vpop.f32.mrb[0].mxu0
  %4404 = vmatprep.mubr.bf16.mxu0 0
  %4405 = vmatmul.mubr.bf16.gmra.mrb[0].mxu0 %v4297
  %v4406 = vpop.f32.mrb[0].mxu0
  %v4407 = vadd.f32 0.0, %v4406
  %v4408 = vpop.f32.mrb[0].mxu0
  %v4409 = vpop.f32.mrb[0].mxu0
  %v4410 = vadd.f32 0.0, %v4409
  %v4411 = vpop.f32.mrb[0].mxu0
  %4412 = vmatprep.mubr.bf16.mxu0 0
  %4413 = vmatmul.mubr.bf16.gmra.mrb[0].mxu0 %v4300
  %v4414 = vpop.f32.mrb[0].mxu0
  %v4415 = vadd.f32 0.0, %v4414
  %v4416 = vpop.f32.mrb[0].mxu0
  %v4417 = vpop.f32.mrb[0].mxu0
  %v4418 = vadd.f32 0.0, %v4417
  %v4419 = vpop.f32.mrb[0].mxu0
  %4420 = vmatprep.mubr.bf16.mxu0 0
  %4421 = vmatmul.mubr.bf16.gmra.mrb[0].mxu0 %v4303
  %v4422 = vpop.f32.mrb[0].mxu0
  %v4423 = vadd.f32 0.0, %v4422
  %v4424 = vpop.f32.mrb[0].mxu0
  %v4425 = vpop.f32.mrb[0].mxu0
  %v4426 = vadd.f32 0.0, %v4425
  %v4427 = vpop.f32.mrb[0].mxu0
  %4428 = vmatprep.mubr.bf16.mxu0 0
  %4429 = vmatmul.mubr.bf16.gmra.mrb[0].mxu0 %v4306
  %v4430 = vpop.f32.mrb[0].mxu0
  %v4431 = vadd.f32 0.0, %v4430
  %v4432 = vpop.f32.mrb[0].mxu0
  %v4433 = vpop.f32.mrb[0].mxu0
  %v4434 = vadd.f32 0.0, %v4433
  %v4435 = vpop.f32.mrb[0].mxu0
  %4436 = vdwg.mxu0
  %v4437 = vadd.f32 %v4203, %v4343
  %v4438 = vadd.f32 %v4204, %v4346
  %v4439 = vadd.f32 %v4205, %v4351
  %v4440 = vadd.f32 %v4206, %v4354
  %v4441 = vadd.f32 %v4207, %v4359
  %v4442 = vadd.f32 %v4208, %v4362
  %v4443 = vadd.f32 %v4209, %v4367
  %v4444 = vadd.f32 %v4210, %v4370
  %v4445 = vadd.f32 %v4211, %v4375
  %v4446 = vadd.f32 %v4212, %v4378
  %v4447 = vadd.f32 %v4213, %v4383
  %v4448 = vadd.f32 %v4214, %v4386
  %v4449 = vadd.f32 %v4215, %v4391
  %v4450 = vadd.f32 %v4216, %v4394
  %v4451 = vadd.f32 %v4217, %v4399
  %v4452 = vadd.f32 %v4218, %v4402
  %v4453 = vadd.f32 %v4219, %v4407
  %v4454 = vadd.f32 %v4220, %v4410
  %v4455 = vadd.f32 %v4221, %v4415
  %v4456 = vadd.f32 %v4222, %v4418
  %v4457 = vadd.f32 %v4223, %v4423
  %v4458 = vadd.f32 %v4224, %v4426
  %v4459 = vadd.f32 %v4225, %v4431
  %v4460 = vadd.f32 %v4226, %v4434
  %v4461 = vld [vmem:[#allocation2 + $0x7] sm:$0xff]
  %v4462 = vld [vmem:[#allocation2 + $0xf] sm:$0xff]
  %v4463 = vld [vmem:[#allocation2 + $0x17] sm:$0xff]
  %v4464 = vld [vmem:[#allocation2 + $0x1f] sm:$0xff]
  %v4465 = vld [vmem:[#allocation2 + $0x27] sm:$0xff]
  %v4466 = vld [vmem:[#allocation2 + $0x2f] sm:$0xff]
  %v4467 = vld [vmem:[#allocation2 + $0x37] sm:$0xff]
  %v4468 = vld [vmem:[#allocation2 + $0x3f] sm:$0xff]
  %v4469 = vld [vmem:[#allocation2 + $0x47] sm:$0xff]
  %v4470 = vld [vmem:[#allocation2 + $0x4f] sm:$0xff]
  %v4471 = vld [vmem:[#allocation2 + $0x57] sm:$0xff]
  %v4472 = vld [vmem:[#allocation2 + $0x5f] sm:$0xff]
  %v4473 = vld [vmem:[#allocation2 + $0x67] sm:$0xff]
  %v4474 = vld [vmem:[#allocation2 + $0x6f] sm:$0xff]
  %v4475 = vld [vmem:[#allocation2 + $0x77] sm:$0xff]
  %v4476 = vld [vmem:[#allocation2 + $0x7f] sm:$0xff]
  %v4477 = vld [vmem:[#allocation2 + $0x87] sm:$0xff]
  %v4478 = vld [vmem:[#allocation2 + $0x8f] sm:$0xff]
  %v4479 = vld [vmem:[#allocation2 + $0x97] sm:$0xff]
  %v4480 = vld [vmem:[#allocation2 + $0x9f] sm:$0xff]
  %v4481 = vld [vmem:[#allocation2 + $0xa7] sm:$0xff]
  %v4482 = vld [vmem:[#allocation2 + $0xaf] sm:$0xff]
  %v4483 = vld [vmem:[#allocation2 + $0xb7] sm:$0xff]
  %v4484 = vld [vmem:[#allocation2 + $0xbf] sm:$0xff]
  %v4485 = vpack.c.bf16 %v4462, %v4461
  %v4486 = vpack.c.bf16 %v4464, %v4463
  %v4487 = vpack.c.bf16 %v4466, %v4465
  %v4488 = vpack.c.bf16 %v4468, %v4467
  %v4489 = vpack.c.bf16 %v4470, %v4469
  %v4490 = vpack.c.bf16 %v4472, %v4471
  %v4491 = vpack.c.bf16 %v4474, %v4473
  %v4492 = vpack.c.bf16 %v4476, %v4475
  %v4493 = vpack.c.bf16 %v4478, %v4477
  %v4494 = vpack.c.bf16 %v4480, %v4479
  %v4495 = vpack.c.bf16 %v4482, %v4481
  %v4496 = vpack.c.bf16 %v4484, %v4483
  %s4497 = scalar_lea.vmem %s10, 88
  %v4498 = vld [vmem:[%s4497] sm:$0xf]
  %v4499 = vld [vmem:[%s4497 + $0x4] sm:$0xf]
  %v4502 = vunpack.c.l.b16 %v4498
  %v4503 = vunpack.c.l.b16 %v4499
  %v4504 = vpack.c.b16 %v4503, %v4502
  %v4507 = vsel %vm57, %v4485, 0
  %v4510 = vsel %vm57, %v4486, 0
  %v4513 = vsel %vm57, %v4487, 0
  %v4516 = vsel %vm57, %v4488, 0
  %v4519 = vsel %vm57, %v4489, 0
  %v4522 = vsel %vm57, %v4490, 0
  %v4525 = vsel %vm57, %v4491, 0
  %v4528 = vsel %vm57, %v4492, 0
  %v4531 = vsel %vm57, %v4493, 0
  %v4534 = vsel %vm57, %v4494, 0
  %v4537 = vsel %vm57, %v4495, 0
  %v4540 = vsel %vm57, %v4496, 0
  %4542 = vmatprep.subr.bf16.mxu0 0
  %4543 = vmatpush1.bf16.msra.mxu0 %v4504
  %4544 = vmatprep.subr.bf16.mxu0 0
  %4545 = vmatpush1.bf16.msra.mxu0 0
  %4546 = vmatprep.subr.bf16.mxu0 0
  %4547 = vmatpush1.bf16.msra.mxu0 0
  %4548 = vmatprep.subr.bf16.mxu0 0
  %4549 = vmatpush1.bf16.msra.mxu0 0
  %4550 = vmatprep.subr.bf16.mxu0 0
  %4551 = vmatpush1.bf16.msra.mxu0 0
  %4552 = vmatprep.subr.bf16.mxu0 0
  %4553 = vmatpush1.bf16.msra.mxu0 0
  %4554 = vmatprep.subr.bf16.mxu0 0
  %4555 = vmatpush1.bf16.msra.mxu0 0
  %4556 = vmatprep.subr.bf16.mxu0 0
  %4557 = vmatpush1.bf16.msra.mxu0 0
  %4558 = vmatprep.subr.bf16.mxu0 0
  %4559 = vmatpush1.bf16.msra.mxu0 0
  %4560 = vmatprep.subr.bf16.mxu0 0
  %4561 = vmatpush1.bf16.msra.mxu0 0
  %4562 = vmatprep.subr.bf16.mxu0 0
  %4563 = vmatpush1.bf16.msra.mxu0 0
  %4564 = vmatprep.subr.bf16.mxu0 0
  %4565 = vmatpush1.bf16.msra.mxu0 0
  %4566 = vmatprep.subr.bf16.mxu0 0
  %4567 = vmatpush1.bf16.msra.mxu0 0
  %4568 = vmatprep.subr.bf16.mxu0 0
  %4569 = vmatpush1.bf16.msra.mxu0 0
  %4570 = vmatprep.subr.bf16.mxu0 0
  %4571 = vmatpush1.bf16.msra.mxu0 0
  %4572 = vmatprep.subr.bf16.mxu0 0
  %4573 = vmatpush1.bf16.msra.mxu0 0
  %4574 = vmatprep.mubr.bf16.mxu0 0
  %4575 = vmatmul.mubr.bf16.gmra.mrb[0].mxu0 %v4507
  %v4576 = vpop.f32.mrb[0].mxu0
  %v4577 = vadd.f32 0.0, %v4576
  %v4578 = vpop.f32.mrb[0].mxu0
  %v4579 = vpop.f32.mrb[0].mxu0
  %v4580 = vadd.f32 0.0, %v4579
  %v4581 = vpop.f32.mrb[0].mxu0
  %4582 = vmatprep.mubr.bf16.mxu0 0
  %4583 = vmatmul.mubr.bf16.gmra.mrb[0].mxu0 %v4510
  %v4584 = vpop.f32.mrb[0].mxu0
  %v4585 = vadd.f32 0.0, %v4584
  %v4586 = vpop.f32.mrb[0].mxu0
  %v4587 = vpop.f32.mrb[0].mxu0
  %v4588 = vadd.f32 0.0, %v4587
  %v4589 = vpop.f32.mrb[0].mxu0
  %4590 = vmatprep.mubr.bf16.mxu0 0
  %4591 = vmatmul.mubr.bf16.gmra.mrb[0].mxu0 %v4513
  %v4592 = vpop.f32.mrb[0].mxu0
  %v4593 = vadd.f32 0.0, %v4592
  %v4594 = vpop.f32.mrb[0].mxu0
  %v4595 = vpop.f32.mrb[0].mxu0
  %v4596 = vadd.f32 0.0, %v4595
  %v4597 = vpop.f32.mrb[0].mxu0
  %4598 = vmatprep.mubr.bf16.mxu0 0
  %4599 = vmatmul.mubr.bf16.gmra.mrb[0].mxu0 %v4516
  %v4600 = vpop.f32.mrb[0].mxu0
  %v4601 = vadd.f32 0.0, %v4600
  %v4602 = vpop.f32.mrb[0].mxu0
  %v4603 = vpop.f32.mrb[0].mxu0
  %v4604 = vadd.f32 0.0, %v4603
  %v4605 = vpop.f32.mrb[0].mxu0
  %4606 = vmatprep.mubr.bf16.mxu0 0
  %4607 = vmatmul.mubr.bf16.gmra.mrb[0].mxu0 %v4519
  %v4608 = vpop.f32.mrb[0].mxu0
  %v4609 = vadd.f32 0.0, %v4608
  %v4610 = vpop.f32.mrb[0].mxu0
  %v4611 = vpop.f32.mrb[0].mxu0
  %v4612 = vadd.f32 0.0, %v4611
  %v4613 = vpop.f32.mrb[0].mxu0
  %4614 = vmatprep.mubr.bf16.mxu0 0
  %4615 = vmatmul.mubr.bf16.gmra.mrb[0].mxu0 %v4522
  %v4616 = vpop.f32.mrb[0].mxu0
  %v4617 = vadd.f32 0.0, %v4616
  %v4618 = vpop.f32.mrb[0].mxu0
  %v4619 = vpop.f32.mrb[0].mxu0
  %v4620 = vadd.f32 0.0, %v4619
  %v4621 = vpop.f32.mrb[0].mxu0
  %4622 = vmatprep.mubr.bf16.mxu0 0
  %4623 = vmatmul.mubr.bf16.gmra.mrb[0].mxu0 %v4525
  %v4624 = vpop.f32.mrb[0].mxu0
  %v4625 = vadd.f32 0.0, %v4624
  %v4626 = vpop.f32.mrb[0].mxu0
  %v4627 = vpop.f32.mrb[0].mxu0
  %v4628 = vadd.f32 0.0, %v4627
  %v4629 = vpop.f32.mrb[0].mxu0
  %4630 = vmatprep.mubr.bf16.mxu0 0
  %4631 = vmatmul.mubr.bf16.gmra.mrb[0].mxu0 %v4528
  %v4632 = vpop.f32.mrb[0].mxu0
  %v4633 = vadd.f32 0.0, %v4632
  %v4634 = vpop.f32.mrb[0].mxu0
  %v4635 = vpop.f32.mrb[0].mxu0
  %v4636 = vadd.f32 0.0, %v4635
  %v4637 = vpop.f32.mrb[0].mxu0
  %4638 = vmatprep.mubr.bf16.mxu0 0
  %4639 = vmatmul.mubr.bf16.gmra.mrb[0].mxu0 %v4531
  %v4640 = vpop.f32.mrb[0].mxu0
  %v4641 = vadd.f32 0.0, %v4640
  %v4642 = vpop.f32.mrb[0].mxu0
  %v4643 = vpop.f32.mrb[0].mxu0
  %v4644 = vadd.f32 0.0, %v4643
  %v4645 = vpop.f32.mrb[0].mxu0
  %4646 = vmatprep.mubr.bf16.mxu0 0
  %4647 = vmatmul.mubr.bf16.gmra.mrb[0].mxu0 %v4534
  %v4648 = vpop.f32.mrb[0].mxu0
  %v4649 = vadd.f32 0.0, %v4648
  %v4650 = vpop.f32.mrb[0].mxu0
  %v4651 = vpop.f32.mrb[0].mxu0
  %v4652 = vadd.f32 0.0, %v4651
  %v4653 = vpop.f32.mrb[0].mxu0
  %4654 = vmatprep.mubr.bf16.mxu0 0
  %4655 = vmatmul.mubr.bf16.gmra.mrb[0].mxu0 %v4537
  %v4656 = vpop.f32.mrb[0].mxu0
  %v4657 = vadd.f32 0.0, %v4656
  %v4658 = vpop.f32.mrb[0].mxu0
  %v4659 = vpop.f32.mrb[0].mxu0
  %v4660 = vadd.f32 0.0, %v4659
  %v4661 = vpop.f32.mrb[0].mxu0
  %4662 = vmatprep.mubr.bf16.mxu0 0
  %4663 = vmatmul.mubr.bf16.gmra.mrb[0].mxu0 %v4540
  %v4664 = vpop.f32.mrb[0].mxu0
  %v4665 = vadd.f32 0.0, %v4664
  %v4666 = vpop.f32.mrb[0].mxu0
  %v4667 = vpop.f32.mrb[0].mxu0
  %v4668 = vadd.f32 0.0, %v4667
  %v4669 = vpop.f32.mrb[0].mxu0
  %4670 = vdwg.mxu0
  %v4671 = vadd.f32 %v4437, %v4577
  %v4672 = vadd.f32 %v4438, %v4580
  %v4673 = vadd.f32 %v4439, %v4585
  %v4674 = vadd.f32 %v4440, %v4588
  %v4675 = vadd.f32 %v4441, %v4593
  %v4676 = vadd.f32 %v4442, %v4596
  %v4677 = vadd.f32 %v4443, %v4601
  %v4678 = vadd.f32 %v4444, %v4604
  %v4679 = vadd.f32 %v4445, %v4609
  %v4680 = vadd.f32 %v4446, %v4612
  %v4681 = vadd.f32 %v4447, %v4617
  %v4682 = vadd.f32 %v4448, %v4620
  %v4683 = vadd.f32 %v4449, %v4625
  %v4684 = vadd.f32 %v4450, %v4628
  %v4685 = vadd.f32 %v4451, %v4633
  %v4686 = vadd.f32 %v4452, %v4636
  %v4687 = vadd.f32 %v4453, %v4641
  %v4688 = vadd.f32 %v4454, %v4644
  %v4689 = vadd.f32 %v4455, %v4649
  %v4690 = vadd.f32 %v4456, %v4652
  %v4691 = vadd.f32 %v4457, %v4657
  %v4692 = vadd.f32 %v4458, %v4660
  %v4693 = vadd.f32 %v4459, %v4665
  %v4694 = vadd.f32 %v4460, %v4668
  %v4695 = vld [vmem:[#allocation2 + $0xf] sm:$0xff]
  %v4696 = vld [vmem:[#allocation2 + $0x17] sm:$0xff]
  %v4697 = vld [vmem:[#allocation2 + $0x1f] sm:$0xff]
  %v4698 = vld [vmem:[#allocation2 + $0x27] sm:$0xff]
  %v4699 = vld [vmem:[#allocation2 + $0x2f] sm:$0xff]
  %v4700 = vld [vmem:[#allocation2 + $0x37] sm:$0xff]
  %v4701 = vld [vmem:[#allocation2 + $0x3f] sm:$0xff]
  %v4702 = vld [vmem:[#allocation2 + $0x47] sm:$0xff]
  %v4703 = vld [vmem:[#allocation2 + $0x4f] sm:$0xff]
  %v4704 = vld [vmem:[#allocation2 + $0x57] sm:$0xff]
  %v4705 = vld [vmem:[#allocation2 + $0x5f] sm:$0xff]
  %v4706 = vld [vmem:[#allocation2 + $0x67] sm:$0xff]
  %v4707 = vld [vmem:[#allocation2 + $0x6f] sm:$0xff]
  %v4708 = vld [vmem:[#allocation2 + $0x77] sm:$0xff]
  %v4709 = vld [vmem:[#allocation2 + $0x7f] sm:$0xff]
  %v4710 = vld [vmem:[#allocation2 + $0x87] sm:$0xff]
  %v4711 = vld [vmem:[#allocation2 + $0x8f] sm:$0xff]
  %v4712 = vld [vmem:[#allocation2 + $0x97] sm:$0xff]
  %v4713 = vld [vmem:[#allocation2 + $0x9f] sm:$0xff]
  %v4714 = vld [vmem:[#allocation2 + $0xa7] sm:$0xff]
  %v4715 = vld [vmem:[#allocation2 + $0xaf] sm:$0xff]
  %v4716 = vld [vmem:[#allocation2 + $0xb7] sm:$0xff]
  %v4717 = vld [vmem:[#allocation2 + $0xbf] sm:$0xff]
  %v4718 = vld [vmem:[#allocation2 + $0xc7] sm:$0xff]
  %v4719 = vpack.c.bf16 %v4696, %v4695
  %v4720 = vpack.c.bf16 %v4698, %v4697
  %v4721 = vpack.c.bf16 %v4700, %v4699
  %v4722 = vpack.c.bf16 %v4702, %v4701
  %v4723 = vpack.c.bf16 %v4704, %v4703
  %v4724 = vpack.c.bf16 %v4706, %v4705
  %v4725 = vpack.c.bf16 %v4708, %v4707
  %v4726 = vpack.c.bf16 %v4710, %v4709
  %v4727 = vpack.c.bf16 %v4712, %v4711
  %v4728 = vpack.c.bf16 %v4714, %v4713
  %v4729 = vpack.c.bf16 %v4716, %v4715
  %v4730 = vpack.c.bf16 %v4718, %v4717
  %s4731 = scalar_lea.vmem %s10, 96
  %v4732 = vld [vmem:[%s4731] sm:$0xf]
  %v4733 = vld [vmem:[%s4731 + $0x4] sm:$0xf]
  %v4736 = vunpack.c.l.b16 %v4732
  %v4737 = vunpack.c.l.b16 %v4733
  %v4738 = vpack.c.b16 %v4737, %v4736
  %v4741 = vsel %vm57, %v4719, 0
  %v4744 = vsel %vm57, %v4720, 0
  %v4747 = vsel %vm57, %v4721, 0
  %v4750 = vsel %vm57, %v4722, 0
  %v4753 = vsel %vm57, %v4723, 0
  %v4756 = vsel %vm57, %v4724, 0
  %v4759 = vsel %vm57, %v4725, 0
  %v4762 = vsel %vm57, %v4726, 0
  %v4765 = vsel %vm57, %v4727, 0
  %v4768 = vsel %vm57, %v4728, 0
  %v4771 = vsel %vm57, %v4729, 0
  %v4774 = vsel %vm57, %v4730, 0
  %4776 = vmatprep.subr.bf16.mxu0 0
  %4777 = vmatpush1.bf16.msra.mxu0 %v4738
  %4778 = vmatprep.subr.bf16.mxu0 0
  %4779 = vmatpush1.bf16.msra.mxu0 0
  %4780 = vmatprep.subr.bf16.mxu0 0
  %4781 = vmatpush1.bf16.msra.mxu0 0
  %4782 = vmatprep.subr.bf16.mxu0 0
  %4783 = vmatpush1.bf16.msra.mxu0 0
  %4784 = vmatprep.subr.bf16.mxu0 0
  %4785 = vmatpush1.bf16.msra.mxu0 0
  %4786 = vmatprep.subr.bf16.mxu0 0
  %4787 = vmatpush1.bf16.msra.mxu0 0
  %4788 = vmatprep.subr.bf16.mxu0 0
  %4789 = vmatpush1.bf16.msra.mxu0 0
  %4790 = vmatprep.subr.bf16.mxu0 0
  %4791 = vmatpush1.bf16.msra.mxu0 0
  %4792 = vmatprep.subr.bf16.mxu0 0
  %4793 = vmatpush1.bf16.msra.mxu0 0
  %4794 = vmatprep.subr.bf16.mxu0 0
  %4795 = vmatpush1.bf16.msra.mxu0 0
  %4796 = vmatprep.subr.bf16.mxu0 0
  %4797 = vmatpush1.bf16.msra.mxu0 0
  %4798 = vmatprep.subr.bf16.mxu0 0
  %4799 = vmatpush1.bf16.msra.mxu0 0
  %4800 = vmatprep.subr.bf16.mxu0 0
  %4801 = vmatpush1.bf16.msra.mxu0 0
  %4802 = vmatprep.subr.bf16.mxu0 0
  %4803 = vmatpush1.bf16.msra.mxu0 0
  %4804 = vmatprep.subr.bf16.mxu0 0
  %4805 = vmatpush1.bf16.msra.mxu0 0
  %4806 = vmatprep.subr.bf16.mxu0 0
  %4807 = vmatpush1.bf16.msra.mxu0 0
  %4808 = vmatprep.mubr.bf16.mxu0 0
  %4809 = vmatmul.mubr.bf16.gmra.mrb[0].mxu0 %v4741
  %v4810 = vpop.f32.mrb[0].mxu0
  %v4811 = vadd.f32 0.0, %v4810
  %v4812 = vpop.f32.mrb[0].mxu0
  %v4813 = vpop.f32.mrb[0].mxu0
  %v4814 = vadd.f32 0.0, %v4813
  %v4815 = vpop.f32.mrb[0].mxu0
  %4816 = vmatprep.mubr.bf16.mxu0 0
  %4817 = vmatmul.mubr.bf16.gmra.mrb[0].mxu0 %v4744
  %v4818 = vpop.f32.mrb[0].mxu0
  %v4819 = vadd.f32 0.0, %v4818
  %v4820 = vpop.f32.mrb[0].mxu0
  %v4821 = vpop.f32.mrb[0].mxu0
  %v4822 = vadd.f32 0.0, %v4821
  %v4823 = vpop.f32.mrb[0].mxu0
  %4824 = vmatprep.mubr.bf16.mxu0 0
  %4825 = vmatmul.mubr.bf16.gmra.mrb[0].mxu0 %v4747
  %v4826 = vpop.f32.mrb[0].mxu0
  %v4827 = vadd.f32 0.0, %v4826
  %v4828 = vpop.f32.mrb[0].mxu0
  %v4829 = vpop.f32.mrb[0].mxu0
  %v4830 = vadd.f32 0.0, %v4829
  %v4831 = vpop.f32.mrb[0].mxu0
  %4832 = vmatprep.mubr.bf16.mxu0 0
  %4833 = vmatmul.mubr.bf16.gmra.mrb[0].mxu0 %v4750
  %v4834 = vpop.f32.mrb[0].mxu0
  %v4835 = vadd.f32 0.0, %v4834
  %v4836 = vpop.f32.mrb[0].mxu0
  %v4837 = vpop.f32.mrb[0].mxu0
  %v4838 = vadd.f32 0.0, %v4837
  %v4839 = vpop.f32.mrb[0].mxu0
  %4840 = vmatprep.mubr.bf16.mxu0 0
  %4841 = vmatmul.mubr.bf16.gmra.mrb[0].mxu0 %v4753
  %v4842 = vpop.f32.mrb[0].mxu0
  %v4843 = vadd.f32 0.0, %v4842
  %v4844 = vpop.f32.mrb[0].mxu0
  %v4845 = vpop.f32.mrb[0].mxu0
  %v4846 = vadd.f32 0.0, %v4845
  %v4847 = vpop.f32.mrb[0].mxu0
  %4848 = vmatprep.mubr.bf16.mxu0 0
  %4849 = vmatmul.mubr.bf16.gmra.mrb[0].mxu0 %v4756
  %v4850 = vpop.f32.mrb[0].mxu0
  %v4851 = vadd.f32 0.0, %v4850
  %v4852 = vpop.f32.mrb[0].mxu0
  %v4853 = vpop.f32.mrb[0].mxu0
  %v4854 = vadd.f32 0.0, %v4853
  %v4855 = vpop.f32.mrb[0].mxu0
  %4856 = vmatprep.mubr.bf16.mxu0 0
  %4857 = vmatmul.mubr.bf16.gmra.mrb[0].mxu0 %v4759
  %v4858 = vpop.f32.mrb[0].mxu0
  %v4859 = vadd.f32 0.0, %v4858
  %v4860 = vpop.f32.mrb[0].mxu0
  %v4861 = vpop.f32.mrb[0].mxu0
  %v4862 = vadd.f32 0.0, %v4861
  %v4863 = vpop.f32.mrb[0].mxu0
  %4864 = vmatprep.mubr.bf16.mxu0 0
  %4865 = vmatmul.mubr.bf16.gmra.mrb[0].mxu0 %v4762
  %v4866 = vpop.f32.mrb[0].mxu0
  %v4867 = vadd.f32 0.0, %v4866
  %v4868 = vpop.f32.mrb[0].mxu0
  %v4869 = vpop.f32.mrb[0].mxu0
  %v4870 = vadd.f32 0.0, %v4869
  %v4871 = vpop.f32.mrb[0].mxu0
  %4872 = vmatprep.mubr.bf16.mxu0 0
  %4873 = vmatmul.mubr.bf16.gmra.mrb[0].mxu0 %v4765
  %v4874 = vpop.f32.mrb[0].mxu0
  %v4875 = vadd.f32 0.0, %v4874
  %v4876 = vpop.f32.mrb[0].mxu0
  %v4877 = vpop.f32.mrb[0].mxu0
  %v4878 = vadd.f32 0.0, %v4877
  %v4879 = vpop.f32.mrb[0].mxu0
  %4880 = vmatprep.mubr.bf16.mxu0 0
  %4881 = vmatmul.mubr.bf16.gmra.mrb[0].mxu0 %v4768
  %v4882 = vpop.f32.mrb[0].mxu0
  %v4883 = vadd.f32 0.0, %v4882
  %v4884 = vpop.f32.mrb[0].mxu0
  %v4885 = vpop.f32.mrb[0].mxu0
  %v4886 = vadd.f32 0.0, %v4885
  %v4887 = vpop.f32.mrb[0].mxu0
  %4888 = vmatprep.mubr.bf16.mxu0 0
  %4889 = vmatmul.mubr.bf16.gmra.mrb[0].mxu0 %v4771
  %v4890 = vpop.f32.mrb[0].mxu0
  %v4891 = vadd.f32 0.0, %v4890
  %v4892 = vpop.f32.mrb[0].mxu0
  %v4893 = vpop.f32.mrb[0].mxu0
  %v4894 = vadd.f32 0.0, %v4893
  %v4895 = vpop.f32.mrb[0].mxu0
  %4896 = vmatprep.mubr.bf16.mxu0 0
  %4897 = vmatmul.mubr.bf16.gmra.mrb[0].mxu0 %v4774
  %v4898 = vpop.f32.mrb[0].mxu0
  %v4899 = vadd.f32 0.0, %v4898
  %v4900 = vpop.f32.mrb[0].mxu0
  %v4901 = vpop.f32.mrb[0].mxu0
  %v4902 = vadd.f32 0.0, %v4901
  %v4903 = vpop.f32.mrb[0].mxu0
  %4904 = vdwg.mxu0
  %v4905 = vadd.f32 %v4671, %v4811
  %v4906 = vadd.f32 %v4672, %v4814
  %v4907 = vadd.f32 %v4673, %v4819
  %v4908 = vadd.f32 %v4674, %v4822
  %v4909 = vadd.f32 %v4675, %v4827
  %v4910 = vadd.f32 %v4676, %v4830
  %v4911 = vadd.f32 %v4677, %v4835
  %v4912 = vadd.f32 %v4678, %v4838
  %v4913 = vadd.f32 %v4679, %v4843
  %v4914 = vadd.f32 %v4680, %v4846
  %v4915 = vadd.f32 %v4681, %v4851
  %v4916 = vadd.f32 %v4682, %v4854
  %v4917 = vadd.f32 %v4683, %v4859
  %v4918 = vadd.f32 %v4684, %v4862
  %v4919 = vadd.f32 %v4685, %v4867
  %v4920 = vadd.f32 %v4686, %v4870
  %v4921 = vadd.f32 %v4687, %v4875
  %v4922 = vadd.f32 %v4688, %v4878
  %v4923 = vadd.f32 %v4689, %v4883
  %v4924 = vadd.f32 %v4690, %v4886
  %v4925 = vadd.f32 %v4691, %v4891
  %v4926 = vadd.f32 %v4692, %v4894
  %v4927 = vadd.f32 %v4693, %v4899
  %v4928 = vadd.f32 %v4694, %v4902
  %v4929 = vld [vmem:[#allocation2 + $0x10] sm:$0xff]
  %v4930 = vld [vmem:[#allocation2 + $0x18] sm:$0xff]
  %v4931 = vld [vmem:[#allocation2 + $0x20] sm:$0xff]
  %v4932 = vld [vmem:[#allocation2 + $0x28] sm:$0xff]
  %v4933 = vld [vmem:[#allocation2 + $0x30] sm:$0xff]
  %v4934 = vld [vmem:[#allocation2 + $0x38] sm:$0xff]
  %v4935 = vld [vmem:[#allocation2 + $0x40] sm:$0xff]
  %v4936 = vld [vmem:[#allocation2 + $0x48] sm:$0xff]
  %v4937 = vld [vmem:[#allocation2 + $0x50] sm:$0xff]
  %v4938 = vld [vmem:[#allocation2 + $0x58] sm:$0xff]
  %v4939 = vld [vmem:[#allocation2 + $0x60] sm:$0xff]
  %v4940 = vld [vmem:[#allocation2 + $0x68] sm:$0xff]
  %v4941 = vld [vmem:[#allocation2 + $0x70] sm:$0xff]
  %v4942 = vld [vmem:[#allocation2 + $0x78] sm:$0xff]
  %v4943 = vld [vmem:[#allocation2 + $0x80] sm:$0xff]
  %v4944 = vld [vmem:[#allocation2 + $0x88] sm:$0xff]
  %v4945 = vld [vmem:[#allocation2 + $0x90] sm:$0xff]
  %v4946 = vld [vmem:[#allocation2 + $0x98] sm:$0xff]
  %v4947 = vld [vmem:[#allocation2 + $0xa0] sm:$0xff]
  %v4948 = vld [vmem:[#allocation2 + $0xa8] sm:$0xff]
  %v4949 = vld [vmem:[#allocation2 + $0xb0] sm:$0xff]
  %v4950 = vld [vmem:[#allocation2 + $0xb8] sm:$0xff]
  %v4951 = vld [vmem:[#allocation2 + $0xc0] sm:$0xff]
  %v4952 = vld [vmem:[#allocation2 + $0xc8] sm:$0xff]
  %v4953 = vpack.c.bf16 %v4930, %v4929
  %v4954 = vpack.c.bf16 %v4932, %v4931
  %v4955 = vpack.c.bf16 %v4934, %v4933
  %v4956 = vpack.c.bf16 %v4936, %v4935
  %v4957 = vpack.c.bf16 %v4938, %v4937
  %v4958 = vpack.c.bf16 %v4940, %v4939
  %v4959 = vpack.c.bf16 %v4942, %v4941
  %v4960 = vpack.c.bf16 %v4944, %v4943
  %v4961 = vpack.c.bf16 %v4946, %v4945
  %v4962 = vpack.c.bf16 %v4948, %v4947
  %v4963 = vpack.c.bf16 %v4950, %v4949
  %v4964 = vpack.c.bf16 %v4952, %v4951
  %s4965 = scalar_lea.vmem %s10, 104
  %v4966 = vld [vmem:[%s4965] sm:$0xf]
  %v4967 = vld [vmem:[%s4965 + $0x4] sm:$0xf]
  %v4970 = vunpack.c.l.b16 %v4966
  %v4971 = vunpack.c.l.b16 %v4967
  %v4972 = vpack.c.b16 %v4971, %v4970
  %v4975 = vsel %vm57, %v4953, 0
  %v4978 = vsel %vm57, %v4954, 0
  %v4981 = vsel %vm57, %v4955, 0
  %v4984 = vsel %vm57, %v4956, 0
  %v4987 = vsel %vm57, %v4957, 0
  %v4990 = vsel %vm57, %v4958, 0
  %v4993 = vsel %vm57, %v4959, 0
  %v4996 = vsel %vm57, %v4960, 0
  %v4999 = vsel %vm57, %v4961, 0
  %v5002 = vsel %vm57, %v4962, 0
  %v5005 = vsel %vm57, %v4963, 0
  %v5008 = vsel %vm57, %v4964, 0
  %5010 = vmatprep.subr.bf16.mxu0 0
  %5011 = vmatpush1.bf16.msra.mxu0 %v4972
  %5012 = vmatprep.subr.bf16.mxu0 0
  %5013 = vmatpush1.bf16.msra.mxu0 0
  %5014 = vmatprep.subr.bf16.mxu0 0
  %5015 = vmatpush1.bf16.msra.mxu0 0
  %5016 = vmatprep.subr.bf16.mxu0 0
  %5017 = vmatpush1.bf16.msra.mxu0 0
  %5018 = vmatprep.subr.bf16.mxu0 0
  %5019 = vmatpush1.bf16.msra.mxu0 0
  %5020 = vmatprep.subr.bf16.mxu0 0
  %5021 = vmatpush1.bf16.msra.mxu0 0
  %5022 = vmatprep.subr.bf16.mxu0 0
  %5023 = vmatpush1.bf16.msra.mxu0 0
  %5024 = vmatprep.subr.bf16.mxu0 0
  %5025 = vmatpush1.bf16.msra.mxu0 0
  %5026 = vmatprep.subr.bf16.mxu0 0
  %5027 = vmatpush1.bf16.msra.mxu0 0
  %5028 = vmatprep.subr.bf16.mxu0 0
  %5029 = vmatpush1.bf16.msra.mxu0 0
  %5030 = vmatprep.subr.bf16.mxu0 0
  %5031 = vmatpush1.bf16.msra.mxu0 0
  %5032 = vmatprep.subr.bf16.mxu0 0
  %5033 = vmatpush1.bf16.msra.mxu0 0
  %5034 = vmatprep.subr.bf16.mxu0 0
  %5035 = vmatpush1.bf16.msra.mxu0 0
  %5036 = vmatprep.subr.bf16.mxu0 0
  %5037 = vmatpush1.bf16.msra.mxu0 0
  %5038 = vmatprep.subr.bf16.mxu0 0
  %5039 = vmatpush1.bf16.msra.mxu0 0
  %5040 = vmatprep.subr.bf16.mxu0 0
  %5041 = vmatpush1.bf16.msra.mxu0 0
  %5042 = vmatprep.mubr.bf16.mxu0 0
  %5043 = vmatmul.mubr.bf16.gmra.mrb[0].mxu0 %v4975
  %v5044 = vpop.f32.mrb[0].mxu0
  %v5045 = vadd.f32 0.0, %v5044
  %v5046 = vpop.f32.mrb[0].mxu0
  %v5047 = vpop.f32.mrb[0].mxu0
  %v5048 = vadd.f32 0.0, %v5047
  %v5049 = vpop.f32.mrb[0].mxu0
  %5050 = vmatprep.mubr.bf16.mxu0 0
  %5051 = vmatmul.mubr.bf16.gmra.mrb[0].mxu0 %v4978
  %v5052 = vpop.f32.mrb[0].mxu0
  %v5053 = vadd.f32 0.0, %v5052
  %v5054 = vpop.f32.mrb[0].mxu0
  %v5055 = vpop.f32.mrb[0].mxu0
  %v5056 = vadd.f32 0.0, %v5055
  %v5057 = vpop.f32.mrb[0].mxu0
  %5058 = vmatprep.mubr.bf16.mxu0 0
  %5059 = vmatmul.mubr.bf16.gmra.mrb[0].mxu0 %v4981
  %v5060 = vpop.f32.mrb[0].mxu0
  %v5061 = vadd.f32 0.0, %v5060
  %v5062 = vpop.f32.mrb[0].mxu0
  %v5063 = vpop.f32.mrb[0].mxu0
  %v5064 = vadd.f32 0.0, %v5063
  %v5065 = vpop.f32.mrb[0].mxu0
  %5066 = vmatprep.mubr.bf16.mxu0 0
  %5067 = vmatmul.mubr.bf16.gmra.mrb[0].mxu0 %v4984
  %v5068 = vpop.f32.mrb[0].mxu0
  %v5069 = vadd.f32 0.0, %v5068
  %v5070 = vpop.f32.mrb[0].mxu0
  %v5071 = vpop.f32.mrb[0].mxu0
  %v5072 = vadd.f32 0.0, %v5071
  %v5073 = vpop.f32.mrb[0].mxu0
  %5074 = vmatprep.mubr.bf16.mxu0 0
  %5075 = vmatmul.mubr.bf16.gmra.mrb[0].mxu0 %v4987
  %v5076 = vpop.f32.mrb[0].mxu0
  %v5077 = vadd.f32 0.0, %v5076
  %v5078 = vpop.f32.mrb[0].mxu0
  %v5079 = vpop.f32.mrb[0].mxu0
  %v5080 = vadd.f32 0.0, %v5079
  %v5081 = vpop.f32.mrb[0].mxu0
  %5082 = vmatprep.mubr.bf16.mxu0 0
  %5083 = vmatmul.mubr.bf16.gmra.mrb[0].mxu0 %v4990
  %v5084 = vpop.f32.mrb[0].mxu0
  %v5085 = vadd.f32 0.0, %v5084
  %v5086 = vpop.f32.mrb[0].mxu0
  %v5087 = vpop.f32.mrb[0].mxu0
  %v5088 = vadd.f32 0.0, %v5087
  %v5089 = vpop.f32.mrb[0].mxu0
  %5090 = vmatprep.mubr.bf16.mxu0 0
  %5091 = vmatmul.mubr.bf16.gmra.mrb[0].mxu0 %v4993
  %v5092 = vpop.f32.mrb[0].mxu0
  %v5093 = vadd.f32 0.0, %v5092
  %v5094 = vpop.f32.mrb[0].mxu0
  %v5095 = vpop.f32.mrb[0].mxu0
  %v5096 = vadd.f32 0.0, %v5095
  %v5097 = vpop.f32.mrb[0].mxu0
  %5098 = vmatprep.mubr.bf16.mxu0 0
  %5099 = vmatmul.mubr.bf16.gmra.mrb[0].mxu0 %v4996
  %v5100 = vpop.f32.mrb[0].mxu0
  %v5101 = vadd.f32 0.0, %v5100
  %v5102 = vpop.f32.mrb[0].mxu0
  %v5103 = vpop.f32.mrb[0].mxu0
  %v5104 = vadd.f32 0.0, %v5103
  %v5105 = vpop.f32.mrb[0].mxu0
  %5106 = vmatprep.mubr.bf16.mxu0 0
  %5107 = vmatmul.mubr.bf16.gmra.mrb[0].mxu0 %v4999
  %v5108 = vpop.f32.mrb[0].mxu0
  %v5109 = vadd.f32 0.0, %v5108
  %v5110 = vpop.f32.mrb[0].mxu0
  %v5111 = vpop.f32.mrb[0].mxu0
  %v5112 = vadd.f32 0.0, %v5111
  %v5113 = vpop.f32.mrb[0].mxu0
  %5114 = vmatprep.mubr.bf16.mxu0 0
  %5115 = vmatmul.mubr.bf16.gmra.mrb[0].mxu0 %v5002
  %v5116 = vpop.f32.mrb[0].mxu0
  %v5117 = vadd.f32 0.0, %v5116
  %v5118 = vpop.f32.mrb[0].mxu0
  %v5119 = vpop.f32.mrb[0].mxu0
  %v5120 = vadd.f32 0.0, %v5119
  %v5121 = vpop.f32.mrb[0].mxu0
  %5122 = vmatprep.mubr.bf16.mxu0 0
  %5123 = vmatmul.mubr.bf16.gmra.mrb[0].mxu0 %v5005
  %v5124 = vpop.f32.mrb[0].mxu0
  %v5125 = vadd.f32 0.0, %v5124
  %v5126 = vpop.f32.mrb[0].mxu0
  %v5127 = vpop.f32.mrb[0].mxu0
  %v5128 = vadd.f32 0.0, %v5127
  %v5129 = vpop.f32.mrb[0].mxu0
  %5130 = vmatprep.mubr.bf16.mxu0 0
  %5131 = vmatmul.mubr.bf16.gmra.mrb[0].mxu0 %v5008
  %v5132 = vpop.f32.mrb[0].mxu0
  %v5133 = vadd.f32 0.0, %v5132
  %v5134 = vpop.f32.mrb[0].mxu0
  %v5135 = vpop.f32.mrb[0].mxu0
  %v5136 = vadd.f32 0.0, %v5135
  %v5137 = vpop.f32.mrb[0].mxu0
  %5138 = vdwg.mxu0
  %v5139 = vadd.f32 %v4905, %v5045
  %v5140 = vadd.f32 %v4906, %v5048
  %v5141 = vadd.f32 %v4907, %v5053
  %v5142 = vadd.f32 %v4908, %v5056
  %v5143 = vadd.f32 %v4909, %v5061
  %v5144 = vadd.f32 %v4910, %v5064
  %v5145 = vadd.f32 %v4911, %v5069
  %v5146 = vadd.f32 %v4912, %v5072
  %v5147 = vadd.f32 %v4913, %v5077
  %v5148 = vadd.f32 %v4914, %v5080
  %v5149 = vadd.f32 %v4915, %v5085
  %v5150 = vadd.f32 %v4916, %v5088
  %v5151 = vadd.f32 %v4917, %v5093
  %v5152 = vadd.f32 %v4918, %v5096
  %v5153 = vadd.f32 %v4919, %v5101
  %v5154 = vadd.f32 %v4920, %v5104
  %v5155 = vadd.f32 %v4921, %v5109
  %v5156 = vadd.f32 %v4922, %v5112
  %v5157 = vadd.f32 %v4923, %v5117
  %v5158 = vadd.f32 %v4924, %v5120
  %v5159 = vadd.f32 %v4925, %v5125
  %v5160 = vadd.f32 %v4926, %v5128
  %v5161 = vadd.f32 %v4927, %v5133
  %v5162 = vadd.f32 %v4928, %v5136
  %v5163 = vld [vmem:[#allocation2 + $0x11] sm:$0xff]
  %v5164 = vld [vmem:[#allocation2 + $0x19] sm:$0xff]
  %v5165 = vld [vmem:[#allocation2 + $0x21] sm:$0xff]
  %v5166 = vld [vmem:[#allocation2 + $0x29] sm:$0xff]
  %v5167 = vld [vmem:[#allocation2 + $0x31] sm:$0xff]
  %v5168 = vld [vmem:[#allocation2 + $0x39] sm:$0xff]
  %v5169 = vld [vmem:[#allocation2 + $0x41] sm:$0xff]
  %v5170 = vld [vmem:[#allocation2 + $0x49] sm:$0xff]
  %v5171 = vld [vmem:[#allocation2 + $0x51] sm:$0xff]
  %v5172 = vld [vmem:[#allocation2 + $0x59] sm:$0xff]
  %v5173 = vld [vmem:[#allocation2 + $0x61] sm:$0xff]
  %v5174 = vld [vmem:[#allocation2 + $0x69] sm:$0xff]
  %v5175 = vld [vmem:[#allocation2 + $0x71] sm:$0xff]
  %v5176 = vld [vmem:[#allocation2 + $0x79] sm:$0xff]
  %v5177 = vld [vmem:[#allocation2 + $0x81] sm:$0xff]
  %v5178 = vld [vmem:[#allocation2 + $0x89] sm:$0xff]
  %v5179 = vld [vmem:[#allocation2 + $0x91] sm:$0xff]
  %v5180 = vld [vmem:[#allocation2 + $0x99] sm:$0xff]
  %v5181 = vld [vmem:[#allocation2 + $0xa1] sm:$0xff]
  %v5182 = vld [vmem:[#allocation2 + $0xa9] sm:$0xff]
  %v5183 = vld [vmem:[#allocation2 + $0xb1] sm:$0xff]
  %v5184 = vld [vmem:[#allocation2 + $0xb9] sm:$0xff]
  %v5185 = vld [vmem:[#allocation2 + $0xc1] sm:$0xff]
  %v5186 = vld [vmem:[#allocation2 + $0xc9] sm:$0xff]
  %v5187 = vpack.c.bf16 %v5164, %v5163
  %v5188 = vpack.c.bf16 %v5166, %v5165
  %v5189 = vpack.c.bf16 %v5168, %v5167
  %v5190 = vpack.c.bf16 %v5170, %v5169
  %v5191 = vpack.c.bf16 %v5172, %v5171
  %v5192 = vpack.c.bf16 %v5174, %v5173
  %v5193 = vpack.c.bf16 %v5176, %v5175
  %v5194 = vpack.c.bf16 %v5178, %v5177
  %v5195 = vpack.c.bf16 %v5180, %v5179
  %v5196 = vpack.c.bf16 %v5182, %v5181
  %v5197 = vpack.c.bf16 %v5184, %v5183
  %v5198 = vpack.c.bf16 %v5186, %v5185
  %s5199 = scalar_lea.vmem %s10, 112
  %v5200 = vld [vmem:[%s5199] sm:$0xf]
  %v5201 = vld [vmem:[%s5199 + $0x4] sm:$0xf]
  %v5204 = vunpack.c.l.b16 %v5200
  %v5205 = vunpack.c.l.b16 %v5201
  %v5206 = vpack.c.b16 %v5205, %v5204
  %v5209 = vsel %vm57, %v5187, 0
  %v5212 = vsel %vm57, %v5188, 0
  %v5215 = vsel %vm57, %v5189, 0
  %v5218 = vsel %vm57, %v5190, 0
  %v5221 = vsel %vm57, %v5191, 0
  %v5224 = vsel %vm57, %v5192, 0
  %v5227 = vsel %vm57, %v5193, 0
  %v5230 = vsel %vm57, %v5194, 0
  %v5233 = vsel %vm57, %v5195, 0
  %v5236 = vsel %vm57, %v5196, 0
  %v5239 = vsel %vm57, %v5197, 0
  %v5242 = vsel %vm57, %v5198, 0
  %5244 = vmatprep.subr.bf16.mxu0 0
  %5245 = vmatpush1.bf16.msra.mxu0 %v5206
  %5246 = vmatprep.subr.bf16.mxu0 0
  %5247 = vmatpush1.bf16.msra.mxu0 0
  %5248 = vmatprep.subr.bf16.mxu0 0
  %5249 = vmatpush1.bf16.msra.mxu0 0
  %5250 = vmatprep.subr.bf16.mxu0 0
  %5251 = vmatpush1.bf16.msra.mxu0 0
  %5252 = vmatprep.subr.bf16.mxu0 0
  %5253 = vmatpush1.bf16.msra.mxu0 0
  %5254 = vmatprep.subr.bf16.mxu0 0
  %5255 = vmatpush1.bf16.msra.mxu0 0
  %5256 = vmatprep.subr.bf16.mxu0 0
  %5257 = vmatpush1.bf16.msra.mxu0 0
  %5258 = vmatprep.subr.bf16.mxu0 0
  %5259 = vmatpush1.bf16.msra.mxu0 0
  %5260 = vmatprep.subr.bf16.mxu0 0
  %5261 = vmatpush1.bf16.msra.mxu0 0
  %5262 = vmatprep.subr.bf16.mxu0 0
  %5263 = vmatpush1.bf16.msra.mxu0 0
  %5264 = vmatprep.subr.bf16.mxu0 0
  %5265 = vmatpush1.bf16.msra.mxu0 0
  %5266 = vmatprep.subr.bf16.mxu0 0
  %5267 = vmatpush1.bf16.msra.mxu0 0
  %5268 = vmatprep.subr.bf16.mxu0 0
  %5269 = vmatpush1.bf16.msra.mxu0 0
  %5270 = vmatprep.subr.bf16.mxu0 0
  %5271 = vmatpush1.bf16.msra.mxu0 0
  %5272 = vmatprep.subr.bf16.mxu0 0
  %5273 = vmatpush1.bf16.msra.mxu0 0
  %5274 = vmatprep.subr.bf16.mxu0 0
  %5275 = vmatpush1.bf16.msra.mxu0 0
  %5276 = vmatprep.mubr.bf16.mxu0 0
  %5277 = vmatmul.mubr.bf16.gmra.mrb[0].mxu0 %v5209
  %v5278 = vpop.f32.mrb[0].mxu0
  %v5279 = vadd.f32 0.0, %v5278
  %v5280 = vpop.f32.mrb[0].mxu0
  %v5281 = vpop.f32.mrb[0].mxu0
  %v5282 = vadd.f32 0.0, %v5281
  %v5283 = vpop.f32.mrb[0].mxu0
  %5284 = vmatprep.mubr.bf16.mxu0 0
  %5285 = vmatmul.mubr.bf16.gmra.mrb[0].mxu0 %v5212
  %v5286 = vpop.f32.mrb[0].mxu0
  %v5287 = vadd.f32 0.0, %v5286
  %v5288 = vpop.f32.mrb[0].mxu0
  %v5289 = vpop.f32.mrb[0].mxu0
  %v5290 = vadd.f32 0.0, %v5289
  %v5291 = vpop.f32.mrb[0].mxu0
  %5292 = vmatprep.mubr.bf16.mxu0 0
  %5293 = vmatmul.mubr.bf16.gmra.mrb[0].mxu0 %v5215
  %v5294 = vpop.f32.mrb[0].mxu0
  %v5295 = vadd.f32 0.0, %v5294
  %v5296 = vpop.f32.mrb[0].mxu0
  %v5297 = vpop.f32.mrb[0].mxu0
  %v5298 = vadd.f32 0.0, %v5297
  %v5299 = vpop.f32.mrb[0].mxu0
  %5300 = vmatprep.mubr.bf16.mxu0 0
  %5301 = vmatmul.mubr.bf16.gmra.mrb[0].mxu0 %v5218
  %v5302 = vpop.f32.mrb[0].mxu0
  %v5303 = vadd.f32 0.0, %v5302
  %v5304 = vpop.f32.mrb[0].mxu0
  %v5305 = vpop.f32.mrb[0].mxu0
  %v5306 = vadd.f32 0.0, %v5305
  %v5307 = vpop.f32.mrb[0].mxu0
  %5308 = vmatprep.mubr.bf16.mxu0 0
  %5309 = vmatmul.mubr.bf16.gmra.mrb[0].mxu0 %v5221
  %v5310 = vpop.f32.mrb[0].mxu0
  %v5311 = vadd.f32 0.0, %v5310
  %v5312 = vpop.f32.mrb[0].mxu0
  %v5313 = vpop.f32.mrb[0].mxu0
  %v5314 = vadd.f32 0.0, %v5313
  %v5315 = vpop.f32.mrb[0].mxu0
  %5316 = vmatprep.mubr.bf16.mxu0 0
  %5317 = vmatmul.mubr.bf16.gmra.mrb[0].mxu0 %v5224
  %v5318 = vpop.f32.mrb[0].mxu0
  %v5319 = vadd.f32 0.0, %v5318
  %v5320 = vpop.f32.mrb[0].mxu0
  %v5321 = vpop.f32.mrb[0].mxu0
  %v5322 = vadd.f32 0.0, %v5321
  %v5323 = vpop.f32.mrb[0].mxu0
  %5324 = vmatprep.mubr.bf16.mxu0 0
  %5325 = vmatmul.mubr.bf16.gmra.mrb[0].mxu0 %v5227
  %v5326 = vpop.f32.mrb[0].mxu0
  %v5327 = vadd.f32 0.0, %v5326
  %v5328 = vpop.f32.mrb[0].mxu0
  %v5329 = vpop.f32.mrb[0].mxu0
  %v5330 = vadd.f32 0.0, %v5329
  %v5331 = vpop.f32.mrb[0].mxu0
  %5332 = vmatprep.mubr.bf16.mxu0 0
  %5333 = vmatmul.mubr.bf16.gmra.mrb[0].mxu0 %v5230
  %v5334 = vpop.f32.mrb[0].mxu0
  %v5335 = vadd.f32 0.0, %v5334
  %v5336 = vpop.f32.mrb[0].mxu0
  %v5337 = vpop.f32.mrb[0].mxu0
  %v5338 = vadd.f32 0.0, %v5337
  %v5339 = vpop.f32.mrb[0].mxu0
  %5340 = vmatprep.mubr.bf16.mxu0 0
  %5341 = vmatmul.mubr.bf16.gmra.mrb[0].mxu0 %v5233
  %v5342 = vpop.f32.mrb[0].mxu0
  %v5343 = vadd.f32 0.0, %v5342
  %v5344 = vpop.f32.mrb[0].mxu0
  %v5345 = vpop.f32.mrb[0].mxu0
  %v5346 = vadd.f32 0.0, %v5345
  %v5347 = vpop.f32.mrb[0].mxu0
  %5348 = vmatprep.mubr.bf16.mxu0 0
  %5349 = vmatmul.mubr.bf16.gmra.mrb[0].mxu0 %v5236
  %v5350 = vpop.f32.mrb[0].mxu0
  %v5351 = vadd.f32 0.0, %v5350
  %v5352 = vpop.f32.mrb[0].mxu0
  %v5353 = vpop.f32.mrb[0].mxu0
  %v5354 = vadd.f32 0.0, %v5353
  %v5355 = vpop.f32.mrb[0].mxu0
  %5356 = vmatprep.mubr.bf16.mxu0 0
  %5357 = vmatmul.mubr.bf16.gmra.mrb[0].mxu0 %v5239
  %v5358 = vpop.f32.mrb[0].mxu0
  %v5359 = vadd.f32 0.0, %v5358
  %v5360 = vpop.f32.mrb[0].mxu0
  %v5361 = vpop.f32.mrb[0].mxu0
  %v5362 = vadd.f32 0.0, %v5361
  %v5363 = vpop.f32.mrb[0].mxu0
  %5364 = vmatprep.mubr.bf16.mxu0 0
  %5365 = vmatmul.mubr.bf16.gmra.mrb[0].mxu0 %v5242
  %v5366 = vpop.f32.mrb[0].mxu0
  %v5367 = vadd.f32 0.0, %v5366
  %v5368 = vpop.f32.mrb[0].mxu0
  %v5369 = vpop.f32.mrb[0].mxu0
  %v5370 = vadd.f32 0.0, %v5369
  %v5371 = vpop.f32.mrb[0].mxu0
  %5372 = vdwg.mxu0
  %v5373 = vadd.f32 %v5139, %v5279
  %v5374 = vadd.f32 %v5140, %v5282
  %v5375 = vadd.f32 %v5141, %v5287
  %v5376 = vadd.f32 %v5142, %v5290
  %v5377 = vadd.f32 %v5143, %v5295
  %v5378 = vadd.f32 %v5144, %v5298
  %v5379 = vadd.f32 %v5145, %v5303
  %v5380 = vadd.f32 %v5146, %v5306
  %v5381 = vadd.f32 %v5147, %v5311
  %v5382 = vadd.f32 %v5148, %v5314
  %v5383 = vadd.f32 %v5149, %v5319
  %v5384 = vadd.f32 %v5150, %v5322
  %v5385 = vadd.f32 %v5151, %v5327
  %v5386 = vadd.f32 %v5152, %v5330
  %v5387 = vadd.f32 %v5153, %v5335
  %v5388 = vadd.f32 %v5154, %v5338
  %v5389 = vadd.f32 %v5155, %v5343
  %v5390 = vadd.f32 %v5156, %v5346
  %v5391 = vadd.f32 %v5157, %v5351
  %v5392 = vadd.f32 %v5158, %v5354
  %v5393 = vadd.f32 %v5159, %v5359
  %v5394 = vadd.f32 %v5160, %v5362
  %v5395 = vadd.f32 %v5161, %v5367
  %v5396 = vadd.f32 %v5162, %v5370
  %v5397 = vld [vmem:[#allocation2 + $0x19] sm:$0xff]
  %v5398 = vld [vmem:[#allocation2 + $0x21] sm:$0xff]
  %v5399 = vld [vmem:[#allocation2 + $0x29] sm:$0xff]
  %v5400 = vld [vmem:[#allocation2 + $0x31] sm:$0xff]
  %v5401 = vld [vmem:[#allocation2 + $0x39] sm:$0xff]
  %v5402 = vld [vmem:[#allocation2 + $0x41] sm:$0xff]
  %v5403 = vld [vmem:[#allocation2 + $0x49] sm:$0xff]
  %v5404 = vld [vmem:[#allocation2 + $0x51] sm:$0xff]
  %v5405 = vld [vmem:[#allocation2 + $0x59] sm:$0xff]
  %v5406 = vld [vmem:[#allocation2 + $0x61] sm:$0xff]
  %v5407 = vld [vmem:[#allocation2 + $0x69] sm:$0xff]
  %v5408 = vld [vmem:[#allocation2 + $0x71] sm:$0xff]
  %v5409 = vld [vmem:[#allocation2 + $0x79] sm:$0xff]
  %v5410 = vld [vmem:[#allocation2 + $0x81] sm:$0xff]
  %v5411 = vld [vmem:[#allocation2 + $0x89] sm:$0xff]
  %v5412 = vld [vmem:[#allocation2 + $0x91] sm:$0xff]
  %v5413 = vld [vmem:[#allocation2 + $0x99] sm:$0xff]
  %v5414 = vld [vmem:[#allocation2 + $0xa1] sm:$0xff]
  %v5415 = vld [vmem:[#allocation2 + $0xa9] sm:$0xff]
  %v5416 = vld [vmem:[#allocation2 + $0xb1] sm:$0xff]
  %v5417 = vld [vmem:[#allocation2 + $0xb9] sm:$0xff]
  %v5418 = vld [vmem:[#allocation2 + $0xc1] sm:$0xff]
  %v5419 = vld [vmem:[#allocation2 + $0xc9] sm:$0xff]
  %v5420 = vld [vmem:[#allocation2 + $0xd1] sm:$0xff]
  %v5421 = vpack.c.bf16 %v5398, %v5397
  %v5422 = vpack.c.bf16 %v5400, %v5399
  %v5423 = vpack.c.bf16 %v5402, %v5401
  %v5424 = vpack.c.bf16 %v5404, %v5403
  %v5425 = vpack.c.bf16 %v5406, %v5405
  %v5426 = vpack.c.bf16 %v5408, %v5407
  %v5427 = vpack.c.bf16 %v5410, %v5409
  %v5428 = vpack.c.bf16 %v5412, %v5411
  %v5429 = vpack.c.bf16 %v5414, %v5413
  %v5430 = vpack.c.bf16 %v5416, %v5415
  %v5431 = vpack.c.bf16 %v5418, %v5417
  %v5432 = vpack.c.bf16 %v5420, %v5419
  %s5433 = scalar_lea.vmem %s10, 120
  %v5434 = vld [vmem:[%s5433] sm:$0xf]
  %v5435 = vld [vmem:[%s5433 + $0x4] sm:$0xf]
  %v5438 = vunpack.c.l.b16 %v5434
  %v5439 = vunpack.c.l.b16 %v5435
  %v5440 = vpack.c.b16 %v5439, %v5438
  %v5443 = vsel %vm57, %v5421, 0
  %v5446 = vsel %vm57, %v5422, 0
  %v5449 = vsel %vm57, %v5423, 0
  %v5452 = vsel %vm57, %v5424, 0
  %v5455 = vsel %vm57, %v5425, 0
  %v5458 = vsel %vm57, %v5426, 0
  %v5461 = vsel %vm57, %v5427, 0
  %v5464 = vsel %vm57, %v5428, 0
  %v5467 = vsel %vm57, %v5429, 0
  %v5470 = vsel %vm57, %v5430, 0
  %v5473 = vsel %vm57, %v5431, 0
  %v5476 = vsel %vm57, %v5432, 0
  %5478 = vmatprep.subr.bf16.mxu0 0
  %5479 = vmatpush1.bf16.msra.mxu0 %v5440
  %5480 = vmatprep.subr.bf16.mxu0 0
  %5481 = vmatpush1.bf16.msra.mxu0 0
  %5482 = vmatprep.subr.bf16.mxu0 0
  %5483 = vmatpush1.bf16.msra.mxu0 0
  %5484 = vmatprep.subr.bf16.mxu0 0
  %5485 = vmatpush1.bf16.msra.mxu0 0
  %5486 = vmatprep.subr.bf16.mxu0 0
  %5487 = vmatpush1.bf16.msra.mxu0 0
  %5488 = vmatprep.subr.bf16.mxu0 0
  %5489 = vmatpush1.bf16.msra.mxu0 0
  %5490 = vmatprep.subr.bf16.mxu0 0
  %5491 = vmatpush1.bf16.msra.mxu0 0
  %5492 = vmatprep.subr.bf16.mxu0 0
  %5493 = vmatpush1.bf16.msra.mxu0 0
  %5494 = vmatprep.subr.bf16.mxu0 0
  %5495 = vmatpush1.bf16.msra.mxu0 0
  %5496 = vmatprep.subr.bf16.mxu0 0
  %5497 = vmatpush1.bf16.msra.mxu0 0
  %5498 = vmatprep.subr.bf16.mxu0 0
  %5499 = vmatpush1.bf16.msra.mxu0 0
  %5500 = vmatprep.subr.bf16.mxu0 0
  %5501 = vmatpush1.bf16.msra.mxu0 0
  %5502 = vmatprep.subr.bf16.mxu0 0
  %5503 = vmatpush1.bf16.msra.mxu0 0
  %5504 = vmatprep.subr.bf16.mxu0 0
  %5505 = vmatpush1.bf16.msra.mxu0 0
  %5506 = vmatprep.subr.bf16.mxu0 0
  %5507 = vmatpush1.bf16.msra.mxu0 0
  %5508 = vmatprep.subr.bf16.mxu0 0
  %5509 = vmatpush1.bf16.msra.mxu0 0
  %5510 = vmatprep.mubr.bf16.mxu0 0
  %5511 = vmatmul.mubr.bf16.gmra.mrb[0].mxu0 %v5443
  %v5512 = vpop.f32.mrb[0].mxu0
  %v5513 = vadd.f32 0.0, %v5512
  %v5514 = vpop.f32.mrb[0].mxu0
  %v5515 = vpop.f32.mrb[0].mxu0
  %v5516 = vadd.f32 0.0, %v5515
  %v5517 = vpop.f32.mrb[0].mxu0
  %5518 = vmatprep.mubr.bf16.mxu0 0
  %5519 = vmatmul.mubr.bf16.gmra.mrb[0].mxu0 %v5446
  %v5520 = vpop.f32.mrb[0].mxu0
  %v5521 = vadd.f32 0.0, %v5520
  %v5522 = vpop.f32.mrb[0].mxu0
  %v5523 = vpop.f32.mrb[0].mxu0
  %v5524 = vadd.f32 0.0, %v5523
  %v5525 = vpop.f32.mrb[0].mxu0
  %5526 = vmatprep.mubr.bf16.mxu0 0
  %5527 = vmatmul.mubr.bf16.gmra.mrb[0].mxu0 %v5449
  %v5528 = vpop.f32.mrb[0].mxu0
  %v5529 = vadd.f32 0.0, %v5528
  %v5530 = vpop.f32.mrb[0].mxu0
  %v5531 = vpop.f32.mrb[0].mxu0
  %v5532 = vadd.f32 0.0, %v5531
  %v5533 = vpop.f32.mrb[0].mxu0
  %5534 = vmatprep.mubr.bf16.mxu0 0
  %5535 = vmatmul.mubr.bf16.gmra.mrb[0].mxu0 %v5452
  %v5536 = vpop.f32.mrb[0].mxu0
  %v5537 = vadd.f32 0.0, %v5536
  %v5538 = vpop.f32.mrb[0].mxu0
  %v5539 = vpop.f32.mrb[0].mxu0
  %v5540 = vadd.f32 0.0, %v5539
  %v5541 = vpop.f32.mrb[0].mxu0
  %5542 = vmatprep.mubr.bf16.mxu0 0
  %5543 = vmatmul.mubr.bf16.gmra.mrb[0].mxu0 %v5455
  %v5544 = vpop.f32.mrb[0].mxu0
  %v5545 = vadd.f32 0.0, %v5544
  %v5546 = vpop.f32.mrb[0].mxu0
  %v5547 = vpop.f32.mrb[0].mxu0
  %v5548 = vadd.f32 0.0, %v5547
  %v5549 = vpop.f32.mrb[0].mxu0
  %5550 = vmatprep.mubr.bf16.mxu0 0
  %5551 = vmatmul.mubr.bf16.gmra.mrb[0].mxu0 %v5458
  %v5552 = vpop.f32.mrb[0].mxu0
  %v5553 = vadd.f32 0.0, %v5552
  %v5554 = vpop.f32.mrb[0].mxu0
  %v5555 = vpop.f32.mrb[0].mxu0
  %v5556 = vadd.f32 0.0, %v5555
  %v5557 = vpop.f32.mrb[0].mxu0
  %5558 = vmatprep.mubr.bf16.mxu0 0
  %5559 = vmatmul.mubr.bf16.gmra.mrb[0].mxu0 %v5461
  %v5560 = vpop.f32.mrb[0].mxu0
  %v5561 = vadd.f32 0.0, %v5560
  %v5562 = vpop.f32.mrb[0].mxu0
  %v5563 = vpop.f32.mrb[0].mxu0
  %v5564 = vadd.f32 0.0, %v5563
  %v5565 = vpop.f32.mrb[0].mxu0
  %5566 = vmatprep.mubr.bf16.mxu0 0
  %5567 = vmatmul.mubr.bf16.gmra.mrb[0].mxu0 %v5464
  %v5568 = vpop.f32.mrb[0].mxu0
  %v5569 = vadd.f32 0.0, %v5568
  %v5570 = vpop.f32.mrb[0].mxu0
  %v5571 = vpop.f32.mrb[0].mxu0
  %v5572 = vadd.f32 0.0, %v5571
  %v5573 = vpop.f32.mrb[0].mxu0
  %5574 = vmatprep.mubr.bf16.mxu0 0
  %5575 = vmatmul.mubr.bf16.gmra.mrb[0].mxu0 %v5467
  %v5576 = vpop.f32.mrb[0].mxu0
  %v5577 = vadd.f32 0.0, %v5576
  %v5578 = vpop.f32.mrb[0].mxu0
  %v5579 = vpop.f32.mrb[0].mxu0
  %v5580 = vadd.f32 0.0, %v5579
  %v5581 = vpop.f32.mrb[0].mxu0
  %5582 = vmatprep.mubr.bf16.mxu0 0
  %5583 = vmatmul.mubr.bf16.gmra.mrb[0].mxu0 %v5470
  %v5584 = vpop.f32.mrb[0].mxu0
  %v5585 = vadd.f32 0.0, %v5584
  %v5586 = vpop.f32.mrb[0].mxu0
  %v5587 = vpop.f32.mrb[0].mxu0
  %v5588 = vadd.f32 0.0, %v5587
  %v5589 = vpop.f32.mrb[0].mxu0
  %5590 = vmatprep.mubr.bf16.mxu0 0
  %5591 = vmatmul.mubr.bf16.gmra.mrb[0].mxu0 %v5473
  %v5592 = vpop.f32.mrb[0].mxu0
  %v5593 = vadd.f32 0.0, %v5592
  %v5594 = vpop.f32.mrb[0].mxu0
  %v5595 = vpop.f32.mrb[0].mxu0
  %v5596 = vadd.f32 0.0, %v5595
  %v5597 = vpop.f32.mrb[0].mxu0
  %5598 = vmatprep.mubr.bf16.mxu0 0
  %5599 = vmatmul.mubr.bf16.gmra.mrb[0].mxu0 %v5476
  %v5600 = vpop.f32.mrb[0].mxu0
  %v5601 = vadd.f32 0.0, %v5600
  %v5602 = vpop.f32.mrb[0].mxu0
  %v5603 = vpop.f32.mrb[0].mxu0
  %v5604 = vadd.f32 0.0, %v5603
  %v5605 = vpop.f32.mrb[0].mxu0
  %5606 = vdwg.mxu0
  %v5607 = vadd.f32 %v5373, %v5513
  %v5608 = vadd.f32 %v5374, %v5516
  %v5609 = vadd.f32 %v5375, %v5521
  %v5610 = vadd.f32 %v5376, %v5524
  %v5611 = vadd.f32 %v5377, %v5529
  %v5612 = vadd.f32 %v5378, %v5532
  %v5613 = vadd.f32 %v5379, %v5537
  %v5614 = vadd.f32 %v5380, %v5540
  %v5615 = vadd.f32 %v5381, %v5545
  %v5616 = vadd.f32 %v5382, %v5548
  %v5617 = vadd.f32 %v5383, %v5553
  %v5618 = vadd.f32 %v5384, %v5556
  %v5619 = vadd.f32 %v5385, %v5561
  %v5620 = vadd.f32 %v5386, %v5564
  %v5621 = vadd.f32 %v5387, %v5569
  %v5622 = vadd.f32 %v5388, %v5572
  %v5623 = vadd.f32 %v5389, %v5577
  %v5624 = vadd.f32 %v5390, %v5580
  %v5625 = vadd.f32 %v5391, %v5585
  %v5626 = vadd.f32 %v5392, %v5588
  %v5627 = vadd.f32 %v5393, %v5593
  %v5628 = vadd.f32 %v5394, %v5596
  %v5629 = vadd.f32 %v5395, %v5601
  %v5630 = vadd.f32 %v5396, %v5604
  %v5631 = vld [vmem:[#allocation2 + $0x1a] sm:$0xff]
  %v5632 = vld [vmem:[#allocation2 + $0x22] sm:$0xff]
  %v5633 = vld [vmem:[#allocation2 + $0x2a] sm:$0xff]
  %v5634 = vld [vmem:[#allocation2 + $0x32] sm:$0xff]
  %v5635 = vld [vmem:[#allocation2 + $0x3a] sm:$0xff]
  %v5636 = vld [vmem:[#allocation2 + $0x42] sm:$0xff]
  %v5637 = vld [vmem:[#allocation2 + $0x4a] sm:$0xff]
  %v5638 = vld [vmem:[#allocation2 + $0x52] sm:$0xff]
  %v5639 = vld [vmem:[#allocation2 + $0x5a] sm:$0xff]
  %v5640 = vld [vmem:[#allocation2 + $0x62] sm:$0xff]
  %v5641 = vld [vmem:[#allocation2 + $0x6a] sm:$0xff]
  %v5642 = vld [vmem:[#allocation2 + $0x72] sm:$0xff]
  %v5643 = vld [vmem:[#allocation2 + $0x7a] sm:$0xff]
  %v5644 = vld [vmem:[#allocation2 + $0x82] sm:$0xff]
  %v5645 = vld [vmem:[#allocation2 + $0x8a] sm:$0xff]
  %v5646 = vld [vmem:[#allocation2 + $0x92] sm:$0xff]
  %v5647 = vld [vmem:[#allocation2 + $0x9a] sm:$0xff]
  %v5648 = vld [vmem:[#allocation2 + $0xa2] sm:$0xff]
  %v5649 = vld [vmem:[#allocation2 + $0xaa] sm:$0xff]
  %v5650 = vld [vmem:[#allocation2 + $0xb2] sm:$0xff]
  %v5651 = vld [vmem:[#allocation2 + $0xba] sm:$0xff]
  %v5652 = vld [vmem:[#allocation2 + $0xc2] sm:$0xff]
  %v5653 = vld [vmem:[#allocation2 + $0xca] sm:$0xff]
  %v5654 = vld [vmem:[#allocation2 + $0xd2] sm:$0xff]
  %v5655 = vpack.c.bf16 %v5632, %v5631
  %v5656 = vpack.c.bf16 %v5634, %v5633
  %v5657 = vpack.c.bf16 %v5636, %v5635
  %v5658 = vpack.c.bf16 %v5638, %v5637
  %v5659 = vpack.c.bf16 %v5640, %v5639
  %v5660 = vpack.c.bf16 %v5642, %v5641
  %v5661 = vpack.c.bf16 %v5644, %v5643
  %v5662 = vpack.c.bf16 %v5646, %v5645
  %v5663 = vpack.c.bf16 %v5648, %v5647
  %v5664 = vpack.c.bf16 %v5650, %v5649
  %v5665 = vpack.c.bf16 %v5652, %v5651
  %v5666 = vpack.c.bf16 %v5654, %v5653
  %s5667 = scalar_lea.vmem %s10, 128
  %v5668 = vld [vmem:[%s5667] sm:$0xf]
  %v5669 = vld [vmem:[%s5667 + $0x4] sm:$0xf]
  %v5672 = vunpack.c.l.b16 %v5668
  %v5673 = vunpack.c.l.b16 %v5669
  %v5674 = vpack.c.b16 %v5673, %v5672
  %v5677 = vsel %vm57, %v5655, 0
  %v5680 = vsel %vm57, %v5656, 0
  %v5683 = vsel %vm57, %v5657, 0
  %v5686 = vsel %vm57, %v5658, 0
  %v5689 = vsel %vm57, %v5659, 0
  %v5692 = vsel %vm57, %v5660, 0
  %v5695 = vsel %vm57, %v5661, 0
  %v5698 = vsel %vm57, %v5662, 0
  %v5701 = vsel %vm57, %v5663, 0
  %v5704 = vsel %vm57, %v5664, 0
  %v5707 = vsel %vm57, %v5665, 0
  %v5710 = vsel %vm57, %v5666, 0
  %5712 = vmatprep.subr.bf16.mxu0 0
  %5713 = vmatpush1.bf16.msra.mxu0 %v5674
  %5714 = vmatprep.subr.bf16.mxu0 0
  %5715 = vmatpush1.bf16.msra.mxu0 0
  %5716 = vmatprep.subr.bf16.mxu0 0
  %5717 = vmatpush1.bf16.msra.mxu0 0
  %5718 = vmatprep.subr.bf16.mxu0 0
  %5719 = vmatpush1.bf16.msra.mxu0 0
  %5720 = vmatprep.subr.bf16.mxu0 0
  %5721 = vmatpush1.bf16.msra.mxu0 0
  %5722 = vmatprep.subr.bf16.mxu0 0
  %5723 = vmatpush1.bf16.msra.mxu0 0
  %5724 = vmatprep.subr.bf16.mxu0 0
  %5725 = vmatpush1.bf16.msra.mxu0 0
  %5726 = vmatprep.subr.bf16.mxu0 0
  %5727 = vmatpush1.bf16.msra.mxu0 0
  %5728 = vmatprep.subr.bf16.mxu0 0
  %5729 = vmatpush1.bf16.msra.mxu0 0
  %5730 = vmatprep.subr.bf16.mxu0 0
  %5731 = vmatpush1.bf16.msra.mxu0 0
  %5732 = vmatprep.subr.bf16.mxu0 0
  %5733 = vmatpush1.bf16.msra.mxu0 0
  %5734 = vmatprep.subr.bf16.mxu0 0
  %5735 = vmatpush1.bf16.msra.mxu0 0
  %5736 = vmatprep.subr.bf16.mxu0 0
  %5737 = vmatpush1.bf16.msra.mxu0 0
  %5738 = vmatprep.subr.bf16.mxu0 0
  %5739 = vmatpush1.bf16.msra.mxu0 0
  %5740 = vmatprep.subr.bf16.mxu0 0
  %5741 = vmatpush1.bf16.msra.mxu0 0
  %5742 = vmatprep.subr.bf16.mxu0 0
  %5743 = vmatpush1.bf16.msra.mxu0 0
  %5744 = vmatprep.mubr.bf16.mxu0 0
  %5745 = vmatmul.mubr.bf16.gmra.mrb[0].mxu0 %v5677
  %v5746 = vpop.f32.mrb[0].mxu0
  %v5747 = vadd.f32 0.0, %v5746
  %v5748 = vpop.f32.mrb[0].mxu0
  %v5749 = vpop.f32.mrb[0].mxu0
  %v5750 = vadd.f32 0.0, %v5749
  %v5751 = vpop.f32.mrb[0].mxu0
  %5752 = vmatprep.mubr.bf16.mxu0 0
  %5753 = vmatmul.mubr.bf16.gmra.mrb[0].mxu0 %v5680
  %v5754 = vpop.f32.mrb[0].mxu0
  %v5755 = vadd.f32 0.0, %v5754
  %v5756 = vpop.f32.mrb[0].mxu0
  %v5757 = vpop.f32.mrb[0].mxu0
  %v5758 = vadd.f32 0.0, %v5757
  %v5759 = vpop.f32.mrb[0].mxu0
  %5760 = vmatprep.mubr.bf16.mxu0 0
  %5761 = vmatmul.mubr.bf16.gmra.mrb[0].mxu0 %v5683
  %v5762 = vpop.f32.mrb[0].mxu0
  %v5763 = vadd.f32 0.0, %v5762
  %v5764 = vpop.f32.mrb[0].mxu0
  %v5765 = vpop.f32.mrb[0].mxu0
  %v5766 = vadd.f32 0.0, %v5765
  %v5767 = vpop.f32.mrb[0].mxu0
  %5768 = vmatprep.mubr.bf16.mxu0 0
  %5769 = vmatmul.mubr.bf16.gmra.mrb[0].mxu0 %v5686
  %v5770 = vpop.f32.mrb[0].mxu0
  %v5771 = vadd.f32 0.0, %v5770
  %v5772 = vpop.f32.mrb[0].mxu0
  %v5773 = vpop.f32.mrb[0].mxu0
  %v5774 = vadd.f32 0.0, %v5773
  %v5775 = vpop.f32.mrb[0].mxu0
  %5776 = vmatprep.mubr.bf16.mxu0 0
  %5777 = vmatmul.mubr.bf16.gmra.mrb[0].mxu0 %v5689
  %v5778 = vpop.f32.mrb[0].mxu0
  %v5779 = vadd.f32 0.0, %v5778
  %v5780 = vpop.f32.mrb[0].mxu0
  %v5781 = vpop.f32.mrb[0].mxu0
  %v5782 = vadd.f32 0.0, %v5781
  %v5783 = vpop.f32.mrb[0].mxu0
  %5784 = vmatprep.mubr.bf16.mxu0 0
  %5785 = vmatmul.mubr.bf16.gmra.mrb[0].mxu0 %v5692
  %v5786 = vpop.f32.mrb[0].mxu0
  %v5787 = vadd.f32 0.0, %v5786
  %v5788 = vpop.f32.mrb[0].mxu0
  %v5789 = vpop.f32.mrb[0].mxu0
  %v5790 = vadd.f32 0.0, %v5789
  %v5791 = vpop.f32.mrb[0].mxu0
  %5792 = vmatprep.mubr.bf16.mxu0 0
  %5793 = vmatmul.mubr.bf16.gmra.mrb[0].mxu0 %v5695
  %v5794 = vpop.f32.mrb[0].mxu0
  %v5795 = vadd.f32 0.0, %v5794
  %v5796 = vpop.f32.mrb[0].mxu0
  %v5797 = vpop.f32.mrb[0].mxu0
  %v5798 = vadd.f32 0.0, %v5797
  %v5799 = vpop.f32.mrb[0].mxu0
  %5800 = vmatprep.mubr.bf16.mxu0 0
  %5801 = vmatmul.mubr.bf16.gmra.mrb[0].mxu0 %v5698
  %v5802 = vpop.f32.mrb[0].mxu0
  %v5803 = vadd.f32 0.0, %v5802
  %v5804 = vpop.f32.mrb[0].mxu0
  %v5805 = vpop.f32.mrb[0].mxu0
  %v5806 = vadd.f32 0.0, %v5805
  %v5807 = vpop.f32.mrb[0].mxu0
  %5808 = vmatprep.mubr.bf16.mxu0 0
  %5809 = vmatmul.mubr.bf16.gmra.mrb[0].mxu0 %v5701
  %v5810 = vpop.f32.mrb[0].mxu0
  %v5811 = vadd.f32 0.0, %v5810
  %v5812 = vpop.f32.mrb[0].mxu0
  %v5813 = vpop.f32.mrb[0].mxu0
  %v5814 = vadd.f32 0.0, %v5813
  %v5815 = vpop.f32.mrb[0].mxu0
  %5816 = vmatprep.mubr.bf16.mxu0 0
  %5817 = vmatmul.mubr.bf16.gmra.mrb[0].mxu0 %v5704
  %v5818 = vpop.f32.mrb[0].mxu0
  %v5819 = vadd.f32 0.0, %v5818
  %v5820 = vpop.f32.mrb[0].mxu0
  %v5821 = vpop.f32.mrb[0].mxu0
  %v5822 = vadd.f32 0.0, %v5821
  %v5823 = vpop.f32.mrb[0].mxu0
  %5824 = vmatprep.mubr.bf16.mxu0 0
  %5825 = vmatmul.mubr.bf16.gmra.mrb[0].mxu0 %v5707
  %v5826 = vpop.f32.mrb[0].mxu0
  %v5827 = vadd.f32 0.0, %v5826
  %v5828 = vpop.f32.mrb[0].mxu0
  %v5829 = vpop.f32.mrb[0].mxu0
  %v5830 = vadd.f32 0.0, %v5829
  %v5831 = vpop.f32.mrb[0].mxu0
  %5832 = vmatprep.mubr.bf16.mxu0 0
  %5833 = vmatmul.mubr.bf16.gmra.mrb[0].mxu0 %v5710
  %v5834 = vpop.f32.mrb[0].mxu0
  %v5835 = vadd.f32 0.0, %v5834
  %v5836 = vpop.f32.mrb[0].mxu0
  %v5837 = vpop.f32.mrb[0].mxu0
  %v5838 = vadd.f32 0.0, %v5837
  %v5839 = vpop.f32.mrb[0].mxu0
  %5840 = vdwg.mxu0
  %v5841 = vadd.f32 %v5607, %v5747
  %v5842 = vadd.f32 %v5608, %v5750
  %v5843 = vadd.f32 %v5609, %v5755
  %v5844 = vadd.f32 %v5610, %v5758
  %v5845 = vadd.f32 %v5611, %v5763
  %v5846 = vadd.f32 %v5612, %v5766
  %v5847 = vadd.f32 %v5613, %v5771
  %v5848 = vadd.f32 %v5614, %v5774
  %v5849 = vadd.f32 %v5615, %v5779
  %v5850 = vadd.f32 %v5616, %v5782
  %v5851 = vadd.f32 %v5617, %v5787
  %v5852 = vadd.f32 %v5618, %v5790
  %v5853 = vadd.f32 %v5619, %v5795
  %v5854 = vadd.f32 %v5620, %v5798
  %v5855 = vadd.f32 %v5621, %v5803
  %v5856 = vadd.f32 %v5622, %v5806
  %v5857 = vadd.f32 %v5623, %v5811
  %v5858 = vadd.f32 %v5624, %v5814
  %v5859 = vadd.f32 %v5625, %v5819
  %v5860 = vadd.f32 %v5626, %v5822
  %v5861 = vadd.f32 %v5627, %v5827
  %v5862 = vadd.f32 %v5628, %v5830
  %v5863 = vadd.f32 %v5629, %v5835
  %v5864 = vadd.f32 %v5630, %v5838
  %v5865 = vld [vmem:[#allocation2 + $0x1b] sm:$0xff]
  %v5866 = vld [vmem:[#allocation2 + $0x23] sm:$0xff]
  %v5867 = vld [vmem:[#allocation2 + $0x2b] sm:$0xff]
  %v5868 = vld [vmem:[#allocation2 + $0x33] sm:$0xff]
  %v5869 = vld [vmem:[#allocation2 + $0x3b] sm:$0xff]
  %v5870 = vld [vmem:[#allocation2 + $0x43] sm:$0xff]
  %v5871 = vld [vmem:[#allocation2 + $0x4b] sm:$0xff]
  %v5872 = vld [vmem:[#allocation2 + $0x53] sm:$0xff]
  %v5873 = vld [vmem:[#allocation2 + $0x5b] sm:$0xff]
  %v5874 = vld [vmem:[#allocation2 + $0x63] sm:$0xff]
  %v5875 = vld [vmem:[#allocation2 + $0x6b] sm:$0xff]
  %v5876 = vld [vmem:[#allocation2 + $0x73] sm:$0xff]
  %v5877 = vld [vmem:[#allocation2 + $0x7b] sm:$0xff]
  %v5878 = vld [vmem:[#allocation2 + $0x83] sm:$0xff]
  %v5879 = vld [vmem:[#allocation2 + $0x8b] sm:$0xff]
  %v5880 = vld [vmem:[#allocation2 + $0x93] sm:$0xff]
  %v5881 = vld [vmem:[#allocation2 + $0x9b] sm:$0xff]
  %v5882 = vld [vmem:[#allocation2 + $0xa3] sm:$0xff]
  %v5883 = vld [vmem:[#allocation2 + $0xab] sm:$0xff]
  %v5884 = vld [vmem:[#allocation2 + $0xb3] sm:$0xff]
  %v5885 = vld [vmem:[#allocation2 + $0xbb] sm:$0xff]
  %v5886 = vld [vmem:[#allocation2 + $0xc3] sm:$0xff]
  %v5887 = vld [vmem:[#allocation2 + $0xcb] sm:$0xff]
  %v5888 = vld [vmem:[#allocation2 + $0xd3] sm:$0xff]
  %v5889 = vpack.c.bf16 %v5866, %v5865
  %v5890 = vpack.c.bf16 %v5868, %v5867
  %v5891 = vpack.c.bf16 %v5870, %v5869
  %v5892 = vpack.c.bf16 %v5872, %v5871
  %v5893 = vpack.c.bf16 %v5874, %v5873
  %v5894 = vpack.c.bf16 %v5876, %v5875
  %v5895 = vpack.c.bf16 %v5878, %v5877
  %v5896 = vpack.c.bf16 %v5880, %v5879
  %v5897 = vpack.c.bf16 %v5882, %v5881
  %v5898 = vpack.c.bf16 %v5884, %v5883
  %v5899 = vpack.c.bf16 %v5886, %v5885
  %v5900 = vpack.c.bf16 %v5888, %v5887
  %s5901 = scalar_lea.vmem %s10, 136
  %v5902 = vld [vmem:[%s5901] sm:$0xf]
  %v5903 = vld [vmem:[%s5901 + $0x4] sm:$0xf]
  %v5906 = vunpack.c.l.b16 %v5902
  %v5907 = vunpack.c.l.b16 %v5903
  %v5908 = vpack.c.b16 %v5907, %v5906
  %v5911 = vsel %vm57, %v5889, 0
  %v5914 = vsel %vm57, %v5890, 0
  %v5917 = vsel %vm57, %v5891, 0
  %v5920 = vsel %vm57, %v5892, 0
  %v5923 = vsel %vm57, %v5893, 0
  %v5926 = vsel %vm57, %v5894, 0
  %v5929 = vsel %vm57, %v5895, 0
  %v5932 = vsel %vm57, %v5896, 0
  %v5935 = vsel %vm57, %v5897, 0
  %v5938 = vsel %vm57, %v5898, 0
  %v5941 = vsel %vm57, %v5899, 0
  %v5944 = vsel %vm57, %v5900, 0
  %5946 = vmatprep.subr.bf16.mxu0 0
  %5947 = vmatpush1.bf16.msra.mxu0 %v5908
  %5948 = vmatprep.subr.bf16.mxu0 0
  %5949 = vmatpush1.bf16.msra.mxu0 0
  %5950 = vmatprep.subr.bf16.mxu0 0
  %5951 = vmatpush1.bf16.msra.mxu0 0
  %5952 = vmatprep.subr.bf16.mxu0 0
  %5953 = vmatpush1.bf16.msra.mxu0 0
  %5954 = vmatprep.subr.bf16.mxu0 0
  %5955 = vmatpush1.bf16.msra.mxu0 0
  %5956 = vmatprep.subr.bf16.mxu0 0
  %5957 = vmatpush1.bf16.msra.mxu0 0
  %5958 = vmatprep.subr.bf16.mxu0 0
  %5959 = vmatpush1.bf16.msra.mxu0 0
  %5960 = vmatprep.subr.bf16.mxu0 0
  %5961 = vmatpush1.bf16.msra.mxu0 0
  %5962 = vmatprep.subr.bf16.mxu0 0
  %5963 = vmatpush1.bf16.msra.mxu0 0
  %5964 = vmatprep.subr.bf16.mxu0 0
  %5965 = vmatpush1.bf16.msra.mxu0 0
  %5966 = vmatprep.subr.bf16.mxu0 0
  %5967 = vmatpush1.bf16.msra.mxu0 0
  %5968 = vmatprep.subr.bf16.mxu0 0
  %5969 = vmatpush1.bf16.msra.mxu0 0
  %5970 = vmatprep.subr.bf16.mxu0 0
  %5971 = vmatpush1.bf16.msra.mxu0 0
  %5972 = vmatprep.subr.bf16.mxu0 0
  %5973 = vmatpush1.bf16.msra.mxu0 0
  %5974 = vmatprep.subr.bf16.mxu0 0
  %5975 = vmatpush1.bf16.msra.mxu0 0
  %5976 = vmatprep.subr.bf16.mxu0 0
  %5977 = vmatpush1.bf16.msra.mxu0 0
  %5978 = vmatprep.mubr.bf16.mxu0 0
  %5979 = vmatmul.mubr.bf16.gmra.mrb[0].mxu0 %v5911
  %v5980 = vpop.f32.mrb[0].mxu0
  %v5981 = vadd.f32 0.0, %v5980
  %v5982 = vpop.f32.mrb[0].mxu0
  %v5983 = vpop.f32.mrb[0].mxu0
  %v5984 = vadd.f32 0.0, %v5983
  %v5985 = vpop.f32.mrb[0].mxu0
  %5986 = vmatprep.mubr.bf16.mxu0 0
  %5987 = vmatmul.mubr.bf16.gmra.mrb[0].mxu0 %v5914
  %v5988 = vpop.f32.mrb[0].mxu0
  %v5989 = vadd.f32 0.0, %v5988
  %v5990 = vpop.f32.mrb[0].mxu0
  %v5991 = vpop.f32.mrb[0].mxu0
  %v5992 = vadd.f32 0.0, %v5991
  %v5993 = vpop.f32.mrb[0].mxu0
  %5994 = vmatprep.mubr.bf16.mxu0 0
  %5995 = vmatmul.mubr.bf16.gmra.mrb[0].mxu0 %v5917
  %v5996 = vpop.f32.mrb[0].mxu0
  %v5997 = vadd.f32 0.0, %v5996
  %v5998 = vpop.f32.mrb[0].mxu0
  %v5999 = vpop.f32.mrb[0].mxu0
  %v6000 = vadd.f32 0.0, %v5999
  %v6001 = vpop.f32.mrb[0].mxu0
  %6002 = vmatprep.mubr.bf16.mxu0 0
  %6003 = vmatmul.mubr.bf16.gmra.mrb[0].mxu0 %v5920
  %v6004 = vpop.f32.mrb[0].mxu0
  %v6005 = vadd.f32 0.0, %v6004
  %v6006 = vpop.f32.mrb[0].mxu0
  %v6007 = vpop.f32.mrb[0].mxu0
  %v6008 = vadd.f32 0.0, %v6007
  %v6009 = vpop.f32.mrb[0].mxu0
  %6010 = vmatprep.mubr.bf16.mxu0 0
  %6011 = vmatmul.mubr.bf16.gmra.mrb[0].mxu0 %v5923
  %v6012 = vpop.f32.mrb[0].mxu0
  %v6013 = vadd.f32 0.0, %v6012
  %v6014 = vpop.f32.mrb[0].mxu0
  %v6015 = vpop.f32.mrb[0].mxu0
  %v6016 = vadd.f32 0.0, %v6015
  %v6017 = vpop.f32.mrb[0].mxu0
  %6018 = vmatprep.mubr.bf16.mxu0 0
  %6019 = vmatmul.mubr.bf16.gmra.mrb[0].mxu0 %v5926
  %v6020 = vpop.f32.mrb[0].mxu0
  %v6021 = vadd.f32 0.0, %v6020
  %v6022 = vpop.f32.mrb[0].mxu0
  %v6023 = vpop.f32.mrb[0].mxu0
  %v6024 = vadd.f32 0.0, %v6023
  %v6025 = vpop.f32.mrb[0].mxu0
  %6026 = vmatprep.mubr.bf16.mxu0 0
  %6027 = vmatmul.mubr.bf16.gmra.mrb[0].mxu0 %v5929
  %v6028 = vpop.f32.mrb[0].mxu0
  %v6029 = vadd.f32 0.0, %v6028
  %v6030 = vpop.f32.mrb[0].mxu0
  %v6031 = vpop.f32.mrb[0].mxu0
  %v6032 = vadd.f32 0.0, %v6031
  %v6033 = vpop.f32.mrb[0].mxu0
  %6034 = vmatprep.mubr.bf16.mxu0 0
  %6035 = vmatmul.mubr.bf16.gmra.mrb[0].mxu0 %v5932
  %v6036 = vpop.f32.mrb[0].mxu0
  %v6037 = vadd.f32 0.0, %v6036
  %v6038 = vpop.f32.mrb[0].mxu0
  %v6039 = vpop.f32.mrb[0].mxu0
  %v6040 = vadd.f32 0.0, %v6039
  %v6041 = vpop.f32.mrb[0].mxu0
  %6042 = vmatprep.mubr.bf16.mxu0 0
  %6043 = vmatmul.mubr.bf16.gmra.mrb[0].mxu0 %v5935
  %v6044 = vpop.f32.mrb[0].mxu0
  %v6045 = vadd.f32 0.0, %v6044
  %v6046 = vpop.f32.mrb[0].mxu0
  %v6047 = vpop.f32.mrb[0].mxu0
  %v6048 = vadd.f32 0.0, %v6047
  %v6049 = vpop.f32.mrb[0].mxu0
  %6050 = vmatprep.mubr.bf16.mxu0 0
  %6051 = vmatmul.mubr.bf16.gmra.mrb[0].mxu0 %v5938
  %v6052 = vpop.f32.mrb[0].mxu0
  %v6053 = vadd.f32 0.0, %v6052
  %v6054 = vpop.f32.mrb[0].mxu0
  %v6055 = vpop.f32.mrb[0].mxu0
  %v6056 = vadd.f32 0.0, %v6055
  %v6057 = vpop.f32.mrb[0].mxu0
  %6058 = vmatprep.mubr.bf16.mxu0 0
  %6059 = vmatmul.mubr.bf16.gmra.mrb[0].mxu0 %v5941
  %v6060 = vpop.f32.mrb[0].mxu0
  %v6061 = vadd.f32 0.0, %v6060
  %v6062 = vpop.f32.mrb[0].mxu0
  %v6063 = vpop.f32.mrb[0].mxu0
  %v6064 = vadd.f32 0.0, %v6063
  %v6065 = vpop.f32.mrb[0].mxu0
  %6066 = vmatprep.mubr.bf16.mxu0 0
  %6067 = vmatmul.mubr.bf16.gmra.mrb[0].mxu0 %v5944
  %v6068 = vpop.f32.mrb[0].mxu0
  %v6069 = vadd.f32 0.0, %v6068
  %v6070 = vpop.f32.mrb[0].mxu0
  %v6071 = vpop.f32.mrb[0].mxu0
  %v6072 = vadd.f32 0.0, %v6071
  %v6073 = vpop.f32.mrb[0].mxu0
  %6074 = vdwg.mxu0
  %v6075 = vadd.f32 %v5841, %v5981
  %v6076 = vadd.f32 %v5842, %v5984
  %v6077 = vadd.f32 %v5843, %v5989
  %v6078 = vadd.f32 %v5844, %v5992
  %v6079 = vadd.f32 %v5845, %v5997
  %v6080 = vadd.f32 %v5846, %v6000
  %v6081 = vadd.f32 %v5847, %v6005
  %v6082 = vadd.f32 %v5848, %v6008
  %v6083 = vadd.f32 %v5849, %v6013
  %v6084 = vadd.f32 %v5850, %v6016
  %v6085 = vadd.f32 %v5851, %v6021
  %v6086 = vadd.f32 %v5852, %v6024
  %v6087 = vadd.f32 %v5853, %v6029
  %v6088 = vadd.f32 %v5854, %v6032
  %v6089 = vadd.f32 %v5855, %v6037
  %v6090 = vadd.f32 %v5856, %v6040
  %v6091 = vadd.f32 %v5857, %v6045
  %v6092 = vadd.f32 %v5858, %v6048
  %v6093 = vadd.f32 %v5859, %v6053
  %v6094 = vadd.f32 %v5860, %v6056
  %v6095 = vadd.f32 %v5861, %v6061
  %v6096 = vadd.f32 %v5862, %v6064
  %v6097 = vadd.f32 %v5863, %v6069
  %v6098 = vadd.f32 %v5864, %v6072
  %vm6099 = vcmp.gt.f32.partialorder %v6075, 0.0
  %vm6100 = vcmp.gt.f32.partialorder %v6076, 0.0
  %vm6101 = vcmp.gt.f32.partialorder %v6077, 0.0
  %vm6102 = vcmp.gt.f32.partialorder %v6078, 0.0
  %vm6103 = vcmp.gt.f32.partialorder %v6079, 0.0
  %vm6104 = vcmp.gt.f32.partialorder %v6080, 0.0
  %vm6105 = vcmp.gt.f32.partialorder %v6081, 0.0
  %vm6106 = vcmp.gt.f32.partialorder %v6082, 0.0
  %vm6107 = vcmp.gt.f32.partialorder %v6083, 0.0
  %vm6108 = vcmp.gt.f32.partialorder %v6084, 0.0
  %vm6109 = vcmp.gt.f32.partialorder %v6085, 0.0
  %vm6110 = vcmp.gt.f32.partialorder %v6086, 0.0
  %vm6111 = vcmp.gt.f32.partialorder %v6087, 0.0
  %vm6112 = vcmp.gt.f32.partialorder %v6088, 0.0
  %vm6113 = vcmp.gt.f32.partialorder %v6089, 0.0
  %vm6114 = vcmp.gt.f32.partialorder %v6090, 0.0
  %vm6115 = vcmp.gt.f32.partialorder %v6091, 0.0
  %vm6116 = vcmp.gt.f32.partialorder %v6092, 0.0
  %vm6117 = vcmp.gt.f32.partialorder %v6093, 0.0
  %vm6118 = vcmp.gt.f32.partialorder %v6094, 0.0
  %vm6119 = vcmp.gt.f32.partialorder %v6095, 0.0
  %vm6120 = vcmp.gt.f32.partialorder %v6096, 0.0
  %vm6121 = vcmp.gt.f32.partialorder %v6097, 0.0
  %vm6122 = vcmp.gt.f32.partialorder %v6098, 0.0
  %v6123 = vmul.f32 %v6075, 0.01
  %v6124 = vmul.f32 %v6076, 0.01
  %v6125 = vmul.f32 %v6077, 0.01
  %v6126 = vmul.f32 %v6078, 0.01
  %v6127 = vmul.f32 %v6079, 0.01
  %v6128 = vmul.f32 %v6080, 0.01
  %v6129 = vmul.f32 %v6081, 0.01
  %v6130 = vmul.f32 %v6082, 0.01
  %v6131 = vmul.f32 %v6083, 0.01
  %v6132 = vmul.f32 %v6084, 0.01
  %v6133 = vmul.f32 %v6085, 0.01
  %v6134 = vmul.f32 %v6086, 0.01
  %v6135 = vmul.f32 %v6087, 0.01
  %v6136 = vmul.f32 %v6088, 0.01
  %v6137 = vmul.f32 %v6089, 0.01
  %v6138 = vmul.f32 %v6090, 0.01
  %v6139 = vmul.f32 %v6091, 0.01
  %v6140 = vmul.f32 %v6092, 0.01
  %v6141 = vmul.f32 %v6093, 0.01
  %v6142 = vmul.f32 %v6094, 0.01
  %v6143 = vmul.f32 %v6095, 0.01
  %v6144 = vmul.f32 %v6096, 0.01
  %v6145 = vmul.f32 %v6097, 0.01
  %v6146 = vmul.f32 %v6098, 0.01
  %v6147 = vsel %vm6099, %v6075, %v6123
  %v6148 = vsel %vm6100, %v6076, %v6124
  %v6149 = vsel %vm6101, %v6077, %v6125
  %v6150 = vsel %vm6102, %v6078, %v6126
  %v6151 = vsel %vm6103, %v6079, %v6127
  %v6152 = vsel %vm6104, %v6080, %v6128
  %v6153 = vsel %vm6105, %v6081, %v6129
  %v6154 = vsel %vm6106, %v6082, %v6130
  %v6155 = vsel %vm6107, %v6083, %v6131
  %v6156 = vsel %vm6108, %v6084, %v6132
  %v6157 = vsel %vm6109, %v6085, %v6133
  %v6158 = vsel %vm6110, %v6086, %v6134
  %v6159 = vsel %vm6111, %v6087, %v6135
  %v6160 = vsel %vm6112, %v6088, %v6136
  %v6161 = vsel %vm6113, %v6089, %v6137
  %v6162 = vsel %vm6114, %v6090, %v6138
  %v6163 = vsel %vm6115, %v6091, %v6139
  %v6164 = vsel %vm6116, %v6092, %v6140
  %v6165 = vsel %vm6117, %v6093, %v6141
  %v6166 = vsel %vm6118, %v6094, %v6142
  %v6167 = vsel %vm6119, %v6095, %v6143
  %v6168 = vsel %vm6120, %v6096, %v6144
  %v6169 = vsel %vm6121, %v6097, %v6145
  %v6170 = vsel %vm6122, %v6098, %v6146
  %v6171 = vadd.f32 %v6147, %v3639
  %v6172 = vadd.f32 %v6148, %v3640
  %v6173 = vadd.f32 %v6149, %v3641
  %v6174 = vadd.f32 %v6150, %v3642
  %v6175 = vadd.f32 %v6151, %v3643
  %v6176 = vadd.f32 %v6152, %v3644
  %v6177 = vadd.f32 %v6153, %v3645
  %v6178 = vadd.f32 %v6154, %v3646
  %v6179 = vadd.f32 %v6155, %v3647
  %v6180 = vadd.f32 %v6156, %v3648
  %v6181 = vadd.f32 %v6157, %v3649
  %v6182 = vadd.f32 %v6158, %v3650
  %v6183 = vadd.f32 %v6159, %v3651
  %v6184 = vadd.f32 %v6160, %v3652
  %v6185 = vadd.f32 %v6161, %v3653
  %v6186 = vadd.f32 %v6162, %v3654
  %v6187 = vadd.f32 %v6163, %v3655
  %v6188 = vadd.f32 %v6164, %v3656
  %v6189 = vadd.f32 %v6165, %v3657
  %v6190 = vadd.f32 %v6166, %v3658
  %v6191 = vadd.f32 %v6167, %v3659
  %v6192 = vadd.f32 %v6168, %v3660
  %v6193 = vadd.f32 %v6169, %v3661
  %v6194 = vadd.f32 %v6170, %v3662
  %v6195 = vld [vmem:[%s12] sm:$0xf]
  %v6196 = vld [vmem:[%s12 + $0x4] sm:$0xf]
  %v6197 = vld [vmem:[%s12 + $0x8] sm:$0xf]
  %v6198 = vld [vmem:[%s12 + $0xc] sm:$0xf]
  %v6199 = vld [vmem:[%s13] sm:$0x1]
  %v6200 = vpack.c.bf16 %v6172, %v6171
  %v6201 = vpack.c.bf16 %v6174, %v6173
  %v6202 = vpack.c.bf16 %v6176, %v6175
  %v6203 = vpack.c.bf16 %v6178, %v6177
  %v6204 = vpack.c.bf16 %v6180, %v6179
  %v6205 = vpack.c.bf16 %v6182, %v6181
  %v6206 = vpack.c.bf16 %v6184, %v6183
  %v6207 = vpack.c.bf16 %v6186, %v6185
  %v6208 = vpack.c.bf16 %v6188, %v6187
  %v6209 = vpack.c.bf16 %v6190, %v6189
  %v6210 = vpack.c.bf16 %v6192, %v6191
  %v6211 = vpack.c.bf16 %v6194, %v6193
  %v6213 = vlaneseq
  %v6214 = vshrl.u32 %v6213, 7
  %v6215 = vsub.s32 0, %v6214
  %v6216 = vrot.slane %v6199, %v6215
  %v6222 = vunpack.c.l.b16 %v6195
  %v6223 = vunpack.c.l.b16 %v6196
  %v6224 = vunpack.c.l.b16 %v6197
  %v6225 = vunpack.c.l.b16 %v6198
  %v6226 = vpack.c.b16 %v6223, %v6222
  %v6227 = vpack.c.b16 %v6225, %v6224
  %v6231 = vsel %vm1169, %v6200, 0
  %v6234 = vsel %vm1169, %v6201, 0
  %v6237 = vsel %vm1169, %v6202, 0
  %v6240 = vsel %vm1169, %v6203, 0
  %v6243 = vsel %vm1169, %v6204, 0
  %v6246 = vsel %vm1169, %v6205, 0
  %v6249 = vsel %vm1169, %v6206, 0
  %v6252 = vsel %vm1169, %v6207, 0
  %v6255 = vsel %vm1169, %v6208, 0
  %v6258 = vsel %vm1169, %v6209, 0
  %v6261 = vsel %vm1169, %v6210, 0
  %v6264 = vsel %vm1169, %v6211, 0
  %6266 = vmatprep.subr.bf16.mxu0 0
  %6267 = vmatpush1.bf16.msra.mxu0 %v6226
  %6268 = vmatprep.subr.bf16.mxu0 0
  %6269 = vmatpush1.bf16.msra.mxu0 %v6227
  %6270 = vmatprep.subr.bf16.mxu0 0
  %6271 = vmatpush1.bf16.msra.mxu0 0
  %6272 = vmatprep.subr.bf16.mxu0 0
  %6273 = vmatpush1.bf16.msra.mxu0 0
  %6274 = vmatprep.subr.bf16.mxu0 0
  %6275 = vmatpush1.bf16.msra.mxu0 0
  %6276 = vmatprep.subr.bf16.mxu0 0
  %6277 = vmatpush1.bf16.msra.mxu0 0
  %6278 = vmatprep.subr.bf16.mxu0 0
  %6279 = vmatpush1.bf16.msra.mxu0 0
  %6280 = vmatprep.subr.bf16.mxu0 0
  %6281 = vmatpush1.bf16.msra.mxu0 0
  %6282 = vmatprep.subr.bf16.mxu0 0
  %6283 = vmatpush1.bf16.msra.mxu0 0
  %6284 = vmatprep.subr.bf16.mxu0 0
  %6285 = vmatpush1.bf16.msra.mxu0 0
  %6286 = vmatprep.subr.bf16.mxu0 0
  %6287 = vmatpush1.bf16.msra.mxu0 0
  %6288 = vmatprep.subr.bf16.mxu0 0
  %6289 = vmatpush1.bf16.msra.mxu0 0
  %6290 = vmatprep.subr.bf16.mxu0 0
  %6291 = vmatpush1.bf16.msra.mxu0 0
  %6292 = vmatprep.subr.bf16.mxu0 0
  %6293 = vmatpush1.bf16.msra.mxu0 0
  %6294 = vmatprep.subr.bf16.mxu0 0
  %6295 = vmatpush1.bf16.msra.mxu0 0
  %6296 = vmatprep.subr.bf16.mxu0 0
  %6297 = vmatpush1.bf16.msra.mxu0 0
  %6298 = vmatprep.mubr.bf16.mxu0 0
  %6299 = vmatmul.mubr.bf16.gmra.mrb[0].mxu0 %v6231
  %v6300 = vpop.f32.mrb[0].mxu0
  %v6301 = vadd.f32 %v6216, %v6300
  %v6302 = vpop.f32.mrb[0].mxu0
  %v6303 = vpop.f32.mrb[0].mxu0
  %v6304 = vadd.f32 %v6216, %v6303
  %v6305 = vpop.f32.mrb[0].mxu0
  %6306 = vmatprep.mubr.bf16.mxu0 0
  %6307 = vmatmul.mubr.bf16.gmra.mrb[0].mxu0 %v6234
  %v6308 = vpop.f32.mrb[0].mxu0
  %v6309 = vadd.f32 %v6216, %v6308
  %v6310 = vpop.f32.mrb[0].mxu0
  %v6311 = vpop.f32.mrb[0].mxu0
  %v6312 = vadd.f32 %v6216, %v6311
  %v6313 = vpop.f32.mrb[0].mxu0
  %6314 = vmatprep.mubr.bf16.mxu0 0
  %6315 = vmatmul.mubr.bf16.gmra.mrb[0].mxu0 %v6237
  %v6316 = vpop.f32.mrb[0].mxu0
  %v6317 = vadd.f32 %v6216, %v6316
  %v6318 = vpop.f32.mrb[0].mxu0
  %v6319 = vpop.f32.mrb[0].mxu0
  %v6320 = vadd.f32 %v6216, %v6319
  %v6321 = vpop.f32.mrb[0].mxu0
  %6322 = vmatprep.mubr.bf16.mxu0 0
  %6323 = vmatmul.mubr.bf16.gmra.mrb[0].mxu0 %v6240
  %v6324 = vpop.f32.mrb[0].mxu0
  %v6325 = vadd.f32 %v6216, %v6324
  %v6326 = vpop.f32.mrb[0].mxu0
  %v6327 = vpop.f32.mrb[0].mxu0
  %v6328 = vadd.f32 %v6216, %v6327
  %v6329 = vpop.f32.mrb[0].mxu0
  %6330 = vmatprep.mubr.bf16.mxu0 0
  %6331 = vmatmul.mubr.bf16.gmra.mrb[0].mxu0 %v6243
  %v6332 = vpop.f32.mrb[0].mxu0
  %v6333 = vadd.f32 %v6216, %v6332
  %v6334 = vpop.f32.mrb[0].mxu0
  %v6335 = vpop.f32.mrb[0].mxu0
  %v6336 = vadd.f32 %v6216, %v6335
  %v6337 = vpop.f32.mrb[0].mxu0
  %6338 = vmatprep.mubr.bf16.mxu0 0
  %6339 = vmatmul.mubr.bf16.gmra.mrb[0].mxu0 %v6246
  %v6340 = vpop.f32.mrb[0].mxu0
  %v6341 = vadd.f32 %v6216, %v6340
  %v6342 = vpop.f32.mrb[0].mxu0
  %v6343 = vpop.f32.mrb[0].mxu0
  %v6344 = vadd.f32 %v6216, %v6343
  %v6345 = vpop.f32.mrb[0].mxu0
  %6346 = vmatprep.mubr.bf16.mxu0 0
  %6347 = vmatmul.mubr.bf16.gmra.mrb[0].mxu0 %v6249
  %v6348 = vpop.f32.mrb[0].mxu0
  %v6349 = vadd.f32 %v6216, %v6348
  %v6350 = vpop.f32.mrb[0].mxu0
  %v6351 = vpop.f32.mrb[0].mxu0
  %v6352 = vadd.f32 %v6216, %v6351
  %v6353 = vpop.f32.mrb[0].mxu0
  %6354 = vmatprep.mubr.bf16.mxu0 0
  %6355 = vmatmul.mubr.bf16.gmra.mrb[0].mxu0 %v6252
  %v6356 = vpop.f32.mrb[0].mxu0
  %v6357 = vadd.f32 %v6216, %v6356
  %v6358 = vpop.f32.mrb[0].mxu0
  %v6359 = vpop.f32.mrb[0].mxu0
  %v6360 = vadd.f32 %v6216, %v6359
  %v6361 = vpop.f32.mrb[0].mxu0
  %6362 = vmatprep.mubr.bf16.mxu0 0
  %6363 = vmatmul.mubr.bf16.gmra.mrb[0].mxu0 %v6255
  %v6364 = vpop.f32.mrb[0].mxu0
  %v6365 = vadd.f32 %v6216, %v6364
  %v6366 = vpop.f32.mrb[0].mxu0
  %v6367 = vpop.f32.mrb[0].mxu0
  %v6368 = vadd.f32 %v6216, %v6367
  %v6369 = vpop.f32.mrb[0].mxu0
  %6370 = vmatprep.mubr.bf16.mxu0 0
  %6371 = vmatmul.mubr.bf16.gmra.mrb[0].mxu0 %v6258
  %v6372 = vpop.f32.mrb[0].mxu0
  %v6373 = vadd.f32 %v6216, %v6372
  %v6374 = vpop.f32.mrb[0].mxu0
  %v6375 = vpop.f32.mrb[0].mxu0
  %v6376 = vadd.f32 %v6216, %v6375
  %v6377 = vpop.f32.mrb[0].mxu0
  %6378 = vmatprep.mubr.bf16.mxu0 0
  %6379 = vmatmul.mubr.bf16.gmra.mrb[0].mxu0 %v6261
  %v6380 = vpop.f32.mrb[0].mxu0
  %v6381 = vadd.f32 %v6216, %v6380
  %v6382 = vpop.f32.mrb[0].mxu0
  %v6383 = vpop.f32.mrb[0].mxu0
  %v6384 = vadd.f32 %v6216, %v6383
  %v6385 = vpop.f32.mrb[0].mxu0
  %6386 = vmatprep.mubr.bf16.mxu0 0
  %6387 = vmatmul.mubr.bf16.gmra.mrb[0].mxu0 %v6264
  %v6388 = vpop.f32.mrb[0].mxu0
  %v6389 = vadd.f32 %v6216, %v6388
  %v6390 = vpop.f32.mrb[0].mxu0
  %v6391 = vpop.f32.mrb[0].mxu0
  %v6392 = vadd.f32 %v6216, %v6391
  %v6393 = vpop.f32.mrb[0].mxu0
  %6394 = vdwg.mxu0
  %vm6395 = vcmp.gt.f32.partialorder %v6301, 0.0
  %vm6396 = vcmp.gt.f32.partialorder %v6304, 0.0
  %vm6397 = vcmp.gt.f32.partialorder %v6309, 0.0
  %vm6398 = vcmp.gt.f32.partialorder %v6312, 0.0
  %vm6399 = vcmp.gt.f32.partialorder %v6317, 0.0
  %vm6400 = vcmp.gt.f32.partialorder %v6320, 0.0
  %vm6401 = vcmp.gt.f32.partialorder %v6325, 0.0
  %vm6402 = vcmp.gt.f32.partialorder %v6328, 0.0
  %vm6403 = vcmp.gt.f32.partialorder %v6333, 0.0
  %vm6404 = vcmp.gt.f32.partialorder %v6336, 0.0
  %vm6405 = vcmp.gt.f32.partialorder %v6341, 0.0
  %vm6406 = vcmp.gt.f32.partialorder %v6344, 0.0
  %vm6407 = vcmp.gt.f32.partialorder %v6349, 0.0
  %vm6408 = vcmp.gt.f32.partialorder %v6352, 0.0
  %vm6409 = vcmp.gt.f32.partialorder %v6357, 0.0
  %vm6410 = vcmp.gt.f32.partialorder %v6360, 0.0
  %vm6411 = vcmp.gt.f32.partialorder %v6365, 0.0
  %vm6412 = vcmp.gt.f32.partialorder %v6368, 0.0
  %vm6413 = vcmp.gt.f32.partialorder %v6373, 0.0
  %vm6414 = vcmp.gt.f32.partialorder %v6376, 0.0
  %vm6415 = vcmp.gt.f32.partialorder %v6381, 0.0
  %vm6416 = vcmp.gt.f32.partialorder %v6384, 0.0
  %vm6417 = vcmp.gt.f32.partialorder %v6389, 0.0
  %vm6418 = vcmp.gt.f32.partialorder %v6392, 0.0
  %v6419 = vmul.f32 %v6301, 0.01
  %v6420 = vmul.f32 %v6304, 0.01
  %v6421 = vmul.f32 %v6309, 0.01
  %v6422 = vmul.f32 %v6312, 0.01
  %v6423 = vmul.f32 %v6317, 0.01
  %v6424 = vmul.f32 %v6320, 0.01
  %v6425 = vmul.f32 %v6325, 0.01
  %v6426 = vmul.f32 %v6328, 0.01
  %v6427 = vmul.f32 %v6333, 0.01
  %v6428 = vmul.f32 %v6336, 0.01
  %v6429 = vmul.f32 %v6341, 0.01
  %v6430 = vmul.f32 %v6344, 0.01
  %v6431 = vmul.f32 %v6349, 0.01
  %v6432 = vmul.f32 %v6352, 0.01
  %v6433 = vmul.f32 %v6357, 0.01
  %v6434 = vmul.f32 %v6360, 0.01
  %v6435 = vmul.f32 %v6365, 0.01
  %v6436 = vmul.f32 %v6368, 0.01
  %v6437 = vmul.f32 %v6373, 0.01
  %v6438 = vmul.f32 %v6376, 0.01
  %v6439 = vmul.f32 %v6381, 0.01
  %v6440 = vmul.f32 %v6384, 0.01
  %v6441 = vmul.f32 %v6389, 0.01
  %v6442 = vmul.f32 %v6392, 0.01
  %v6443 = vsel %vm6395, %v6301, %v6419
  %v6444 = vsel %vm6396, %v6304, %v6420
  %v6445 = vsel %vm6397, %v6309, %v6421
  %v6446 = vsel %vm6398, %v6312, %v6422
  %v6447 = vsel %vm6399, %v6317, %v6423
  %v6448 = vsel %vm6400, %v6320, %v6424
  %v6449 = vsel %vm6401, %v6325, %v6425
  %v6450 = vsel %vm6402, %v6328, %v6426
  %v6451 = vsel %vm6403, %v6333, %v6427
  %v6452 = vsel %vm6404, %v6336, %v6428
  %v6453 = vsel %vm6405, %v6341, %v6429
  %v6454 = vsel %vm6406, %v6344, %v6430
  %v6455 = vsel %vm6407, %v6349, %v6431
  %v6456 = vsel %vm6408, %v6352, %v6432
  %v6457 = vsel %vm6409, %v6357, %v6433
  %v6458 = vsel %vm6410, %v6360, %v6434
  %v6459 = vsel %vm6411, %v6365, %v6435
  %v6460 = vsel %vm6412, %v6368, %v6436
  %v6461 = vsel %vm6413, %v6373, %v6437
  %v6462 = vsel %vm6414, %v6376, %v6438
  %v6463 = vsel %vm6415, %v6381, %v6439
  %v6464 = vsel %vm6416, %v6384, %v6440
  %v6465 = vsel %vm6417, %v6389, %v6441
  %v6466 = vsel %vm6418, %v6392, %v6442
  %v6467 = vld [vmem:[%s14] sm:$0xff]
  %v6468 = vld [vmem:[%s14 + $0x8] sm:$0xff]
  %v6469 = vld [vmem:[%s14 + $0x10] sm:$0xff]
  %v6470 = vld [vmem:[%s14 + $0x18] sm:$0xff]
  %v6471 = vld [vmem:[%s15] sm:$0xff]
  %v6472 = vld [vmem:[%s15 + $0x8] sm:$0xff]
  %v6473 = vld [vmem:[%s15 + $0x10] sm:$0xff]
  %v6474 = vld [vmem:[%s15 + $0x18] sm:$0xff]
  %v6476 = vsel %vm1169, %v6443, 0
  %v6479 = vsel %vm1169, %v6444, 0
  %v6482 = vsel %vm1169, %v6445, 0
  %v6485 = vsel %vm1169, %v6446, 0
  %v6488 = vsel %vm1169, %v6447, 0
  %v6491 = vsel %vm1169, %v6448, 0
  %v6494 = vsel %vm1169, %v6449, 0
  %v6497 = vsel %vm1169, %v6450, 0
  %v6500 = vsel %vm1169, %v6451, 0
  %v6503 = vsel %vm1169, %v6452, 0
  %v6506 = vsel %vm1169, %v6453, 0
  %v6509 = vsel %vm1169, %v6454, 0
  %v6512 = vsel %vm1169, %v6455, 0
  %v6515 = vsel %vm1169, %v6456, 0
  %v6518 = vsel %vm1169, %v6457, 0
  %v6521 = vsel %vm1169, %v6458, 0
  %v6524 = vsel %vm1169, %v6459, 0
  %v6527 = vsel %vm1169, %v6460, 0
  %v6530 = vsel %vm1169, %v6461, 0
  %v6533 = vsel %vm1169, %v6462, 0
  %v6536 = vsel %vm1169, %v6463, 0
  %v6539 = vsel %vm1169, %v6464, 0
  %v6542 = vsel %vm1169, %v6465, 0
  %v6545 = vsel %vm1169, %v6466, 0
  %6547 = vmatprep.subr.mxu0 0.0
  %6548 = vmatpush1.msra.mxu0 %v6471
  %6549 = vmatprep.subr.mxu0 0.0
  %6550 = vmatpush1.msra.mxu0 %v6472
  %6551 = vmatprep.subr.mxu0 0.0
  %6552 = vmatpush1.msra.mxu0 %v6473
  %6553 = vmatprep.subr.mxu0 0.0
  %6554 = vmatpush1.msra.mxu0 %v6474
  %6555 = vmatprep.subr.mxu0 0.0
  %6556 = vmatpush1.msra.mxu0 0.0
  %6557 = vmatprep.subr.mxu0 0.0
  %6558 = vmatpush1.msra.mxu0 0.0
  %6559 = vmatprep.subr.mxu0 0.0
  %6560 = vmatpush1.msra.mxu0 0.0
  %6561 = vmatprep.subr.mxu0 0.0
  %6562 = vmatpush1.msra.mxu0 0.0
  %6563 = vmatprep.subr.mxu0 0.0
  %6564 = vmatpush1.msra.mxu0 0.0
  %6565 = vmatprep.subr.mxu0 0.0
  %6566 = vmatpush1.msra.mxu0 0.0
  %6567 = vmatprep.subr.mxu0 0.0
  %6568 = vmatpush1.msra.mxu0 0.0
  %6569 = vmatprep.subr.mxu0 0.0
  %6570 = vmatpush1.msra.mxu0 0.0
  %6571 = vmatprep.subr.mxu0 0.0
  %6572 = vmatpush1.msra.mxu0 0.0
  %6573 = vmatprep.subr.mxu0 0.0
  %6574 = vmatpush1.msra.mxu0 0.0
  %6575 = vmatprep.subr.mxu0 0.0
  %6576 = vmatpush1.msra.mxu0 0.0
  %6577 = vmatprep.subr.mxu0 0.0
  %6578 = vmatpush1.msra.mxu0 0.0
  %6579 = vmatprep.subr.mxu0 0.0
  %6580 = vmatpush1.msra.mxu0 0.0
  %6581 = vmatprep.subr.mxu0 0.0
  %6582 = vmatpush1.msra.mxu0 0.0
  %6583 = vmatprep.subr.mxu0 0.0
  %6584 = vmatpush1.msra.mxu0 0.0
  %6585 = vmatprep.subr.mxu0 0.0
  %6586 = vmatpush1.msra.mxu0 0.0
  %6587 = vmatprep.subr.mxu0 0.0
  %6588 = vmatpush1.msra.mxu0 0.0
  %6589 = vmatprep.subr.mxu0 0.0
  %6590 = vmatpush1.msra.mxu0 0.0
  %6591 = vmatprep.subr.mxu0 0.0
  %6592 = vmatpush1.msra.mxu0 0.0
  %6593 = vmatprep.subr.mxu0 0.0
  %6594 = vmatpush1.msra.mxu0 0.0
  %6595 = vmatprep.subr.mxu0 0.0
  %6596 = vmatpush1.msra.mxu0 0.0
  %6597 = vmatprep.subr.mxu0 0.0
  %6598 = vmatpush1.msra.mxu0 0.0
  %6599 = vmatprep.subr.mxu0 0.0
  %6600 = vmatpush1.msra.mxu0 0.0
  %6601 = vmatprep.subr.mxu0 0.0
  %6602 = vmatpush1.msra.mxu0 0.0
  %6603 = vmatprep.subr.mxu0 0.0
  %6604 = vmatpush1.msra.mxu0 0.0
  %6605 = vmatprep.subr.mxu0 0.0
  %6606 = vmatpush1.msra.mxu0 0.0
  %6607 = vmatprep.subr.mxu0 0.0
  %6608 = vmatpush1.msra.mxu0 0.0
  %6609 = vmatprep.subr.mxu0 0.0
  %6610 = vmatpush1.msra.mxu0 0.0
  %6611 = vmatprep.mubr.f32.mxu0 0.0
  %6612 = vmatmul.mubr.f32.gmra.mrb[0].mxu0 %v6476
  %v6613 = vpop.f32.mrb[0].mxu0
  %v6614 = vadd.f32 0.0, %v6613
  %v6615 = vpop.f32.mrb[0].mxu0
  %6616 = vmatprep.mubr.f32.mxu0 0.0
  %6617 = vmatmul.mubr.f32.gmra.mrb[0].mxu0 %v6479
  %v6618 = vpop.f32.mrb[0].mxu0
  %v6619 = vadd.f32 0.0, %v6618
  %v6620 = vpop.f32.mrb[0].mxu0
  %6621 = vmatprep.mubr.f32.mxu0 0.0
  %6622 = vmatmul.mubr.f32.gmra.mrb[0].mxu0 %v6482
  %v6623 = vpop.f32.mrb[0].mxu0
  %v6624 = vadd.f32 0.0, %v6623
  %v6625 = vpop.f32.mrb[0].mxu0
  %6626 = vmatprep.mubr.f32.mxu0 0.0
  %6627 = vmatmul.mubr.f32.gmra.mrb[0].mxu0 %v6485
  %v6628 = vpop.f32.mrb[0].mxu0
  %v6629 = vadd.f32 0.0, %v6628
  %v6630 = vpop.f32.mrb[0].mxu0
  %6631 = vmatprep.mubr.f32.mxu0 0.0
  %6632 = vmatmul.mubr.f32.gmra.mrb[0].mxu0 %v6488
  %v6633 = vpop.f32.mrb[0].mxu0
  %v6634 = vadd.f32 0.0, %v6633
  %v6635 = vpop.f32.mrb[0].mxu0
  %6636 = vmatprep.mubr.f32.mxu0 0.0
  %6637 = vmatmul.mubr.f32.gmra.mrb[0].mxu0 %v6491
  %v6638 = vpop.f32.mrb[0].mxu0
  %v6639 = vadd.f32 0.0, %v6638
  %v6640 = vpop.f32.mrb[0].mxu0
  %6641 = vmatprep.mubr.f32.mxu0 0.0
  %6642 = vmatmul.mubr.f32.gmra.mrb[0].mxu0 %v6494
  %v6643 = vpop.f32.mrb[0].mxu0
  %v6644 = vadd.f32 0.0, %v6643
  %v6645 = vpop.f32.mrb[0].mxu0
  %6646 = vmatprep.mubr.f32.mxu0 0.0
  %6647 = vmatmul.mubr.f32.gmra.mrb[0].mxu0 %v6497
  %v6648 = vpop.f32.mrb[0].mxu0
  %v6649 = vadd.f32 0.0, %v6648
  %v6650 = vpop.f32.mrb[0].mxu0
  %6651 = vmatprep.mubr.f32.mxu0 0.0
  %6652 = vmatmul.mubr.f32.gmra.mrb[0].mxu0 %v6500
  %v6653 = vpop.f32.mrb[0].mxu0
  %v6654 = vadd.f32 0.0, %v6653
  %v6655 = vpop.f32.mrb[0].mxu0
  %6656 = vmatprep.mubr.f32.mxu0 0.0
  %6657 = vmatmul.mubr.f32.gmra.mrb[0].mxu0 %v6503
  %v6658 = vpop.f32.mrb[0].mxu0
  %v6659 = vadd.f32 0.0, %v6658
  %v6660 = vpop.f32.mrb[0].mxu0
  %6661 = vmatprep.mubr.f32.mxu0 0.0
  %6662 = vmatmul.mubr.f32.gmra.mrb[0].mxu0 %v6506
  %v6663 = vpop.f32.mrb[0].mxu0
  %v6664 = vadd.f32 0.0, %v6663
  %v6665 = vpop.f32.mrb[0].mxu0
  %6666 = vmatprep.mubr.f32.mxu0 0.0
  %6667 = vmatmul.mubr.f32.gmra.mrb[0].mxu0 %v6509
  %v6668 = vpop.f32.mrb[0].mxu0
  %v6669 = vadd.f32 0.0, %v6668
  %v6670 = vpop.f32.mrb[0].mxu0
  %6671 = vmatprep.mubr.f32.mxu0 0.0
  %6672 = vmatmul.mubr.f32.gmra.mrb[0].mxu0 %v6512
  %v6673 = vpop.f32.mrb[0].mxu0
  %v6674 = vadd.f32 0.0, %v6673
  %v6675 = vpop.f32.mrb[0].mxu0
  %6676 = vmatprep.mubr.f32.mxu0 0.0
  %6677 = vmatmul.mubr.f32.gmra.mrb[0].mxu0 %v6515
  %v6678 = vpop.f32.mrb[0].mxu0
  %v6679 = vadd.f32 0.0, %v6678
  %v6680 = vpop.f32.mrb[0].mxu0
  %6681 = vmatprep.mubr.f32.mxu0 0.0
  %6682 = vmatmul.mubr.f32.gmra.mrb[0].mxu0 %v6518
  %v6683 = vpop.f32.mrb[0].mxu0
  %v6684 = vadd.f32 0.0, %v6683
  %v6685 = vpop.f32.mrb[0].mxu0
  %6686 = vmatprep.mubr.f32.mxu0 0.0
  %6687 = vmatmul.mubr.f32.gmra.mrb[0].mxu0 %v6521
  %v6688 = vpop.f32.mrb[0].mxu0
  %v6689 = vadd.f32 0.0, %v6688
  %v6690 = vpop.f32.mrb[0].mxu0
  %6691 = vmatprep.mubr.f32.mxu0 0.0
  %6692 = vmatmul.mubr.f32.gmra.mrb[0].mxu0 %v6524
  %v6693 = vpop.f32.mrb[0].mxu0
  %v6694 = vadd.f32 0.0, %v6693
  %v6695 = vpop.f32.mrb[0].mxu0
  %6696 = vmatprep.mubr.f32.mxu0 0.0
  %6697 = vmatmul.mubr.f32.gmra.mrb[0].mxu0 %v6527
  %v6698 = vpop.f32.mrb[0].mxu0
  %v6699 = vadd.f32 0.0, %v6698
  %v6700 = vpop.f32.mrb[0].mxu0
  %6701 = vmatprep.mubr.f32.mxu0 0.0
  %6702 = vmatmul.mubr.f32.gmra.mrb[0].mxu0 %v6530
  %v6703 = vpop.f32.mrb[0].mxu0
  %v6704 = vadd.f32 0.0, %v6703
  %v6705 = vpop.f32.mrb[0].mxu0
  %6706 = vmatprep.mubr.f32.mxu0 0.0
  %6707 = vmatmul.mubr.f32.gmra.mrb[0].mxu0 %v6533
  %v6708 = vpop.f32.mrb[0].mxu0
  %v6709 = vadd.f32 0.0, %v6708
  %v6710 = vpop.f32.mrb[0].mxu0
  %6711 = vmatprep.mubr.f32.mxu0 0.0
  %6712 = vmatmul.mubr.f32.gmra.mrb[0].mxu0 %v6536
  %v6713 = vpop.f32.mrb[0].mxu0
  %v6714 = vadd.f32 0.0, %v6713
  %v6715 = vpop.f32.mrb[0].mxu0
  %6716 = vmatprep.mubr.f32.mxu0 0.0
  %6717 = vmatmul.mubr.f32.gmra.mrb[0].mxu0 %v6539
  %v6718 = vpop.f32.mrb[0].mxu0
  %v6719 = vadd.f32 0.0, %v6718
  %v6720 = vpop.f32.mrb[0].mxu0
  %6721 = vmatprep.mubr.f32.mxu0 0.0
  %6722 = vmatmul.mubr.f32.gmra.mrb[0].mxu0 %v6542
  %v6723 = vpop.f32.mrb[0].mxu0
  %v6724 = vadd.f32 0.0, %v6723
  %v6725 = vpop.f32.mrb[0].mxu0
  %6726 = vmatprep.mubr.f32.mxu0 0.0
  %6727 = vmatmul.mubr.f32.gmra.mrb[0].mxu0 %v6545
  %v6728 = vpop.f32.mrb[0].mxu0
  %v6729 = vadd.f32 0.0, %v6728
  %v6730 = vpop.f32.mrb[0].mxu0
  %6731 = vdwg.mxu0
  %v6733 = vsel %vm1169, %v894, 0
  %v6736 = vsel %vm1169, %v895, 0
  %v6739 = vsel %vm1169, %v896, 0
  %v6742 = vsel %vm1169, %v897, 0
  %v6745 = vsel %vm1169, %v898, 0
  %v6748 = vsel %vm1169, %v899, 0
  %v6751 = vsel %vm1169, %v900, 0
  %v6754 = vsel %vm1169, %v901, 0
  %v6757 = vsel %vm1169, %v902, 0
  %v6760 = vsel %vm1169, %v903, 0
  %v6763 = vsel %vm1169, %v904, 0
  %v6766 = vsel %vm1169, %v905, 0
  %v6769 = vsel %vm1169, %v906, 0
  %v6772 = vsel %vm1169, %v907, 0
  %v6775 = vsel %vm1169, %v908, 0
  %v6778 = vsel %vm1169, %v909, 0
  %v6781 = vsel %vm1169, %v910, 0
  %v6784 = vsel %vm1169, %v911, 0
  %v6787 = vsel %vm1169, %v912, 0
  %v6790 = vsel %vm1169, %v913, 0
  %v6793 = vsel %vm1169, %v914, 0
  %v6796 = vsel %vm1169, %v915, 0
  %v6799 = vsel %vm1169, %v916, 0
  %v6802 = vsel %vm1169, %v917, 0
  %6804 = vmatprep.subr.mxu0 0.0
  %6805 = vmatpush1.msra.mxu0 %v6467
  %6806 = vmatprep.subr.mxu0 0.0
  %6807 = vmatpush1.msra.mxu0 %v6468
  %6808 = vmatprep.subr.mxu0 0.0
  %6809 = vmatpush1.msra.mxu0 %v6469
  %6810 = vmatprep.subr.mxu0 0.0
  %6811 = vmatpush1.msra.mxu0 %v6470
  %6812 = vmatprep.subr.mxu0 0.0
  %6813 = vmatpush1.msra.mxu0 0.0
  %6814 = vmatprep.subr.mxu0 0.0
  %6815 = vmatpush1.msra.mxu0 0.0
  %6816 = vmatprep.subr.mxu0 0.0
  %6817 = vmatpush1.msra.mxu0 0.0
  %6818 = vmatprep.subr.mxu0 0.0
  %6819 = vmatpush1.msra.mxu0 0.0
  %6820 = vmatprep.subr.mxu0 0.0
  %6821 = vmatpush1.msra.mxu0 0.0
  %6822 = vmatprep.subr.mxu0 0.0
  %6823 = vmatpush1.msra.mxu0 0.0
  %6824 = vmatprep.subr.mxu0 0.0
  %6825 = vmatpush1.msra.mxu0 0.0
  %6826 = vmatprep.subr.mxu0 0.0
  %6827 = vmatpush1.msra.mxu0 0.0
  %6828 = vmatprep.subr.mxu0 0.0
  %6829 = vmatpush1.msra.mxu0 0.0
  %6830 = vmatprep.subr.mxu0 0.0
  %6831 = vmatpush1.msra.mxu0 0.0
  %6832 = vmatprep.subr.mxu0 0.0
  %6833 = vmatpush1.msra.mxu0 0.0
  %6834 = vmatprep.subr.mxu0 0.0
  %6835 = vmatpush1.msra.mxu0 0.0
  %6836 = vmatprep.subr.mxu0 0.0
  %6837 = vmatpush1.msra.mxu0 0.0
  %6838 = vmatprep.subr.mxu0 0.0
  %6839 = vmatpush1.msra.mxu0 0.0
  %6840 = vmatprep.subr.mxu0 0.0
  %6841 = vmatpush1.msra.mxu0 0.0
  %6842 = vmatprep.subr.mxu0 0.0
  %6843 = vmatpush1.msra.mxu0 0.0
  %6844 = vmatprep.subr.mxu0 0.0
  %6845 = vmatpush1.msra.mxu0 0.0
  %6846 = vmatprep.subr.mxu0 0.0
  %6847 = vmatpush1.msra.mxu0 0.0
  %6848 = vmatprep.subr.mxu0 0.0
  %6849 = vmatpush1.msra.mxu0 0.0
  %6850 = vmatprep.subr.mxu0 0.0
  %6851 = vmatpush1.msra.mxu0 0.0
  %6852 = vmatprep.subr.mxu0 0.0
  %6853 = vmatpush1.msra.mxu0 0.0
  %6854 = vmatprep.subr.mxu0 0.0
  %6855 = vmatpush1.msra.mxu0 0.0
  %6856 = vmatprep.subr.mxu0 0.0
  %6857 = vmatpush1.msra.mxu0 0.0
  %6858 = vmatprep.subr.mxu0 0.0
  %6859 = vmatpush1.msra.mxu0 0.0
  %6860 = vmatprep.subr.mxu0 0.0
  %6861 = vmatpush1.msra.mxu0 0.0
  %6862 = vmatprep.subr.mxu0 0.0
  %6863 = vmatpush1.msra.mxu0 0.0
  %6864 = vmatprep.subr.mxu0 0.0
  %6865 = vmatpush1.msra.mxu0 0.0
  %6866 = vmatprep.subr.mxu0 0.0
  %6867 = vmatpush1.msra.mxu0 0.0
  %6868 = vmatprep.mubr.f32.mxu0 0.0
  %6869 = vmatmul.mubr.f32.gmra.mrb[0].mxu0 %v6733
  %v6870 = vpop.f32.mrb[0].mxu0
  %v6871 = vadd.f32 %v6614, %v6870
  %v6872 = vpop.f32.mrb[0].mxu0
  %6873 = vmatprep.mubr.f32.mxu0 0.0
  %6874 = vmatmul.mubr.f32.gmra.mrb[0].mxu0 %v6736
  %v6875 = vpop.f32.mrb[0].mxu0
  %v6876 = vadd.f32 %v6619, %v6875
  %v6877 = vpop.f32.mrb[0].mxu0
  %6878 = vmatprep.mubr.f32.mxu0 0.0
  %6879 = vmatmul.mubr.f32.gmra.mrb[0].mxu0 %v6739
  %v6880 = vpop.f32.mrb[0].mxu0
  %v6881 = vadd.f32 %v6624, %v6880
  %v6882 = vpop.f32.mrb[0].mxu0
  %6883 = vmatprep.mubr.f32.mxu0 0.0
  %6884 = vmatmul.mubr.f32.gmra.mrb[0].mxu0 %v6742
  %v6885 = vpop.f32.mrb[0].mxu0
  %v6886 = vadd.f32 %v6629, %v6885
  %v6887 = vpop.f32.mrb[0].mxu0
  %6888 = vmatprep.mubr.f32.mxu0 0.0
  %6889 = vmatmul.mubr.f32.gmra.mrb[0].mxu0 %v6745
  %v6890 = vpop.f32.mrb[0].mxu0
  %v6891 = vadd.f32 %v6634, %v6890
  %v6892 = vpop.f32.mrb[0].mxu0
  %6893 = vmatprep.mubr.f32.mxu0 0.0
  %6894 = vmatmul.mubr.f32.gmra.mrb[0].mxu0 %v6748
  %v6895 = vpop.f32.mrb[0].mxu0
  %v6896 = vadd.f32 %v6639, %v6895
  %v6897 = vpop.f32.mrb[0].mxu0
  %6898 = vmatprep.mubr.f32.mxu0 0.0
  %6899 = vmatmul.mubr.f32.gmra.mrb[0].mxu0 %v6751
  %v6900 = vpop.f32.mrb[0].mxu0
  %v6901 = vadd.f32 %v6644, %v6900
  %v6902 = vpop.f32.mrb[0].mxu0
  %6903 = vmatprep.mubr.f32.mxu0 0.0
  %6904 = vmatmul.mubr.f32.gmra.mrb[0].mxu0 %v6754
  %v6905 = vpop.f32.mrb[0].mxu0
  %v6906 = vadd.f32 %v6649, %v6905
  %v6907 = vpop.f32.mrb[0].mxu0
  %6908 = vmatprep.mubr.f32.mxu0 0.0
  %6909 = vmatmul.mubr.f32.gmra.mrb[0].mxu0 %v6757
  %v6910 = vpop.f32.mrb[0].mxu0
  %v6911 = vadd.f32 %v6654, %v6910
  %v6912 = vpop.f32.mrb[0].mxu0
  %6913 = vmatprep.mubr.f32.mxu0 0.0
  %6914 = vmatmul.mubr.f32.gmra.mrb[0].mxu0 %v6760
  %v6915 = vpop.f32.mrb[0].mxu0
  %v6916 = vadd.f32 %v6659, %v6915
  %v6917 = vpop.f32.mrb[0].mxu0
  %6918 = vmatprep.mubr.f32.mxu0 0.0
  %6919 = vmatmul.mubr.f32.gmra.mrb[0].mxu0 %v6763
  %v6920 = vpop.f32.mrb[0].mxu0
  %v6921 = vadd.f32 %v6664, %v6920
  %v6922 = vpop.f32.mrb[0].mxu0
  %6923 = vmatprep.mubr.f32.mxu0 0.0
  %6924 = vmatmul.mubr.f32.gmra.mrb[0].mxu0 %v6766
  %v6925 = vpop.f32.mrb[0].mxu0
  %v6926 = vadd.f32 %v6669, %v6925
  %v6927 = vpop.f32.mrb[0].mxu0
  %6928 = vmatprep.mubr.f32.mxu0 0.0
  %6929 = vmatmul.mubr.f32.gmra.mrb[0].mxu0 %v6769
  %v6930 = vpop.f32.mrb[0].mxu0
  %v6931 = vadd.f32 %v6674, %v6930
  %v6932 = vpop.f32.mrb[0].mxu0
  %6933 = vmatprep.mubr.f32.mxu0 0.0
  %6934 = vmatmul.mubr.f32.gmra.mrb[0].mxu0 %v6772
  %v6935 = vpop.f32.mrb[0].mxu0
  %v6936 = vadd.f32 %v6679, %v6935
  %v6937 = vpop.f32.mrb[0].mxu0
  %6938 = vmatprep.mubr.f32.mxu0 0.0
  %6939 = vmatmul.mubr.f32.gmra.mrb[0].mxu0 %v6775
  %v6940 = vpop.f32.mrb[0].mxu0
  %v6941 = vadd.f32 %v6684, %v6940
  %v6942 = vpop.f32.mrb[0].mxu0
  %6943 = vmatprep.mubr.f32.mxu0 0.0
  %6944 = vmatmul.mubr.f32.gmra.mrb[0].mxu0 %v6778
  %v6945 = vpop.f32.mrb[0].mxu0
  %v6946 = vadd.f32 %v6689, %v6945
  %v6947 = vpop.f32.mrb[0].mxu0
  %6948 = vmatprep.mubr.f32.mxu0 0.0
  %6949 = vmatmul.mubr.f32.gmra.mrb[0].mxu0 %v6781
  %v6950 = vpop.f32.mrb[0].mxu0
  %v6951 = vadd.f32 %v6694, %v6950
  %v6952 = vpop.f32.mrb[0].mxu0
  %6953 = vmatprep.mubr.f32.mxu0 0.0
  %6954 = vmatmul.mubr.f32.gmra.mrb[0].mxu0 %v6784
  %v6955 = vpop.f32.mrb[0].mxu0
  %v6956 = vadd.f32 %v6699, %v6955
  %v6957 = vpop.f32.mrb[0].mxu0
  %6958 = vmatprep.mubr.f32.mxu0 0.0
  %6959 = vmatmul.mubr.f32.gmra.mrb[0].mxu0 %v6787
  %v6960 = vpop.f32.mrb[0].mxu0
  %v6961 = vadd.f32 %v6704, %v6960
  %v6962 = vpop.f32.mrb[0].mxu0
  %6963 = vmatprep.mubr.f32.mxu0 0.0
  %6964 = vmatmul.mubr.f32.gmra.mrb[0].mxu0 %v6790
  %v6965 = vpop.f32.mrb[0].mxu0
  %v6966 = vadd.f32 %v6709, %v6965
  %v6967 = vpop.f32.mrb[0].mxu0
  %6968 = vmatprep.mubr.f32.mxu0 0.0
  %6969 = vmatmul.mubr.f32.gmra.mrb[0].mxu0 %v6793
  %v6970 = vpop.f32.mrb[0].mxu0
  %v6971 = vadd.f32 %v6714, %v6970
  %v6972 = vpop.f32.mrb[0].mxu0
  %6973 = vmatprep.mubr.f32.mxu0 0.0
  %6974 = vmatmul.mubr.f32.gmra.mrb[0].mxu0 %v6796
  %v6975 = vpop.f32.mrb[0].mxu0
  %v6976 = vadd.f32 %v6719, %v6975
  %v6977 = vpop.f32.mrb[0].mxu0
  %6978 = vmatprep.mubr.f32.mxu0 0.0
  %6979 = vmatmul.mubr.f32.gmra.mrb[0].mxu0 %v6799
  %v6980 = vpop.f32.mrb[0].mxu0
  %v6981 = vadd.f32 %v6724, %v6980
  %v6982 = vpop.f32.mrb[0].mxu0
  %6983 = vmatprep.mubr.f32.mxu0 0.0
  %6984 = vmatmul.mubr.f32.gmra.mrb[0].mxu0 %v6802
  %v6985 = vpop.f32.mrb[0].mxu0
  %v6986 = vadd.f32 %v6729, %v6985
  %v6987 = vpop.f32.mrb[0].mxu0
  %6988 = vdwg.mxu0
  %v6989 = vld [vmem:[%s16] sm:$0x1]
  %v6991 = vlaneseq
  %v6992 = vshrl.u32 %v6991, 7
  %v6993 = vsub.s32 0, %v6992
  %v6994 = vrot.slane %v6989, %v6993
  %v6996 = vadd.f32 %v6871, %v6994
  %v6997 = vadd.f32 %v6876, %v6994
  %v6998 = vadd.f32 %v6881, %v6994
  %v6999 = vadd.f32 %v6886, %v6994
  %v7000 = vadd.f32 %v6891, %v6994
  %v7001 = vadd.f32 %v6896, %v6994
  %v7002 = vadd.f32 %v6901, %v6994
  %v7003 = vadd.f32 %v6906, %v6994
  %v7004 = vadd.f32 %v6911, %v6994
  %v7005 = vadd.f32 %v6916, %v6994
  %v7006 = vadd.f32 %v6921, %v6994
  %v7007 = vadd.f32 %v6926, %v6994
  %v7008 = vadd.f32 %v6931, %v6994
  %v7009 = vadd.f32 %v6936, %v6994
  %v7010 = vadd.f32 %v6941, %v6994
  %v7011 = vadd.f32 %v6946, %v6994
  %v7012 = vadd.f32 %v6951, %v6994
  %v7013 = vadd.f32 %v6956, %v6994
  %v7014 = vadd.f32 %v6961, %v6994
  %v7015 = vadd.f32 %v6966, %v6994
  %v7016 = vadd.f32 %v6971, %v6994
  %v7017 = vadd.f32 %v6976, %v6994
  %v7018 = vadd.f32 %v6981, %v6994
  %v7019 = vadd.f32 %v6986, %v6994
  %vm7020 = vcmp.gt.f32.partialorder %v6996, 0.0
  %vm7021 = vcmp.gt.f32.partialorder %v6997, 0.0
  %vm7022 = vcmp.gt.f32.partialorder %v6998, 0.0
  %vm7023 = vcmp.gt.f32.partialorder %v6999, 0.0
  %vm7024 = vcmp.gt.f32.partialorder %v7000, 0.0
  %vm7025 = vcmp.gt.f32.partialorder %v7001, 0.0
  %vm7026 = vcmp.gt.f32.partialorder %v7002, 0.0
  %vm7027 = vcmp.gt.f32.partialorder %v7003, 0.0
  %vm7028 = vcmp.gt.f32.partialorder %v7004, 0.0
  %vm7029 = vcmp.gt.f32.partialorder %v7005, 0.0
  %vm7030 = vcmp.gt.f32.partialorder %v7006, 0.0
  %vm7031 = vcmp.gt.f32.partialorder %v7007, 0.0
  %vm7032 = vcmp.gt.f32.partialorder %v7008, 0.0
  %vm7033 = vcmp.gt.f32.partialorder %v7009, 0.0
  %vm7034 = vcmp.gt.f32.partialorder %v7010, 0.0
  %vm7035 = vcmp.gt.f32.partialorder %v7011, 0.0
  %vm7036 = vcmp.gt.f32.partialorder %v7012, 0.0
  %vm7037 = vcmp.gt.f32.partialorder %v7013, 0.0
  %vm7038 = vcmp.gt.f32.partialorder %v7014, 0.0
  %vm7039 = vcmp.gt.f32.partialorder %v7015, 0.0
  %vm7040 = vcmp.gt.f32.partialorder %v7016, 0.0
  %vm7041 = vcmp.gt.f32.partialorder %v7017, 0.0
  %vm7042 = vcmp.gt.f32.partialorder %v7018, 0.0
  %vm7043 = vcmp.gt.f32.partialorder %v7019, 0.0
  %v7044 = vmul.f32 %v6996, 0.01
  %v7045 = vmul.f32 %v6997, 0.01
  %v7046 = vmul.f32 %v6998, 0.01
  %v7047 = vmul.f32 %v6999, 0.01
  %v7048 = vmul.f32 %v7000, 0.01
  %v7049 = vmul.f32 %v7001, 0.01
  %v7050 = vmul.f32 %v7002, 0.01
  %v7051 = vmul.f32 %v7003, 0.01
  %v7052 = vmul.f32 %v7004, 0.01
  %v7053 = vmul.f32 %v7005, 0.01
  %v7054 = vmul.f32 %v7006, 0.01
  %v7055 = vmul.f32 %v7007, 0.01
  %v7056 = vmul.f32 %v7008, 0.01
  %v7057 = vmul.f32 %v7009, 0.01
  %v7058 = vmul.f32 %v7010, 0.01
  %v7059 = vmul.f32 %v7011, 0.01
  %v7060 = vmul.f32 %v7012, 0.01
  %v7061 = vmul.f32 %v7013, 0.01
  %v7062 = vmul.f32 %v7014, 0.01
  %v7063 = vmul.f32 %v7015, 0.01
  %v7064 = vmul.f32 %v7016, 0.01
  %v7065 = vmul.f32 %v7017, 0.01
  %v7066 = vmul.f32 %v7018, 0.01
  %v7067 = vmul.f32 %v7019, 0.01
  %v7068 = vsel %vm7020, %v6996, %v7044
  %v7069 = vsel %vm7021, %v6997, %v7045
  %v7070 = vsel %vm7022, %v6998, %v7046
  %v7071 = vsel %vm7023, %v6999, %v7047
  %v7072 = vsel %vm7024, %v7000, %v7048
  %v7073 = vsel %vm7025, %v7001, %v7049
  %v7074 = vsel %vm7026, %v7002, %v7050
  %v7075 = vsel %vm7027, %v7003, %v7051
  %v7076 = vsel %vm7028, %v7004, %v7052
  %v7077 = vsel %vm7029, %v7005, %v7053
  %v7078 = vsel %vm7030, %v7006, %v7054
  %v7079 = vsel %vm7031, %v7007, %v7055
  %v7080 = vsel %vm7032, %v7008, %v7056
  %v7081 = vsel %vm7033, %v7009, %v7057
  %v7082 = vsel %vm7034, %v7010, %v7058
  %v7083 = vsel %vm7035, %v7011, %v7059
  %v7084 = vsel %vm7036, %v7012, %v7060
  %v7085 = vsel %vm7037, %v7013, %v7061
  %v7086 = vsel %vm7038, %v7014, %v7062
  %v7087 = vsel %vm7039, %v7015, %v7063
  %v7088 = vsel %vm7040, %v7016, %v7064
  %v7089 = vsel %vm7041, %v7017, %v7065
  %v7090 = vsel %vm7042, %v7018, %v7066
  %v7091 = vsel %vm7043, %v7019, %v7067
  %7098 = vrot.lane.b32.xlu0 %v7074, 32
  %v7099 = vpop.permute.xlu0 %7098
  %7100 = vrot.lane.b32.xlu0 %v7075, 32
  %v7101 = vpop.permute.xlu0 %7100
  %7102 = vrot.lane.b32.xlu0 %v7076, 32
  %v7103 = vpop.permute.xlu0 %7102
  %7104 = vrot.lane.b32.xlu0 %v7077, 32
  %v7105 = vpop.permute.xlu0 %7104
  %7106 = vrot.lane.b32.xlu0 %v7078, 32
  %v7107 = vpop.permute.xlu0 %7106
  %7108 = vrot.lane.b32.xlu0 %v7079, 32
  %v7109 = vpop.permute.xlu0 %7108
  %7122 = vrot.lane.b32.xlu0 %v7080, 64
  %v7123 = vpop.permute.xlu0 %7122
  %7124 = vrot.lane.b32.xlu0 %v7081, 64
  %v7125 = vpop.permute.xlu0 %7124
  %7126 = vrot.lane.b32.xlu0 %v7082, 64
  %v7127 = vpop.permute.xlu0 %7126
  %7128 = vrot.lane.b32.xlu0 %v7083, 64
  %v7129 = vpop.permute.xlu0 %7128
  %7130 = vrot.lane.b32.xlu0 %v7084, 64
  %v7131 = vpop.permute.xlu0 %7130
  %7132 = vrot.lane.b32.xlu0 %v7085, 64
  %v7133 = vpop.permute.xlu0 %7132
  %7146 = vrot.lane.b32.xlu0 %v7086, 96
  %v7147 = vpop.permute.xlu0 %7146
  %7148 = vrot.lane.b32.xlu0 %v7087, 96
  %v7149 = vpop.permute.xlu0 %7148
  %7150 = vrot.lane.b32.xlu0 %v7088, 96
  %v7151 = vpop.permute.xlu0 %7150
  %7152 = vrot.lane.b32.xlu0 %v7089, 96
  %v7153 = vpop.permute.xlu0 %7152
  %7154 = vrot.lane.b32.xlu0 %v7090, 96
  %v7155 = vpop.permute.xlu0 %7154
  %7156 = vrot.lane.b32.xlu0 %v7091, 96
  %v7157 = vpop.permute.xlu0 %7156
  %v7164 = vsel %vm1169, %v7068, %v7099
  %v7165 = vsel %vm1169, %v7069, %v7101
  %v7166 = vsel %vm1169, %v7070, %v7103
  %v7167 = vsel %vm1169, %v7071, %v7105
  %v7168 = vsel %vm1169, %v7072, %v7107
  %v7169 = vsel %vm1169, %v7073, %v7109
  %vm7170 = vcmask 523264
  %v7171 = vsel %vm7170, %v7164, %v7123
  %v7172 = vsel %vm7170, %v7165, %v7125
  %v7173 = vsel %vm7170, %v7166, %v7127
  %v7174 = vsel %vm7170, %v7167, %v7129
  %v7175 = vsel %vm7170, %v7168, %v7131
  %v7176 = vsel %vm7170, %v7169, %v7133
  %vm7177 = vcmask 785408
  %v7178 = vsel %vm7177, %v7171, %v7147
  %v7179 = vsel %vm7177, %v7172, %v7149
  %v7180 = vsel %vm7177, %v7173, %v7151
  %v7181 = vsel %vm7177, %v7174, %v7153
  %v7182 = vsel %vm7177, %v7175, %v7155
  %v7183 = vsel %vm7177, %v7176, %v7157
  %7184 = vst [vmem:[%s17] sm:$0xff] %v7178
  %7185 = vst [vmem:[%s17 + $0x8] sm:$0xff] %v7179
  %7186 = vst [vmem:[%s17 + $0x10] sm:$0xff] %v7180
  %7187 = vst [vmem:[%s17 + $0x18] sm:$0xff] %v7181
  %7188 = vst [vmem:[%s17 + $0x20] sm:$0xff] %v7182
  %7189 = vst [vmem:[%s17 + $0x28] sm:$0xff] %v7183
  // Predicated region
  $region70: #{cross_stage_forward.1} parent=0 // pred_check
    _
  $region71: #{cross_stage_forward.1} parent=0 // pred_check_branch
    %7191 = sbr.rel (0) target = $region73
  $region72: #{cross_stage_forward.1} parent=0 // pred_region
    _
  $region73: #{cross_stage_forward.1} parent=0 // pred_fallthru
    _
  // Predicated region
  $region74: #{cross_stage_forward.1} parent=0 // pred_check
    _
  $region75: #{cross_stage_forward.1} parent=0 // pred_check_branch
    %7193 = sbr.rel (0) target = $region77
  $region76: #{cross_stage_forward.1} parent=0 // pred_region
    _
  $region77: #{cross_stage_forward.1} parent=0 // pred_fallthru
    _

</llo_original>
